<compile_context>
chip_gen: v5e
topology: v5e:2x2
jax: 0.10.0
libtpu: 0.0.40
codegen_flags: <defaults>
</compile_context>

<pallas_src>
import functools

import jax
import jax.numpy as jnp
from jax import lax
from jax.experimental import pallas as pl
from jax.experimental.pallas import tpu as pltpu


# =============================================================================
# Fully fused kernel: 3 bidirectional LSTM layers + time-mean + MLP head
# =============================================================================
def _fused_lstm_kernel(x_ref,
                       ws0_ref, wc0_ref, whh0_ref, b0_ref,
                       ws1_ref, wc1_ref, whh1_ref, b1_ref,
                       ws2_ref, wc2_ref, whh2_ref, b2_ref,
                       mw1_ref, mb1_ref, mw2_ref, mb2_ref,
                       logits_ref, emb_ref,
                       xrev_ref, act_ref, actrev_ref, xw_ref,
                       *, hidden, seq_len, batch, unroll):
    H, T, B = hidden, seq_len, batch
    inv_t = 1.0 / float(T)

    # ---- Prologue: time-reversed copy of the (padded) input so every layer's
    #      hoisted projection is two dense whole-sequence MXU matmuls.
    def rev_copy(t, carry):
        src = pl.multiple_of(t * B, B)
        dst = pl.multiple_of((T - 1 - t) * B, B)
        xrev_ref[pl.ds(dst, B), :] = x_ref[pl.ds(src, B), :]
        return carry

    lax.fori_loop(0, T, rev_copy, 0, unroll=unroll)

    def run_layer(src_ref, srcrev_ref, ws_ref, wc_ref, whh_ref, bias_ref,
                  *, store, with_sum):
        # Hoisted input projection for the whole sequence in the SKEWED layout:
        # row t holds fwd-gate columns for time t and bwd-gate columns for time
        # T-1-t, so each recurrent step reads one contiguous (B, 8H) slab.
        xw_ref[...] = (
            jnp.dot(src_ref[...].astype(jnp.bfloat16), ws_ref[...],
                    preferred_element_type=jnp.float32)
            + jnp.dot(srcrev_ref[...].astype(jnp.bfloat16), wc_ref[...],
                      preferred_element_type=jnp.float32)
            + bias_ref[...])

        whh = whh_ref[...]                                    # (2H, 8H) bf16

        def cell(t, h, c):
            row = pl.multiple_of(t * B, B)
            rrow = pl.multiple_of((T - 1 - t) * B, B)
            gates = xw_ref[pl.ds(row, B), :] + jnp.dot(
                h.astype(jnp.bfloat16), whh, preferred_element_type=jnp.float32)
            # sigmoid(x) = 0.5*(1 + tanh(0.5 x)) -> one EUP op instead of exp+recip
            sg = 0.5 * (jnp.tanh(0.5 * gates[:, :6 * H]) + 1.0)
            g_gate = jnp.tanh(gates[:, 6 * H:])               # [g_f | g_b]
            i_gate = sg[:, :2 * H]
            f_gate = sg[:, 2 * H:4 * H]
            o_gate = sg[:, 4 * H:6 * H]
            c_new = f_gate * c + i_gate * g_gate              # (B, 2H)
            h_new = o_gate * jnp.tanh(c_new)                  # [h_f(t) | h_b(T-1-t)]
            if store:
                # One unmasked full-128-lane store, plus its time-reversed copy
                # so the next layer's projection stays a dense matmul.
                act_ref[pl.ds(row, B), :] = h_new
                actrev_ref[pl.ds(rrow, B), :] = h_new
            return h_new, c_new

        zeros = jnp.zeros((B, 2 * H), jnp.float32)
        if with_sum:
            def step(t, carry):
                h, c, s = carry
                h_new, c_new = cell(t, h, c)
                return h_new, c_new, s + h_new
            _, _, h_sum = lax.fori_loop(0, T, step, (zeros, zeros, zeros),
                                        unroll=unroll)
            return h_sum
        else:
            def step(t, carry):
                h, c = carry
                return cell(t, h, c)
            lax.fori_loop(0, T, step, (zeros, zeros), unroll=unroll)
            return None

    # Layer 0: x -> act.  Layer 1: act -> act (in place: the projection fully
    # consumes its input into xw before the recurrence overwrites it).
    # Layer 2: fused with the mean + MLP head (its sequence is never stored).
    run_layer(x_ref, xrev_ref, ws0_ref, wc0_ref, whh0_ref, b0_ref,
              store=True, with_sum=False)
    run_layer(act_ref, actrev_ref, ws1_ref, wc1_ref, whh1_ref, b1_ref,
              store=True, with_sum=False)
    h_sum = run_layer(act_ref, actrev_ref, ws2_ref, wc2_ref, whh2_ref, b2_ref,
                      store=False, with_sum=True)

    emb = h_sum * inv_t                                       # mean over time
    z = jnp.dot(emb, mw1_ref[...], preferred_element_type=jnp.float32) + mb1_ref[...]
    z = jnp.maximum(z, 0.0)                                   # ReLU
    logits_ref[...] = (jnp.dot(z, mw2_ref[...],
                               preferred_element_type=jnp.float32) + mb2_ref[...])
    emb_ref[...] = emb


# =============================================================================
# pallas_call wrapper (single fused call)
# =============================================================================
def _full_spec(shape):
    zeros = (0,) * len(shape)
    return pl.BlockSpec(shape, lambda i: zeros)


def lstm_model_forward(params, x, _times=None, get_embedding=False, dim=128):
    # x: (T, B, d_inp), time-major (the PyTorch forward's non-captum path).
    hidden = dim // 2
    G = 8 * hidden
    T, B, d_inp = x.shape
    n_classes = params["mlp"]["w2"].shape[1]

    B_pad = max(8, ((B + 7) // 8) * 8)                 # f32 sublane multiple
    D_pad = params["lstm"][0]["w_same"].shape[0]       # lane-padded input dim
    TB = T * B_pad

    inp = x.astype(jnp.float32)
    if B_pad != B or D_pad != d_inp:
        inp = jnp.pad(inp, ((0, 0), (0, B_pad - B), (0, D_pad - d_inp)))
    inp = inp.reshape(TB, D_pad)                       # row t*B_pad + b = x[t, b]

    # Full unroll for short sequences; partial unroll keeps the LLO scheduler's
    # window open without blowing instruction memory for long ones.
    unroll = True if T <= 32 else 8

    # VMEM budget: scratch + weights + (double-buffered) IO, with 2x margin.
    f32b, bf16b = 4, 2
    scratch_bytes = TB * (D_pad + 2 * dim + G) * f32b
    weight_bytes = ((2 * D_pad + 7 * dim) * G * bf16b + 3 * G * f32b
                    + (dim * dim + dim + dim * n_classes + n_classes) * f32b)
    io_bytes = TB * D_pad * f32b + B_pad * (dim + n_classes) * f32b
    vmem_limit = int(min(max(2 * (scratch_bytes + weight_bytes + io_bytes),
                             32 * 2 ** 20), 100 * 2 ** 20))
    # TODO(synk): for very long sequences, chunk the time axis (double-buffered
    # xw / activation tiles via emit_pipeline) so VMEM stays bounded on v7x's
    # 64 MiB / v5e's 16 MiB default, and add a batch-parallel grid axis
    # ("parallel") to use v7x's two TensorCores when B_pad >= 16.

    kernel = functools.partial(_fused_lstm_kernel, hidden=hidden, seq_len=T,
                               batch=B_pad, unroll=unroll)

    lp0, lp1, lp2 = params["lstm"]
    mlp = params["mlp"]

    def wspecs(lp):
        d_src = lp["w_same"].shape[0]
        return [_full_spec((d_src, G)), _full_spec((d_src, G)),
                _full_spec((dim, G)), _full_spec((1, G))]

    logits, emb = pl.pallas_call(
        kernel,
        out_shape=(jax.ShapeDtypeStruct((B_pad, n_classes), jnp.float32),
                   jax.ShapeDtypeStruct((B_pad, dim), jnp.float32)),
        grid=(1,),
        in_specs=([_full_spec((TB, D_pad))]
                  + wspecs(lp0) + wspecs(lp1) + wspecs(lp2)
                  + [_full_spec((dim, dim)), _full_spec((1, dim)),
                     _full_spec((dim, n_classes)), _full_spec((1, n_classes))]),
        out_specs=(_full_spec((B_pad, n_classes)), _full_spec((B_pad, dim))),
        scratch_shapes=[pltpu.VMEM((TB, D_pad), jnp.float32),   # rev(x)
                        pltpu.VMEM((TB, dim), jnp.float32),     # act (skewed)
                        pltpu.VMEM((TB, dim), jnp.float32),     # act reversed
                        pltpu.VMEM((TB, G), jnp.float32)],      # hoisted xw
        compiler_params=pltpu.CompilerParams(
            dimension_semantics=("arbitrary",),
            vmem_limit_bytes=vmem_limit),
    )(inp,
      lp0["w_same"], lp0["w_cross"], lp0["whh"], lp0["b"],
      lp1["w_same"], lp1["w_cross"], lp1["whh"], lp1["b"],
      lp2["w_same"], lp2["w_cross"], lp2["whh"], lp2["b"],
      mlp["w1"], mlp["b1"], mlp["w2"], mlp["b2"])

    logits = logits[:B]
    if get_embedding:
        return logits, emb[:B]
    return logits


# =============================================================================
# Parameters (PyTorch-style init) + re-packing into the fused kernel layout
# =============================================================================
def init_raw_params(key, d_inp, n_classes, dim=128, num_layers=3):
    """Per-direction weights, transposed vs. torch, gate order [i, f, g, o]."""
    hidden = dim // 2
    k_lstm = 1.0 / float(hidden) ** 0.5

    def unif(key, shape, k):
        return jax.random.uniform(key, shape, jnp.float32, -k, k)

    params = {"lstm": [], "mlp": {}}
    for layer in range(num_layers):
        d_in = d_inp if layer == 0 else dim
        layer_p = {}
        for direction in ("fwd", "bwd"):
            key, k1, k2, k3, k4 = jax.random.split(key, 5)
            layer_p[direction] = {
                "w_ih": unif(k1, (d_in, 4 * hidden), k_lstm),
                "w_hh": unif(k2, (hidden, 4 * hidden), k_lstm),
                "b": (unif(k3, (4 * hidden,), k_lstm)
                      + unif(k4, (4 * hidden,), k_lstm)).reshape(1, 4 * hidden),
            }
        params["lstm"].append(layer_p)

    k_mlp = 1.0 / float(dim) ** 0.5
    key, k1, k2, k3, k4 = jax.random.split(key, 5)
    params["mlp"] = {
        "w1": unif(k1, (dim, dim), k_mlp),
        "b1": unif(k2, (1, dim), k_mlp),
        "w2": unif(k3, (dim, n_classes), k_mlp),
        "b2": unif(k4, (1, n_classes), k_mlp),
    }
    return params


def round_lstm_weights_to_bf16(raw):
    """Round LSTM matmul weights to bf16-representable f32 values so the kernel
    (bf16 MXU operands) and the f32 reference share identical weights."""
    def rnd(a):
        return a.astype(jnp.bfloat16).astype(jnp.float32)
    out = {"lstm": [], "mlp": raw["mlp"]}
    for lp in raw["lstm"]:
        out["lstm"].append({d: {"w_ih": rnd(lp[d]["w_ih"]),
                                "w_hh": rnd(lp[d]["w_hh"]),
                                "b": lp[d]["b"]} for d in ("fwd", "bwd")})
    return out


def prepare_fused_params(raw, dim=128):
    """Re-pack per-direction [i,f,g,o] weights into the fused skewed layout.

    Gate column layout (each block H wide):
        [ i_f  i_b | f_f  f_b | o_f  o_b | g_f  g_b ]
    W_same multiplies the layer input in its stored order; W_cross multiplies
    the time-reversed copy, so the hoisted projection lands directly in the
    skewed per-step layout (fwd gates of time t, bwd gates of time T-1-t).
    """
    hidden = dim // 2
    H = hidden

    def scatter_cols(w4, direction):
        i = w4[:, 0 * H:1 * H]
        f = w4[:, 1 * H:2 * H]
        g = w4[:, 2 * H:3 * H]
        o = w4[:, 3 * H:4 * H]
        z = jnp.zeros_like(i)
        blocks = ([i, z, f, z, o, z, g, z] if direction == "fwd"
                  else [z, i, z, f, z, o, z, g])
        return jnp.concatenate(blocks, axis=1)

    fused = {"lstm": [], "mlp": dict(raw["mlp"])}
    for layer, lp in enumerate(raw["lstm"]):
        wf, wb = lp["fwd"]["w_ih"], lp["bwd"]["w_ih"]
        if layer == 0:
            # Zero-pad the input feature dim to a lane-friendly multiple of 128.
            d_in = wf.shape[0]
            d_pad = ((max(d_in, 1) + 127) // 128) * 128
            wf = jnp.pad(wf, ((0, d_pad - d_in), (0, 0)))
            wb = jnp.pad(wb, ((0, d_pad - d_in), (0, 0)))
            w_same = scatter_cols(wf, "fwd")            # x(t)       -> fwd gates
            w_cross = scatter_cols(wb, "bwd")           # x(T-1-t)   -> bwd gates
        else:
            # Previous layer's output arrives skewed: [h_f(t) | h_b(T-1-t)].
            w_same = jnp.concatenate(
                [scatter_cols(wf[:H], "fwd"),           # a_f(t)     -> fwd gates
                 scatter_cols(wb[H:], "bwd")], axis=0)  # a_b(T-1-t) -> bwd gates
            w_cross = jnp.concatenate(
                [scatter_cols(wb[:H], "bwd"),           # a_f(T-1-t) -> bwd gates
                 scatter_cols(wf[H:], "fwd")], axis=0)  # a_b(t)     -> fwd gates
        whh = jnp.concatenate([scatter_cols(lp["fwd"]["w_hh"], "fwd"),
                               scatter_cols(lp["bwd"]["w_hh"], "bwd")], axis=0)
        b = (scatter_cols(lp["fwd"]["b"], "fwd")
             + scatter_cols(lp["bwd"]["b"], "bwd"))
        fused["lstm"].append({
            "w_same": w_same.astype(jnp.bfloat16),
            "w_cross": w_cross.astype(jnp.bfloat16),
            "whh": whh.astype(jnp.bfloat16),
            "b": b.astype(jnp.float32),
        })
    return fused


# =============================================================================
# Pure-JAX reference (same math, per-direction, used only for verification)
# =============================================================================
def _ref_lstm_dir(x, w_ih, w_hh, b, hidden):
    H = hidden

    def step(carry, x_t):
        h, c = carry
        gates = x_t @ w_ih + h @ w_hh + b
        i = jax.nn.sigmoid(gates[:, 0 * H:1 * H])
        f = jax.nn.sigmoid(gates[:, 1 * H:2 * H])
        g = jnp.tanh(gates[:, 2 * H:3 * H])
        o = jax.nn.sigmoid(gates[:, 3 * H:4 * H])
        c = f * c + i * g
        h = o * jnp.tanh(c)
        return (h, c), h

    B = x.shape[1]
    init = (jnp.zeros((B, H), jnp.float32), jnp.zeros((B, H), jnp.float32))
    _, hs = lax.scan(step, init, x)
    return hs


def reference_forward(raw, x, dim=128):
    hidden = dim // 2
    inp = x.astype(jnp.float32)
    for lp in raw["lstm"]:
        hf = _ref_lstm_dir(inp, lp["fwd"]["w_ih"], lp["fwd"]["w_hh"],
                           lp["fwd"]["b"], hidden)
        hb = jnp.flip(_ref_lstm_dir(jnp.flip(inp, 0), lp["bwd"]["w_ih"],
                                    lp["bwd"]["w_hh"], lp["bwd"]["b"], hidden), 0)
        inp = jnp.concatenate([hf, hb], axis=-1)
    emb = jnp.mean(inp, axis=0)
    mlp = raw["mlp"]
    z = jnp.maximum(emb @ mlp["w1"] + mlp["b1"], 0.0)
    return z @ mlp["w2"] + mlp["b2"], emb


if __name__ == "__main__":
    # Small, module-consistent shapes (dim=128 is the module default).
    T, B, d_inp = 8, 2, 4
    dim, n_classes = 128, 5

    key = jax.random.PRNGKey(0)
    key, kx, kp = jax.random.split(key, 3)
    x = jax.random.normal(kx, (T, B, d_inp), jnp.float32)        # (seq, batch, d_inp)
    times = jnp.tile(jnp.arange(T, dtype=jnp.float32)[:, None], (1, B))  # unused

    raw = init_raw_params(kp, d_inp, n_classes, dim=dim, num_layers=3)
    raw = round_lstm_weights_to_bf16(raw)    # identical weights for kernel + ref
    params = prepare_fused_params(raw, dim=dim)

    out, emb = lstm_model_forward(params, x, times, get_embedding=True, dim=dim)
    out, emb = jax.block_until_ready((out, emb))
    assert out.shape == (B, n_classes), out.shape
    assert emb.shape == (B, dim), emb.shape
    assert bool(jnp.all(jnp.isfinite(out)))

    # Verify against the pure-JAX reference (f32 math, same bf16-rounded weights).
    with jax.default_matmul_precision("highest"):
        ref_out, ref_emb = reference_forward(raw, x, dim=dim)
    assert jnp.allclose(out, ref_out, rtol=1e-2, atol=1e-2), \
        float(jnp.max(jnp.abs(out - ref_out)))
    assert jnp.allclose(emb, ref_emb, rtol=1e-2, atol=1e-2), \
        float(jnp.max(jnp.abs(emb - ref_emb)))

    print("KERNEL_OK")
</pallas_src>

<mosaic_0001>
module attributes {stable_mosaic.version = 11 : i64} {
  func.func @_fused_lstm_kernel(%arg0: i32, %arg1: memref<64x128xf32, #tpu.memory_space<vmem>>, %arg2: memref<128x512xbf16, #tpu.memory_space<vmem>>, %arg3: memref<128x512xbf16, #tpu.memory_space<vmem>>, %arg4: memref<128x512xbf16, #tpu.memory_space<vmem>>, %arg5: memref<1x512xf32, #tpu.memory_space<vmem>>, %arg6: memref<128x512xbf16, #tpu.memory_space<vmem>>, %arg7: memref<128x512xbf16, #tpu.memory_space<vmem>>, %arg8: memref<128x512xbf16, #tpu.memory_space<vmem>>, %arg9: memref<1x512xf32, #tpu.memory_space<vmem>>, %arg10: memref<128x512xbf16, #tpu.memory_space<vmem>>, %arg11: memref<128x512xbf16, #tpu.memory_space<vmem>>, %arg12: memref<128x512xbf16, #tpu.memory_space<vmem>>, %arg13: memref<1x512xf32, #tpu.memory_space<vmem>>, %arg14: memref<128x128xf32, #tpu.memory_space<vmem>>, %arg15: memref<1x128xf32, #tpu.memory_space<vmem>>, %arg16: memref<128x5xf32, #tpu.memory_space<vmem>>, %arg17: memref<1x5xf32, #tpu.memory_space<vmem>>, %arg18: memref<8x5xf32, #tpu.memory_space<vmem>>, %arg19: memref<8x128xf32, #tpu.memory_space<vmem>>, %arg20: memref<64x128xf32, #tpu.memory_space<vmem>>, %arg21: memref<64x128xf32, #tpu.memory_space<vmem>>, %arg22: memref<64x128xf32, #tpu.memory_space<vmem>>, %arg23: memref<64x512xf32, #tpu.memory_space<vmem>>) attributes {dimension_semantics = [#tpu.dimension_semantics<arbitrary>], iteration_bounds = array<i64: 1>, scalar_prefetch = 0 : i64, scratch_operands = 4 : i64, tpu.core_type = #tpu.core_type<tc>, window_params = [{pipeline_mode = #tpu.pipeline_mode<synchronous>, transform_indices = @transform_0, window_bounds = array<i64: 64, 128>}, {pipeline_mode = #tpu.pipeline_mode<synchronous>, transform_indices = @transform_1, window_bounds = array<i64: 128, 512>}, {pipeline_mode = #tpu.pipeline_mode<synchronous>, transform_indices = @transform_2, window_bounds = array<i64: 128, 512>}, {pipeline_mode = #tpu.pipeline_mode<synchronous>, transform_indices = @transform_3, window_bounds = array<i64: 128, 512>}, {pipeline_mode = #tpu.pipeline_mode<synchronous>, transform_indices = @transform_4, window_bounds = array<i64: 1, 512>}, {pipeline_mode = #tpu.pipeline_mode<synchronous>, transform_indices = @transform_5, window_bounds = array<i64: 128, 512>}, {pipeline_mode = #tpu.pipeline_mode<synchronous>, transform_indices = @transform_6, window_bounds = array<i64: 128, 512>}, {pipeline_mode = #tpu.pipeline_mode<synchronous>, transform_indices = @transform_7, window_bounds = array<i64: 128, 512>}, {pipeline_mode = #tpu.pipeline_mode<synchronous>, transform_indices = @transform_8, window_bounds = array<i64: 1, 512>}, {pipeline_mode = #tpu.pipeline_mode<synchronous>, transform_indices = @transform_9, window_bounds = array<i64: 128, 512>}, {pipeline_mode = #tpu.pipeline_mode<synchronous>, transform_indices = @transform_10, window_bounds = array<i64: 128, 512>}, {pipeline_mode = #tpu.pipeline_mode<synchronous>, transform_indices = @transform_11, window_bounds = array<i64: 128, 512>}, {pipeline_mode = #tpu.pipeline_mode<synchronous>, transform_indices = @transform_12, window_bounds = array<i64: 1, 512>}, {pipeline_mode = #tpu.pipeline_mode<synchronous>, transform_indices = @transform_13, window_bounds = array<i64: 128, 128>}, {pipeline_mode = #tpu.pipeline_mode<synchronous>, transform_indices = @transform_14, window_bounds = array<i64: 1, 128>}, {pipeline_mode = #tpu.pipeline_mode<synchronous>, transform_indices = @transform_15, window_bounds = array<i64: 128, 5>}, {pipeline_mode = #tpu.pipeline_mode<synchronous>, transform_indices = @transform_16, window_bounds = array<i64: 1, 5>}, {pipeline_mode = #tpu.pipeline_mode<synchronous>, transform_indices = @transform_17, window_bounds = array<i64: 8, 5>}, {pipeline_mode = #tpu.pipeline_mode<synchronous>, transform_indices = @transform_18, window_bounds = array<i64: 8, 128>}]} {
    %c0_i32 = arith.constant 0 : i32
    %c8_i32 = arith.constant 8 : i32
    %0 = arith.muli %c0_i32, %c8_i32 : i32
    %1 = tpu.assume_multiple %0, 8 : i32
    %c7_i32 = arith.constant 7 : i32
    %2 = arith.subi %c7_i32, %c0_i32 : i32
    %c8_i32_0 = arith.constant 8 : i32
    %3 = arith.muli %2, %c8_i32_0 : i32
    %4 = tpu.assume_multiple %3, 8 : i32
    %5 = arith.index_cast %1 : i32 to index
    %c0 = arith.constant 0 : index
    %6 = vector.load %arg1[%5, %c0] : memref<64x128xf32, #tpu.memory_space<vmem>>, vector<8x128xf32>
    %7 = arith.index_cast %4 : i32 to index
    %c0_1 = arith.constant 0 : index
    %8 = vector.load %arg20[%7, %c0_1] : memref<64x128xf32, #tpu.memory_space<vmem>>, vector<8x128xf32>
    tpu.vector_store %arg20[%7, %c0_1], %6 {strides = array<i32>} : memref<64x128xf32, #tpu.memory_space<vmem>>, vector<8x128xf32>,
    %c1_i32 = arith.constant 1 : i32
    %c8_i32_2 = arith.constant 8 : i32
    %9 = arith.muli %c1_i32, %c8_i32_2 : i32
    %10 = tpu.assume_multiple %9, 8 : i32
    %c7_i32_3 = arith.constant 7 : i32
    %11 = arith.subi %c7_i32_3, %c1_i32 : i32
    %c8_i32_4 = arith.constant 8 : i32
    %12 = arith.muli %11, %c8_i32_4 : i32
    %13 = tpu.assume_multiple %12, 8 : i32
    %14 = arith.index_cast %10 : i32 to index
    %c0_5 = arith.constant 0 : index
    %15 = vector.load %arg1[%14, %c0_5] : memref<64x128xf32, #tpu.memory_space<vmem>>, vector<8x128xf32>
    %16 = arith.index_cast %13 : i32 to index
    %c0_6 = arith.constant 0 : index
    %17 = vector.load %arg20[%16, %c0_6] : memref<64x128xf32, #tpu.memory_space<vmem>>, vector<8x128xf32>
    tpu.vector_store %arg20[%16, %c0_6], %15 {strides = array<i32>} : memref<64x128xf32, #tpu.memory_space<vmem>>, vector<8x128xf32>,
    %c2_i32 = arith.constant 2 : i32
    %c8_i32_7 = arith.constant 8 : i32
    %18 = arith.muli %c2_i32, %c8_i32_7 : i32
    %19 = tpu.assume_multiple %18, 8 : i32
    %c7_i32_8 = arith.constant 7 : i32
    %20 = arith.subi %c7_i32_8, %c2_i32 : i32
    %c8_i32_9 = arith.constant 8 : i32
    %21 = arith.muli %20, %c8_i32_9 : i32
    %22 = tpu.assume_multiple %21, 8 : i32
    %23 = arith.index_cast %19 : i32 to index
    %c0_10 = arith.constant 0 : index
    %24 = vector.load %arg1[%23, %c0_10] : memref<64x128xf32, #tpu.memory_space<vmem>>, vector<8x128xf32>
    %25 = arith.index_cast %22 : i32 to index
    %c0_11 = arith.constant 0 : index
    %26 = vector.load %arg20[%25, %c0_11] : memref<64x128xf32, #tpu.memory_space<vmem>>, vector<8x128xf32>
    tpu.vector_store %arg20[%25, %c0_11], %24 {strides = array<i32>} : memref<64x128xf32, #tpu.memory_space<vmem>>, vector<8x128xf32>,
    %c3_i32 = arith.constant 3 : i32
    %c8_i32_12 = arith.constant 8 : i32
    %27 = arith.muli %c3_i32, %c8_i32_12 : i32
    %28 = tpu.assume_multiple %27, 8 : i32
    %c7_i32_13 = arith.constant 7 : i32
    %29 = arith.subi %c7_i32_13, %c3_i32 : i32
    %c8_i32_14 = arith.constant 8 : i32
    %30 = arith.muli %29, %c8_i32_14 : i32
    %31 = tpu.assume_multiple %30, 8 : i32
    %32 = arith.index_cast %28 : i32 to index
    %c0_15 = arith.constant 0 : index
    %33 = vector.load %arg1[%32, %c0_15] : memref<64x128xf32, #tpu.memory_space<vmem>>, vector<8x128xf32>
    %34 = arith.index_cast %31 : i32 to index
    %c0_16 = arith.constant 0 : index
    %35 = vector.load %arg20[%34, %c0_16] : memref<64x128xf32, #tpu.memory_space<vmem>>, vector<8x128xf32>
    tpu.vector_store %arg20[%34, %c0_16], %33 {strides = array<i32>} : memref<64x128xf32, #tpu.memory_space<vmem>>, vector<8x128xf32>,
    %c4_i32 = arith.constant 4 : i32
    %c8_i32_17 = arith.constant 8 : i32
    %36 = arith.muli %c4_i32, %c8_i32_17 : i32
    %37 = tpu.assume_multiple %36, 8 : i32
    %c7_i32_18 = arith.constant 7 : i32
    %38 = arith.subi %c7_i32_18, %c4_i32 : i32
    %c8_i32_19 = arith.constant 8 : i32
    %39 = arith.muli %38, %c8_i32_19 : i32
    %40 = tpu.assume_multiple %39, 8 : i32
    %41 = arith.index_cast %37 : i32 to index
    %c0_20 = arith.constant 0 : index
    %42 = vector.load %arg1[%41, %c0_20] : memref<64x128xf32, #tpu.memory_space<vmem>>, vector<8x128xf32>
    %43 = arith.index_cast %40 : i32 to index
    %c0_21 = arith.constant 0 : index
    %44 = vector.load %arg20[%43, %c0_21] : memref<64x128xf32, #tpu.memory_space<vmem>>, vector<8x128xf32>
    tpu.vector_store %arg20[%43, %c0_21], %42 {strides = array<i32>} : memref<64x128xf32, #tpu.memory_space<vmem>>, vector<8x128xf32>,
    %c5_i32 = arith.constant 5 : i32
    %c8_i32_22 = arith.constant 8 : i32
    %45 = arith.muli %c5_i32, %c8_i32_22 : i32
    %46 = tpu.assume_multiple %45, 8 : i32
    %c7_i32_23 = arith.constant 7 : i32
    %47 = arith.subi %c7_i32_23, %c5_i32 : i32
    %c8_i32_24 = arith.constant 8 : i32
    %48 = arith.muli %47, %c8_i32_24 : i32
    %49 = tpu.assume_multiple %48, 8 : i32
    %50 = arith.index_cast %46 : i32 to index
    %c0_25 = arith.constant 0 : index
    %51 = vector.load %arg1[%50, %c0_25] : memref<64x128xf32, #tpu.memory_space<vmem>>, vector<8x128xf32>
    %52 = arith.index_cast %49 : i32 to index
    %c0_26 = arith.constant 0 : index
    %53 = vector.load %arg20[%52, %c0_26] : memref<64x128xf32, #tpu.memory_space<vmem>>, vector<8x128xf32>
    tpu.vector_store %arg20[%52, %c0_26], %51 {strides = array<i32>} : memref<64x128xf32, #tpu.memory_space<vmem>>, vector<8x128xf32>,
    %c6_i32 = arith.constant 6 : i32
    %c8_i32_27 = arith.constant 8 : i32
    %54 = arith.muli %c6_i32, %c8_i32_27 : i32
    %55 = tpu.assume_multiple %54, 8 : i32
    %c7_i32_28 = arith.constant 7 : i32
    %56 = arith.subi %c7_i32_28, %c6_i32 : i32
    %c8_i32_29 = arith.constant 8 : i32
    %57 = arith.muli %56, %c8_i32_29 : i32
    %58 = tpu.assume_multiple %57, 8 : i32
    %59 = arith.index_cast %55 : i32 to index
    %c0_30 = arith.constant 0 : index
    %60 = vector.load %arg1[%59, %c0_30] : memref<64x128xf32, #tpu.memory_space<vmem>>, vector<8x128xf32>
    %61 = arith.index_cast %58 : i32 to index
    %c0_31 = arith.constant 0 : index
    %62 = vector.load %arg20[%61, %c0_31] : memref<64x128xf32, #tpu.memory_space<vmem>>, vector<8x128xf32>
    tpu.vector_store %arg20[%61, %c0_31], %60 {strides = array<i32>} : memref<64x128xf32, #tpu.memory_space<vmem>>, vector<8x128xf32>,
    %c7_i32_32 = arith.constant 7 : i32
    %c8_i32_33 = arith.constant 8 : i32
    %63 = arith.muli %c7_i32_32, %c8_i32_33 : i32
    %64 = tpu.assume_multiple %63, 8 : i32
    %c7_i32_34 = arith.constant 7 : i32
    %65 = arith.subi %c7_i32_34, %c7_i32_32 : i32
    %c8_i32_35 = arith.constant 8 : i32
    %66 = arith.muli %65, %c8_i32_35 : i32
    %67 = tpu.assume_multiple %66, 8 : i32
    %68 = arith.index_cast %64 : i32 to index
    %c0_36 = arith.constant 0 : index
    %69 = vector.load %arg1[%68, %c0_36] : memref<64x128xf32, #tpu.memory_space<vmem>>, vector<8x128xf32>
    %70 = arith.index_cast %67 : i32 to index
    %c0_37 = arith.constant 0 : index
    %71 = vector.load %arg20[%70, %c0_37] : memref<64x128xf32, #tpu.memory_space<vmem>>, vector<8x128xf32>
    tpu.vector_store %arg20[%70, %c0_37], %69 {strides = array<i32>} : memref<64x128xf32, #tpu.memory_space<vmem>>, vector<8x128xf32>,
    %c8_i32_38 = arith.constant 8 : i32
    %c0_39 = arith.constant 0 : index
    %c0_40 = arith.constant 0 : index
    %72 = vector.load %arg1[%c0_39, %c0_40] : memref<64x128xf32, #tpu.memory_space<vmem>>, vector<64x128xf32>
    %73 = arith.truncf %72 : vector<64x128xf32> to vector<64x128xbf16>
    %c0_41 = arith.constant 0 : index
    %c0_42 = arith.constant 0 : index
    %74 = vector.load %arg2[%c0_41, %c0_42] : memref<128x512xbf16, #tpu.memory_space<vmem>>, vector<128x512xbf16>
    %cst = arith.constant dense<0.000000e+00> : vector<64x512xf32>
    %75 = tpu.matmul %73, %74, %cst {dimension_numbers = #tpu.dot_dimension_numbers<[1], [0], [0], [1], [0, 0, 1, 1], [], []>} : vector<64x128xbf16>, vector<128x512xbf16>, vector<64x512xf32> -> vector<64x512xf32>
    %c0_43 = arith.constant 0 : index
    %c0_44 = arith.constant 0 : index
    %76 = vector.load %arg20[%c0_43, %c0_44] : memref<64x128xf32, #tpu.memory_space<vmem>>, vector<64x128xf32>
    %77 = arith.truncf %76 : vector<64x128xf32> to vector<64x128xbf16>
    %c0_45 = arith.constant 0 : index
    %c0_46 = arith.constant 0 : index
    %78 = vector.load %arg3[%c0_45, %c0_46] : memref<128x512xbf16, #tpu.memory_space<vmem>>, vector<128x512xbf16>
    %cst_47 = arith.constant dense<0.000000e+00> : vector<64x512xf32>
    %79 = tpu.matmul %77, %78, %cst_47 {dimension_numbers = #tpu.dot_dimension_numbers<[1], [0], [0], [1], [0, 0, 1, 1], [], []>} : vector<64x128xbf16>, vector<128x512xbf16>, vector<64x512xf32> -> vector<64x512xf32>
    %80 = arith.addf %75, %79 : vector<64x512xf32>
    %c0_48 = arith.constant 0 : index
    %c0_49 = arith.constant 0 : index
    %81 = vector.load %arg5[%c0_48, %c0_49] : memref<1x512xf32, #tpu.memory_space<vmem>>, vector<1x512xf32>
    %82 = vector.broadcast %81 : vector<1x512xf32> to vector<64x512xf32>
    %83 = arith.addf %80, %82 : vector<64x512xf32>
    %c0_50 = arith.constant 0 : index
    %c0_51 = arith.constant 0 : index
    %84 = vector.load %arg23[%c0_50, %c0_51] : memref<64x512xf32, #tpu.memory_space<vmem>>, vector<64x512xf32>
    tpu.vector_store %arg23[%c0_50, %c0_51], %83 {strides = array<i32>} : memref<64x512xf32, #tpu.memory_space<vmem>>, vector<64x512xf32>,
    %c0_52 = arith.constant 0 : index
    %c0_53 = arith.constant 0 : index
    %85 = vector.load %arg4[%c0_52, %c0_53] : memref<128x512xbf16, #tpu.memory_space<vmem>>, vector<128x512xbf16>
    %cst_54 = arith.constant 0.000000e+00 : f32
    %86 = vector.broadcast %cst_54 : f32 to vector<8x128xf32>
    %c0_i32_55 = arith.constant 0 : i32
    %c8_i32_56 = arith.constant 8 : i32
    %87 = arith.muli %c0_i32_55, %c8_i32_56 : i32
    %88 = tpu.assume_multiple %87, 8 : i32
    %c7_i32_57 = arith.constant 7 : i32
    %89 = arith.subi %c7_i32_57, %c0_i32_55 : i32
    %c8_i32_58 = arith.constant 8 : i32
    %90 = arith.muli %89, %c8_i32_58 : i32
    %91 = tpu.assume_multiple %90, 8 : i32
    %92 = arith.index_cast %88 : i32 to index
    %c0_59 = arith.constant 0 : index
    %93 = vector.load %arg23[%92, %c0_59] : memref<64x512xf32, #tpu.memory_space<vmem>>, vector<8x512xf32>
    %94 = arith.truncf %86 : vector<8x128xf32> to vector<8x128xbf16>
    %cst_60 = arith.constant dense<0.000000e+00> : vector<8x512xf32>
    %95 = tpu.matmul %94, %85, %cst_60 {dimension_numbers = #tpu.dot_dimension_numbers<[1], [0], [0], [1], [0, 0, 1, 1], [], []>} : vector<8x128xbf16>, vector<128x512xbf16>, vector<8x512xf32> -> vector<8x512xf32>
    %96 = arith.addf %93, %95 : vector<8x512xf32>
    %97 = vector.extract_strided_slice %96 {offsets = [0, 0], sizes = [8, 384], strides = [1, 1]} : vector<8x512xf32> to vector<8x384xf32>
    %cst_61 = arith.constant 5.000000e-01 : f32
    %98 = vector.broadcast %cst_61 : f32 to vector<8x384xf32>
    %99 = arith.mulf %98, %97 : vector<8x384xf32>
    %100 = math.tanh %99 : vector<8x384xf32>
    %cst_62 = arith.constant 1.000000e+00 : f32
    %101 = vector.broadcast %cst_62 : f32 to vector<8x384xf32>
    %102 = arith.addf %100, %101 : vector<8x384xf32>
    %cst_63 = arith.constant 5.000000e-01 : f32
    %103 = vector.broadcast %cst_63 : f32 to vector<8x384xf32>
    %104 = arith.mulf %103, %102 : vector<8x384xf32>
    %105 = vector.extract_strided_slice %96 {offsets = [0, 384], sizes = [8, 128], strides = [1, 1]} : vector<8x512xf32> to vector<8x128xf32>
    %106 = math.tanh %105 : vector<8x128xf32>
    %107 = vector.extract_strided_slice %104 {offsets = [0, 0], sizes = [8, 128], strides = [1, 1]} : vector<8x384xf32> to vector<8x128xf32>
    %108 = vector.extract_strided_slice %104 {offsets = [0, 128], sizes = [8, 128], strides = [1, 1]} : vector<8x384xf32> to vector<8x128xf32>
    %109 = vector.extract_strided_slice %104 {offsets = [0, 256], sizes = [8, 128], strides = [1, 1]} : vector<8x384xf32> to vector<8x128xf32>
    %110 = arith.mulf %108, %86 : vector<8x128xf32>
    %111 = arith.mulf %107, %106 : vector<8x128xf32>
    %112 = arith.addf %110, %111 : vector<8x128xf32>
    %113 = math.tanh %112 : vector<8x128xf32>
    %114 = arith.mulf %109, %113 : vector<8x128xf32>
    %115 = arith.index_cast %88 : i32 to index
    %c0_64 = arith.constant 0 : index
    %116 = vector.load %arg21[%115, %c0_64] : memref<64x128xf32, #tpu.memory_space<vmem>>, vector<8x128xf32>
    tpu.vector_store %arg21[%115, %c0_64], %114 {strides = array<i32>} : memref<64x128xf32, #tpu.memory_space<vmem>>, vector<8x128xf32>,
    %117 = arith.index_cast %91 : i32 to index
    %c0_65 = arith.constant 0 : index
    %118 = vector.load %arg22[%117, %c0_65] : memref<64x128xf32, #tpu.memory_space<vmem>>, vector<8x128xf32>
    tpu.vector_store %arg22[%117, %c0_65], %114 {strides = array<i32>} : memref<64x128xf32, #tpu.memory_space<vmem>>, vector<8x128xf32>,
    %c1_i32_66 = arith.constant 1 : i32
    %c8_i32_67 = arith.constant 8 : i32
    %119 = arith.muli %c1_i32_66, %c8_i32_67 : i32
    %120 = tpu.assume_multiple %119, 8 : i32
    %c7_i32_68 = arith.constant 7 : i32
    %121 = arith.subi %c7_i32_68, %c1_i32_66 : i32
    %c8_i32_69 = arith.constant 8 : i32
    %122 = arith.muli %121, %c8_i32_69 : i32
    %123 = tpu.assume_multiple %122, 8 : i32
    %124 = arith.index_cast %120 : i32 to index
    %c0_70 = arith.constant 0 : index
    %125 = vector.load %arg23[%124, %c0_70] : memref<64x512xf32, #tpu.memory_space<vmem>>, vector<8x512xf32>
    %126 = arith.truncf %114 : vector<8x128xf32> to vector<8x128xbf16>
    %cst_71 = arith.constant dense<0.000000e+00> : vector<8x512xf32>
    %127 = tpu.matmul %126, %85, %cst_71 {dimension_numbers = #tpu.dot_dimension_numbers<[1], [0], [0], [1], [0, 0, 1, 1], [], []>} : vector<8x128xbf16>, vector<128x512xbf16>, vector<8x512xf32> -> vector<8x512xf32>
    %128 = arith.addf %125, %127 : vector<8x512xf32>
    %129 = vector.extract_strided_slice %128 {offsets = [0, 0], sizes = [8, 384], strides = [1, 1]} : vector<8x512xf32> to vector<8x384xf32>
    %cst_72 = arith.constant 5.000000e-01 : f32
    %130 = vector.broadcast %cst_72 : f32 to vector<8x384xf32>
    %131 = arith.mulf %130, %129 : vector<8x384xf32>
    %132 = math.tanh %131 : vector<8x384xf32>
    %cst_73 = arith.constant 1.000000e+00 : f32
    %133 = vector.broadcast %cst_73 : f32 to vector<8x384xf32>
    %134 = arith.addf %132, %133 : vector<8x384xf32>
    %cst_74 = arith.constant 5.000000e-01 : f32
    %135 = vector.broadcast %cst_74 : f32 to vector<8x384xf32>
    %136 = arith.mulf %135, %134 : vector<8x384xf32>
    %137 = vector.extract_strided_slice %128 {offsets = [0, 384], sizes = [8, 128], strides = [1, 1]} : vector<8x512xf32> to vector<8x128xf32>
    %138 = math.tanh %137 : vector<8x128xf32>
    %139 = vector.extract_strided_slice %136 {offsets = [0, 0], sizes = [8, 128], strides = [1, 1]} : vector<8x384xf32> to vector<8x128xf32>
    %140 = vector.extract_strided_slice %136 {offsets = [0, 128], sizes = [8, 128], strides = [1, 1]} : vector<8x384xf32> to vector<8x128xf32>
    %141 = vector.extract_strided_slice %136 {offsets = [0, 256], sizes = [8, 128], strides = [1, 1]} : vector<8x384xf32> to vector<8x128xf32>
    %142 = arith.mulf %140, %112 : vector<8x128xf32>
    %143 = arith.mulf %139, %138 : vector<8x128xf32>
    %144 = arith.addf %142, %143 : vector<8x128xf32>
    %145 = math.tanh %144 : vector<8x128xf32>
    %146 = arith.mulf %141, %145 : vector<8x128xf32>
    %147 = arith.index_cast %120 : i32 to index
    %c0_75 = arith.constant 0 : index
    %148 = vector.load %arg21[%147, %c0_75] : memref<64x128xf32, #tpu.memory_space<vmem>>, vector<8x128xf32>
    tpu.vector_store %arg21[%147, %c0_75], %146 {strides = array<i32>} : memref<64x128xf32, #tpu.memory_space<vmem>>, vector<8x128xf32>,
    %149 = arith.index_cast %123 : i32 to index
    %c0_76 = arith.constant 0 : index
    %150 = vector.load %arg22[%149, %c0_76] : memref<64x128xf32, #tpu.memory_space<vmem>>, vector<8x128xf32>
    tpu.vector_store %arg22[%149, %c0_76], %146 {strides = array<i32>} : memref<64x128xf32, #tpu.memory_space<vmem>>, vector<8x128xf32>,
    %c2_i32_77 = arith.constant 2 : i32
    %c8_i32_78 = arith.constant 8 : i32
    %151 = arith.muli %c2_i32_77, %c8_i32_78 : i32
    %152 = tpu.assume_multiple %151, 8 : i32
    %c7_i32_79 = arith.constant 7 : i32
    %153 = arith.subi %c7_i32_79, %c2_i32_77 : i32
    %c8_i32_80 = arith.constant 8 : i32
    %154 = arith.muli %153, %c8_i32_80 : i32
    %155 = tpu.assume_multiple %154, 8 : i32
    %156 = arith.index_cast %152 : i32 to index
    %c0_81 = arith.constant 0 : index
    %157 = vector.load %arg23[%156, %c0_81] : memref<64x512xf32, #tpu.memory_space<vmem>>, vector<8x512xf32>
    %158 = arith.truncf %146 : vector<8x128xf32> to vector<8x128xbf16>
    %cst_82 = arith.constant dense<0.000000e+00> : vector<8x512xf32>
    %159 = tpu.matmul %158, %85, %cst_82 {dimension_numbers = #tpu.dot_dimension_numbers<[1], [0], [0], [1], [0, 0, 1, 1], [], []>} : vector<8x128xbf16>, vector<128x512xbf16>, vector<8x512xf32> -> vector<8x512xf32>
    %160 = arith.addf %157, %159 : vector<8x512xf32>
    %161 = vector.extract_strided_slice %160 {offsets = [0, 0], sizes = [8, 384], strides = [1, 1]} : vector<8x512xf32> to vector<8x384xf32>
    %cst_83 = arith.constant 5.000000e-01 : f32
    %162 = vector.broadcast %cst_83 : f32 to vector<8x384xf32>
    %163 = arith.mulf %162, %161 : vector<8x384xf32>
    %164 = math.tanh %163 : vector<8x384xf32>
    %cst_84 = arith.constant 1.000000e+00 : f32
    %165 = vector.broadcast %cst_84 : f32 to vector<8x384xf32>
    %166 = arith.addf %164, %165 : vector<8x384xf32>
    %cst_85 = arith.constant 5.000000e-01 : f32
    %167 = vector.broadcast %cst_85 : f32 to vector<8x384xf32>
    %168 = arith.mulf %167, %166 : vector<8x384xf32>
    %169 = vector.extract_strided_slice %160 {offsets = [0, 384], sizes = [8, 128], strides = [1, 1]} : vector<8x512xf32> to vector<8x128xf32>
    %170 = math.tanh %169 : vector<8x128xf32>
    %171 = vector.extract_strided_slice %168 {offsets = [0, 0], sizes = [8, 128], strides = [1, 1]} : vector<8x384xf32> to vector<8x128xf32>
    %172 = vector.extract_strided_slice %168 {offsets = [0, 128], sizes = [8, 128], strides = [1, 1]} : vector<8x384xf32> to vector<8x128xf32>
    %173 = vector.extract_strided_slice %168 {offsets = [0, 256], sizes = [8, 128], strides = [1, 1]} : vector<8x384xf32> to vector<8x128xf32>
    %174 = arith.mulf %172, %144 : vector<8x128xf32>
    %175 = arith.mulf %171, %170 : vector<8x128xf32>
    %176 = arith.addf %174, %175 : vector<8x128xf32>
    %177 = math.tanh %176 : vector<8x128xf32>
    %178 = arith.mulf %173, %177 : vector<8x128xf32>
    %179 = arith.index_cast %152 : i32 to index
    %c0_86 = arith.constant 0 : index
    %180 = vector.load %arg21[%179, %c0_86] : memref<64x128xf32, #tpu.memory_space<vmem>>, vector<8x128xf32>
    tpu.vector_store %arg21[%179, %c0_86], %178 {strides = array<i32>} : memref<64x128xf32, #tpu.memory_space<vmem>>, vector<8x128xf32>,
    %181 = arith.index_cast %155 : i32 to index
    %c0_87 = arith.constant 0 : index
    %182 = vector.load %arg22[%181, %c0_87] : memref<64x128xf32, #tpu.memory_space<vmem>>, vector<8x128xf32>
    tpu.vector_store %arg22[%181, %c0_87], %178 {strides = array<i32>} : memref<64x128xf32, #tpu.memory_space<vmem>>, vector<8x128xf32>,
    %c3_i32_88 = arith.constant 3 : i32
    %c8_i32_89 = arith.constant 8 : i32
    %183 = arith.muli %c3_i32_88, %c8_i32_89 : i32
    %184 = tpu.assume_multiple %183, 8 : i32
    %c7_i32_90 = arith.constant 7 : i32
    %185 = arith.subi %c7_i32_90, %c3_i32_88 : i32
    %c8_i32_91 = arith.constant 8 : i32
    %186 = arith.muli %185, %c8_i32_91 : i32
    %187 = tpu.assume_multiple %186, 8 : i32
    %188 = arith.index_cast %184 : i32 to index
    %c0_92 = arith.constant 0 : index
    %189 = vector.load %arg23[%188, %c0_92] : memref<64x512xf32, #tpu.memory_space<vmem>>, vector<8x512xf32>
    %190 = arith.truncf %178 : vector<8x128xf32> to vector<8x128xbf16>
    %cst_93 = arith.constant dense<0.000000e+00> : vector<8x512xf32>
    %191 = tpu.matmul %190, %85, %cst_93 {dimension_numbers = #tpu.dot_dimension_numbers<[1], [0], [0], [1], [0, 0, 1, 1], [], []>} : vector<8x128xbf16>, vector<128x512xbf16>, vector<8x512xf32> -> vector<8x512xf32>
    %192 = arith.addf %189, %191 : vector<8x512xf32>
    %193 = vector.extract_strided_slice %192 {offsets = [0, 0], sizes = [8, 384], strides = [1, 1]} : vector<8x512xf32> to vector<8x384xf32>
    %cst_94 = arith.constant 5.000000e-01 : f32
    %194 = vector.broadcast %cst_94 : f32 to vector<8x384xf32>
    %195 = arith.mulf %194, %193 : vector<8x384xf32>
    %196 = math.tanh %195 : vector<8x384xf32>
    %cst_95 = arith.constant 1.000000e+00 : f32
    %197 = vector.broadcast %cst_95 : f32 to vector<8x384xf32>
    %198 = arith.addf %196, %197 : vector<8x384xf32>
    %cst_96 = arith.constant 5.000000e-01 : f32
    %199 = vector.broadcast %cst_96 : f32 to vector<8x384xf32>
    %200 = arith.mulf %199, %198 : vector<8x384xf32>
    %201 = vector.extract_strided_slice %192 {offsets = [0, 384], sizes = [8, 128], strides = [1, 1]} : vector<8x512xf32> to vector<8x128xf32>
    %202 = math.tanh %201 : vector<8x128xf32>
    %203 = vector.extract_strided_slice %200 {offsets = [0, 0], sizes = [8, 128], strides = [1, 1]} : vector<8x384xf32> to vector<8x128xf32>
    %204 = vector.extract_strided_slice %200 {offsets = [0, 128], sizes = [8, 128], strides = [1, 1]} : vector<8x384xf32> to vector<8x128xf32>
    %205 = vector.extract_strided_slice %200 {offsets = [0, 256], sizes = [8, 128], strides = [1, 1]} : vector<8x384xf32> to vector<8x128xf32>
    %206 = arith.mulf %204, %176 : vector<8x128xf32>
    %207 = arith.mulf %203, %202 : vector<8x128xf32>
    %208 = arith.addf %206, %207 : vector<8x128xf32>
    %209 = math.tanh %208 : vector<8x128xf32>
    %210 = arith.mulf %205, %209 : vector<8x128xf32>
    %211 = arith.index_cast %184 : i32 to index
    %c0_97 = arith.constant 0 : index
    %212 = vector.load %arg21[%211, %c0_97] : memref<64x128xf32, #tpu.memory_space<vmem>>, vector<8x128xf32>
    tpu.vector_store %arg21[%211, %c0_97], %210 {strides = array<i32>} : memref<64x128xf32, #tpu.memory_space<vmem>>, vector<8x128xf32>,
    %213 = arith.index_cast %187 : i32 to index
    %c0_98 = arith.constant 0 : index
    %214 = vector.load %arg22[%213, %c0_98] : memref<64x128xf32, #tpu.memory_space<vmem>>, vector<8x128xf32>
    tpu.vector_store %arg22[%213, %c0_98], %210 {strides = array<i32>} : memref<64x128xf32, #tpu.memory_space<vmem>>, vector<8x128xf32>,
    %c4_i32_99 = arith.constant 4 : i32
    %c8_i32_100 = arith.constant 8 : i32
    %215 = arith.muli %c4_i32_99, %c8_i32_100 : i32
    %216 = tpu.assume_multiple %215, 8 : i32
    %c7_i32_101 = arith.constant 7 : i32
    %217 = arith.subi %c7_i32_101, %c4_i32_99 : i32
    %c8_i32_102 = arith.constant 8 : i32
    %218 = arith.muli %217, %c8_i32_102 : i32
    %219 = tpu.assume_multiple %218, 8 : i32
    %220 = arith.index_cast %216 : i32 to index
    %c0_103 = arith.constant 0 : index
    %221 = vector.load %arg23[%220, %c0_103] : memref<64x512xf32, #tpu.memory_space<vmem>>, vector<8x512xf32>
    %222 = arith.truncf %210 : vector<8x128xf32> to vector<8x128xbf16>
    %cst_104 = arith.constant dense<0.000000e+00> : vector<8x512xf32>
    %223 = tpu.matmul %222, %85, %cst_104 {dimension_numbers = #tpu.dot_dimension_numbers<[1], [0], [0], [1], [0, 0, 1, 1], [], []>} : vector<8x128xbf16>, vector<128x512xbf16>, vector<8x512xf32> -> vector<8x512xf32>
    %224 = arith.addf %221, %223 : vector<8x512xf32>
    %225 = vector.extract_strided_slice %224 {offsets = [0, 0], sizes = [8, 384], strides = [1, 1]} : vector<8x512xf32> to vector<8x384xf32>
    %cst_105 = arith.constant 5.000000e-01 : f32
    %226 = vector.broadcast %cst_105 : f32 to vector<8x384xf32>
    %227 = arith.mulf %226, %225 : vector<8x384xf32>
    %228 = math.tanh %227 : vector<8x384xf32>
    %cst_106 = arith.constant 1.000000e+00 : f32
    %229 = vector.broadcast %cst_106 : f32 to vector<8x384xf32>
    %230 = arith.addf %228, %229 : vector<8x384xf32>
    %cst_107 = arith.constant 5.000000e-01 : f32
    %231 = vector.broadcast %cst_107 : f32 to vector<8x384xf32>
    %232 = arith.mulf %231, %230 : vector<8x384xf32>
    %233 = vector.extract_strided_slice %224 {offsets = [0, 384], sizes = [8, 128], strides = [1, 1]} : vector<8x512xf32> to vector<8x128xf32>
    %234 = math.tanh %233 : vector<8x128xf32>
    %235 = vector.extract_strided_slice %232 {offsets = [0, 0], sizes = [8, 128], strides = [1, 1]} : vector<8x384xf32> to vector<8x128xf32>
    %236 = vector.extract_strided_slice %232 {offsets = [0, 128], sizes = [8, 128], strides = [1, 1]} : vector<8x384xf32> to vector<8x128xf32>
    %237 = vector.extract_strided_slice %232 {offsets = [0, 256], sizes = [8, 128], strides = [1, 1]} : vector<8x384xf32> to vector<8x128xf32>
    %238 = arith.mulf %236, %208 : vector<8x128xf32>
    %239 = arith.mulf %235, %234 : vector<8x128xf32>
    %240 = arith.addf %238, %239 : vector<8x128xf32>
    %241 = math.tanh %240 : vector<8x128xf32>
    %242 = arith.mulf %237, %241 : vector<8x128xf32>
    %243 = arith.index_cast %216 : i32 to index
    %c0_108 = arith.constant 0 : index
    %244 = vector.load %arg21[%243, %c0_108] : memref<64x128xf32, #tpu.memory_space<vmem>>, vector<8x128xf32>
    tpu.vector_store %arg21[%243, %c0_108], %242 {strides = array<i32>} : memref<64x128xf32, #tpu.memory_space<vmem>>, vector<8x128xf32>,
    %245 = arith.index_cast %219 : i32 to index
    %c0_109 = arith.constant 0 : index
    %246 = vector.load %arg22[%245, %c0_109] : memref<64x128xf32, #tpu.memory_space<vmem>>, vector<8x128xf32>
    tpu.vector_store %arg22[%245, %c0_109], %242 {strides = array<i32>} : memref<64x128xf32, #tpu.memory_space<vmem>>, vector<8x128xf32>,
    %c5_i32_110 = arith.constant 5 : i32
    %c8_i32_111 = arith.constant 8 : i32
    %247 = arith.muli %c5_i32_110, %c8_i32_111 : i32
    %248 = tpu.assume_multiple %247, 8 : i32
    %c7_i32_112 = arith.constant 7 : i32
    %249 = arith.subi %c7_i32_112, %c5_i32_110 : i32
    %c8_i32_113 = arith.constant 8 : i32
    %250 = arith.muli %249, %c8_i32_113 : i32
    %251 = tpu.assume_multiple %250, 8 : i32
    %252 = arith.index_cast %248 : i32 to index
    %c0_114 = arith.constant 0 : index
    %253 = vector.load %arg23[%252, %c0_114] : memref<64x512xf32, #tpu.memory_space<vmem>>, vector<8x512xf32>
    %254 = arith.truncf %242 : vector<8x128xf32> to vector<8x128xbf16>
    %cst_115 = arith.constant dense<0.000000e+00> : vector<8x512xf32>
    %255 = tpu.matmul %254, %85, %cst_115 {dimension_numbers = #tpu.dot_dimension_numbers<[1], [0], [0], [1], [0, 0, 1, 1], [], []>} : vector<8x128xbf16>, vector<128x512xbf16>, vector<8x512xf32> -> vector<8x512xf32>
    %256 = arith.addf %253, %255 : vector<8x512xf32>
    %257 = vector.extract_strided_slice %256 {offsets = [0, 0], sizes = [8, 384], strides = [1, 1]} : vector<8x512xf32> to vector<8x384xf32>
    %cst_116 = arith.constant 5.000000e-01 : f32
    %258 = vector.broadcast %cst_116 : f32 to vector<8x384xf32>
    %259 = arith.mulf %258, %257 : vector<8x384xf32>
    %260 = math.tanh %259 : vector<8x384xf32>
    %cst_117 = arith.constant 1.000000e+00 : f32
    %261 = vector.broadcast %cst_117 : f32 to vector<8x384xf32>
    %262 = arith.addf %260, %261 : vector<8x384xf32>
    %cst_118 = arith.constant 5.000000e-01 : f32
    %263 = vector.broadcast %cst_118 : f32 to vector<8x384xf32>
    %264 = arith.mulf %263, %262 : vector<8x384xf32>
    %265 = vector.extract_strided_slice %256 {offsets = [0, 384], sizes = [8, 128], strides = [1, 1]} : vector<8x512xf32> to vector<8x128xf32>
    %266 = math.tanh %265 : vector<8x128xf32>
    %267 = vector.extract_strided_slice %264 {offsets = [0, 0], sizes = [8, 128], strides = [1, 1]} : vector<8x384xf32> to vector<8x128xf32>
    %268 = vector.extract_strided_slice %264 {offsets = [0, 128], sizes = [8, 128], strides = [1, 1]} : vector<8x384xf32> to vector<8x128xf32>
    %269 = vector.extract_strided_slice %264 {offsets = [0, 256], sizes = [8, 128], strides = [1, 1]} : vector<8x384xf32> to vector<8x128xf32>
    %270 = arith.mulf %268, %240 : vector<8x128xf32>
    %271 = arith.mulf %267, %266 : vector<8x128xf32>
    %272 = arith.addf %270, %271 : vector<8x128xf32>
    %273 = math.tanh %272 : vector<8x128xf32>
    %274 = arith.mulf %269, %273 : vector<8x128xf32>
    %275 = arith.index_cast %248 : i32 to index
    %c0_119 = arith.constant 0 : index
    %276 = vector.load %arg21[%275, %c0_119] : memref<64x128xf32, #tpu.memory_space<vmem>>, vector<8x128xf32>
    tpu.vector_store %arg21[%275, %c0_119], %274 {strides = array<i32>} : memref<64x128xf32, #tpu.memory_space<vmem>>, vector<8x128xf32>,
    %277 = arith.index_cast %251 : i32 to index
    %c0_120 = arith.constant 0 : index
    %278 = vector.load %arg22[%277, %c0_120] : memref<64x128xf32, #tpu.memory_space<vmem>>, vector<8x128xf32>
    tpu.vector_store %arg22[%277, %c0_120], %274 {strides = array<i32>} : memref<64x128xf32, #tpu.memory_space<vmem>>, vector<8x128xf32>,
    %c6_i32_121 = arith.constant 6 : i32
    %c8_i32_122 = arith.constant 8 : i32
    %279 = arith.muli %c6_i32_121, %c8_i32_122 : i32
    %280 = tpu.assume_multiple %279, 8 : i32
    %c7_i32_123 = arith.constant 7 : i32
    %281 = arith.subi %c7_i32_123, %c6_i32_121 : i32
    %c8_i32_124 = arith.constant 8 : i32
    %282 = arith.muli %281, %c8_i32_124 : i32
    %283 = tpu.assume_multiple %282, 8 : i32
    %284 = arith.index_cast %280 : i32 to index
    %c0_125 = arith.constant 0 : index
    %285 = vector.load %arg23[%284, %c0_125] : memref<64x512xf32, #tpu.memory_space<vmem>>, vector<8x512xf32>
    %286 = arith.truncf %274 : vector<8x128xf32> to vector<8x128xbf16>
    %cst_126 = arith.constant dense<0.000000e+00> : vector<8x512xf32>
    %287 = tpu.matmul %286, %85, %cst_126 {dimension_numbers = #tpu.dot_dimension_numbers<[1], [0], [0], [1], [0, 0, 1, 1], [], []>} : vector<8x128xbf16>, vector<128x512xbf16>, vector<8x512xf32> -> vector<8x512xf32>
    %288 = arith.addf %285, %287 : vector<8x512xf32>
    %289 = vector.extract_strided_slice %288 {offsets = [0, 0], sizes = [8, 384], strides = [1, 1]} : vector<8x512xf32> to vector<8x384xf32>
    %cst_127 = arith.constant 5.000000e-01 : f32
    %290 = vector.broadcast %cst_127 : f32 to vector<8x384xf32>
    %291 = arith.mulf %290, %289 : vector<8x384xf32>
    %292 = math.tanh %291 : vector<8x384xf32>
    %cst_128 = arith.constant 1.000000e+00 : f32
    %293 = vector.broadcast %cst_128 : f32 to vector<8x384xf32>
    %294 = arith.addf %292, %293 : vector<8x384xf32>
    %cst_129 = arith.constant 5.000000e-01 : f32
    %295 = vector.broadcast %cst_129 : f32 to vector<8x384xf32>
    %296 = arith.mulf %295, %294 : vector<8x384xf32>
    %297 = vector.extract_strided_slice %288 {offsets = [0, 384], sizes = [8, 128], strides = [1, 1]} : vector<8x512xf32> to vector<8x128xf32>
    %298 = math.tanh %297 : vector<8x128xf32>
    %299 = vector.extract_strided_slice %296 {offsets = [0, 0], sizes = [8, 128], strides = [1, 1]} : vector<8x384xf32> to vector<8x128xf32>
    %300 = vector.extract_strided_slice %296 {offsets = [0, 128], sizes = [8, 128], strides = [1, 1]} : vector<8x384xf32> to vector<8x128xf32>
    %301 = vector.extract_strided_slice %296 {offsets = [0, 256], sizes = [8, 128], strides = [1, 1]} : vector<8x384xf32> to vector<8x128xf32>
    %302 = arith.mulf %300, %272 : vector<8x128xf32>
    %303 = arith.mulf %299, %298 : vector<8x128xf32>
    %304 = arith.addf %302, %303 : vector<8x128xf32>
    %305 = math.tanh %304 : vector<8x128xf32>
    %306 = arith.mulf %301, %305 : vector<8x128xf32>
    %307 = arith.index_cast %280 : i32 to index
    %c0_130 = arith.constant 0 : index
    %308 = vector.load %arg21[%307, %c0_130] : memref<64x128xf32, #tpu.memory_space<vmem>>, vector<8x128xf32>
    tpu.vector_store %arg21[%307, %c0_130], %306 {strides = array<i32>} : memref<64x128xf32, #tpu.memory_space<vmem>>, vector<8x128xf32>,
    %309 = arith.index_cast %283 : i32 to index
    %c0_131 = arith.constant 0 : index
    %310 = vector.load %arg22[%309, %c0_131] : memref<64x128xf32, #tpu.memory_space<vmem>>, vector<8x128xf32>
    tpu.vector_store %arg22[%309, %c0_131], %306 {strides = array<i32>} : memref<64x128xf32, #tpu.memory_space<vmem>>, vector<8x128xf32>,
    %c7_i32_132 = arith.constant 7 : i32
    %c8_i32_133 = arith.constant 8 : i32
    %311 = arith.muli %c7_i32_132, %c8_i32_133 : i32
    %312 = tpu.assume_multiple %311, 8 : i32
    %c7_i32_134 = arith.constant 7 : i32
    %313 = arith.subi %c7_i32_134, %c7_i32_132 : i32
    %c8_i32_135 = arith.constant 8 : i32
    %314 = arith.muli %313, %c8_i32_135 : i32
    %315 = tpu.assume_multiple %314, 8 : i32
    %316 = arith.index_cast %312 : i32 to index
    %c0_136 = arith.constant 0 : index
    %317 = vector.load %arg23[%316, %c0_136] : memref<64x512xf32, #tpu.memory_space<vmem>>, vector<8x512xf32>
    %318 = arith.truncf %306 : vector<8x128xf32> to vector<8x128xbf16>
    %cst_137 = arith.constant dense<0.000000e+00> : vector<8x512xf32>
    %319 = tpu.matmul %318, %85, %cst_137 {dimension_numbers = #tpu.dot_dimension_numbers<[1], [0], [0], [1], [0, 0, 1, 1], [], []>} : vector<8x128xbf16>, vector<128x512xbf16>, vector<8x512xf32> -> vector<8x512xf32>
    %320 = arith.addf %317, %319 : vector<8x512xf32>
    %321 = vector.extract_strided_slice %320 {offsets = [0, 0], sizes = [8, 384], strides = [1, 1]} : vector<8x512xf32> to vector<8x384xf32>
    %cst_138 = arith.constant 5.000000e-01 : f32
    %322 = vector.broadcast %cst_138 : f32 to vector<8x384xf32>
    %323 = arith.mulf %322, %321 : vector<8x384xf32>
    %324 = math.tanh %323 : vector<8x384xf32>
    %cst_139 = arith.constant 1.000000e+00 : f32
    %325 = vector.broadcast %cst_139 : f32 to vector<8x384xf32>
    %326 = arith.addf %324, %325 : vector<8x384xf32>
    %cst_140 = arith.constant 5.000000e-01 : f32
    %327 = vector.broadcast %cst_140 : f32 to vector<8x384xf32>
    %328 = arith.mulf %327, %326 : vector<8x384xf32>
    %329 = vector.extract_strided_slice %320 {offsets = [0, 384], sizes = [8, 128], strides = [1, 1]} : vector<8x512xf32> to vector<8x128xf32>
    %330 = math.tanh %329 : vector<8x128xf32>
    %331 = vector.extract_strided_slice %328 {offsets = [0, 0], sizes = [8, 128], strides = [1, 1]} : vector<8x384xf32> to vector<8x128xf32>
    %332 = vector.extract_strided_slice %328 {offsets = [0, 128], sizes = [8, 128], strides = [1, 1]} : vector<8x384xf32> to vector<8x128xf32>
    %333 = vector.extract_strided_slice %328 {offsets = [0, 256], sizes = [8, 128], strides = [1, 1]} : vector<8x384xf32> to vector<8x128xf32>
    %334 = arith.mulf %332, %304 : vector<8x128xf32>
    %335 = arith.mulf %331, %330 : vector<8x128xf32>
    %336 = arith.addf %334, %335 : vector<8x128xf32>
    %337 = math.tanh %336 : vector<8x128xf32>
    %338 = arith.mulf %333, %337 : vector<8x128xf32>
    %339 = arith.index_cast %312 : i32 to index
    %c0_141 = arith.constant 0 : index
    %340 = vector.load %arg21[%339, %c0_141] : memref<64x128xf32, #tpu.memory_space<vmem>>, vector<8x128xf32>
    tpu.vector_store %arg21[%339, %c0_141], %338 {strides = array<i32>} : memref<64x128xf32, #tpu.memory_space<vmem>>, vector<8x128xf32>,
    %341 = arith.index_cast %315 : i32 to index
    %c0_142 = arith.constant 0 : index
    %342 = vector.load %arg22[%341, %c0_142] : memref<64x128xf32, #tpu.memory_space<vmem>>, vector<8x128xf32>
    tpu.vector_store %arg22[%341, %c0_142], %338 {strides = array<i32>} : memref<64x128xf32, #tpu.memory_space<vmem>>, vector<8x128xf32>,
    %c8_i32_143 = arith.constant 8 : i32
    %c0_144 = arith.constant 0 : index
    %c0_145 = arith.constant 0 : index
    %343 = vector.load %arg21[%c0_144, %c0_145] : memref<64x128xf32, #tpu.memory_space<vmem>>, vector<64x128xf32>
    %344 = arith.truncf %343 : vector<64x128xf32> to vector<64x128xbf16>
    %c0_146 = arith.constant 0 : index
    %c0_147 = arith.constant 0 : index
    %345 = vector.load %arg6[%c0_146, %c0_147] : memref<128x512xbf16, #tpu.memory_space<vmem>>, vector<128x512xbf16>
    %cst_148 = arith.constant dense<0.000000e+00> : vector<64x512xf32>
    %346 = tpu.matmul %344, %345, %cst_148 {dimension_numbers = #tpu.dot_dimension_numbers<[1], [0], [0], [1], [0, 0, 1, 1], [], []>} : vector<64x128xbf16>, vector<128x512xbf16>, vector<64x512xf32> -> vector<64x512xf32>
    %c0_149 = arith.constant 0 : index
    %c0_150 = arith.constant 0 : index
    %347 = vector.load %arg22[%c0_149, %c0_150] : memref<64x128xf32, #tpu.memory_space<vmem>>, vector<64x128xf32>
    %348 = arith.truncf %347 : vector<64x128xf32> to vector<64x128xbf16>
    %c0_151 = arith.constant 0 : index
    %c0_152 = arith.constant 0 : index
    %349 = vector.load %arg7[%c0_151, %c0_152] : memref<128x512xbf16, #tpu.memory_space<vmem>>, vector<128x512xbf16>
    %cst_153 = arith.constant dense<0.000000e+00> : vector<64x512xf32>
    %350 = tpu.matmul %348, %349, %cst_153 {dimension_numbers = #tpu.dot_dimension_numbers<[1], [0], [0], [1], [0, 0, 1, 1], [], []>} : vector<64x128xbf16>, vector<128x512xbf16>, vector<64x512xf32> -> vector<64x512xf32>
    %351 = arith.addf %346, %350 : vector<64x512xf32>
    %c0_154 = arith.constant 0 : index
    %c0_155 = arith.constant 0 : index
    %352 = vector.load %arg9[%c0_154, %c0_155] : memref<1x512xf32, #tpu.memory_space<vmem>>, vector<1x512xf32>
    %353 = vector.broadcast %352 : vector<1x512xf32> to vector<64x512xf32>
    %354 = arith.addf %351, %353 : vector<64x512xf32>
    %c0_156 = arith.constant 0 : index
    %c0_157 = arith.constant 0 : index
    %355 = vector.load %arg23[%c0_156, %c0_157] : memref<64x512xf32, #tpu.memory_space<vmem>>, vector<64x512xf32>
    tpu.vector_store %arg23[%c0_156, %c0_157], %354 {strides = array<i32>} : memref<64x512xf32, #tpu.memory_space<vmem>>, vector<64x512xf32>,
    %c0_158 = arith.constant 0 : index
    %c0_159 = arith.constant 0 : index
    %356 = vector.load %arg8[%c0_158, %c0_159] : memref<128x512xbf16, #tpu.memory_space<vmem>>, vector<128x512xbf16>
    %cst_160 = arith.constant 0.000000e+00 : f32
    %357 = vector.broadcast %cst_160 : f32 to vector<8x128xf32>
    %c0_i32_161 = arith.constant 0 : i32
    %c8_i32_162 = arith.constant 8 : i32
    %358 = arith.muli %c0_i32_161, %c8_i32_162 : i32
    %359 = tpu.assume_multiple %358, 8 : i32
    %c7_i32_163 = arith.constant 7 : i32
    %360 = arith.subi %c7_i32_163, %c0_i32_161 : i32
    %c8_i32_164 = arith.constant 8 : i32
    %361 = arith.muli %360, %c8_i32_164 : i32
    %362 = tpu.assume_multiple %361, 8 : i32
    %363 = arith.index_cast %359 : i32 to index
    %c0_165 = arith.constant 0 : index
    %364 = vector.load %arg23[%363, %c0_165] : memref<64x512xf32, #tpu.memory_space<vmem>>, vector<8x512xf32>
    %365 = arith.truncf %357 : vector<8x128xf32> to vector<8x128xbf16>
    %cst_166 = arith.constant dense<0.000000e+00> : vector<8x512xf32>
    %366 = tpu.matmul %365, %356, %cst_166 {dimension_numbers = #tpu.dot_dimension_numbers<[1], [0], [0], [1], [0, 0, 1, 1], [], []>} : vector<8x128xbf16>, vector<128x512xbf16>, vector<8x512xf32> -> vector<8x512xf32>
    %367 = arith.addf %364, %366 : vector<8x512xf32>
    %368 = vector.extract_strided_slice %367 {offsets = [0, 0], sizes = [8, 384], strides = [1, 1]} : vector<8x512xf32> to vector<8x384xf32>
    %cst_167 = arith.constant 5.000000e-01 : f32
    %369 = vector.broadcast %cst_167 : f32 to vector<8x384xf32>
    %370 = arith.mulf %369, %368 : vector<8x384xf32>
    %371 = math.tanh %370 : vector<8x384xf32>
    %cst_168 = arith.constant 1.000000e+00 : f32
    %372 = vector.broadcast %cst_168 : f32 to vector<8x384xf32>
    %373 = arith.addf %371, %372 : vector<8x384xf32>
    %cst_169 = arith.constant 5.000000e-01 : f32
    %374 = vector.broadcast %cst_169 : f32 to vector<8x384xf32>
    %375 = arith.mulf %374, %373 : vector<8x384xf32>
    %376 = vector.extract_strided_slice %367 {offsets = [0, 384], sizes = [8, 128], strides = [1, 1]} : vector<8x512xf32> to vector<8x128xf32>
    %377 = math.tanh %376 : vector<8x128xf32>
    %378 = vector.extract_strided_slice %375 {offsets = [0, 0], sizes = [8, 128], strides = [1, 1]} : vector<8x384xf32> to vector<8x128xf32>
    %379 = vector.extract_strided_slice %375 {offsets = [0, 128], sizes = [8, 128], strides = [1, 1]} : vector<8x384xf32> to vector<8x128xf32>
    %380 = vector.extract_strided_slice %375 {offsets = [0, 256], sizes = [8, 128], strides = [1, 1]} : vector<8x384xf32> to vector<8x128xf32>
    %381 = arith.mulf %379, %357 : vector<8x128xf32>
    %382 = arith.mulf %378, %377 : vector<8x128xf32>
    %383 = arith.addf %381, %382 : vector<8x128xf32>
    %384 = math.tanh %383 : vector<8x128xf32>
    %385 = arith.mulf %380, %384 : vector<8x128xf32>
    %386 = arith.index_cast %359 : i32 to index
    %c0_170 = arith.constant 0 : index
    %387 = vector.load %arg21[%386, %c0_170] : memref<64x128xf32, #tpu.memory_space<vmem>>, vector<8x128xf32>
    tpu.vector_store %arg21[%386, %c0_170], %385 {strides = array<i32>} : memref<64x128xf32, #tpu.memory_space<vmem>>, vector<8x128xf32>,
    %388 = arith.index_cast %362 : i32 to index
    %c0_171 = arith.constant 0 : index
    %389 = vector.load %arg22[%388, %c0_171] : memref<64x128xf32, #tpu.memory_space<vmem>>, vector<8x128xf32>
    tpu.vector_store %arg22[%388, %c0_171], %385 {strides = array<i32>} : memref<64x128xf32, #tpu.memory_space<vmem>>, vector<8x128xf32>,
    %c1_i32_172 = arith.constant 1 : i32
    %c8_i32_173 = arith.constant 8 : i32
    %390 = arith.muli %c1_i32_172, %c8_i32_173 : i32
    %391 = tpu.assume_multiple %390, 8 : i32
    %c7_i32_174 = arith.constant 7 : i32
    %392 = arith.subi %c7_i32_174, %c1_i32_172 : i32
    %c8_i32_175 = arith.constant 8 : i32
    %393 = arith.muli %392, %c8_i32_175 : i32
    %394 = tpu.assume_multiple %393, 8 : i32
    %395 = arith.index_cast %391 : i32 to index
    %c0_176 = arith.constant 0 : index
    %396 = vector.load %arg23[%395, %c0_176] : memref<64x512xf32, #tpu.memory_space<vmem>>, vector<8x512xf32>
    %397 = arith.truncf %385 : vector<8x128xf32> to vector<8x128xbf16>
    %cst_177 = arith.constant dense<0.000000e+00> : vector<8x512xf32>
    %398 = tpu.matmul %397, %356, %cst_177 {dimension_numbers = #tpu.dot_dimension_numbers<[1], [0], [0], [1], [0, 0, 1, 1], [], []>} : vector<8x128xbf16>, vector<128x512xbf16>, vector<8x512xf32> -> vector<8x512xf32>
    %399 = arith.addf %396, %398 : vector<8x512xf32>
    %400 = vector.extract_strided_slice %399 {offsets = [0, 0], sizes = [8, 384], strides = [1, 1]} : vector<8x512xf32> to vector<8x384xf32>
    %cst_178 = arith.constant 5.000000e-01 : f32
    %401 = vector.broadcast %cst_178 : f32 to vector<8x384xf32>
    %402 = arith.mulf %401, %400 : vector<8x384xf32>
    %403 = math.tanh %402 : vector<8x384xf32>
    %cst_179 = arith.constant 1.000000e+00 : f32
    %404 = vector.broadcast %cst_179 : f32 to vector<8x384xf32>
    %405 = arith.addf %403, %404 : vector<8x384xf32>
    %cst_180 = arith.constant 5.000000e-01 : f32
    %406 = vector.broadcast %cst_180 : f32 to vector<8x384xf32>
    %407 = arith.mulf %406, %405 : vector<8x384xf32>
    %408 = vector.extract_strided_slice %399 {offsets = [0, 384], sizes = [8, 128], strides = [1, 1]} : vector<8x512xf32> to vector<8x128xf32>
    %409 = math.tanh %408 : vector<8x128xf32>
    %410 = vector.extract_strided_slice %407 {offsets = [0, 0], sizes = [8, 128], strides = [1, 1]} : vector<8x384xf32> to vector<8x128xf32>
    %411 = vector.extract_strided_slice %407 {offsets = [0, 128], sizes = [8, 128], strides = [1, 1]} : vector<8x384xf32> to vector<8x128xf32>
    %412 = vector.extract_strided_slice %407 {offsets = [0, 256], sizes = [8, 128], strides = [1, 1]} : vector<8x384xf32> to vector<8x128xf32>
    %413 = arith.mulf %411, %383 : vector<8x128xf32>
    %414 = arith.mulf %410, %409 : vector<8x128xf32>
    %415 = arith.addf %413, %414 : vector<8x128xf32>
    %416 = math.tanh %415 : vector<8x128xf32>
    %417 = arith.mulf %412, %416 : vector<8x128xf32>
    %418 = arith.index_cast %391 : i32 to index
    %c0_181 = arith.constant 0 : index
    %419 = vector.load %arg21[%418, %c0_181] : memref<64x128xf32, #tpu.memory_space<vmem>>, vector<8x128xf32>
    tpu.vector_store %arg21[%418, %c0_181], %417 {strides = array<i32>} : memref<64x128xf32, #tpu.memory_space<vmem>>, vector<8x128xf32>,
    %420 = arith.index_cast %394 : i32 to index
    %c0_182 = arith.constant 0 : index
    %421 = vector.load %arg22[%420, %c0_182] : memref<64x128xf32, #tpu.memory_space<vmem>>, vector<8x128xf32>
    tpu.vector_store %arg22[%420, %c0_182], %417 {strides = array<i32>} : memref<64x128xf32, #tpu.memory_space<vmem>>, vector<8x128xf32>,
    %c2_i32_183 = arith.constant 2 : i32
    %c8_i32_184 = arith.constant 8 : i32
    %422 = arith.muli %c2_i32_183, %c8_i32_184 : i32
    %423 = tpu.assume_multiple %422, 8 : i32
    %c7_i32_185 = arith.constant 7 : i32
    %424 = arith.subi %c7_i32_185, %c2_i32_183 : i32
    %c8_i32_186 = arith.constant 8 : i32
    %425 = arith.muli %424, %c8_i32_186 : i32
    %426 = tpu.assume_multiple %425, 8 : i32
    %427 = arith.index_cast %423 : i32 to index
    %c0_187 = arith.constant 0 : index
    %428 = vector.load %arg23[%427, %c0_187] : memref<64x512xf32, #tpu.memory_space<vmem>>, vector<8x512xf32>
    %429 = arith.truncf %417 : vector<8x128xf32> to vector<8x128xbf16>
    %cst_188 = arith.constant dense<0.000000e+00> : vector<8x512xf32>
    %430 = tpu.matmul %429, %356, %cst_188 {dimension_numbers = #tpu.dot_dimension_numbers<[1], [0], [0], [1], [0, 0, 1, 1], [], []>} : vector<8x128xbf16>, vector<128x512xbf16>, vector<8x512xf32> -> vector<8x512xf32>
    %431 = arith.addf %428, %430 : vector<8x512xf32>
    %432 = vector.extract_strided_slice %431 {offsets = [0, 0], sizes = [8, 384], strides = [1, 1]} : vector<8x512xf32> to vector<8x384xf32>
    %cst_189 = arith.constant 5.000000e-01 : f32
    %433 = vector.broadcast %cst_189 : f32 to vector<8x384xf32>
    %434 = arith.mulf %433, %432 : vector<8x384xf32>
    %435 = math.tanh %434 : vector<8x384xf32>
    %cst_190 = arith.constant 1.000000e+00 : f32
    %436 = vector.broadcast %cst_190 : f32 to vector<8x384xf32>
    %437 = arith.addf %435, %436 : vector<8x384xf32>
    %cst_191 = arith.constant 5.000000e-01 : f32
    %438 = vector.broadcast %cst_191 : f32 to vector<8x384xf32>
    %439 = arith.mulf %438, %437 : vector<8x384xf32>
    %440 = vector.extract_strided_slice %431 {offsets = [0, 384], sizes = [8, 128], strides = [1, 1]} : vector<8x512xf32> to vector<8x128xf32>
    %441 = math.tanh %440 : vector<8x128xf32>
    %442 = vector.extract_strided_slice %439 {offsets = [0, 0], sizes = [8, 128], strides = [1, 1]} : vector<8x384xf32> to vector<8x128xf32>
    %443 = vector.extract_strided_slice %439 {offsets = [0, 128], sizes = [8, 128], strides = [1, 1]} : vector<8x384xf32> to vector<8x128xf32>
    %444 = vector.extract_strided_slice %439 {offsets = [0, 256], sizes = [8, 128], strides = [1, 1]} : vector<8x384xf32> to vector<8x128xf32>
    %445 = arith.mulf %443, %415 : vector<8x128xf32>
    %446 = arith.mulf %442, %441 : vector<8x128xf32>
    %447 = arith.addf %445, %446 : vector<8x128xf32>
    %448 = math.tanh %447 : vector<8x128xf32>
    %449 = arith.mulf %444, %448 : vector<8x128xf32>
    %450 = arith.index_cast %423 : i32 to index
    %c0_192 = arith.constant 0 : index
    %451 = vector.load %arg21[%450, %c0_192] : memref<64x128xf32, #tpu.memory_space<vmem>>, vector<8x128xf32>
    tpu.vector_store %arg21[%450, %c0_192], %449 {strides = array<i32>} : memref<64x128xf32, #tpu.memory_space<vmem>>, vector<8x128xf32>,
    %452 = arith.index_cast %426 : i32 to index
    %c0_193 = arith.constant 0 : index
    %453 = vector.load %arg22[%452, %c0_193] : memref<64x128xf32, #tpu.memory_space<vmem>>, vector<8x128xf32>
    tpu.vector_store %arg22[%452, %c0_193], %449 {strides = array<i32>} : memref<64x128xf32, #tpu.memory_space<vmem>>, vector<8x128xf32>,
    %c3_i32_194 = arith.constant 3 : i32
    %c8_i32_195 = arith.constant 8 : i32
    %454 = arith.muli %c3_i32_194, %c8_i32_195 : i32
    %455 = tpu.assume_multiple %454, 8 : i32
    %c7_i32_196 = arith.constant 7 : i32
    %456 = arith.subi %c7_i32_196, %c3_i32_194 : i32
    %c8_i32_197 = arith.constant 8 : i32
    %457 = arith.muli %456, %c8_i32_197 : i32
    %458 = tpu.assume_multiple %457, 8 : i32
    %459 = arith.index_cast %455 : i32 to index
    %c0_198 = arith.constant 0 : index
    %460 = vector.load %arg23[%459, %c0_198] : memref<64x512xf32, #tpu.memory_space<vmem>>, vector<8x512xf32>
    %461 = arith.truncf %449 : vector<8x128xf32> to vector<8x128xbf16>
    %cst_199 = arith.constant dense<0.000000e+00> : vector<8x512xf32>
    %462 = tpu.matmul %461, %356, %cst_199 {dimension_numbers = #tpu.dot_dimension_numbers<[1], [0], [0], [1], [0, 0, 1, 1], [], []>} : vector<8x128xbf16>, vector<128x512xbf16>, vector<8x512xf32> -> vector<8x512xf32>
    %463 = arith.addf %460, %462 : vector<8x512xf32>
    %464 = vector.extract_strided_slice %463 {offsets = [0, 0], sizes = [8, 384], strides = [1, 1]} : vector<8x512xf32> to vector<8x384xf32>
    %cst_200 = arith.constant 5.000000e-01 : f32
    %465 = vector.broadcast %cst_200 : f32 to vector<8x384xf32>
    %466 = arith.mulf %465, %464 : vector<8x384xf32>
    %467 = math.tanh %466 : vector<8x384xf32>
    %cst_201 = arith.constant 1.000000e+00 : f32
    %468 = vector.broadcast %cst_201 : f32 to vector<8x384xf32>
    %469 = arith.addf %467, %468 : vector<8x384xf32>
    %cst_202 = arith.constant 5.000000e-01 : f32
    %470 = vector.broadcast %cst_202 : f32 to vector<8x384xf32>
    %471 = arith.mulf %470, %469 : vector<8x384xf32>
    %472 = vector.extract_strided_slice %463 {offsets = [0, 384], sizes = [8, 128], strides = [1, 1]} : vector<8x512xf32> to vector<8x128xf32>
    %473 = math.tanh %472 : vector<8x128xf32>
    %474 = vector.extract_strided_slice %471 {offsets = [0, 0], sizes = [8, 128], strides = [1, 1]} : vector<8x384xf32> to vector<8x128xf32>
    %475 = vector.extract_strided_slice %471 {offsets = [0, 128], sizes = [8, 128], strides = [1, 1]} : vector<8x384xf32> to vector<8x128xf32>
    %476 = vector.extract_strided_slice %471 {offsets = [0, 256], sizes = [8, 128], strides = [1, 1]} : vector<8x384xf32> to vector<8x128xf32>
    %477 = arith.mulf %475, %447 : vector<8x128xf32>
    %478 = arith.mulf %474, %473 : vector<8x128xf32>
    %479 = arith.addf %477, %478 : vector<8x128xf32>
    %480 = math.tanh %479 : vector<8x128xf32>
    %481 = arith.mulf %476, %480 : vector<8x128xf32>
    %482 = arith.index_cast %455 : i32 to index
    %c0_203 = arith.constant 0 : index
    %483 = vector.load %arg21[%482, %c0_203] : memref<64x128xf32, #tpu.memory_space<vmem>>, vector<8x128xf32>
    tpu.vector_store %arg21[%482, %c0_203], %481 {strides = array<i32>} : memref<64x128xf32, #tpu.memory_space<vmem>>, vector<8x128xf32>,
    %484 = arith.index_cast %458 : i32 to index
    %c0_204 = arith.constant 0 : index
    %485 = vector.load %arg22[%484, %c0_204] : memref<64x128xf32, #tpu.memory_space<vmem>>, vector<8x128xf32>
    tpu.vector_store %arg22[%484, %c0_204], %481 {strides = array<i32>} : memref<64x128xf32, #tpu.memory_space<vmem>>, vector<8x128xf32>,
    %c4_i32_205 = arith.constant 4 : i32
    %c8_i32_206 = arith.constant 8 : i32
    %486 = arith.muli %c4_i32_205, %c8_i32_206 : i32
    %487 = tpu.assume_multiple %486, 8 : i32
    %c7_i32_207 = arith.constant 7 : i32
    %488 = arith.subi %c7_i32_207, %c4_i32_205 : i32
    %c8_i32_208 = arith.constant 8 : i32
    %489 = arith.muli %488, %c8_i32_208 : i32
    %490 = tpu.assume_multiple %489, 8 : i32
    %491 = arith.index_cast %487 : i32 to index
    %c0_209 = arith.constant 0 : index
    %492 = vector.load %arg23[%491, %c0_209] : memref<64x512xf32, #tpu.memory_space<vmem>>, vector<8x512xf32>
    %493 = arith.truncf %481 : vector<8x128xf32> to vector<8x128xbf16>
    %cst_210 = arith.constant dense<0.000000e+00> : vector<8x512xf32>
    %494 = tpu.matmul %493, %356, %cst_210 {dimension_numbers = #tpu.dot_dimension_numbers<[1], [0], [0], [1], [0, 0, 1, 1], [], []>} : vector<8x128xbf16>, vector<128x512xbf16>, vector<8x512xf32> -> vector<8x512xf32>
    %495 = arith.addf %492, %494 : vector<8x512xf32>
    %496 = vector.extract_strided_slice %495 {offsets = [0, 0], sizes = [8, 384], strides = [1, 1]} : vector<8x512xf32> to vector<8x384xf32>
    %cst_211 = arith.constant 5.000000e-01 : f32
    %497 = vector.broadcast %cst_211 : f32 to vector<8x384xf32>
    %498 = arith.mulf %497, %496 : vector<8x384xf32>
    %499 = math.tanh %498 : vector<8x384xf32>
    %cst_212 = arith.constant 1.000000e+00 : f32
    %500 = vector.broadcast %cst_212 : f32 to vector<8x384xf32>
    %501 = arith.addf %499, %500 : vector<8x384xf32>
    %cst_213 = arith.constant 5.000000e-01 : f32
    %502 = vector.broadcast %cst_213 : f32 to vector<8x384xf32>
    %503 = arith.mulf %502, %501 : vector<8x384xf32>
    %504 = vector.extract_strided_slice %495 {offsets = [0, 384], sizes = [8, 128], strides = [1, 1]} : vector<8x512xf32> to vector<8x128xf32>
    %505 = math.tanh %504 : vector<8x128xf32>
    %506 = vector.extract_strided_slice %503 {offsets = [0, 0], sizes = [8, 128], strides = [1, 1]} : vector<8x384xf32> to vector<8x128xf32>
    %507 = vector.extract_strided_slice %503 {offsets = [0, 128], sizes = [8, 128], strides = [1, 1]} : vector<8x384xf32> to vector<8x128xf32>
    %508 = vector.extract_strided_slice %503 {offsets = [0, 256], sizes = [8, 128], strides = [1, 1]} : vector<8x384xf32> to vector<8x128xf32>
    %509 = arith.mulf %507, %479 : vector<8x128xf32>
    %510 = arith.mulf %506, %505 : vector<8x128xf32>
    %511 = arith.addf %509, %510 : vector<8x128xf32>
    %512 = math.tanh %511 : vector<8x128xf32>
    %513 = arith.mulf %508, %512 : vector<8x128xf32>
    %514 = arith.index_cast %487 : i32 to index
    %c0_214 = arith.constant 0 : index
    %515 = vector.load %arg21[%514, %c0_214] : memref<64x128xf32, #tpu.memory_space<vmem>>, vector<8x128xf32>
    tpu.vector_store %arg21[%514, %c0_214], %513 {strides = array<i32>} : memref<64x128xf32, #tpu.memory_space<vmem>>, vector<8x128xf32>,
    %516 = arith.index_cast %490 : i32 to index
    %c0_215 = arith.constant 0 : index
    %517 = vector.load %arg22[%516, %c0_215] : memref<64x128xf32, #tpu.memory_space<vmem>>, vector<8x128xf32>
    tpu.vector_store %arg22[%516, %c0_215], %513 {strides = array<i32>} : memref<64x128xf32, #tpu.memory_space<vmem>>, vector<8x128xf32>,
    %c5_i32_216 = arith.constant 5 : i32
    %c8_i32_217 = arith.constant 8 : i32
    %518 = arith.muli %c5_i32_216, %c8_i32_217 : i32
    %519 = tpu.assume_multiple %518, 8 : i32
    %c7_i32_218 = arith.constant 7 : i32
    %520 = arith.subi %c7_i32_218, %c5_i32_216 : i32
    %c8_i32_219 = arith.constant 8 : i32
    %521 = arith.muli %520, %c8_i32_219 : i32
    %522 = tpu.assume_multiple %521, 8 : i32
    %523 = arith.index_cast %519 : i32 to index
    %c0_220 = arith.constant 0 : index
    %524 = vector.load %arg23[%523, %c0_220] : memref<64x512xf32, #tpu.memory_space<vmem>>, vector<8x512xf32>
    %525 = arith.truncf %513 : vector<8x128xf32> to vector<8x128xbf16>
    %cst_221 = arith.constant dense<0.000000e+00> : vector<8x512xf32>
    %526 = tpu.matmul %525, %356, %cst_221 {dimension_numbers = #tpu.dot_dimension_numbers<[1], [0], [0], [1], [0, 0, 1, 1], [], []>} : vector<8x128xbf16>, vector<128x512xbf16>, vector<8x512xf32> -> vector<8x512xf32>
    %527 = arith.addf %524, %526 : vector<8x512xf32>
    %528 = vector.extract_strided_slice %527 {offsets = [0, 0], sizes = [8, 384], strides = [1, 1]} : vector<8x512xf32> to vector<8x384xf32>
    %cst_222 = arith.constant 5.000000e-01 : f32
    %529 = vector.broadcast %cst_222 : f32 to vector<8x384xf32>
    %530 = arith.mulf %529, %528 : vector<8x384xf32>
    %531 = math.tanh %530 : vector<8x384xf32>
    %cst_223 = arith.constant 1.000000e+00 : f32
    %532 = vector.broadcast %cst_223 : f32 to vector<8x384xf32>
    %533 = arith.addf %531, %532 : vector<8x384xf32>
    %cst_224 = arith.constant 5.000000e-01 : f32
    %534 = vector.broadcast %cst_224 : f32 to vector<8x384xf32>
    %535 = arith.mulf %534, %533 : vector<8x384xf32>
    %536 = vector.extract_strided_slice %527 {offsets = [0, 384], sizes = [8, 128], strides = [1, 1]} : vector<8x512xf32> to vector<8x128xf32>
    %537 = math.tanh %536 : vector<8x128xf32>
    %538 = vector.extract_strided_slice %535 {offsets = [0, 0], sizes = [8, 128], strides = [1, 1]} : vector<8x384xf32> to vector<8x128xf32>
    %539 = vector.extract_strided_slice %535 {offsets = [0, 128], sizes = [8, 128], strides = [1, 1]} : vector<8x384xf32> to vector<8x128xf32>
    %540 = vector.extract_strided_slice %535 {offsets = [0, 256], sizes = [8, 128], strides = [1, 1]} : vector<8x384xf32> to vector<8x128xf32>
    %541 = arith.mulf %539, %511 : vector<8x128xf32>
    %542 = arith.mulf %538, %537 : vector<8x128xf32>
    %543 = arith.addf %541, %542 : vector<8x128xf32>
    %544 = math.tanh %543 : vector<8x128xf32>
    %545 = arith.mulf %540, %544 : vector<8x128xf32>
    %546 = arith.index_cast %519 : i32 to index
    %c0_225 = arith.constant 0 : index
    %547 = vector.load %arg21[%546, %c0_225] : memref<64x128xf32, #tpu.memory_space<vmem>>, vector<8x128xf32>
    tpu.vector_store %arg21[%546, %c0_225], %545 {strides = array<i32>} : memref<64x128xf32, #tpu.memory_space<vmem>>, vector<8x128xf32>,
    %548 = arith.index_cast %522 : i32 to index
    %c0_226 = arith.constant 0 : index
    %549 = vector.load %arg22[%548, %c0_226] : memref<64x128xf32, #tpu.memory_space<vmem>>, vector<8x128xf32>
    tpu.vector_store %arg22[%548, %c0_226], %545 {strides = array<i32>} : memref<64x128xf32, #tpu.memory_space<vmem>>, vector<8x128xf32>,
    %c6_i32_227 = arith.constant 6 : i32
    %c8_i32_228 = arith.constant 8 : i32
    %550 = arith.muli %c6_i32_227, %c8_i32_228 : i32
    %551 = tpu.assume_multiple %550, 8 : i32
    %c7_i32_229 = arith.constant 7 : i32
    %552 = arith.subi %c7_i32_229, %c6_i32_227 : i32
    %c8_i32_230 = arith.constant 8 : i32
    %553 = arith.muli %552, %c8_i32_230 : i32
    %554 = tpu.assume_multiple %553, 8 : i32
    %555 = arith.index_cast %551 : i32 to index
    %c0_231 = arith.constant 0 : index
    %556 = vector.load %arg23[%555, %c0_231] : memref<64x512xf32, #tpu.memory_space<vmem>>, vector<8x512xf32>
    %557 = arith.truncf %545 : vector<8x128xf32> to vector<8x128xbf16>
    %cst_232 = arith.constant dense<0.000000e+00> : vector<8x512xf32>
    %558 = tpu.matmul %557, %356, %cst_232 {dimension_numbers = #tpu.dot_dimension_numbers<[1], [0], [0], [1], [0, 0, 1, 1], [], []>} : vector<8x128xbf16>, vector<128x512xbf16>, vector<8x512xf32> -> vector<8x512xf32>
    %559 = arith.addf %556, %558 : vector<8x512xf32>
    %560 = vector.extract_strided_slice %559 {offsets = [0, 0], sizes = [8, 384], strides = [1, 1]} : vector<8x512xf32> to vector<8x384xf32>
    %cst_233 = arith.constant 5.000000e-01 : f32
    %561 = vector.broadcast %cst_233 : f32 to vector<8x384xf32>
    %562 = arith.mulf %561, %560 : vector<8x384xf32>
    %563 = math.tanh %562 : vector<8x384xf32>
    %cst_234 = arith.constant 1.000000e+00 : f32
    %564 = vector.broadcast %cst_234 : f32 to vector<8x384xf32>
    %565 = arith.addf %563, %564 : vector<8x384xf32>
    %cst_235 = arith.constant 5.000000e-01 : f32
    %566 = vector.broadcast %cst_235 : f32 to vector<8x384xf32>
    %567 = arith.mulf %566, %565 : vector<8x384xf32>
    %568 = vector.extract_strided_slice %559 {offsets = [0, 384], sizes = [8, 128], strides = [1, 1]} : vector<8x512xf32> to vector<8x128xf32>
    %569 = math.tanh %568 : vector<8x128xf32>
    %570 = vector.extract_strided_slice %567 {offsets = [0, 0], sizes = [8, 128], strides = [1, 1]} : vector<8x384xf32> to vector<8x128xf32>
    %571 = vector.extract_strided_slice %567 {offsets = [0, 128], sizes = [8, 128], strides = [1, 1]} : vector<8x384xf32> to vector<8x128xf32>
    %572 = vector.extract_strided_slice %567 {offsets = [0, 256], sizes = [8, 128], strides = [1, 1]} : vector<8x384xf32> to vector<8x128xf32>
    %573 = arith.mulf %571, %543 : vector<8x128xf32>
    %574 = arith.mulf %570, %569 : vector<8x128xf32>
    %575 = arith.addf %573, %574 : vector<8x128xf32>
    %576 = math.tanh %575 : vector<8x128xf32>
    %577 = arith.mulf %572, %576 : vector<8x128xf32>
    %578 = arith.index_cast %551 : i32 to index
    %c0_236 = arith.constant 0 : index
    %579 = vector.load %arg21[%578, %c0_236] : memref<64x128xf32, #tpu.memory_space<vmem>>, vector<8x128xf32>
    tpu.vector_store %arg21[%578, %c0_236], %577 {strides = array<i32>} : memref<64x128xf32, #tpu.memory_space<vmem>>, vector<8x128xf32>,
    %580 = arith.index_cast %554 : i32 to index
    %c0_237 = arith.constant 0 : index
    %581 = vector.load %arg22[%580, %c0_237] : memref<64x128xf32, #tpu.memory_space<vmem>>, vector<8x128xf32>
    tpu.vector_store %arg22[%580, %c0_237], %577 {strides = array<i32>} : memref<64x128xf32, #tpu.memory_space<vmem>>, vector<8x128xf32>,
    %c7_i32_238 = arith.constant 7 : i32
    %c8_i32_239 = arith.constant 8 : i32
    %582 = arith.muli %c7_i32_238, %c8_i32_239 : i32
    %583 = tpu.assume_multiple %582, 8 : i32
    %c7_i32_240 = arith.constant 7 : i32
    %584 = arith.subi %c7_i32_240, %c7_i32_238 : i32
    %c8_i32_241 = arith.constant 8 : i32
    %585 = arith.muli %584, %c8_i32_241 : i32
    %586 = tpu.assume_multiple %585, 8 : i32
    %587 = arith.index_cast %583 : i32 to index
    %c0_242 = arith.constant 0 : index
    %588 = vector.load %arg23[%587, %c0_242] : memref<64x512xf32, #tpu.memory_space<vmem>>, vector<8x512xf32>
    %589 = arith.truncf %577 : vector<8x128xf32> to vector<8x128xbf16>
    %cst_243 = arith.constant dense<0.000000e+00> : vector<8x512xf32>
    %590 = tpu.matmul %589, %356, %cst_243 {dimension_numbers = #tpu.dot_dimension_numbers<[1], [0], [0], [1], [0, 0, 1, 1], [], []>} : vector<8x128xbf16>, vector<128x512xbf16>, vector<8x512xf32> -> vector<8x512xf32>
    %591 = arith.addf %588, %590 : vector<8x512xf32>
    %592 = vector.extract_strided_slice %591 {offsets = [0, 0], sizes = [8, 384], strides = [1, 1]} : vector<8x512xf32> to vector<8x384xf32>
    %cst_244 = arith.constant 5.000000e-01 : f32
    %593 = vector.broadcast %cst_244 : f32 to vector<8x384xf32>
    %594 = arith.mulf %593, %592 : vector<8x384xf32>
    %595 = math.tanh %594 : vector<8x384xf32>
    %cst_245 = arith.constant 1.000000e+00 : f32
    %596 = vector.broadcast %cst_245 : f32 to vector<8x384xf32>
    %597 = arith.addf %595, %596 : vector<8x384xf32>
    %cst_246 = arith.constant 5.000000e-01 : f32
    %598 = vector.broadcast %cst_246 : f32 to vector<8x384xf32>
    %599 = arith.mulf %598, %597 : vector<8x384xf32>
    %600 = vector.extract_strided_slice %591 {offsets = [0, 384], sizes = [8, 128], strides = [1, 1]} : vector<8x512xf32> to vector<8x128xf32>
    %601 = math.tanh %600 : vector<8x128xf32>
    %602 = vector.extract_strided_slice %599 {offsets = [0, 0], sizes = [8, 128], strides = [1, 1]} : vector<8x384xf32> to vector<8x128xf32>
    %603 = vector.extract_strided_slice %599 {offsets = [0, 128], sizes = [8, 128], strides = [1, 1]} : vector<8x384xf32> to vector<8x128xf32>
    %604 = vector.extract_strided_slice %599 {offsets = [0, 256], sizes = [8, 128], strides = [1, 1]} : vector<8x384xf32> to vector<8x128xf32>
    %605 = arith.mulf %603, %575 : vector<8x128xf32>
    %606 = arith.mulf %602, %601 : vector<8x128xf32>
    %607 = arith.addf %605, %606 : vector<8x128xf32>
    %608 = math.tanh %607 : vector<8x128xf32>
    %609 = arith.mulf %604, %608 : vector<8x128xf32>
    %610 = arith.index_cast %583 : i32 to index
    %c0_247 = arith.constant 0 : index
    %611 = vector.load %arg21[%610, %c0_247] : memref<64x128xf32, #tpu.memory_space<vmem>>, vector<8x128xf32>
    tpu.vector_store %arg21[%610, %c0_247], %609 {strides = array<i32>} : memref<64x128xf32, #tpu.memory_space<vmem>>, vector<8x128xf32>,
    %612 = arith.index_cast %586 : i32 to index
    %c0_248 = arith.constant 0 : index
    %613 = vector.load %arg22[%612, %c0_248] : memref<64x128xf32, #tpu.memory_space<vmem>>, vector<8x128xf32>
    tpu.vector_store %arg22[%612, %c0_248], %609 {strides = array<i32>} : memref<64x128xf32, #tpu.memory_space<vmem>>, vector<8x128xf32>,
    %c8_i32_249 = arith.constant 8 : i32
    %c0_250 = arith.constant 0 : index
    %c0_251 = arith.constant 0 : index
    %614 = vector.load %arg21[%c0_250, %c0_251] : memref<64x128xf32, #tpu.memory_space<vmem>>, vector<64x128xf32>
    %615 = arith.truncf %614 : vector<64x128xf32> to vector<64x128xbf16>
    %c0_252 = arith.constant 0 : index
    %c0_253 = arith.constant 0 : index
    %616 = vector.load %arg10[%c0_252, %c0_253] : memref<128x512xbf16, #tpu.memory_space<vmem>>, vector<128x512xbf16>
    %cst_254 = arith.constant dense<0.000000e+00> : vector<64x512xf32>
    %617 = tpu.matmul %615, %616, %cst_254 {dimension_numbers = #tpu.dot_dimension_numbers<[1], [0], [0], [1], [0, 0, 1, 1], [], []>} : vector<64x128xbf16>, vector<128x512xbf16>, vector<64x512xf32> -> vector<64x512xf32>
    %c0_255 = arith.constant 0 : index
    %c0_256 = arith.constant 0 : index
    %618 = vector.load %arg22[%c0_255, %c0_256] : memref<64x128xf32, #tpu.memory_space<vmem>>, vector<64x128xf32>
    %619 = arith.truncf %618 : vector<64x128xf32> to vector<64x128xbf16>
    %c0_257 = arith.constant 0 : index
    %c0_258 = arith.constant 0 : index
    %620 = vector.load %arg11[%c0_257, %c0_258] : memref<128x512xbf16, #tpu.memory_space<vmem>>, vector<128x512xbf16>
    %cst_259 = arith.constant dense<0.000000e+00> : vector<64x512xf32>
    %621 = tpu.matmul %619, %620, %cst_259 {dimension_numbers = #tpu.dot_dimension_numbers<[1], [0], [0], [1], [0, 0, 1, 1], [], []>} : vector<64x128xbf16>, vector<128x512xbf16>, vector<64x512xf32> -> vector<64x512xf32>
    %622 = arith.addf %617, %621 : vector<64x512xf32>
    %c0_260 = arith.constant 0 : index
    %c0_261 = arith.constant 0 : index
    %623 = vector.load %arg13[%c0_260, %c0_261] : memref<1x512xf32, #tpu.memory_space<vmem>>, vector<1x512xf32>
    %624 = vector.broadcast %623 : vector<1x512xf32> to vector<64x512xf32>
    %625 = arith.addf %622, %624 : vector<64x512xf32>
    %c0_262 = arith.constant 0 : index
    %c0_263 = arith.constant 0 : index
    %626 = vector.load %arg23[%c0_262, %c0_263] : memref<64x512xf32, #tpu.memory_space<vmem>>, vector<64x512xf32>
    tpu.vector_store %arg23[%c0_262, %c0_263], %625 {strides = array<i32>} : memref<64x512xf32, #tpu.memory_space<vmem>>, vector<64x512xf32>,
    %c0_264 = arith.constant 0 : index
    %c0_265 = arith.constant 0 : index
    %627 = vector.load %arg12[%c0_264, %c0_265] : memref<128x512xbf16, #tpu.memory_space<vmem>>, vector<128x512xbf16>
    %cst_266 = arith.constant 0.000000e+00 : f32
    %628 = vector.broadcast %cst_266 : f32 to vector<8x128xf32>
    %c0_i32_267 = arith.constant 0 : i32
    %c8_i32_268 = arith.constant 8 : i32
    %629 = arith.muli %c0_i32_267, %c8_i32_268 : i32
    %630 = tpu.assume_multiple %629, 8 : i32
    %631 = arith.index_cast %630 : i32 to index
    %c0_269 = arith.constant 0 : index
    %632 = vector.load %arg23[%631, %c0_269] : memref<64x512xf32, #tpu.memory_space<vmem>>, vector<8x512xf32>
    %633 = arith.truncf %628 : vector<8x128xf32> to vector<8x128xbf16>
    %cst_270 = arith.constant dense<0.000000e+00> : vector<8x512xf32>
    %634 = tpu.matmul %633, %627, %cst_270 {dimension_numbers = #tpu.dot_dimension_numbers<[1], [0], [0], [1], [0, 0, 1, 1], [], []>} : vector<8x128xbf16>, vector<128x512xbf16>, vector<8x512xf32> -> vector<8x512xf32>
    %635 = arith.addf %632, %634 : vector<8x512xf32>
    %636 = vector.extract_strided_slice %635 {offsets = [0, 0], sizes = [8, 384], strides = [1, 1]} : vector<8x512xf32> to vector<8x384xf32>
    %cst_271 = arith.constant 5.000000e-01 : f32
    %637 = vector.broadcast %cst_271 : f32 to vector<8x384xf32>
    %638 = arith.mulf %637, %636 : vector<8x384xf32>
    %639 = math.tanh %638 : vector<8x384xf32>
    %cst_272 = arith.constant 1.000000e+00 : f32
    %640 = vector.broadcast %cst_272 : f32 to vector<8x384xf32>
    %641 = arith.addf %639, %640 : vector<8x384xf32>
    %cst_273 = arith.constant 5.000000e-01 : f32
    %642 = vector.broadcast %cst_273 : f32 to vector<8x384xf32>
    %643 = arith.mulf %642, %641 : vector<8x384xf32>
    %644 = vector.extract_strided_slice %635 {offsets = [0, 384], sizes = [8, 128], strides = [1, 1]} : vector<8x512xf32> to vector<8x128xf32>
    %645 = math.tanh %644 : vector<8x128xf32>
    %646 = vector.extract_strided_slice %643 {offsets = [0, 0], sizes = [8, 128], strides = [1, 1]} : vector<8x384xf32> to vector<8x128xf32>
    %647 = vector.extract_strided_slice %643 {offsets = [0, 128], sizes = [8, 128], strides = [1, 1]} : vector<8x384xf32> to vector<8x128xf32>
    %648 = vector.extract_strided_slice %643 {offsets = [0, 256], sizes = [8, 128], strides = [1, 1]} : vector<8x384xf32> to vector<8x128xf32>
    %649 = arith.mulf %647, %628 : vector<8x128xf32>
    %650 = arith.mulf %646, %645 : vector<8x128xf32>
    %651 = arith.addf %649, %650 : vector<8x128xf32>
    %652 = math.tanh %651 : vector<8x128xf32>
    %653 = arith.mulf %648, %652 : vector<8x128xf32>
    %654 = arith.addf %628, %653 : vector<8x128xf32>
    %c1_i32_274 = arith.constant 1 : i32
    %c8_i32_275 = arith.constant 8 : i32
    %655 = arith.muli %c1_i32_274, %c8_i32_275 : i32
    %656 = tpu.assume_multiple %655, 8 : i32
    %657 = arith.index_cast %656 : i32 to index
    %c0_276 = arith.constant 0 : index
    %658 = vector.load %arg23[%657, %c0_276] : memref<64x512xf32, #tpu.memory_space<vmem>>, vector<8x512xf32>
    %659 = arith.truncf %653 : vector<8x128xf32> to vector<8x128xbf16>
    %cst_277 = arith.constant dense<0.000000e+00> : vector<8x512xf32>
    %660 = tpu.matmul %659, %627, %cst_277 {dimension_numbers = #tpu.dot_dimension_numbers<[1], [0], [0], [1], [0, 0, 1, 1], [], []>} : vector<8x128xbf16>, vector<128x512xbf16>, vector<8x512xf32> -> vector<8x512xf32>
    %661 = arith.addf %658, %660 : vector<8x512xf32>
    %662 = vector.extract_strided_slice %661 {offsets = [0, 0], sizes = [8, 384], strides = [1, 1]} : vector<8x512xf32> to vector<8x384xf32>
    %cst_278 = arith.constant 5.000000e-01 : f32
    %663 = vector.broadcast %cst_278 : f32 to vector<8x384xf32>
    %664 = arith.mulf %663, %662 : vector<8x384xf32>
    %665 = math.tanh %664 : vector<8x384xf32>
    %cst_279 = arith.constant 1.000000e+00 : f32
    %666 = vector.broadcast %cst_279 : f32 to vector<8x384xf32>
    %667 = arith.addf %665, %666 : vector<8x384xf32>
    %cst_280 = arith.constant 5.000000e-01 : f32
    %668 = vector.broadcast %cst_280 : f32 to vector<8x384xf32>
    %669 = arith.mulf %668, %667 : vector<8x384xf32>
    %670 = vector.extract_strided_slice %661 {offsets = [0, 384], sizes = [8, 128], strides = [1, 1]} : vector<8x512xf32> to vector<8x128xf32>
    %671 = math.tanh %670 : vector<8x128xf32>
    %672 = vector.extract_strided_slice %669 {offsets = [0, 0], sizes = [8, 128], strides = [1, 1]} : vector<8x384xf32> to vector<8x128xf32>
    %673 = vector.extract_strided_slice %669 {offsets = [0, 128], sizes = [8, 128], strides = [1, 1]} : vector<8x384xf32> to vector<8x128xf32>
    %674 = vector.extract_strided_slice %669 {offsets = [0, 256], sizes = [8, 128], strides = [1, 1]} : vector<8x384xf32> to vector<8x128xf32>
    %675 = arith.mulf %673, %651 : vector<8x128xf32>
    %676 = arith.mulf %672, %671 : vector<8x128xf32>
    %677 = arith.addf %675, %676 : vector<8x128xf32>
    %678 = math.tanh %677 : vector<8x128xf32>
    %679 = arith.mulf %674, %678 : vector<8x128xf32>
    %680 = arith.addf %654, %679 : vector<8x128xf32>
    %c2_i32_281 = arith.constant 2 : i32
    %c8_i32_282 = arith.constant 8 : i32
    %681 = arith.muli %c2_i32_281, %c8_i32_282 : i32
    %682 = tpu.assume_multiple %681, 8 : i32
    %683 = arith.index_cast %682 : i32 to index
    %c0_283 = arith.constant 0 : index
    %684 = vector.load %arg23[%683, %c0_283] : memref<64x512xf32, #tpu.memory_space<vmem>>, vector<8x512xf32>
    %685 = arith.truncf %679 : vector<8x128xf32> to vector<8x128xbf16>
    %cst_284 = arith.constant dense<0.000000e+00> : vector<8x512xf32>
    %686 = tpu.matmul %685, %627, %cst_284 {dimension_numbers = #tpu.dot_dimension_numbers<[1], [0], [0], [1], [0, 0, 1, 1], [], []>} : vector<8x128xbf16>, vector<128x512xbf16>, vector<8x512xf32> -> vector<8x512xf32>
    %687 = arith.addf %684, %686 : vector<8x512xf32>
    %688 = vector.extract_strided_slice %687 {offsets = [0, 0], sizes = [8, 384], strides = [1, 1]} : vector<8x512xf32> to vector<8x384xf32>
    %cst_285 = arith.constant 5.000000e-01 : f32
    %689 = vector.broadcast %cst_285 : f32 to vector<8x384xf32>
    %690 = arith.mulf %689, %688 : vector<8x384xf32>
    %691 = math.tanh %690 : vector<8x384xf32>
    %cst_286 = arith.constant 1.000000e+00 : f32
    %692 = vector.broadcast %cst_286 : f32 to vector<8x384xf32>
    %693 = arith.addf %691, %692 : vector<8x384xf32>
    %cst_287 = arith.constant 5.000000e-01 : f32
    %694 = vector.broadcast %cst_287 : f32 to vector<8x384xf32>
    %695 = arith.mulf %694, %693 : vector<8x384xf32>
    %696 = vector.extract_strided_slice %687 {offsets = [0, 384], sizes = [8, 128], strides = [1, 1]} : vector<8x512xf32> to vector<8x128xf32>
    %697 = math.tanh %696 : vector<8x128xf32>
    %698 = vector.extract_strided_slice %695 {offsets = [0, 0], sizes = [8, 128], strides = [1, 1]} : vector<8x384xf32> to vector<8x128xf32>
    %699 = vector.extract_strided_slice %695 {offsets = [0, 128], sizes = [8, 128], strides = [1, 1]} : vector<8x384xf32> to vector<8x128xf32>
    %700 = vector.extract_strided_slice %695 {offsets = [0, 256], sizes = [8, 128], strides = [1, 1]} : vector<8x384xf32> to vector<8x128xf32>
    %701 = arith.mulf %699, %677 : vector<8x128xf32>
    %702 = arith.mulf %698, %697 : vector<8x128xf32>
    %703 = arith.addf %701, %702 : vector<8x128xf32>
    %704 = math.tanh %703 : vector<8x128xf32>
    %705 = arith.mulf %700, %704 : vector<8x128xf32>
    %706 = arith.addf %680, %705 : vector<8x128xf32>
    %c3_i32_288 = arith.constant 3 : i32
    %c8_i32_289 = arith.constant 8 : i32
    %707 = arith.muli %c3_i32_288, %c8_i32_289 : i32
    %708 = tpu.assume_multiple %707, 8 : i32
    %709 = arith.index_cast %708 : i32 to index
    %c0_290 = arith.constant 0 : index
    %710 = vector.load %arg23[%709, %c0_290] : memref<64x512xf32, #tpu.memory_space<vmem>>, vector<8x512xf32>
    %711 = arith.truncf %705 : vector<8x128xf32> to vector<8x128xbf16>
    %cst_291 = arith.constant dense<0.000000e+00> : vector<8x512xf32>
    %712 = tpu.matmul %711, %627, %cst_291 {dimension_numbers = #tpu.dot_dimension_numbers<[1], [0], [0], [1], [0, 0, 1, 1], [], []>} : vector<8x128xbf16>, vector<128x512xbf16>, vector<8x512xf32> -> vector<8x512xf32>
    %713 = arith.addf %710, %712 : vector<8x512xf32>
    %714 = vector.extract_strided_slice %713 {offsets = [0, 0], sizes = [8, 384], strides = [1, 1]} : vector<8x512xf32> to vector<8x384xf32>
    %cst_292 = arith.constant 5.000000e-01 : f32
    %715 = vector.broadcast %cst_292 : f32 to vector<8x384xf32>
    %716 = arith.mulf %715, %714 : vector<8x384xf32>
    %717 = math.tanh %716 : vector<8x384xf32>
    %cst_293 = arith.constant 1.000000e+00 : f32
    %718 = vector.broadcast %cst_293 : f32 to vector<8x384xf32>
    %719 = arith.addf %717, %718 : vector<8x384xf32>
    %cst_294 = arith.constant 5.000000e-01 : f32
    %720 = vector.broadcast %cst_294 : f32 to vector<8x384xf32>
    %721 = arith.mulf %720, %719 : vector<8x384xf32>
    %722 = vector.extract_strided_slice %713 {offsets = [0, 384], sizes = [8, 128], strides = [1, 1]} : vector<8x512xf32> to vector<8x128xf32>
    %723 = math.tanh %722 : vector<8x128xf32>
    %724 = vector.extract_strided_slice %721 {offsets = [0, 0], sizes = [8, 128], strides = [1, 1]} : vector<8x384xf32> to vector<8x128xf32>
    %725 = vector.extract_strided_slice %721 {offsets = [0, 128], sizes = [8, 128], strides = [1, 1]} : vector<8x384xf32> to vector<8x128xf32>
    %726 = vector.extract_strided_slice %721 {offsets = [0, 256], sizes = [8, 128], strides = [1, 1]} : vector<8x384xf32> to vector<8x128xf32>
    %727 = arith.mulf %725, %703 : vector<8x128xf32>
    %728 = arith.mulf %724, %723 : vector<8x128xf32>
    %729 = arith.addf %727, %728 : vector<8x128xf32>
    %730 = math.tanh %729 : vector<8x128xf32>
    %731 = arith.mulf %726, %730 : vector<8x128xf32>
    %732 = arith.addf %706, %731 : vector<8x128xf32>
    %c4_i32_295 = arith.constant 4 : i32
    %c8_i32_296 = arith.constant 8 : i32
    %733 = arith.muli %c4_i32_295, %c8_i32_296 : i32
    %734 = tpu.assume_multiple %733, 8 : i32
    %735 = arith.index_cast %734 : i32 to index
    %c0_297 = arith.constant 0 : index
    %736 = vector.load %arg23[%735, %c0_297] : memref<64x512xf32, #tpu.memory_space<vmem>>, vector<8x512xf32>
    %737 = arith.truncf %731 : vector<8x128xf32> to vector<8x128xbf16>
    %cst_298 = arith.constant dense<0.000000e+00> : vector<8x512xf32>
    %738 = tpu.matmul %737, %627, %cst_298 {dimension_numbers = #tpu.dot_dimension_numbers<[1], [0], [0], [1], [0, 0, 1, 1], [], []>} : vector<8x128xbf16>, vector<128x512xbf16>, vector<8x512xf32> -> vector<8x512xf32>
    %739 = arith.addf %736, %738 : vector<8x512xf32>
    %740 = vector.extract_strided_slice %739 {offsets = [0, 0], sizes = [8, 384], strides = [1, 1]} : vector<8x512xf32> to vector<8x384xf32>
    %cst_299 = arith.constant 5.000000e-01 : f32
    %741 = vector.broadcast %cst_299 : f32 to vector<8x384xf32>
    %742 = arith.mulf %741, %740 : vector<8x384xf32>
    %743 = math.tanh %742 : vector<8x384xf32>
    %cst_300 = arith.constant 1.000000e+00 : f32
    %744 = vector.broadcast %cst_300 : f32 to vector<8x384xf32>
    %745 = arith.addf %743, %744 : vector<8x384xf32>
    %cst_301 = arith.constant 5.000000e-01 : f32
    %746 = vector.broadcast %cst_301 : f32 to vector<8x384xf32>
    %747 = arith.mulf %746, %745 : vector<8x384xf32>
    %748 = vector.extract_strided_slice %739 {offsets = [0, 384], sizes = [8, 128], strides = [1, 1]} : vector<8x512xf32> to vector<8x128xf32>
    %749 = math.tanh %748 : vector<8x128xf32>
    %750 = vector.extract_strided_slice %747 {offsets = [0, 0], sizes = [8, 128], strides = [1, 1]} : vector<8x384xf32> to vector<8x128xf32>
    %751 = vector.extract_strided_slice %747 {offsets = [0, 128], sizes = [8, 128], strides = [1, 1]} : vector<8x384xf32> to vector<8x128xf32>
    %752 = vector.extract_strided_slice %747 {offsets = [0, 256], sizes = [8, 128], strides = [1, 1]} : vector<8x384xf32> to vector<8x128xf32>
    %753 = arith.mulf %751, %729 : vector<8x128xf32>
    %754 = arith.mulf %750, %749 : vector<8x128xf32>
    %755 = arith.addf %753, %754 : vector<8x128xf32>
    %756 = math.tanh %755 : vector<8x128xf32>
    %757 = arith.mulf %752, %756 : vector<8x128xf32>
    %758 = arith.addf %732, %757 : vector<8x128xf32>
    %c5_i32_302 = arith.constant 5 : i32
    %c8_i32_303 = arith.constant 8 : i32
    %759 = arith.muli %c5_i32_302, %c8_i32_303 : i32
    %760 = tpu.assume_multiple %759, 8 : i32
    %761 = arith.index_cast %760 : i32 to index
    %c0_304 = arith.constant 0 : index
    %762 = vector.load %arg23[%761, %c0_304] : memref<64x512xf32, #tpu.memory_space<vmem>>, vector<8x512xf32>
    %763 = arith.truncf %757 : vector<8x128xf32> to vector<8x128xbf16>
    %cst_305 = arith.constant dense<0.000000e+00> : vector<8x512xf32>
    %764 = tpu.matmul %763, %627, %cst_305 {dimension_numbers = #tpu.dot_dimension_numbers<[1], [0], [0], [1], [0, 0, 1, 1], [], []>} : vector<8x128xbf16>, vector<128x512xbf16>, vector<8x512xf32> -> vector<8x512xf32>
    %765 = arith.addf %762, %764 : vector<8x512xf32>
    %766 = vector.extract_strided_slice %765 {offsets = [0, 0], sizes = [8, 384], strides = [1, 1]} : vector<8x512xf32> to vector<8x384xf32>
    %cst_306 = arith.constant 5.000000e-01 : f32
    %767 = vector.broadcast %cst_306 : f32 to vector<8x384xf32>
    %768 = arith.mulf %767, %766 : vector<8x384xf32>
    %769 = math.tanh %768 : vector<8x384xf32>
    %cst_307 = arith.constant 1.000000e+00 : f32
    %770 = vector.broadcast %cst_307 : f32 to vector<8x384xf32>
    %771 = arith.addf %769, %770 : vector<8x384xf32>
    %cst_308 = arith.constant 5.000000e-01 : f32
    %772 = vector.broadcast %cst_308 : f32 to vector<8x384xf32>
    %773 = arith.mulf %772, %771 : vector<8x384xf32>
    %774 = vector.extract_strided_slice %765 {offsets = [0, 384], sizes = [8, 128], strides = [1, 1]} : vector<8x512xf32> to vector<8x128xf32>
    %775 = math.tanh %774 : vector<8x128xf32>
    %776 = vector.extract_strided_slice %773 {offsets = [0, 0], sizes = [8, 128], strides = [1, 1]} : vector<8x384xf32> to vector<8x128xf32>
    %777 = vector.extract_strided_slice %773 {offsets = [0, 128], sizes = [8, 128], strides = [1, 1]} : vector<8x384xf32> to vector<8x128xf32>
    %778 = vector.extract_strided_slice %773 {offsets = [0, 256], sizes = [8, 128], strides = [1, 1]} : vector<8x384xf32> to vector<8x128xf32>
    %779 = arith.mulf %777, %755 : vector<8x128xf32>
    %780 = arith.mulf %776, %775 : vector<8x128xf32>
    %781 = arith.addf %779, %780 : vector<8x128xf32>
    %782 = math.tanh %781 : vector<8x128xf32>
    %783 = arith.mulf %778, %782 : vector<8x128xf32>
    %784 = arith.addf %758, %783 : vector<8x128xf32>
    %c6_i32_309 = arith.constant 6 : i32
    %c8_i32_310 = arith.constant 8 : i32
    %785 = arith.muli %c6_i32_309, %c8_i32_310 : i32
    %786 = tpu.assume_multiple %785, 8 : i32
    %787 = arith.index_cast %786 : i32 to index
    %c0_311 = arith.constant 0 : index
    %788 = vector.load %arg23[%787, %c0_311] : memref<64x512xf32, #tpu.memory_space<vmem>>, vector<8x512xf32>
    %789 = arith.truncf %783 : vector<8x128xf32> to vector<8x128xbf16>
    %cst_312 = arith.constant dense<0.000000e+00> : vector<8x512xf32>
    %790 = tpu.matmul %789, %627, %cst_312 {dimension_numbers = #tpu.dot_dimension_numbers<[1], [0], [0], [1], [0, 0, 1, 1], [], []>} : vector<8x128xbf16>, vector<128x512xbf16>, vector<8x512xf32> -> vector<8x512xf32>
    %791 = arith.addf %788, %790 : vector<8x512xf32>
    %792 = vector.extract_strided_slice %791 {offsets = [0, 0], sizes = [8, 384], strides = [1, 1]} : vector<8x512xf32> to vector<8x384xf32>
    %cst_313 = arith.constant 5.000000e-01 : f32
    %793 = vector.broadcast %cst_313 : f32 to vector<8x384xf32>
    %794 = arith.mulf %793, %792 : vector<8x384xf32>
    %795 = math.tanh %794 : vector<8x384xf32>
    %cst_314 = arith.constant 1.000000e+00 : f32
    %796 = vector.broadcast %cst_314 : f32 to vector<8x384xf32>
    %797 = arith.addf %795, %796 : vector<8x384xf32>
    %cst_315 = arith.constant 5.000000e-01 : f32
    %798 = vector.broadcast %cst_315 : f32 to vector<8x384xf32>
    %799 = arith.mulf %798, %797 : vector<8x384xf32>
    %800 = vector.extract_strided_slice %791 {offsets = [0, 384], sizes = [8, 128], strides = [1, 1]} : vector<8x512xf32> to vector<8x128xf32>
    %801 = math.tanh %800 : vector<8x128xf32>
    %802 = vector.extract_strided_slice %799 {offsets = [0, 0], sizes = [8, 128], strides = [1, 1]} : vector<8x384xf32> to vector<8x128xf32>
    %803 = vector.extract_strided_slice %799 {offsets = [0, 128], sizes = [8, 128], strides = [1, 1]} : vector<8x384xf32> to vector<8x128xf32>
    %804 = vector.extract_strided_slice %799 {offsets = [0, 256], sizes = [8, 128], strides = [1, 1]} : vector<8x384xf32> to vector<8x128xf32>
    %805 = arith.mulf %803, %781 : vector<8x128xf32>
    %806 = arith.mulf %802, %801 : vector<8x128xf32>
    %807 = arith.addf %805, %806 : vector<8x128xf32>
    %808 = math.tanh %807 : vector<8x128xf32>
    %809 = arith.mulf %804, %808 : vector<8x128xf32>
    %810 = arith.addf %784, %809 : vector<8x128xf32>
    %c7_i32_316 = arith.constant 7 : i32
    %c8_i32_317 = arith.constant 8 : i32
    %811 = arith.muli %c7_i32_316, %c8_i32_317 : i32
    %812 = tpu.assume_multiple %811, 8 : i32
    %813 = arith.index_cast %812 : i32 to index
    %c0_318 = arith.constant 0 : index
    %814 = vector.load %arg23[%813, %c0_318] : memref<64x512xf32, #tpu.memory_space<vmem>>, vector<8x512xf32>
    %815 = arith.truncf %809 : vector<8x128xf32> to vector<8x128xbf16>
    %cst_319 = arith.constant dense<0.000000e+00> : vector<8x512xf32>
    %816 = tpu.matmul %815, %627, %cst_319 {dimension_numbers = #tpu.dot_dimension_numbers<[1], [0], [0], [1], [0, 0, 1, 1], [], []>} : vector<8x128xbf16>, vector<128x512xbf16>, vector<8x512xf32> -> vector<8x512xf32>
    %817 = arith.addf %814, %816 : vector<8x512xf32>
    %818 = vector.extract_strided_slice %817 {offsets = [0, 0], sizes = [8, 384], strides = [1, 1]} : vector<8x512xf32> to vector<8x384xf32>
    %cst_320 = arith.constant 5.000000e-01 : f32
    %819 = vector.broadcast %cst_320 : f32 to vector<8x384xf32>
    %820 = arith.mulf %819, %818 : vector<8x384xf32>
    %821 = math.tanh %820 : vector<8x384xf32>
    %cst_321 = arith.constant 1.000000e+00 : f32
    %822 = vector.broadcast %cst_321 : f32 to vector<8x384xf32>
    %823 = arith.addf %821, %822 : vector<8x384xf32>
    %cst_322 = arith.constant 5.000000e-01 : f32
    %824 = vector.broadcast %cst_322 : f32 to vector<8x384xf32>
    %825 = arith.mulf %824, %823 : vector<8x384xf32>
    %826 = vector.extract_strided_slice %817 {offsets = [0, 384], sizes = [8, 128], strides = [1, 1]} : vector<8x512xf32> to vector<8x128xf32>
    %827 = math.tanh %826 : vector<8x128xf32>
    %828 = vector.extract_strided_slice %825 {offsets = [0, 0], sizes = [8, 128], strides = [1, 1]} : vector<8x384xf32> to vector<8x128xf32>
    %829 = vector.extract_strided_slice %825 {offsets = [0, 128], sizes = [8, 128], strides = [1, 1]} : vector<8x384xf32> to vector<8x128xf32>
    %830 = vector.extract_strided_slice %825 {offsets = [0, 256], sizes = [8, 128], strides = [1, 1]} : vector<8x384xf32> to vector<8x128xf32>
    %831 = arith.mulf %829, %807 : vector<8x128xf32>
    %832 = arith.mulf %828, %827 : vector<8x128xf32>
    %833 = arith.addf %831, %832 : vector<8x128xf32>
    %834 = math.tanh %833 : vector<8x128xf32>
    %835 = arith.mulf %830, %834 : vector<8x128xf32>
    %836 = arith.addf %810, %835 : vector<8x128xf32>
    %c8_i32_323 = arith.constant 8 : i32
    %cst_324 = arith.constant 1.250000e-01 : f32
    %837 = vector.broadcast %cst_324 : f32 to vector<8x128xf32>
    %838 = arith.mulf %836, %837 : vector<8x128xf32>
    %c0_325 = arith.constant 0 : index
    %c0_326 = arith.constant 0 : index
    %839 = vector.load %arg14[%c0_325, %c0_326] : memref<128x128xf32, #tpu.memory_space<vmem>>, vector<128x128xf32>
    %cst_327 = arith.constant dense<0.000000e+00> : vector<8x128xf32>
    %840 = tpu.matmul %838, %839, %cst_327 {dimension_numbers = #tpu.dot_dimension_numbers<[1], [0], [0], [1], [0, 0, 1, 1], [], []>} : vector<8x128xf32>, vector<128x128xf32>, vector<8x128xf32> -> vector<8x128xf32>
    %c0_328 = arith.constant 0 : index
    %c0_329 = arith.constant 0 : index
    %841 = vector.load %arg15[%c0_328, %c0_329] : memref<1x128xf32, #tpu.memory_space<vmem>>, vector<1x128xf32>
    %842 = vector.broadcast %841 : vector<1x128xf32> to vector<8x128xf32>
    %843 = arith.addf %840, %842 : vector<8x128xf32>
    %cst_330 = arith.constant 0.000000e+00 : f32
    %844 = vector.broadcast %cst_330 : f32 to vector<8x128xf32>
    %845 = arith.maximumf %843, %844 : vector<8x128xf32>
    %c0_331 = arith.constant 0 : index
    %c0_332 = arith.constant 0 : index
    %846 = vector.load %arg16[%c0_331, %c0_332] : memref<128x5xf32, #tpu.memory_space<vmem>>, vector<128x5xf32>
    %cst_333 = arith.constant dense<0.000000e+00> : vector<8x5xf32>
    %847 = tpu.matmul %845, %846, %cst_333 {dimension_numbers = #tpu.dot_dimension_numbers<[1], [0], [0], [1], [0, 0, 1, 1], [], []>} : vector<8x128xf32>, vector<128x5xf32>, vector<8x5xf32> -> vector<8x5xf32>
    %c0_334 = arith.constant 0 : index
    %c0_335 = arith.constant 0 : index
    %848 = vector.load %arg17[%c0_334, %c0_335] : memref<1x5xf32, #tpu.memory_space<vmem>>, vector<1x5xf32>
    %849 = vector.broadcast %848 : vector<1x5xf32> to vector<8x5xf32>
    %850 = arith.addf %847, %849 : vector<8x5xf32>
    %c0_336 = arith.constant 0 : index
    %c0_337 = arith.constant 0 : index
    %851 = vector.load %arg18[%c0_336, %c0_337] : memref<8x5xf32, #tpu.memory_space<vmem>>, vector<8x5xf32>
    tpu.vector_store %arg18[%c0_336, %c0_337], %850 {strides = array<i32>} : memref<8x5xf32, #tpu.memory_space<vmem>>, vector<8x5xf32>,
    %c0_338 = arith.constant 0 : index
    %c0_339 = arith.constant 0 : index
    %852 = vector.load %arg19[%c0_338, %c0_339] : memref<8x128xf32, #tpu.memory_space<vmem>>, vector<8x128xf32>
    tpu.vector_store %arg19[%c0_338, %c0_339], %838 {strides = array<i32>} : memref<8x128xf32, #tpu.memory_space<vmem>>, vector<8x128xf32>,
    return
  }
  func.func @transform_0(%arg0: i32) -> (i32, i32) {
    %c0_i32 = arith.constant 0 : i32
    %c0_i32_0 = arith.constant 0 : i32
    %c0_i32_1 = arith.constant 0 : i32
    return %c0_i32, %c0_i32_0 : i32, i32
  }
  func.func @transform_1(%arg0: i32) -> (i32, i32) {
    %c0_i32 = arith.constant 0 : i32
    %c0_i32_0 = arith.constant 0 : i32
    %c0_i32_1 = arith.constant 0 : i32
    return %c0_i32, %c0_i32_0 : i32, i32
  }
  func.func @transform_2(%arg0: i32) -> (i32, i32) {
    %c0_i32 = arith.constant 0 : i32
    %c0_i32_0 = arith.constant 0 : i32
    %c0_i32_1 = arith.constant 0 : i32
    return %c0_i32, %c0_i32_0 : i32, i32
  }
  func.func @transform_3(%arg0: i32) -> (i32, i32) {
    %c0_i32 = arith.constant 0 : i32
    %c0_i32_0 = arith.constant 0 : i32
    %c0_i32_1 = arith.constant 0 : i32
    return %c0_i32, %c0_i32_0 : i32, i32
  }
  func.func @transform_4(%arg0: i32) -> (i32, i32) {
    %c0_i32 = arith.constant 0 : i32
    %c0_i32_0 = arith.constant 0 : i32
    %c0_i32_1 = arith.constant 0 : i32
    return %c0_i32, %c0_i32_0 : i32, i32
  }
  func.func @transform_5(%arg0: i32) -> (i32, i32) {
    %c0_i32 = arith.constant 0 : i32
    %c0_i32_0 = arith.constant 0 : i32
    %c0_i32_1 = arith.constant 0 : i32
    return %c0_i32, %c0_i32_0 : i32, i32
  }
  func.func @transform_6(%arg0: i32) -> (i32, i32) {
    %c0_i32 = arith.constant 0 : i32
    %c0_i32_0 = arith.constant 0 : i32
    %c0_i32_1 = arith.constant 0 : i32
    return %c0_i32, %c0_i32_0 : i32, i32
  }
  func.func @transform_7(%arg0: i32) -> (i32, i32) {
    %c0_i32 = arith.constant 0 : i32
    %c0_i32_0 = arith.constant 0 : i32
    %c0_i32_1 = arith.constant 0 : i32
    return %c0_i32, %c0_i32_0 : i32, i32
  }
  func.func @transform_8(%arg0: i32) -> (i32, i32) {
    %c0_i32 = arith.constant 0 : i32
    %c0_i32_0 = arith.constant 0 : i32
    %c0_i32_1 = arith.constant 0 : i32
    return %c0_i32, %c0_i32_0 : i32, i32
  }
  func.func @transform_9(%arg0: i32) -> (i32, i32) {
    %c0_i32 = arith.constant 0 : i32
    %c0_i32_0 = arith.constant 0 : i32
    %c0_i32_1 = arith.constant 0 : i32
    return %c0_i32, %c0_i32_0 : i32, i32
  }
  func.func @transform_10(%arg0: i32) -> (i32, i32) {
    %c0_i32 = arith.constant 0 : i32
    %c0_i32_0 = arith.constant 0 : i32
    %c0_i32_1 = arith.constant 0 : i32
    return %c0_i32, %c0_i32_0 : i32, i32
  }
  func.func @transform_11(%arg0: i32) -> (i32, i32) {
    %c0_i32 = arith.constant 0 : i32
    %c0_i32_0 = arith.constant 0 : i32
    %c0_i32_1 = arith.constant 0 : i32
    return %c0_i32, %c0_i32_0 : i32, i32
  }
  func.func @transform_12(%arg0: i32) -> (i32, i32) {
    %c0_i32 = arith.constant 0 : i32
    %c0_i32_0 = arith.constant 0 : i32
    %c0_i32_1 = arith.constant 0 : i32
    return %c0_i32, %c0_i32_0 : i32, i32
  }
  func.func @transform_13(%arg0: i32) -> (i32, i32) {
    %c0_i32 = arith.constant 0 : i32
    %c0_i32_0 = arith.constant 0 : i32
    %c0_i32_1 = arith.constant 0 : i32
    return %c0_i32, %c0_i32_0 : i32, i32
  }
  func.func @transform_14(%arg0: i32) -> (i32, i32) {
    %c0_i32 = arith.constant 0 : i32
    %c0_i32_0 = arith.constant 0 : i32
    %c0_i32_1 = arith.constant 0 : i32
    return %c0_i32, %c0_i32_0 : i32, i32
  }
  func.func @transform_15(%arg0: i32) -> (i32, i32) {
    %c0_i32 = arith.constant 0 : i32
    %c0_i32_0 = arith.constant 0 : i32
    %c0_i32_1 = arith.constant 0 : i32
    return %c0_i32, %c0_i32_0 : i32, i32
  }
  func.func @transform_16(%arg0: i32) -> (i32, i32) {
    %c0_i32 = arith.constant 0 : i32
    %c0_i32_0 = arith.constant 0 : i32
    %c0_i32_1 = arith.constant 0 : i32
    return %c0_i32, %c0_i32_0 : i32, i32
  }
  func.func @transform_17(%arg0: i32) -> (i32, i32) {
    %c0_i32 = arith.constant 0 : i32
    %c0_i32_0 = arith.constant 0 : i32
    %c0_i32_1 = arith.constant 0 : i32
    return %c0_i32, %c0_i32_0 : i32, i32
  }
  func.func @transform_18(%arg0: i32) -> (i32, i32) {
    %c0_i32 = arith.constant 0 : i32
    %c0_i32_0 = arith.constant 0 : i32
    %c0_i32_1 = arith.constant 0 : i32
    return %c0_i32, %c0_i32_0 : i32, i32
  }
}

</mosaic_0001>

<llo_original>
// kernel: tpu_custom_call.1
$region0: #{tpu_custom_call.1}
  #allocation0 [shape = 'u32[]', space=smem, size = 0x4, offset = 0x4, fixed_abs, tag = 'smem constant byte address 0x4 - core index']
  #allocation1 [shape = 'u32[72,128]{1,0:T(1,128)}', space=vmem, size = 0x9000, scoped, tag = 'internal scratch']
  #allocation2 [shape = 'f32[64,128]{1,0:T(8,128)}', space=vmem, size = 0x8000, scoped, tag = 'scratch operand']
  #allocation3 [shape = 'f32[64,128]{1,0:T(8,128)}', space=vmem, size = 0x8000, scoped, tag = 'scratch operand']
  #allocation4 [shape = 'f32[64,128]{1,0:T(8,128)}', space=vmem, size = 0x8000, scoped, tag = 'scratch operand']
  #allocation5 [shape = 'f32[64,512]{1,0:T(8,128)}', space=vmem, size = 0x20000, scoped, tag = 'scratch operand']
  %s0 = inlined_call_operand.hbm [shape: f32[64,128], index: 0, kind: input, shape index: {}]
  %s1 = inlined_call_operand.hbm [shape: bf16[128,512], index: 1, kind: input, shape index: {}]
  %s2 = inlined_call_operand.hbm [shape: bf16[128,512], index: 2, kind: input, shape index: {}]
  %s3 = inlined_call_operand.hbm [shape: bf16[128,512], index: 3, kind: input, shape index: {}]
  %s4 = inlined_call_operand.vmem [shape: f32[1,512], index: 4, kind: input, shape index: {}]
  %s5 = inlined_call_operand.hbm [shape: bf16[128,512], index: 5, kind: input, shape index: {}]
  %s6 = inlined_call_operand.hbm [shape: bf16[128,512], index: 6, kind: input, shape index: {}]
  %s7 = inlined_call_operand.hbm [shape: bf16[128,512], index: 7, kind: input, shape index: {}]
  %s8 = inlined_call_operand.vmem [shape: f32[1,512], index: 8, kind: input, shape index: {}]
  %s9 = inlined_call_operand.hbm [shape: bf16[128,512], index: 9, kind: input, shape index: {}]
  %s10 = inlined_call_operand.hbm [shape: bf16[128,512], index: 10, kind: input, shape index: {}]
  %s11 = inlined_call_operand.hbm [shape: bf16[128,512], index: 11, kind: input, shape index: {}]
  %s12 = inlined_call_operand.vmem [shape: f32[1,512], index: 12, kind: input, shape index: {}]
  %s13 = inlined_call_operand.vmem [shape: f32[128,128], index: 13, kind: input, shape index: {}]
  %s14 = inlined_call_operand.vmem [shape: f32[1,128], index: 14, kind: input, shape index: {}]
  %s15 = inlined_call_operand.vmem [shape: f32[128,5], index: 15, kind: input, shape index: {}]
  %s16 = inlined_call_operand.vmem [shape: f32[1,5], index: 16, kind: input, shape index: {}]
  %s17 = inlined_call_operand.hbm [shape: f32[8,5], index: 17, kind: output, shape index: {0}]
  %s18 = inlined_call_operand.hbm [shape: f32[8,128], index: 18, kind: output, shape index: {1}]
  %19 = xla_tuple %s17, %s18
  %s20 = sld [smem:[#allocation0]]
  $region126: #{tpu_custom_call.1} parent=0
    _
  %s22 = ssub.s32 1, %s20
  %s23 = scalar_select 0, %s22, %s20
  $region1: #{tpu_custom_call.1} parent=0
    #allocation6 [shape = 'u8[32768]{0}', space=vmem, size = 0x8000, scoped, tag = 'input window, operand 0, single buffered']
    #allocation7 [shape = 's32[1]{0}', space=sflag, size = 0x4, scoped, tag = 'scoped memory for tpu_custom_call.1']
    #allocation8 [shape = 's32[1]{0}', space=sflag, size = 0x4, scoped, tag = 'scoped memory for tpu_custom_call.1']
    #allocation9 [shape = 'u8[131072]{0}', space=vmem, size = 0x20000, scoped, tag = 'input window, operand 1, single buffered']
    #allocation10 [shape = 's32[1]{0}', space=sflag, size = 0x4, scoped, tag = 'scoped memory for tpu_custom_call.1']
    #allocation11 [shape = 'u8[131072]{0}', space=vmem, size = 0x20000, scoped, tag = 'input window, operand 2, single buffered']
    #allocation12 [shape = 'u8[131072]{0}', space=vmem, size = 0x20000, scoped, tag = 'input window, operand 3, single buffered']
    #allocation13 [shape = 's32[1]{0}', space=sflag, size = 0x4, scoped, tag = 'scoped memory for tpu_custom_call.1']
    #allocation14 [shape = 'u8[131072]{0}', space=vmem, size = 0x20000, scoped, tag = 'input window, operand 5, single buffered']
    #allocation15 [shape = 'u8[131072]{0}', space=vmem, size = 0x20000, scoped, tag = 'input window, operand 6, single buffered']
    #allocation16 [shape = 's32[1]{0}', space=sflag, size = 0x4, scoped, tag = 'scoped memory for tpu_custom_call.1']
    #allocation17 [shape = 'u8[131072]{0}', space=vmem, size = 0x20000, scoped, tag = 'input window, operand 7, single buffered']
    #allocation18 [shape = 'u8[131072]{0}', space=vmem, size = 0x20000, scoped, tag = 'input window, operand 9, single buffered']
    #allocation19 [shape = 's32[1]{0}', space=sflag, size = 0x4, scoped, tag = 'scoped memory for tpu_custom_call.1']
    #allocation20 [shape = 'u8[131072]{0}', space=vmem, size = 0x20000, scoped, tag = 'input window, operand 10, single buffered']
    #allocation21 [shape = 'u8[131072]{0}', space=vmem, size = 0x20000, scoped, tag = 'input window, operand 11, single buffered']
    #allocation22 [shape = 's32[1]{0}', space=sflag, size = 0x4, scoped, tag = 'scoped memory for tpu_custom_call.1']
    #allocation23 [shape = 'u8[4096]{0}', space=vmem, size = 0x1000, scoped, tag = 'output window, operand 0, single buffered']
    #allocation24 [shape = 'u8[4096]{0}', space=vmem, size = 0x1000, scoped, tag = 'output window, operand 1, single buffered']
    #allocation25 [shape = 's32[1]{0}', space=sflag, size = 0x4, scoped, tag = 'scoped memory for tpu_custom_call.1']
    %24 = vsyncpa [#allocation7], 0
    %25 = vsyncpa [#allocation10], 0
    %26 = vsyncpa [#allocation13], 0
    %27 = vsyncpa [#allocation16], 0
    %28 = vsyncpa [#allocation19], 0
    %29 = vsyncpa [#allocation22], 0
    %30 = vsyncpa [#allocation8], 0
    %31 = vsyncpa [#allocation25], 0
    // Predicated region
    $region2: #{tpu_custom_call.1} parent=1 // pred_check
      _
    $region3: #{tpu_custom_call.1} parent=1 // pred_check_branch
      %33 = sbr.rel (0) target = $region5
    $region4: #{tpu_custom_call.1} parent=1 // pred_region
      %35 = vsyncadd [#allocation7], 0
      %s36 = sshll.u32 %s0, 4
      %s37 = int_to_ptr.hbm [resolvable:$true] %s36
      %s38 = sshll.u32 [#allocation6], 4
      %s39 = int_to_ptr.vmem [resolvable:$true] %s38
      %44 = dma.hbm_to_vmem [thread:$0]  %s37, 1024, %s39, [#allocation7], 128, 128, 8
    $region5: #{tpu_custom_call.1} parent=1 // pred_fallthru
      _
    // Predicated region
    $region6: #{tpu_custom_call.1} parent=1 // pred_check
      _
    $region7: #{tpu_custom_call.1} parent=1 // pred_check_branch
      %46 = sbr.rel (0) target = $region9
    $region8: #{tpu_custom_call.1} parent=1 // pred_region
      %48 = vsyncadd [#allocation10], 0
      %s49 = sshll.u32 %s1, 4
      %s50 = int_to_ptr.hbm [resolvable:$true] %s49
      %s51 = sshll.u32 [#allocation9], 4
      %s52 = int_to_ptr.vmem [resolvable:$true] %s51
      %57 = dma.hbm_to_vmem [thread:$0]  %s50, 4096, %s52, [#allocation10], 256, 256, 16
    $region9: #{tpu_custom_call.1} parent=1 // pred_fallthru
      _
    // Predicated region
    $region10: #{tpu_custom_call.1} parent=1 // pred_check
      _
    $region11: #{tpu_custom_call.1} parent=1 // pred_check_branch
      %59 = sbr.rel (0) target = $region13
    $region12: #{tpu_custom_call.1} parent=1 // pred_region
      %61 = vsyncadd [#allocation10], 0
      %s62 = sshll.u32 %s2, 4
      %s63 = int_to_ptr.hbm [resolvable:$true] %s62
      %s64 = sshll.u32 [#allocation11], 4
      %s65 = int_to_ptr.vmem [resolvable:$true] %s64
      %70 = dma.hbm_to_vmem [thread:$0]  %s63, 4096, %s65, [#allocation10], 256, 256, 16
    $region13: #{tpu_custom_call.1} parent=1 // pred_fallthru
      _
    // Predicated region
    $region14: #{tpu_custom_call.1} parent=1 // pred_check
      _
    $region15: #{tpu_custom_call.1} parent=1 // pred_check_branch
      %72 = sbr.rel (0) target = $region17
    $region16: #{tpu_custom_call.1} parent=1 // pred_region
      %74 = vsyncadd [#allocation13], 0
      %s75 = sshll.u32 %s3, 4
      %s76 = int_to_ptr.hbm [resolvable:$true] %s75
      %s77 = sshll.u32 [#allocation12], 4
      %s78 = int_to_ptr.vmem [resolvable:$true] %s77
      %83 = dma.hbm_to_vmem [thread:$0]  %s76, 4096, %s78, [#allocation13], 256, 256, 16
    $region17: #{tpu_custom_call.1} parent=1 // pred_fallthru
      _
    // Predicated region
    $region18: #{tpu_custom_call.1} parent=1 // pred_check
      _
    $region19: #{tpu_custom_call.1} parent=1 // pred_check_branch
      %85 = sbr.rel (0) target = $region21
    $region20: #{tpu_custom_call.1} parent=1 // pred_region
      _
    $region21: #{tpu_custom_call.1} parent=1 // pred_fallthru
      _
    // Predicated region
    $region22: #{tpu_custom_call.1} parent=1 // pred_check
      _
    $region23: #{tpu_custom_call.1} parent=1 // pred_check_branch
      %87 = sbr.rel (0) target = $region25
    $region24: #{tpu_custom_call.1} parent=1 // pred_region
      %89 = vsyncadd [#allocation13], 0
      %s90 = sshll.u32 %s5, 4
      %s91 = int_to_ptr.hbm [resolvable:$true] %s90
      %s92 = sshll.u32 [#allocation14], 4
      %s93 = int_to_ptr.vmem [resolvable:$true] %s92
      %98 = dma.hbm_to_vmem [thread:$0]  %s91, 4096, %s93, [#allocation13], 256, 256, 16
    $region25: #{tpu_custom_call.1} parent=1 // pred_fallthru
      _
    // Predicated region
    $region26: #{tpu_custom_call.1} parent=1 // pred_check
      _
    $region27: #{tpu_custom_call.1} parent=1 // pred_check_branch
      %100 = sbr.rel (0) target = $region29
    $region28: #{tpu_custom_call.1} parent=1 // pred_region
      %102 = vsyncadd [#allocation16], 0
      %s103 = sshll.u32 %s6, 4
      %s104 = int_to_ptr.hbm [resolvable:$true] %s103
      %s105 = sshll.u32 [#allocation15], 4
      %s106 = int_to_ptr.vmem [resolvable:$true] %s105
      %111 = dma.hbm_to_vmem [thread:$0]  %s104, 4096, %s106, [#allocation16], 256, 256, 16
    $region29: #{tpu_custom_call.1} parent=1 // pred_fallthru
      _
    // Predicated region
    $region30: #{tpu_custom_call.1} parent=1 // pred_check
      _
    $region31: #{tpu_custom_call.1} parent=1 // pred_check_branch
      %113 = sbr.rel (0) target = $region33
    $region32: #{tpu_custom_call.1} parent=1 // pred_region
      %115 = vsyncadd [#allocation16], 0
      %s116 = sshll.u32 %s7, 4
      %s117 = int_to_ptr.hbm [resolvable:$true] %s116
      %s118 = sshll.u32 [#allocation17], 4
      %s119 = int_to_ptr.vmem [resolvable:$true] %s118
      %124 = dma.hbm_to_vmem [thread:$0]  %s117, 4096, %s119, [#allocation16], 256, 256, 16
    $region33: #{tpu_custom_call.1} parent=1 // pred_fallthru
      _
    // Predicated region
    $region34: #{tpu_custom_call.1} parent=1 // pred_check
      _
    $region35: #{tpu_custom_call.1} parent=1 // pred_check_branch
      %126 = sbr.rel (0) target = $region37
    $region36: #{tpu_custom_call.1} parent=1 // pred_region
      _
    $region37: #{tpu_custom_call.1} parent=1 // pred_fallthru
      _
    // Predicated region
    $region38: #{tpu_custom_call.1} parent=1 // pred_check
      _
    $region39: #{tpu_custom_call.1} parent=1 // pred_check_branch
      %128 = sbr.rel (0) target = $region41
    $region40: #{tpu_custom_call.1} parent=1 // pred_region
      %130 = vsyncadd [#allocation19], 0
      %s131 = sshll.u32 %s9, 4
      %s132 = int_to_ptr.hbm [resolvable:$true] %s131
      %s133 = sshll.u32 [#allocation18], 4
      %s134 = int_to_ptr.vmem [resolvable:$true] %s133
      %139 = dma.hbm_to_vmem [thread:$0]  %s132, 4096, %s134, [#allocation19], 256, 256, 16
    $region41: #{tpu_custom_call.1} parent=1 // pred_fallthru
      _
    // Predicated region
    $region42: #{tpu_custom_call.1} parent=1 // pred_check
      _
    $region43: #{tpu_custom_call.1} parent=1 // pred_check_branch
      %141 = sbr.rel (0) target = $region45
    $region44: #{tpu_custom_call.1} parent=1 // pred_region
      %143 = vsyncadd [#allocation19], 0
      %s144 = sshll.u32 %s10, 4
      %s145 = int_to_ptr.hbm [resolvable:$true] %s144
      %s146 = sshll.u32 [#allocation20], 4
      %s147 = int_to_ptr.vmem [resolvable:$true] %s146
      %152 = dma.hbm_to_vmem [thread:$0]  %s145, 4096, %s147, [#allocation19], 256, 256, 16
    $region45: #{tpu_custom_call.1} parent=1 // pred_fallthru
      _
    // Predicated region
    $region46: #{tpu_custom_call.1} parent=1 // pred_check
      _
    $region47: #{tpu_custom_call.1} parent=1 // pred_check_branch
      %154 = sbr.rel (0) target = $region49
    $region48: #{tpu_custom_call.1} parent=1 // pred_region
      %156 = vsyncadd [#allocation22], 0
      %s157 = sshll.u32 %s11, 4
      %s158 = int_to_ptr.hbm [resolvable:$true] %s157
      %s159 = sshll.u32 [#allocation21], 4
      %s160 = int_to_ptr.vmem [resolvable:$true] %s159
      %165 = dma.hbm_to_vmem [thread:$0]  %s158, 4096, %s160, [#allocation22], 256, 256, 16
    $region49: #{tpu_custom_call.1} parent=1 // pred_fallthru
      _
    // Predicated region
    $region50: #{tpu_custom_call.1} parent=1 // pred_check
      _
    $region51: #{tpu_custom_call.1} parent=1 // pred_check_branch
      %167 = sbr.rel (0) target = $region53
    $region52: #{tpu_custom_call.1} parent=1 // pred_region
      _
    $region53: #{tpu_custom_call.1} parent=1 // pred_fallthru
      _
    // Predicated region
    $region54: #{tpu_custom_call.1} parent=1 // pred_check
      _
    $region55: #{tpu_custom_call.1} parent=1 // pred_check_branch
      %169 = sbr.rel (0) target = $region57
    $region56: #{tpu_custom_call.1} parent=1 // pred_region
      _
    $region57: #{tpu_custom_call.1} parent=1 // pred_fallthru
      _
    // Predicated region
    $region58: #{tpu_custom_call.1} parent=1 // pred_check
      _
    $region59: #{tpu_custom_call.1} parent=1 // pred_check_branch
      %171 = sbr.rel (0) target = $region61
    $region60: #{tpu_custom_call.1} parent=1 // pred_region
      _
    $region61: #{tpu_custom_call.1} parent=1 // pred_fallthru
      _
    // Predicated region
    $region62: #{tpu_custom_call.1} parent=1 // pred_check
      _
    $region63: #{tpu_custom_call.1} parent=1 // pred_check_branch
      %173 = sbr.rel (0) target = $region65
    $region64: #{tpu_custom_call.1} parent=1 // pred_region
      _
    $region65: #{tpu_custom_call.1} parent=1 // pred_fallthru
      _
    // Predicated region
    $region66: #{tpu_custom_call.1} parent=1 // pred_check
      _
    $region67: #{tpu_custom_call.1} parent=1 // pred_check_branch
      %175 = sbr.rel (0) target = $region69
    $region68: #{tpu_custom_call.1} parent=1 // pred_region
      _
    $region69: #{tpu_custom_call.1} parent=1 // pred_fallthru
      _
    // Predicated region
    $region70: #{tpu_custom_call.1} parent=1 // pred_check
      _
    $region71: #{tpu_custom_call.1} parent=1 // pred_check_branch
      %177 = sbr.rel (0) target = $region73
    $region72: #{tpu_custom_call.1} parent=1 // pred_region
      %179 = dma.done [#allocation7], 1024
    $region73: #{tpu_custom_call.1} parent=1 // pred_fallthru
      _
    // Predicated region
    $region74: #{tpu_custom_call.1} parent=1 // pred_check
      _
    $region75: #{tpu_custom_call.1} parent=1 // pred_check_branch
      %181 = sbr.rel (0) target = $region77
    $region76: #{tpu_custom_call.1} parent=1 // pred_region
      %183 = dma.done [#allocation10], 4096
    $region77: #{tpu_custom_call.1} parent=1 // pred_fallthru
      _
    // Predicated region
    $region78: #{tpu_custom_call.1} parent=1 // pred_check
      _
    $region79: #{tpu_custom_call.1} parent=1 // pred_check_branch
      %185 = sbr.rel (0) target = $region81
    $region80: #{tpu_custom_call.1} parent=1 // pred_region
      %187 = dma.done [#allocation10], 4096
    $region81: #{tpu_custom_call.1} parent=1 // pred_fallthru
      _
    // Predicated region
    $region82: #{tpu_custom_call.1} parent=1 // pred_check
      _
    $region83: #{tpu_custom_call.1} parent=1 // pred_check_branch
      %189 = sbr.rel (0) target = $region85
    $region84: #{tpu_custom_call.1} parent=1 // pred_region
      %191 = dma.done [#allocation13], 4096
    $region85: #{tpu_custom_call.1} parent=1 // pred_fallthru
      _
    // Predicated region
    $region86: #{tpu_custom_call.1} parent=1 // pred_check
      _
    $region87: #{tpu_custom_call.1} parent=1 // pred_check_branch
      %193 = sbr.rel (0) target = $region89
    $region88: #{tpu_custom_call.1} parent=1 // pred_region
      %195 = dma.done [#allocation13], 4096
    $region89: #{tpu_custom_call.1} parent=1 // pred_fallthru
      _
    // Predicated region
    $region90: #{tpu_custom_call.1} parent=1 // pred_check
      _
    $region91: #{tpu_custom_call.1} parent=1 // pred_check_branch
      %197 = sbr.rel (0) target = $region93
    $region92: #{tpu_custom_call.1} parent=1 // pred_region
      %199 = dma.done [#allocation16], 4096
    $region93: #{tpu_custom_call.1} parent=1 // pred_fallthru
      _
    // Predicated region
    $region94: #{tpu_custom_call.1} parent=1 // pred_check
      _
    $region95: #{tpu_custom_call.1} parent=1 // pred_check_branch
      %201 = sbr.rel (0) target = $region97
    $region96: #{tpu_custom_call.1} parent=1 // pred_region
      %203 = dma.done [#allocation16], 4096
    $region97: #{tpu_custom_call.1} parent=1 // pred_fallthru
      _
    // Predicated region
    $region98: #{tpu_custom_call.1} parent=1 // pred_check
      _
    $region99: #{tpu_custom_call.1} parent=1 // pred_check_branch
      %205 = sbr.rel (0) target = $region101
    $region100: #{tpu_custom_call.1} parent=1 // pred_region
      %207 = dma.done [#allocation19], 4096
    $region101: #{tpu_custom_call.1} parent=1 // pred_fallthru
      _
    // Predicated region
    $region102: #{tpu_custom_call.1} parent=1 // pred_check
      _
    $region103: #{tpu_custom_call.1} parent=1 // pred_check_branch
      %209 = sbr.rel (0) target = $region105
    $region104: #{tpu_custom_call.1} parent=1 // pred_region
      %211 = dma.done [#allocation19], 4096
    $region105: #{tpu_custom_call.1} parent=1 // pred_fallthru
      _
    // Predicated region
    $region106: #{tpu_custom_call.1} parent=1 // pred_check
      _
    $region107: #{tpu_custom_call.1} parent=1 // pred_check_branch
      %213 = sbr.rel (0) target = $region109
    $region108: #{tpu_custom_call.1} parent=1 // pred_region
      %215 = dma.done [#allocation22], 4096
    $region109: #{tpu_custom_call.1} parent=1 // pred_fallthru
      _
    %v217 = vld [vmem:[#allocation6] sm:$0xff]
    %s218 = scalar_lea.vmem [#allocation2], 56
    %219 = vst [vmem:[%s218] sm:$0xff] %v217
    %s220 = scalar_lea.vmem [#allocation6], 8
    %v221 = vld [vmem:[%s220] sm:$0xff]
    %s222 = scalar_lea.vmem [#allocation2], 48
    %223 = vst [vmem:[%s222] sm:$0xff] %v221
    %s224 = scalar_lea.vmem [#allocation6], 16
    %v225 = vld [vmem:[%s224] sm:$0xff]
    %s226 = scalar_lea.vmem [#allocation2], 40
    %227 = vst [vmem:[%s226] sm:$0xff] %v225
    %s228 = scalar_lea.vmem [#allocation6], 24
    %v229 = vld [vmem:[%s228] sm:$0xff]
    %s230 = scalar_lea.vmem [#allocation2], 32
    %231 = vst [vmem:[%s230] sm:$0xff] %v229
    %s232 = scalar_lea.vmem [#allocation6], 32
    %v233 = vld [vmem:[%s232] sm:$0xff]
    %s234 = scalar_lea.vmem [#allocation2], 24
    %235 = vst [vmem:[%s234] sm:$0xff] %v233
    %s236 = scalar_lea.vmem [#allocation6], 40
    %v237 = vld [vmem:[%s236] sm:$0xff]
    %s238 = scalar_lea.vmem [#allocation2], 16
    %239 = vst [vmem:[%s238] sm:$0xff] %v237
    %s240 = scalar_lea.vmem [#allocation6], 48
    %v241 = vld [vmem:[%s240] sm:$0xff]
    %s242 = scalar_lea.vmem [#allocation2], 8
    %243 = vst [vmem:[%s242] sm:$0xff] %v241
    %s244 = scalar_lea.vmem [#allocation6], 56
    %v245 = vld [vmem:[%s244] sm:$0xff]
    %246 = vst [vmem:[#allocation2] sm:$0xff] %v245
    %v247 = vld [vmem:[#allocation6] sm:$0xff]
    %v248 = vld [vmem:[#allocation6 + $0x8] sm:$0xff]
    %v249 = vld [vmem:[#allocation6 + $0x10] sm:$0xff]
    %v250 = vld [vmem:[#allocation6 + $0x18] sm:$0xff]
    %v251 = vld [vmem:[#allocation6 + $0x20] sm:$0xff]
    %v252 = vld [vmem:[#allocation6 + $0x28] sm:$0xff]
    %v253 = vld [vmem:[#allocation6 + $0x30] sm:$0xff]
    %v254 = vld [vmem:[#allocation6 + $0x38] sm:$0xff]
    %v255 = vpack.c.bf16 %v248, %v247
    %v256 = vpack.c.bf16 %v250, %v249
    %v257 = vpack.c.bf16 %v252, %v251
    %v258 = vpack.c.bf16 %v254, %v253
    %v259 = vld [vmem:[#allocation9] sm:$0xff]
    %v260 = vld [vmem:[#allocation9 + $0x8] sm:$0xff]
    %v261 = vld [vmem:[#allocation9 + $0x10] sm:$0xff]
    %v262 = vld [vmem:[#allocation9 + $0x18] sm:$0xff]
    %v263 = vld [vmem:[#allocation9 + $0x20] sm:$0xff]
    %v264 = vld [vmem:[#allocation9 + $0x28] sm:$0xff]
    %v265 = vld [vmem:[#allocation9 + $0x30] sm:$0xff]
    %v266 = vld [vmem:[#allocation9 + $0x38] sm:$0xff]
    %v267 = vld [vmem:[#allocation9 + $0x40] sm:$0xff]
    %v268 = vld [vmem:[#allocation9 + $0x48] sm:$0xff]
    %v269 = vld [vmem:[#allocation9 + $0x50] sm:$0xff]
    %v270 = vld [vmem:[#allocation9 + $0x58] sm:$0xff]
    %v271 = vld [vmem:[#allocation9 + $0x60] sm:$0xff]
    %v272 = vld [vmem:[#allocation9 + $0x68] sm:$0xff]
    %v273 = vld [vmem:[#allocation9 + $0x70] sm:$0xff]
    %v274 = vld [vmem:[#allocation9 + $0x78] sm:$0xff]
    %v275 = vld [vmem:[#allocation9 + $0x80] sm:$0xff]
    %v276 = vld [vmem:[#allocation9 + $0x88] sm:$0xff]
    %v277 = vld [vmem:[#allocation9 + $0x90] sm:$0xff]
    %v278 = vld [vmem:[#allocation9 + $0x98] sm:$0xff]
    %v279 = vld [vmem:[#allocation9 + $0xa0] sm:$0xff]
    %v280 = vld [vmem:[#allocation9 + $0xa8] sm:$0xff]
    %v281 = vld [vmem:[#allocation9 + $0xb0] sm:$0xff]
    %v282 = vld [vmem:[#allocation9 + $0xb8] sm:$0xff]
    %v283 = vld [vmem:[#allocation9 + $0xc0] sm:$0xff]
    %v284 = vld [vmem:[#allocation9 + $0xc8] sm:$0xff]
    %v285 = vld [vmem:[#allocation9 + $0xd0] sm:$0xff]
    %v286 = vld [vmem:[#allocation9 + $0xd8] sm:$0xff]
    %v287 = vld [vmem:[#allocation9 + $0xe0] sm:$0xff]
    %v288 = vld [vmem:[#allocation9 + $0xe8] sm:$0xff]
    %v289 = vld [vmem:[#allocation9 + $0xf0] sm:$0xff]
    %v290 = vld [vmem:[#allocation9 + $0xf8] sm:$0xff]
    %v291 = vld [vmem:[#allocation2] sm:$0xff]
    %v292 = vld [vmem:[#allocation2 + $0x8] sm:$0xff]
    %v293 = vld [vmem:[#allocation2 + $0x10] sm:$0xff]
    %v294 = vld [vmem:[#allocation2 + $0x18] sm:$0xff]
    %v295 = vld [vmem:[#allocation2 + $0x20] sm:$0xff]
    %v296 = vld [vmem:[#allocation2 + $0x28] sm:$0xff]
    %v297 = vld [vmem:[#allocation2 + $0x30] sm:$0xff]
    %v298 = vld [vmem:[#allocation2 + $0x38] sm:$0xff]
    %v299 = vpack.c.bf16 %v292, %v291
    %v300 = vpack.c.bf16 %v294, %v293
    %v301 = vpack.c.bf16 %v296, %v295
    %v302 = vpack.c.bf16 %v298, %v297
    %v303 = vld [vmem:[#allocation11] sm:$0xff]
    %v304 = vld [vmem:[#allocation11 + $0x8] sm:$0xff]
    %v305 = vld [vmem:[#allocation11 + $0x10] sm:$0xff]
    %v306 = vld [vmem:[#allocation11 + $0x18] sm:$0xff]
    %v307 = vld [vmem:[#allocation11 + $0x20] sm:$0xff]
    %v308 = vld [vmem:[#allocation11 + $0x28] sm:$0xff]
    %v309 = vld [vmem:[#allocation11 + $0x30] sm:$0xff]
    %v310 = vld [vmem:[#allocation11 + $0x38] sm:$0xff]
    %v311 = vld [vmem:[#allocation11 + $0x40] sm:$0xff]
    %v312 = vld [vmem:[#allocation11 + $0x48] sm:$0xff]
    %v313 = vld [vmem:[#allocation11 + $0x50] sm:$0xff]
    %v314 = vld [vmem:[#allocation11 + $0x58] sm:$0xff]
    %v315 = vld [vmem:[#allocation11 + $0x60] sm:$0xff]
    %v316 = vld [vmem:[#allocation11 + $0x68] sm:$0xff]
    %v317 = vld [vmem:[#allocation11 + $0x70] sm:$0xff]
    %v318 = vld [vmem:[#allocation11 + $0x78] sm:$0xff]
    %v319 = vld [vmem:[#allocation11 + $0x80] sm:$0xff]
    %v320 = vld [vmem:[#allocation11 + $0x88] sm:$0xff]
    %v321 = vld [vmem:[#allocation11 + $0x90] sm:$0xff]
    %v322 = vld [vmem:[#allocation11 + $0x98] sm:$0xff]
    %v323 = vld [vmem:[#allocation11 + $0xa0] sm:$0xff]
    %v324 = vld [vmem:[#allocation11 + $0xa8] sm:$0xff]
    %v325 = vld [vmem:[#allocation11 + $0xb0] sm:$0xff]
    %v326 = vld [vmem:[#allocation11 + $0xb8] sm:$0xff]
    %v327 = vld [vmem:[#allocation11 + $0xc0] sm:$0xff]
    %v328 = vld [vmem:[#allocation11 + $0xc8] sm:$0xff]
    %v329 = vld [vmem:[#allocation11 + $0xd0] sm:$0xff]
    %v330 = vld [vmem:[#allocation11 + $0xd8] sm:$0xff]
    %v331 = vld [vmem:[#allocation11 + $0xe0] sm:$0xff]
    %v332 = vld [vmem:[#allocation11 + $0xe8] sm:$0xff]
    %v333 = vld [vmem:[#allocation11 + $0xf0] sm:$0xff]
    %v334 = vld [vmem:[#allocation11 + $0xf8] sm:$0xff]
    %v367 = vunpack.c.l.b16 %v303
    %v368 = vunpack.c.h.b16 %v303
    %v369 = vunpack.c.l.b16 %v304
    %v370 = vunpack.c.h.b16 %v304
    %v371 = vunpack.c.l.b16 %v305
    %v372 = vunpack.c.h.b16 %v305
    %v373 = vunpack.c.l.b16 %v306
    %v374 = vunpack.c.h.b16 %v306
    %v375 = vunpack.c.l.b16 %v307
    %v376 = vunpack.c.h.b16 %v307
    %v377 = vunpack.c.l.b16 %v308
    %v378 = vunpack.c.h.b16 %v308
    %v379 = vunpack.c.l.b16 %v309
    %v380 = vunpack.c.h.b16 %v309
    %v381 = vunpack.c.l.b16 %v310
    %v382 = vunpack.c.h.b16 %v310
    %v383 = vunpack.c.l.b16 %v311
    %v384 = vunpack.c.h.b16 %v311
    %v385 = vunpack.c.l.b16 %v312
    %v386 = vunpack.c.h.b16 %v312
    %v387 = vunpack.c.l.b16 %v313
    %v388 = vunpack.c.h.b16 %v313
    %v389 = vunpack.c.l.b16 %v314
    %v390 = vunpack.c.h.b16 %v314
    %v391 = vunpack.c.l.b16 %v315
    %v392 = vunpack.c.h.b16 %v315
    %v393 = vunpack.c.l.b16 %v316
    %v394 = vunpack.c.h.b16 %v316
    %v395 = vunpack.c.l.b16 %v317
    %v396 = vunpack.c.h.b16 %v317
    %v397 = vunpack.c.l.b16 %v318
    %v398 = vunpack.c.h.b16 %v318
    %v399 = vunpack.c.l.b16 %v319
    %v400 = vunpack.c.h.b16 %v319
    %v401 = vunpack.c.l.b16 %v320
    %v402 = vunpack.c.h.b16 %v320
    %v403 = vunpack.c.l.b16 %v321
    %v404 = vunpack.c.h.b16 %v321
    %v405 = vunpack.c.l.b16 %v322
    %v406 = vunpack.c.h.b16 %v322
    %v407 = vunpack.c.l.b16 %v323
    %v408 = vunpack.c.h.b16 %v323
    %v409 = vunpack.c.l.b16 %v324
    %v410 = vunpack.c.h.b16 %v324
    %v411 = vunpack.c.l.b16 %v325
    %v412 = vunpack.c.h.b16 %v325
    %v413 = vunpack.c.l.b16 %v326
    %v414 = vunpack.c.h.b16 %v326
    %v415 = vunpack.c.l.b16 %v327
    %v416 = vunpack.c.h.b16 %v327
    %v417 = vunpack.c.l.b16 %v328
    %v418 = vunpack.c.h.b16 %v328
    %v419 = vunpack.c.l.b16 %v329
    %v420 = vunpack.c.h.b16 %v329
    %v421 = vunpack.c.l.b16 %v330
    %v422 = vunpack.c.h.b16 %v330
    %v423 = vunpack.c.l.b16 %v331
    %v424 = vunpack.c.h.b16 %v331
    %v425 = vunpack.c.l.b16 %v332
    %v426 = vunpack.c.h.b16 %v332
    %v427 = vunpack.c.l.b16 %v333
    %v428 = vunpack.c.h.b16 %v333
    %v429 = vunpack.c.l.b16 %v334
    %v430 = vunpack.c.h.b16 %v334
    %v431 = vpack.c.b16 %v371, %v367
    %v432 = vpack.c.b16 %v372, %v368
    %v433 = vpack.c.b16 %v373, %v369
    %v434 = vpack.c.b16 %v374, %v370
    %v435 = vpack.c.b16 %v379, %v375
    %v436 = vpack.c.b16 %v380, %v376
    %v437 = vpack.c.b16 %v381, %v377
    %v438 = vpack.c.b16 %v382, %v378
    %v439 = vpack.c.b16 %v387, %v383
    %v440 = vpack.c.b16 %v388, %v384
    %v441 = vpack.c.b16 %v389, %v385
    %v442 = vpack.c.b16 %v390, %v386
    %v443 = vpack.c.b16 %v395, %v391
    %v444 = vpack.c.b16 %v396, %v392
    %v445 = vpack.c.b16 %v397, %v393
    %v446 = vpack.c.b16 %v398, %v394
    %v447 = vpack.c.b16 %v403, %v399
    %v448 = vpack.c.b16 %v404, %v400
    %v449 = vpack.c.b16 %v405, %v401
    %v450 = vpack.c.b16 %v406, %v402
    %v451 = vpack.c.b16 %v411, %v407
    %v452 = vpack.c.b16 %v412, %v408
    %v453 = vpack.c.b16 %v413, %v409
    %v454 = vpack.c.b16 %v414, %v410
    %v455 = vpack.c.b16 %v419, %v415
    %v456 = vpack.c.b16 %v420, %v416
    %v457 = vpack.c.b16 %v421, %v417
    %v458 = vpack.c.b16 %v422, %v418
    %v459 = vpack.c.b16 %v427, %v423
    %v460 = vpack.c.b16 %v428, %v424
    %v461 = vpack.c.b16 %v429, %v425
    %v462 = vpack.c.b16 %v430, %v426
    %495 = vmatpush.bf16.msra.mxu0 %v459
    %496 = vmatpush.bf16.msra.mxu0 %v455
    %497 = vmatpush.bf16.msra.mxu0 %v451
    %498 = vmatpush.bf16.msra.mxu0 %v447
    %499 = vmatpush.bf16.msra.mxu0 %v443
    %500 = vmatpush.bf16.msra.mxu0 %v439
    %501 = vmatpush.bf16.msra.mxu0 %v435
    %502 = vmatpush.bf16.msra.mxu0 %v431
    %503 = vmatmul.bf16.gmra.mxu0 %v299
    %v504 = vpop.f32.mrf.mxu0
    %v505 = vadd.f32 0.0, %v504
    %v506 = vpop.f32.mrf.mxu0
    %v507 = vadd.f32 0.0, %v506
    %508 = vmatmul.bf16.gmra.mxu0 %v300
    %v509 = vpop.f32.mrf.mxu0
    %v510 = vadd.f32 0.0, %v509
    %v511 = vpop.f32.mrf.mxu0
    %v512 = vadd.f32 0.0, %v511
    %513 = vmatmul.bf16.gmra.mxu0 %v301
    %v514 = vpop.f32.mrf.mxu0
    %v515 = vadd.f32 0.0, %v514
    %v516 = vpop.f32.mrf.mxu0
    %v517 = vadd.f32 0.0, %v516
    %518 = vmatmul.bf16.gmra.mxu0 %v302
    %v519 = vpop.f32.mrf.mxu0
    %v520 = vadd.f32 0.0, %v519
    %v521 = vpop.f32.mrf.mxu0
    %v522 = vadd.f32 0.0, %v521
    %523 = vdwg.mxu0
    %524 = vmatpush.bf16.msra.mxu0 %v460
    %525 = vmatpush.bf16.msra.mxu0 %v456
    %526 = vmatpush.bf16.msra.mxu0 %v452
    %527 = vmatpush.bf16.msra.mxu0 %v448
    %528 = vmatpush.bf16.msra.mxu0 %v444
    %529 = vmatpush.bf16.msra.mxu0 %v440
    %530 = vmatpush.bf16.msra.mxu0 %v436
    %531 = vmatpush.bf16.msra.mxu0 %v432
    %532 = vmatmul.bf16.gmra.mxu0 %v299
    %v533 = vpop.f32.mrf.mxu0
    %v534 = vadd.f32 0.0, %v533
    %v535 = vpop.f32.mrf.mxu0
    %v536 = vadd.f32 0.0, %v535
    %537 = vmatmul.bf16.gmra.mxu0 %v300
    %v538 = vpop.f32.mrf.mxu0
    %v539 = vadd.f32 0.0, %v538
    %v540 = vpop.f32.mrf.mxu0
    %v541 = vadd.f32 0.0, %v540
    %542 = vmatmul.bf16.gmra.mxu0 %v301
    %v543 = vpop.f32.mrf.mxu0
    %v544 = vadd.f32 0.0, %v543
    %v545 = vpop.f32.mrf.mxu0
    %v546 = vadd.f32 0.0, %v545
    %547 = vmatmul.bf16.gmra.mxu0 %v302
    %v548 = vpop.f32.mrf.mxu0
    %v549 = vadd.f32 0.0, %v548
    %v550 = vpop.f32.mrf.mxu0
    %v551 = vadd.f32 0.0, %v550
    %552 = vdwg.mxu0
    %553 = vmatpush.bf16.msra.mxu0 %v461
    %554 = vmatpush.bf16.msra.mxu0 %v457
    %555 = vmatpush.bf16.msra.mxu0 %v453
    %556 = vmatpush.bf16.msra.mxu0 %v449
    %557 = vmatpush.bf16.msra.mxu0 %v445
    %558 = vmatpush.bf16.msra.mxu0 %v441
    %559 = vmatpush.bf16.msra.mxu0 %v437
    %560 = vmatpush.bf16.msra.mxu0 %v433
    %561 = vmatmul.bf16.gmra.mxu0 %v299
    %v562 = vpop.f32.mrf.mxu0
    %v563 = vadd.f32 0.0, %v562
    %v564 = vpop.f32.mrf.mxu0
    %v565 = vadd.f32 0.0, %v564
    %566 = vmatmul.bf16.gmra.mxu0 %v300
    %v567 = vpop.f32.mrf.mxu0
    %v568 = vadd.f32 0.0, %v567
    %v569 = vpop.f32.mrf.mxu0
    %v570 = vadd.f32 0.0, %v569
    %571 = vmatmul.bf16.gmra.mxu0 %v301
    %v572 = vpop.f32.mrf.mxu0
    %v573 = vadd.f32 0.0, %v572
    %v574 = vpop.f32.mrf.mxu0
    %v575 = vadd.f32 0.0, %v574
    %576 = vmatmul.bf16.gmra.mxu0 %v302
    %v577 = vpop.f32.mrf.mxu0
    %v578 = vadd.f32 0.0, %v577
    %v579 = vpop.f32.mrf.mxu0
    %v580 = vadd.f32 0.0, %v579
    %581 = vdwg.mxu0
    %582 = vmatpush.bf16.msra.mxu0 %v462
    %583 = vmatpush.bf16.msra.mxu0 %v458
    %584 = vmatpush.bf16.msra.mxu0 %v454
    %585 = vmatpush.bf16.msra.mxu0 %v450
    %586 = vmatpush.bf16.msra.mxu0 %v446
    %587 = vmatpush.bf16.msra.mxu0 %v442
    %588 = vmatpush.bf16.msra.mxu0 %v438
    %589 = vmatpush.bf16.msra.mxu0 %v434
    %590 = vmatmul.bf16.gmra.mxu0 %v299
    %v591 = vpop.f32.mrf.mxu0
    %v592 = vadd.f32 0.0, %v591
    %v593 = vpop.f32.mrf.mxu0
    %v594 = vadd.f32 0.0, %v593
    %595 = vmatmul.bf16.gmra.mxu0 %v300
    %v596 = vpop.f32.mrf.mxu0
    %v597 = vadd.f32 0.0, %v596
    %v598 = vpop.f32.mrf.mxu0
    %v599 = vadd.f32 0.0, %v598
    %600 = vmatmul.bf16.gmra.mxu0 %v301
    %v601 = vpop.f32.mrf.mxu0
    %v602 = vadd.f32 0.0, %v601
    %v603 = vpop.f32.mrf.mxu0
    %v604 = vadd.f32 0.0, %v603
    %605 = vmatmul.bf16.gmra.mxu0 %v302
    %v606 = vpop.f32.mrf.mxu0
    %v607 = vadd.f32 0.0, %v606
    %v608 = vpop.f32.mrf.mxu0
    %v609 = vadd.f32 0.0, %v608
    %610 = vdwg.mxu0
    %v643 = vunpack.c.l.b16 %v259
    %v644 = vunpack.c.h.b16 %v259
    %v645 = vunpack.c.l.b16 %v260
    %v646 = vunpack.c.h.b16 %v260
    %v647 = vunpack.c.l.b16 %v261
    %v648 = vunpack.c.h.b16 %v261
    %v649 = vunpack.c.l.b16 %v262
    %v650 = vunpack.c.h.b16 %v262
    %v651 = vunpack.c.l.b16 %v263
    %v652 = vunpack.c.h.b16 %v263
    %v653 = vunpack.c.l.b16 %v264
    %v654 = vunpack.c.h.b16 %v264
    %v655 = vunpack.c.l.b16 %v265
    %v656 = vunpack.c.h.b16 %v265
    %v657 = vunpack.c.l.b16 %v266
    %v658 = vunpack.c.h.b16 %v266
    %v659 = vunpack.c.l.b16 %v267
    %v660 = vunpack.c.h.b16 %v267
    %v661 = vunpack.c.l.b16 %v268
    %v662 = vunpack.c.h.b16 %v268
    %v663 = vunpack.c.l.b16 %v269
    %v664 = vunpack.c.h.b16 %v269
    %v665 = vunpack.c.l.b16 %v270
    %v666 = vunpack.c.h.b16 %v270
    %v667 = vunpack.c.l.b16 %v271
    %v668 = vunpack.c.h.b16 %v271
    %v669 = vunpack.c.l.b16 %v272
    %v670 = vunpack.c.h.b16 %v272
    %v671 = vunpack.c.l.b16 %v273
    %v672 = vunpack.c.h.b16 %v273
    %v673 = vunpack.c.l.b16 %v274
    %v674 = vunpack.c.h.b16 %v274
    %v675 = vunpack.c.l.b16 %v275
    %v676 = vunpack.c.h.b16 %v275
    %v677 = vunpack.c.l.b16 %v276
    %v678 = vunpack.c.h.b16 %v276
    %v679 = vunpack.c.l.b16 %v277
    %v680 = vunpack.c.h.b16 %v277
    %v681 = vunpack.c.l.b16 %v278
    %v682 = vunpack.c.h.b16 %v278
    %v683 = vunpack.c.l.b16 %v279
    %v684 = vunpack.c.h.b16 %v279
    %v685 = vunpack.c.l.b16 %v280
    %v686 = vunpack.c.h.b16 %v280
    %v687 = vunpack.c.l.b16 %v281
    %v688 = vunpack.c.h.b16 %v281
    %v689 = vunpack.c.l.b16 %v282
    %v690 = vunpack.c.h.b16 %v282
    %v691 = vunpack.c.l.b16 %v283
    %v692 = vunpack.c.h.b16 %v283
    %v693 = vunpack.c.l.b16 %v284
    %v694 = vunpack.c.h.b16 %v284
    %v695 = vunpack.c.l.b16 %v285
    %v696 = vunpack.c.h.b16 %v285
    %v697 = vunpack.c.l.b16 %v286
    %v698 = vunpack.c.h.b16 %v286
    %v699 = vunpack.c.l.b16 %v287
    %v700 = vunpack.c.h.b16 %v287
    %v701 = vunpack.c.l.b16 %v288
    %v702 = vunpack.c.h.b16 %v288
    %v703 = vunpack.c.l.b16 %v289
    %v704 = vunpack.c.h.b16 %v289
    %v705 = vunpack.c.l.b16 %v290
    %v706 = vunpack.c.h.b16 %v290
    %v707 = vpack.c.b16 %v647, %v643
    %v708 = vpack.c.b16 %v648, %v644
    %v709 = vpack.c.b16 %v649, %v645
    %v710 = vpack.c.b16 %v650, %v646
    %v711 = vpack.c.b16 %v655, %v651
    %v712 = vpack.c.b16 %v656, %v652
    %v713 = vpack.c.b16 %v657, %v653
    %v714 = vpack.c.b16 %v658, %v654
    %v715 = vpack.c.b16 %v663, %v659
    %v716 = vpack.c.b16 %v664, %v660
    %v717 = vpack.c.b16 %v665, %v661
    %v718 = vpack.c.b16 %v666, %v662
    %v719 = vpack.c.b16 %v671, %v667
    %v720 = vpack.c.b16 %v672, %v668
    %v721 = vpack.c.b16 %v673, %v669
    %v722 = vpack.c.b16 %v674, %v670
    %v723 = vpack.c.b16 %v679, %v675
    %v724 = vpack.c.b16 %v680, %v676
    %v725 = vpack.c.b16 %v681, %v677
    %v726 = vpack.c.b16 %v682, %v678
    %v727 = vpack.c.b16 %v687, %v683
    %v728 = vpack.c.b16 %v688, %v684
    %v729 = vpack.c.b16 %v689, %v685
    %v730 = vpack.c.b16 %v690, %v686
    %v731 = vpack.c.b16 %v695, %v691
    %v732 = vpack.c.b16 %v696, %v692
    %v733 = vpack.c.b16 %v697, %v693
    %v734 = vpack.c.b16 %v698, %v694
    %v735 = vpack.c.b16 %v703, %v699
    %v736 = vpack.c.b16 %v704, %v700
    %v737 = vpack.c.b16 %v705, %v701
    %v738 = vpack.c.b16 %v706, %v702
    %771 = vmatpush.bf16.msra.mxu0 %v735
    %772 = vmatpush.bf16.msra.mxu0 %v731
    %773 = vmatpush.bf16.msra.mxu0 %v727
    %774 = vmatpush.bf16.msra.mxu0 %v723
    %775 = vmatpush.bf16.msra.mxu0 %v719
    %776 = vmatpush.bf16.msra.mxu0 %v715
    %777 = vmatpush.bf16.msra.mxu0 %v711
    %778 = vmatpush.bf16.msra.mxu0 %v707
    %779 = vmatmul.bf16.gmra.mxu0 %v255
    %v780 = vpop.f32.mrf.mxu0
    %v781 = vadd.f32 %v505, %v780
    %v782 = vpop.f32.mrf.mxu0
    %v783 = vadd.f32 %v507, %v782
    %784 = vmatmul.bf16.gmra.mxu0 %v256
    %v785 = vpop.f32.mrf.mxu0
    %v786 = vadd.f32 %v510, %v785
    %v787 = vpop.f32.mrf.mxu0
    %v788 = vadd.f32 %v512, %v787
    %789 = vmatmul.bf16.gmra.mxu0 %v257
    %v790 = vpop.f32.mrf.mxu0
    %v791 = vadd.f32 %v515, %v790
    %v792 = vpop.f32.mrf.mxu0
    %v793 = vadd.f32 %v517, %v792
    %794 = vmatmul.bf16.gmra.mxu0 %v258
    %v795 = vpop.f32.mrf.mxu0
    %v796 = vadd.f32 %v520, %v795
    %v797 = vpop.f32.mrf.mxu0
    %v798 = vadd.f32 %v522, %v797
    %799 = vdwg.mxu0
    %800 = vmatpush.bf16.msra.mxu0 %v736
    %801 = vmatpush.bf16.msra.mxu0 %v732
    %802 = vmatpush.bf16.msra.mxu0 %v728
    %803 = vmatpush.bf16.msra.mxu0 %v724
    %804 = vmatpush.bf16.msra.mxu0 %v720
    %805 = vmatpush.bf16.msra.mxu0 %v716
    %806 = vmatpush.bf16.msra.mxu0 %v712
    %807 = vmatpush.bf16.msra.mxu0 %v708
    %808 = vmatmul.bf16.gmra.mxu0 %v255
    %v809 = vpop.f32.mrf.mxu0
    %v810 = vadd.f32 %v534, %v809
    %v811 = vpop.f32.mrf.mxu0
    %v812 = vadd.f32 %v536, %v811
    %813 = vmatmul.bf16.gmra.mxu0 %v256
    %v814 = vpop.f32.mrf.mxu0
    %v815 = vadd.f32 %v539, %v814
    %v816 = vpop.f32.mrf.mxu0
    %v817 = vadd.f32 %v541, %v816
    %818 = vmatmul.bf16.gmra.mxu0 %v257
    %v819 = vpop.f32.mrf.mxu0
    %v820 = vadd.f32 %v544, %v819
    %v821 = vpop.f32.mrf.mxu0
    %v822 = vadd.f32 %v546, %v821
    %823 = vmatmul.bf16.gmra.mxu0 %v258
    %v824 = vpop.f32.mrf.mxu0
    %v825 = vadd.f32 %v549, %v824
    %v826 = vpop.f32.mrf.mxu0
    %v827 = vadd.f32 %v551, %v826
    %828 = vdwg.mxu0
    %829 = vmatpush.bf16.msra.mxu0 %v737
    %830 = vmatpush.bf16.msra.mxu0 %v733
    %831 = vmatpush.bf16.msra.mxu0 %v729
    %832 = vmatpush.bf16.msra.mxu0 %v725
    %833 = vmatpush.bf16.msra.mxu0 %v721
    %834 = vmatpush.bf16.msra.mxu0 %v717
    %835 = vmatpush.bf16.msra.mxu0 %v713
    %836 = vmatpush.bf16.msra.mxu0 %v709
    %837 = vmatmul.bf16.gmra.mxu0 %v255
    %v838 = vpop.f32.mrf.mxu0
    %v839 = vadd.f32 %v563, %v838
    %v840 = vpop.f32.mrf.mxu0
    %v841 = vadd.f32 %v565, %v840
    %842 = vmatmul.bf16.gmra.mxu0 %v256
    %v843 = vpop.f32.mrf.mxu0
    %v844 = vadd.f32 %v568, %v843
    %v845 = vpop.f32.mrf.mxu0
    %v846 = vadd.f32 %v570, %v845
    %847 = vmatmul.bf16.gmra.mxu0 %v257
    %v848 = vpop.f32.mrf.mxu0
    %v849 = vadd.f32 %v573, %v848
    %v850 = vpop.f32.mrf.mxu0
    %v851 = vadd.f32 %v575, %v850
    %852 = vmatmul.bf16.gmra.mxu0 %v258
    %v853 = vpop.f32.mrf.mxu0
    %v854 = vadd.f32 %v578, %v853
    %v855 = vpop.f32.mrf.mxu0
    %v856 = vadd.f32 %v580, %v855
    %857 = vdwg.mxu0
    %858 = vmatpush.bf16.msra.mxu0 %v738
    %859 = vmatpush.bf16.msra.mxu0 %v734
    %860 = vmatpush.bf16.msra.mxu0 %v730
    %861 = vmatpush.bf16.msra.mxu0 %v726
    %862 = vmatpush.bf16.msra.mxu0 %v722
    %863 = vmatpush.bf16.msra.mxu0 %v718
    %864 = vmatpush.bf16.msra.mxu0 %v714
    %865 = vmatpush.bf16.msra.mxu0 %v710
    %866 = vmatmul.bf16.gmra.mxu0 %v255
    %v867 = vpop.f32.mrf.mxu0
    %v868 = vadd.f32 %v592, %v867
    %v869 = vpop.f32.mrf.mxu0
    %v870 = vadd.f32 %v594, %v869
    %871 = vmatmul.bf16.gmra.mxu0 %v256
    %v872 = vpop.f32.mrf.mxu0
    %v873 = vadd.f32 %v597, %v872
    %v874 = vpop.f32.mrf.mxu0
    %v875 = vadd.f32 %v599, %v874
    %876 = vmatmul.bf16.gmra.mxu0 %v257
    %v877 = vpop.f32.mrf.mxu0
    %v878 = vadd.f32 %v602, %v877
    %v879 = vpop.f32.mrf.mxu0
    %v880 = vadd.f32 %v604, %v879
    %881 = vmatmul.bf16.gmra.mxu0 %v258
    %v882 = vpop.f32.mrf.mxu0
    %v883 = vadd.f32 %v607, %v882
    %v884 = vpop.f32.mrf.mxu0
    %v885 = vadd.f32 %v609, %v884
    %886 = vdwg.mxu0
    %v887 = vld [vmem:[%s4] sm:$0xf]
    %v889 = vperm.slane %v887, 0
    %v890 = vperm.slane %v887, 1
    %v891 = vperm.slane %v887, 2
    %v892 = vperm.slane %v887, 3
    %v897 = vadd.f32 %v781, %v889
    %v898 = vadd.f32 %v810, %v890
    %v899 = vadd.f32 %v839, %v891
    %v900 = vadd.f32 %v868, %v892
    %v901 = vadd.f32 %v783, %v889
    %v902 = vadd.f32 %v812, %v890
    %v903 = vadd.f32 %v841, %v891
    %v904 = vadd.f32 %v870, %v892
    %v905 = vadd.f32 %v786, %v889
    %v906 = vadd.f32 %v815, %v890
    %v907 = vadd.f32 %v844, %v891
    %v908 = vadd.f32 %v873, %v892
    %v909 = vadd.f32 %v788, %v889
    %v910 = vadd.f32 %v817, %v890
    %v911 = vadd.f32 %v846, %v891
    %v912 = vadd.f32 %v875, %v892
    %v913 = vadd.f32 %v791, %v889
    %v914 = vadd.f32 %v820, %v890
    %v915 = vadd.f32 %v849, %v891
    %v916 = vadd.f32 %v878, %v892
    %v917 = vadd.f32 %v793, %v889
    %v918 = vadd.f32 %v822, %v890
    %v919 = vadd.f32 %v851, %v891
    %v920 = vadd.f32 %v880, %v892
    %v921 = vadd.f32 %v796, %v889
    %v922 = vadd.f32 %v825, %v890
    %v923 = vadd.f32 %v854, %v891
    %v924 = vadd.f32 %v883, %v892
    %v925 = vadd.f32 %v798, %v889
    %v926 = vadd.f32 %v827, %v890
    %v927 = vadd.f32 %v856, %v891
    %v928 = vadd.f32 %v885, %v892
    %929 = vst [vmem:[#allocation5] sm:$0xff] %v897
    %930 = vst [vmem:[#allocation5 + $0x8] sm:$0xff] %v898
    %931 = vst [vmem:[#allocation5 + $0x10] sm:$0xff] %v899
    %932 = vst [vmem:[#allocation5 + $0x18] sm:$0xff] %v900
    %933 = vst [vmem:[#allocation5 + $0x20] sm:$0xff] %v901
    %934 = vst [vmem:[#allocation5 + $0x28] sm:$0xff] %v902
    %935 = vst [vmem:[#allocation5 + $0x30] sm:$0xff] %v903
    %936 = vst [vmem:[#allocation5 + $0x38] sm:$0xff] %v904
    %937 = vst [vmem:[#allocation5 + $0x40] sm:$0xff] %v905
    %938 = vst [vmem:[#allocation5 + $0x48] sm:$0xff] %v906
    %939 = vst [vmem:[#allocation5 + $0x50] sm:$0xff] %v907
    %940 = vst [vmem:[#allocation5 + $0x58] sm:$0xff] %v908
    %941 = vst [vmem:[#allocation5 + $0x60] sm:$0xff] %v909
    %942 = vst [vmem:[#allocation5 + $0x68] sm:$0xff] %v910
    %943 = vst [vmem:[#allocation5 + $0x70] sm:$0xff] %v911
    %944 = vst [vmem:[#allocation5 + $0x78] sm:$0xff] %v912
    %945 = vst [vmem:[#allocation5 + $0x80] sm:$0xff] %v913
    %946 = vst [vmem:[#allocation5 + $0x88] sm:$0xff] %v914
    %947 = vst [vmem:[#allocation5 + $0x90] sm:$0xff] %v915
    %948 = vst [vmem:[#allocation5 + $0x98] sm:$0xff] %v916
    %949 = vst [vmem:[#allocation5 + $0xa0] sm:$0xff] %v917
    %950 = vst [vmem:[#allocation5 + $0xa8] sm:$0xff] %v918
    %951 = vst [vmem:[#allocation5 + $0xb0] sm:$0xff] %v919
    %952 = vst [vmem:[#allocation5 + $0xb8] sm:$0xff] %v920
    %953 = vst [vmem:[#allocation5 + $0xc0] sm:$0xff] %v921
    %954 = vst [vmem:[#allocation5 + $0xc8] sm:$0xff] %v922
    %955 = vst [vmem:[#allocation5 + $0xd0] sm:$0xff] %v923
    %956 = vst [vmem:[#allocation5 + $0xd8] sm:$0xff] %v924
    %957 = vst [vmem:[#allocation5 + $0xe0] sm:$0xff] %v925
    %958 = vst [vmem:[#allocation5 + $0xe8] sm:$0xff] %v926
    %959 = vst [vmem:[#allocation5 + $0xf0] sm:$0xff] %v927
    %960 = vst [vmem:[#allocation5 + $0xf8] sm:$0xff] %v928
    %v961 = vld [vmem:[#allocation12] sm:$0xff]
    %v962 = vld [vmem:[#allocation12 + $0x8] sm:$0xff]
    %v963 = vld [vmem:[#allocation12 + $0x10] sm:$0xff]
    %v964 = vld [vmem:[#allocation12 + $0x18] sm:$0xff]
    %v965 = vld [vmem:[#allocation12 + $0x20] sm:$0xff]
    %v966 = vld [vmem:[#allocation12 + $0x28] sm:$0xff]
    %v967 = vld [vmem:[#allocation12 + $0x30] sm:$0xff]
    %v968 = vld [vmem:[#allocation12 + $0x38] sm:$0xff]
    %v969 = vld [vmem:[#allocation12 + $0x40] sm:$0xff]
    %v970 = vld [vmem:[#allocation12 + $0x48] sm:$0xff]
    %v971 = vld [vmem:[#allocation12 + $0x50] sm:$0xff]
    %v972 = vld [vmem:[#allocation12 + $0x58] sm:$0xff]
    %v973 = vld [vmem:[#allocation12 + $0x60] sm:$0xff]
    %v974 = vld [vmem:[#allocation12 + $0x68] sm:$0xff]
    %v975 = vld [vmem:[#allocation12 + $0x70] sm:$0xff]
    %v976 = vld [vmem:[#allocation12 + $0x78] sm:$0xff]
    %v977 = vld [vmem:[#allocation12 + $0x80] sm:$0xff]
    %v978 = vld [vmem:[#allocation12 + $0x88] sm:$0xff]
    %v979 = vld [vmem:[#allocation12 + $0x90] sm:$0xff]
    %v980 = vld [vmem:[#allocation12 + $0x98] sm:$0xff]
    %v981 = vld [vmem:[#allocation12 + $0xa0] sm:$0xff]
    %v982 = vld [vmem:[#allocation12 + $0xa8] sm:$0xff]
    %v983 = vld [vmem:[#allocation12 + $0xb0] sm:$0xff]
    %v984 = vld [vmem:[#allocation12 + $0xb8] sm:$0xff]
    %v985 = vld [vmem:[#allocation12 + $0xc0] sm:$0xff]
    %v986 = vld [vmem:[#allocation12 + $0xc8] sm:$0xff]
    %v987 = vld [vmem:[#allocation12 + $0xd0] sm:$0xff]
    %v988 = vld [vmem:[#allocation12 + $0xd8] sm:$0xff]
    %v989 = vld [vmem:[#allocation12 + $0xe0] sm:$0xff]
    %v990 = vld [vmem:[#allocation12 + $0xe8] sm:$0xff]
    %v991 = vld [vmem:[#allocation12 + $0xf0] sm:$0xff]
    %v992 = vld [vmem:[#allocation12 + $0xf8] sm:$0xff]
    %s993 = smul.u32 0, 4
    %s994 = smul.addr %s993, 8
    %s995 = scalar_lea.vmem [#allocation5], %s994
    %v996 = vld [vmem:[%s995] sm:$0xff]
    %v997 = vld [vmem:[%s995 + $0x8] sm:$0xff]
    %v998 = vld [vmem:[%s995 + $0x10] sm:$0xff]
    %v999 = vld [vmem:[%s995 + $0x18] sm:$0xff]
    %v1032 = vunpack.c.l.b16 %v961
    %v1033 = vunpack.c.h.b16 %v961
    %v1034 = vunpack.c.l.b16 %v962
    %v1035 = vunpack.c.h.b16 %v962
    %v1036 = vunpack.c.l.b16 %v963
    %v1037 = vunpack.c.h.b16 %v963
    %v1038 = vunpack.c.l.b16 %v964
    %v1039 = vunpack.c.h.b16 %v964
    %v1040 = vunpack.c.l.b16 %v965
    %v1041 = vunpack.c.h.b16 %v965
    %v1042 = vunpack.c.l.b16 %v966
    %v1043 = vunpack.c.h.b16 %v966
    %v1044 = vunpack.c.l.b16 %v967
    %v1045 = vunpack.c.h.b16 %v967
    %v1046 = vunpack.c.l.b16 %v968
    %v1047 = vunpack.c.h.b16 %v968
    %v1048 = vunpack.c.l.b16 %v969
    %v1049 = vunpack.c.h.b16 %v969
    %v1050 = vunpack.c.l.b16 %v970
    %v1051 = vunpack.c.h.b16 %v970
    %v1052 = vunpack.c.l.b16 %v971
    %v1053 = vunpack.c.h.b16 %v971
    %v1054 = vunpack.c.l.b16 %v972
    %v1055 = vunpack.c.h.b16 %v972
    %v1056 = vunpack.c.l.b16 %v973
    %v1057 = vunpack.c.h.b16 %v973
    %v1058 = vunpack.c.l.b16 %v974
    %v1059 = vunpack.c.h.b16 %v974
    %v1060 = vunpack.c.l.b16 %v975
    %v1061 = vunpack.c.h.b16 %v975
    %v1062 = vunpack.c.l.b16 %v976
    %v1063 = vunpack.c.h.b16 %v976
    %v1064 = vunpack.c.l.b16 %v977
    %v1065 = vunpack.c.h.b16 %v977
    %v1066 = vunpack.c.l.b16 %v978
    %v1067 = vunpack.c.h.b16 %v978
    %v1068 = vunpack.c.l.b16 %v979
    %v1069 = vunpack.c.h.b16 %v979
    %v1070 = vunpack.c.l.b16 %v980
    %v1071 = vunpack.c.h.b16 %v980
    %v1072 = vunpack.c.l.b16 %v981
    %v1073 = vunpack.c.h.b16 %v981
    %v1074 = vunpack.c.l.b16 %v982
    %v1075 = vunpack.c.h.b16 %v982
    %v1076 = vunpack.c.l.b16 %v983
    %v1077 = vunpack.c.h.b16 %v983
    %v1078 = vunpack.c.l.b16 %v984
    %v1079 = vunpack.c.h.b16 %v984
    %v1080 = vunpack.c.l.b16 %v985
    %v1081 = vunpack.c.h.b16 %v985
    %v1082 = vunpack.c.l.b16 %v986
    %v1083 = vunpack.c.h.b16 %v986
    %v1084 = vunpack.c.l.b16 %v987
    %v1085 = vunpack.c.h.b16 %v987
    %v1086 = vunpack.c.l.b16 %v988
    %v1087 = vunpack.c.h.b16 %v988
    %v1088 = vunpack.c.l.b16 %v989
    %v1089 = vunpack.c.h.b16 %v989
    %v1090 = vunpack.c.l.b16 %v990
    %v1091 = vunpack.c.h.b16 %v990
    %v1092 = vunpack.c.l.b16 %v991
    %v1093 = vunpack.c.h.b16 %v991
    %v1094 = vunpack.c.l.b16 %v992
    %v1095 = vunpack.c.h.b16 %v992
    %v1096 = vpack.c.b16 %v1036, %v1032
    %v1097 = vpack.c.b16 %v1037, %v1033
    %v1098 = vpack.c.b16 %v1038, %v1034
    %v1099 = vpack.c.b16 %v1039, %v1035
    %v1100 = vpack.c.b16 %v1044, %v1040
    %v1101 = vpack.c.b16 %v1045, %v1041
    %v1102 = vpack.c.b16 %v1046, %v1042
    %v1103 = vpack.c.b16 %v1047, %v1043
    %v1104 = vpack.c.b16 %v1052, %v1048
    %v1105 = vpack.c.b16 %v1053, %v1049
    %v1106 = vpack.c.b16 %v1054, %v1050
    %v1107 = vpack.c.b16 %v1055, %v1051
    %v1108 = vpack.c.b16 %v1060, %v1056
    %v1109 = vpack.c.b16 %v1061, %v1057
    %v1110 = vpack.c.b16 %v1062, %v1058
    %v1111 = vpack.c.b16 %v1063, %v1059
    %v1112 = vpack.c.b16 %v1068, %v1064
    %v1113 = vpack.c.b16 %v1069, %v1065
    %v1114 = vpack.c.b16 %v1070, %v1066
    %v1115 = vpack.c.b16 %v1071, %v1067
    %v1116 = vpack.c.b16 %v1076, %v1072
    %v1117 = vpack.c.b16 %v1077, %v1073
    %v1118 = vpack.c.b16 %v1078, %v1074
    %v1119 = vpack.c.b16 %v1079, %v1075
    %v1120 = vpack.c.b16 %v1084, %v1080
    %v1121 = vpack.c.b16 %v1085, %v1081
    %v1122 = vpack.c.b16 %v1086, %v1082
    %v1123 = vpack.c.b16 %v1087, %v1083
    %v1124 = vpack.c.b16 %v1092, %v1088
    %v1125 = vpack.c.b16 %v1093, %v1089
    %v1126 = vpack.c.b16 %v1094, %v1090
    %v1127 = vpack.c.b16 %v1095, %v1091
    %1160 = vmatpush.bf16.msra.mxu0 %v1124
    %1161 = vmatpush.bf16.msra.mxu0 %v1120
    %1162 = vmatpush.bf16.msra.mxu0 %v1116
    %1163 = vmatpush.bf16.msra.mxu0 %v1112
    %1164 = vmatpush.bf16.msra.mxu0 %v1108
    %1165 = vmatpush.bf16.msra.mxu0 %v1104
    %1166 = vmatpush.bf16.msra.mxu0 %v1100
    %1167 = vmatpush.bf16.msra.mxu0 %v1096
    %1168 = vmatmul.bf16.gmra.mxu0 0
    %v1169 = vpop.f32.mrf.mxu0
    %v1170 = vadd.f32 0.0, %v1169
    %v1171 = vpop.f32.mrf.mxu0
    %1172 = vdwg.mxu0
    %1173 = vmatpush.bf16.msra.mxu0 %v1125
    %1174 = vmatpush.bf16.msra.mxu0 %v1121
    %1175 = vmatpush.bf16.msra.mxu0 %v1117
    %1176 = vmatpush.bf16.msra.mxu0 %v1113
    %1177 = vmatpush.bf16.msra.mxu0 %v1109
    %1178 = vmatpush.bf16.msra.mxu0 %v1105
    %1179 = vmatpush.bf16.msra.mxu0 %v1101
    %1180 = vmatpush.bf16.msra.mxu0 %v1097
    %1181 = vmatmul.bf16.gmra.mxu0 0
    %v1182 = vpop.f32.mrf.mxu0
    %v1183 = vadd.f32 0.0, %v1182
    %v1184 = vpop.f32.mrf.mxu0
    %1185 = vdwg.mxu0
    %1186 = vmatpush.bf16.msra.mxu0 %v1126
    %1187 = vmatpush.bf16.msra.mxu0 %v1122
    %1188 = vmatpush.bf16.msra.mxu0 %v1118
    %1189 = vmatpush.bf16.msra.mxu0 %v1114
    %1190 = vmatpush.bf16.msra.mxu0 %v1110
    %1191 = vmatpush.bf16.msra.mxu0 %v1106
    %1192 = vmatpush.bf16.msra.mxu0 %v1102
    %1193 = vmatpush.bf16.msra.mxu0 %v1098
    %1194 = vmatmul.bf16.gmra.mxu0 0
    %v1195 = vpop.f32.mrf.mxu0
    %v1196 = vadd.f32 0.0, %v1195
    %v1197 = vpop.f32.mrf.mxu0
    %1198 = vdwg.mxu0
    %1199 = vmatpush.bf16.msra.mxu0 %v1127
    %1200 = vmatpush.bf16.msra.mxu0 %v1123
    %1201 = vmatpush.bf16.msra.mxu0 %v1119
    %1202 = vmatpush.bf16.msra.mxu0 %v1115
    %1203 = vmatpush.bf16.msra.mxu0 %v1111
    %1204 = vmatpush.bf16.msra.mxu0 %v1107
    %1205 = vmatpush.bf16.msra.mxu0 %v1103
    %1206 = vmatpush.bf16.msra.mxu0 %v1099
    %1207 = vmatmul.bf16.gmra.mxu0 0
    %v1208 = vpop.f32.mrf.mxu0
    %v1209 = vadd.f32 0.0, %v1208
    %v1210 = vpop.f32.mrf.mxu0
    %1211 = vdwg.mxu0
    %v1212 = vadd.f32 %v996, %v1170
    %v1213 = vadd.f32 %v997, %v1183
    %v1214 = vadd.f32 %v998, %v1196
    %v1215 = vadd.f32 %v999, %v1209
    %v1216 = vmul.f32 %v1212, 0.5
    %v1217 = vmul.f32 %v1213, 0.5
    %v1218 = vmul.f32 %v1214, 0.5
    %v1219 = vtanh.pop %v1216
    %v1220 = vtanh.pop %v1217
    %v1221 = vtanh.pop %v1218
    %v1222 = vadd.f32 %v1219, 1.0
    %v1223 = vadd.f32 %v1220, 1.0
    %v1224 = vadd.f32 %v1221, 1.0
    %v1225 = vmul.f32 %v1222, 0.5
    %v1226 = vmul.f32 %v1223, 0.5
    %v1227 = vmul.f32 %v1224, 0.5
    %v1228 = vtanh.pop %v1215
    %v1229 = vmul.f32 %v1226, 0.0
    %v1230 = vmul.f32 %v1225, %v1228
    %v1231 = vadd.f32 %v1229, %v1230
    %v1232 = vtanh.pop %v1231
    %v1233 = vmul.f32 %v1227, %v1232
    %1234 = vst [vmem:[#allocation3] sm:$0xff] %v1233
    %s1235 = scalar_lea.vmem [#allocation4], 56
    %1236 = vst [vmem:[%s1235] sm:$0xff] %v1233
    %s1237 = smul.u32 1, 4
    %s1238 = smul.addr %s1237, 8
    %s1239 = scalar_lea.vmem [#allocation5], %s1238
    %v1240 = vld [vmem:[%s1239] sm:$0xff]
    %v1241 = vld [vmem:[%s1239 + $0x8] sm:$0xff]
    %v1242 = vld [vmem:[%s1239 + $0x10] sm:$0xff]
    %v1243 = vld [vmem:[%s1239 + $0x18] sm:$0xff]
    %v1244 = vpack.c.bf16 %v1233, %v1233
    %1245 = vmatpush.bf16.msra.mxu0 %v1124
    %1246 = vmatpush.bf16.msra.mxu0 %v1120
    %1247 = vmatpush.bf16.msra.mxu0 %v1116
    %1248 = vmatpush.bf16.msra.mxu0 %v1112
    %1249 = vmatpush.bf16.msra.mxu0 %v1108
    %1250 = vmatpush.bf16.msra.mxu0 %v1104
    %1251 = vmatpush.bf16.msra.mxu0 %v1100
    %1252 = vmatpush.bf16.msra.mxu0 %v1096
    %1253 = vmatmul.bf16.gmra.mxu0 %v1244
    %v1254 = vpop.f32.mrf.mxu0
    %v1255 = vadd.f32 0.0, %v1254
    %v1256 = vpop.f32.mrf.mxu0
    %1257 = vdwg.mxu0
    %1258 = vmatpush.bf16.msra.mxu0 %v1125
    %1259 = vmatpush.bf16.msra.mxu0 %v1121
    %1260 = vmatpush.bf16.msra.mxu0 %v1117
    %1261 = vmatpush.bf16.msra.mxu0 %v1113
    %1262 = vmatpush.bf16.msra.mxu0 %v1109
    %1263 = vmatpush.bf16.msra.mxu0 %v1105
    %1264 = vmatpush.bf16.msra.mxu0 %v1101
    %1265 = vmatpush.bf16.msra.mxu0 %v1097
    %1266 = vmatmul.bf16.gmra.mxu0 %v1244
    %v1267 = vpop.f32.mrf.mxu0
    %v1268 = vadd.f32 0.0, %v1267
    %v1269 = vpop.f32.mrf.mxu0
    %1270 = vdwg.mxu0
    %1271 = vmatpush.bf16.msra.mxu0 %v1126
    %1272 = vmatpush.bf16.msra.mxu0 %v1122
    %1273 = vmatpush.bf16.msra.mxu0 %v1118
    %1274 = vmatpush.bf16.msra.mxu0 %v1114
    %1275 = vmatpush.bf16.msra.mxu0 %v1110
    %1276 = vmatpush.bf16.msra.mxu0 %v1106
    %1277 = vmatpush.bf16.msra.mxu0 %v1102
    %1278 = vmatpush.bf16.msra.mxu0 %v1098
    %1279 = vmatmul.bf16.gmra.mxu0 %v1244
    %v1280 = vpop.f32.mrf.mxu0
    %v1281 = vadd.f32 0.0, %v1280
    %v1282 = vpop.f32.mrf.mxu0
    %1283 = vdwg.mxu0
    %1284 = vmatpush.bf16.msra.mxu0 %v1127
    %1285 = vmatpush.bf16.msra.mxu0 %v1123
    %1286 = vmatpush.bf16.msra.mxu0 %v1119
    %1287 = vmatpush.bf16.msra.mxu0 %v1115
    %1288 = vmatpush.bf16.msra.mxu0 %v1111
    %1289 = vmatpush.bf16.msra.mxu0 %v1107
    %1290 = vmatpush.bf16.msra.mxu0 %v1103
    %1291 = vmatpush.bf16.msra.mxu0 %v1099
    %1292 = vmatmul.bf16.gmra.mxu0 %v1244
    %v1293 = vpop.f32.mrf.mxu0
    %v1294 = vadd.f32 0.0, %v1293
    %v1295 = vpop.f32.mrf.mxu0
    %1296 = vdwg.mxu0
    %v1297 = vadd.f32 %v1240, %v1255
    %v1298 = vadd.f32 %v1241, %v1268
    %v1299 = vadd.f32 %v1242, %v1281
    %v1300 = vadd.f32 %v1243, %v1294
    %v1301 = vmul.f32 %v1297, 0.5
    %v1302 = vmul.f32 %v1298, 0.5
    %v1303 = vmul.f32 %v1299, 0.5
    %v1304 = vtanh.pop %v1301
    %v1305 = vtanh.pop %v1302
    %v1306 = vtanh.pop %v1303
    %v1307 = vadd.f32 %v1304, 1.0
    %v1308 = vadd.f32 %v1305, 1.0
    %v1309 = vadd.f32 %v1306, 1.0
    %v1310 = vmul.f32 %v1307, 0.5
    %v1311 = vmul.f32 %v1308, 0.5
    %v1312 = vmul.f32 %v1309, 0.5
    %v1313 = vtanh.pop %v1300
    %v1314 = vmul.f32 %v1311, %v1231
    %v1315 = vmul.f32 %v1310, %v1313
    %v1316 = vadd.f32 %v1314, %v1315
    %v1317 = vtanh.pop %v1316
    %v1318 = vmul.f32 %v1312, %v1317
    %s1319 = scalar_lea.vmem [#allocation3], 8
    %1320 = vst [vmem:[%s1319] sm:$0xff] %v1318
    %s1321 = scalar_lea.vmem [#allocation4], 48
    %1322 = vst [vmem:[%s1321] sm:$0xff] %v1318
    %s1323 = smul.u32 2, 4
    %s1324 = smul.addr %s1323, 8
    %s1325 = scalar_lea.vmem [#allocation5], %s1324
    %v1326 = vld [vmem:[%s1325] sm:$0xff]
    %v1327 = vld [vmem:[%s1325 + $0x8] sm:$0xff]
    %v1328 = vld [vmem:[%s1325 + $0x10] sm:$0xff]
    %v1329 = vld [vmem:[%s1325 + $0x18] sm:$0xff]
    %v1330 = vpack.c.bf16 %v1318, %v1318
    %1331 = vmatpush.bf16.msra.mxu0 %v1124
    %1332 = vmatpush.bf16.msra.mxu0 %v1120
    %1333 = vmatpush.bf16.msra.mxu0 %v1116
    %1334 = vmatpush.bf16.msra.mxu0 %v1112
    %1335 = vmatpush.bf16.msra.mxu0 %v1108
    %1336 = vmatpush.bf16.msra.mxu0 %v1104
    %1337 = vmatpush.bf16.msra.mxu0 %v1100
    %1338 = vmatpush.bf16.msra.mxu0 %v1096
    %1339 = vmatmul.bf16.gmra.mxu0 %v1330
    %v1340 = vpop.f32.mrf.mxu0
    %v1341 = vadd.f32 0.0, %v1340
    %v1342 = vpop.f32.mrf.mxu0
    %1343 = vdwg.mxu0
    %1344 = vmatpush.bf16.msra.mxu0 %v1125
    %1345 = vmatpush.bf16.msra.mxu0 %v1121
    %1346 = vmatpush.bf16.msra.mxu0 %v1117
    %1347 = vmatpush.bf16.msra.mxu0 %v1113
    %1348 = vmatpush.bf16.msra.mxu0 %v1109
    %1349 = vmatpush.bf16.msra.mxu0 %v1105
    %1350 = vmatpush.bf16.msra.mxu0 %v1101
    %1351 = vmatpush.bf16.msra.mxu0 %v1097
    %1352 = vmatmul.bf16.gmra.mxu0 %v1330
    %v1353 = vpop.f32.mrf.mxu0
    %v1354 = vadd.f32 0.0, %v1353
    %v1355 = vpop.f32.mrf.mxu0
    %1356 = vdwg.mxu0
    %1357 = vmatpush.bf16.msra.mxu0 %v1126
    %1358 = vmatpush.bf16.msra.mxu0 %v1122
    %1359 = vmatpush.bf16.msra.mxu0 %v1118
    %1360 = vmatpush.bf16.msra.mxu0 %v1114
    %1361 = vmatpush.bf16.msra.mxu0 %v1110
    %1362 = vmatpush.bf16.msra.mxu0 %v1106
    %1363 = vmatpush.bf16.msra.mxu0 %v1102
    %1364 = vmatpush.bf16.msra.mxu0 %v1098
    %1365 = vmatmul.bf16.gmra.mxu0 %v1330
    %v1366 = vpop.f32.mrf.mxu0
    %v1367 = vadd.f32 0.0, %v1366
    %v1368 = vpop.f32.mrf.mxu0
    %1369 = vdwg.mxu0
    %1370 = vmatpush.bf16.msra.mxu0 %v1127
    %1371 = vmatpush.bf16.msra.mxu0 %v1123
    %1372 = vmatpush.bf16.msra.mxu0 %v1119
    %1373 = vmatpush.bf16.msra.mxu0 %v1115
    %1374 = vmatpush.bf16.msra.mxu0 %v1111
    %1375 = vmatpush.bf16.msra.mxu0 %v1107
    %1376 = vmatpush.bf16.msra.mxu0 %v1103
    %1377 = vmatpush.bf16.msra.mxu0 %v1099
    %1378 = vmatmul.bf16.gmra.mxu0 %v1330
    %v1379 = vpop.f32.mrf.mxu0
    %v1380 = vadd.f32 0.0, %v1379
    %v1381 = vpop.f32.mrf.mxu0
    %1382 = vdwg.mxu0
    %v1383 = vadd.f32 %v1326, %v1341
    %v1384 = vadd.f32 %v1327, %v1354
    %v1385 = vadd.f32 %v1328, %v1367
    %v1386 = vadd.f32 %v1329, %v1380
    %v1387 = vmul.f32 %v1383, 0.5
    %v1388 = vmul.f32 %v1384, 0.5
    %v1389 = vmul.f32 %v1385, 0.5
    %v1390 = vtanh.pop %v1387
    %v1391 = vtanh.pop %v1388
    %v1392 = vtanh.pop %v1389
    %v1393 = vadd.f32 %v1390, 1.0
    %v1394 = vadd.f32 %v1391, 1.0
    %v1395 = vadd.f32 %v1392, 1.0
    %v1396 = vmul.f32 %v1393, 0.5
    %v1397 = vmul.f32 %v1394, 0.5
    %v1398 = vmul.f32 %v1395, 0.5
    %v1399 = vtanh.pop %v1386
    %v1400 = vmul.f32 %v1397, %v1316
    %v1401 = vmul.f32 %v1396, %v1399
    %v1402 = vadd.f32 %v1400, %v1401
    %v1403 = vtanh.pop %v1402
    %v1404 = vmul.f32 %v1398, %v1403
    %s1405 = scalar_lea.vmem [#allocation3], 16
    %1406 = vst [vmem:[%s1405] sm:$0xff] %v1404
    %s1407 = scalar_lea.vmem [#allocation4], 40
    %1408 = vst [vmem:[%s1407] sm:$0xff] %v1404
    %s1409 = smul.u32 3, 4
    %s1410 = smul.addr %s1409, 8
    %s1411 = scalar_lea.vmem [#allocation5], %s1410
    %v1412 = vld [vmem:[%s1411] sm:$0xff]
    %v1413 = vld [vmem:[%s1411 + $0x8] sm:$0xff]
    %v1414 = vld [vmem:[%s1411 + $0x10] sm:$0xff]
    %v1415 = vld [vmem:[%s1411 + $0x18] sm:$0xff]
    %v1416 = vpack.c.bf16 %v1404, %v1404
    %1417 = vmatpush.bf16.msra.mxu0 %v1124
    %1418 = vmatpush.bf16.msra.mxu0 %v1120
    %1419 = vmatpush.bf16.msra.mxu0 %v1116
    %1420 = vmatpush.bf16.msra.mxu0 %v1112
    %1421 = vmatpush.bf16.msra.mxu0 %v1108
    %1422 = vmatpush.bf16.msra.mxu0 %v1104
    %1423 = vmatpush.bf16.msra.mxu0 %v1100
    %1424 = vmatpush.bf16.msra.mxu0 %v1096
    %1425 = vmatmul.bf16.gmra.mxu0 %v1416
    %v1426 = vpop.f32.mrf.mxu0
    %v1427 = vadd.f32 0.0, %v1426
    %v1428 = vpop.f32.mrf.mxu0
    %1429 = vdwg.mxu0
    %1430 = vmatpush.bf16.msra.mxu0 %v1125
    %1431 = vmatpush.bf16.msra.mxu0 %v1121
    %1432 = vmatpush.bf16.msra.mxu0 %v1117
    %1433 = vmatpush.bf16.msra.mxu0 %v1113
    %1434 = vmatpush.bf16.msra.mxu0 %v1109
    %1435 = vmatpush.bf16.msra.mxu0 %v1105
    %1436 = vmatpush.bf16.msra.mxu0 %v1101
    %1437 = vmatpush.bf16.msra.mxu0 %v1097
    %1438 = vmatmul.bf16.gmra.mxu0 %v1416
    %v1439 = vpop.f32.mrf.mxu0
    %v1440 = vadd.f32 0.0, %v1439
    %v1441 = vpop.f32.mrf.mxu0
    %1442 = vdwg.mxu0
    %1443 = vmatpush.bf16.msra.mxu0 %v1126
    %1444 = vmatpush.bf16.msra.mxu0 %v1122
    %1445 = vmatpush.bf16.msra.mxu0 %v1118
    %1446 = vmatpush.bf16.msra.mxu0 %v1114
    %1447 = vmatpush.bf16.msra.mxu0 %v1110
    %1448 = vmatpush.bf16.msra.mxu0 %v1106
    %1449 = vmatpush.bf16.msra.mxu0 %v1102
    %1450 = vmatpush.bf16.msra.mxu0 %v1098
    %1451 = vmatmul.bf16.gmra.mxu0 %v1416
    %v1452 = vpop.f32.mrf.mxu0
    %v1453 = vadd.f32 0.0, %v1452
    %v1454 = vpop.f32.mrf.mxu0
    %1455 = vdwg.mxu0
    %1456 = vmatpush.bf16.msra.mxu0 %v1127
    %1457 = vmatpush.bf16.msra.mxu0 %v1123
    %1458 = vmatpush.bf16.msra.mxu0 %v1119
    %1459 = vmatpush.bf16.msra.mxu0 %v1115
    %1460 = vmatpush.bf16.msra.mxu0 %v1111
    %1461 = vmatpush.bf16.msra.mxu0 %v1107
    %1462 = vmatpush.bf16.msra.mxu0 %v1103
    %1463 = vmatpush.bf16.msra.mxu0 %v1099
    %1464 = vmatmul.bf16.gmra.mxu0 %v1416
    %v1465 = vpop.f32.mrf.mxu0
    %v1466 = vadd.f32 0.0, %v1465
    %v1467 = vpop.f32.mrf.mxu0
    %1468 = vdwg.mxu0
    %v1469 = vadd.f32 %v1412, %v1427
    %v1470 = vadd.f32 %v1413, %v1440
    %v1471 = vadd.f32 %v1414, %v1453
    %v1472 = vadd.f32 %v1415, %v1466
    %v1473 = vmul.f32 %v1469, 0.5
    %v1474 = vmul.f32 %v1470, 0.5
    %v1475 = vmul.f32 %v1471, 0.5
    %v1476 = vtanh.pop %v1473
    %v1477 = vtanh.pop %v1474
    %v1478 = vtanh.pop %v1475
    %v1479 = vadd.f32 %v1476, 1.0
    %v1480 = vadd.f32 %v1477, 1.0
    %v1481 = vadd.f32 %v1478, 1.0
    %v1482 = vmul.f32 %v1479, 0.5
    %v1483 = vmul.f32 %v1480, 0.5
    %v1484 = vmul.f32 %v1481, 0.5
    %v1485 = vtanh.pop %v1472
    %v1486 = vmul.f32 %v1483, %v1402
    %v1487 = vmul.f32 %v1482, %v1485
    %v1488 = vadd.f32 %v1486, %v1487
    %v1489 = vtanh.pop %v1488
    %v1490 = vmul.f32 %v1484, %v1489
    %s1491 = scalar_lea.vmem [#allocation3], 24
    %1492 = vst [vmem:[%s1491] sm:$0xff] %v1490
    %s1493 = scalar_lea.vmem [#allocation4], 32
    %1494 = vst [vmem:[%s1493] sm:$0xff] %v1490
    %s1495 = smul.u32 4, 4
    %s1496 = smul.addr %s1495, 8
    %s1497 = scalar_lea.vmem [#allocation5], %s1496
    %v1498 = vld [vmem:[%s1497] sm:$0xff]
    %v1499 = vld [vmem:[%s1497 + $0x8] sm:$0xff]
    %v1500 = vld [vmem:[%s1497 + $0x10] sm:$0xff]
    %v1501 = vld [vmem:[%s1497 + $0x18] sm:$0xff]
    %v1502 = vpack.c.bf16 %v1490, %v1490
    %1503 = vmatpush.bf16.msra.mxu0 %v1124
    %1504 = vmatpush.bf16.msra.mxu0 %v1120
    %1505 = vmatpush.bf16.msra.mxu0 %v1116
    %1506 = vmatpush.bf16.msra.mxu0 %v1112
    %1507 = vmatpush.bf16.msra.mxu0 %v1108
    %1508 = vmatpush.bf16.msra.mxu0 %v1104
    %1509 = vmatpush.bf16.msra.mxu0 %v1100
    %1510 = vmatpush.bf16.msra.mxu0 %v1096
    %1511 = vmatmul.bf16.gmra.mxu0 %v1502
    %v1512 = vpop.f32.mrf.mxu0
    %v1513 = vadd.f32 0.0, %v1512
    %v1514 = vpop.f32.mrf.mxu0
    %1515 = vdwg.mxu0
    %1516 = vmatpush.bf16.msra.mxu0 %v1125
    %1517 = vmatpush.bf16.msra.mxu0 %v1121
    %1518 = vmatpush.bf16.msra.mxu0 %v1117
    %1519 = vmatpush.bf16.msra.mxu0 %v1113
    %1520 = vmatpush.bf16.msra.mxu0 %v1109
    %1521 = vmatpush.bf16.msra.mxu0 %v1105
    %1522 = vmatpush.bf16.msra.mxu0 %v1101
    %1523 = vmatpush.bf16.msra.mxu0 %v1097
    %1524 = vmatmul.bf16.gmra.mxu0 %v1502
    %v1525 = vpop.f32.mrf.mxu0
    %v1526 = vadd.f32 0.0, %v1525
    %v1527 = vpop.f32.mrf.mxu0
    %1528 = vdwg.mxu0
    %1529 = vmatpush.bf16.msra.mxu0 %v1126
    %1530 = vmatpush.bf16.msra.mxu0 %v1122
    %1531 = vmatpush.bf16.msra.mxu0 %v1118
    %1532 = vmatpush.bf16.msra.mxu0 %v1114
    %1533 = vmatpush.bf16.msra.mxu0 %v1110
    %1534 = vmatpush.bf16.msra.mxu0 %v1106
    %1535 = vmatpush.bf16.msra.mxu0 %v1102
    %1536 = vmatpush.bf16.msra.mxu0 %v1098
    %1537 = vmatmul.bf16.gmra.mxu0 %v1502
    %v1538 = vpop.f32.mrf.mxu0
    %v1539 = vadd.f32 0.0, %v1538
    %v1540 = vpop.f32.mrf.mxu0
    %1541 = vdwg.mxu0
    %1542 = vmatpush.bf16.msra.mxu0 %v1127
    %1543 = vmatpush.bf16.msra.mxu0 %v1123
    %1544 = vmatpush.bf16.msra.mxu0 %v1119
    %1545 = vmatpush.bf16.msra.mxu0 %v1115
    %1546 = vmatpush.bf16.msra.mxu0 %v1111
    %1547 = vmatpush.bf16.msra.mxu0 %v1107
    %1548 = vmatpush.bf16.msra.mxu0 %v1103
    %1549 = vmatpush.bf16.msra.mxu0 %v1099
    %1550 = vmatmul.bf16.gmra.mxu0 %v1502
    %v1551 = vpop.f32.mrf.mxu0
    %v1552 = vadd.f32 0.0, %v1551
    %v1553 = vpop.f32.mrf.mxu0
    %1554 = vdwg.mxu0
    %v1555 = vadd.f32 %v1498, %v1513
    %v1556 = vadd.f32 %v1499, %v1526
    %v1557 = vadd.f32 %v1500, %v1539
    %v1558 = vadd.f32 %v1501, %v1552
    %v1559 = vmul.f32 %v1555, 0.5
    %v1560 = vmul.f32 %v1556, 0.5
    %v1561 = vmul.f32 %v1557, 0.5
    %v1562 = vtanh.pop %v1559
    %v1563 = vtanh.pop %v1560
    %v1564 = vtanh.pop %v1561
    %v1565 = vadd.f32 %v1562, 1.0
    %v1566 = vadd.f32 %v1563, 1.0
    %v1567 = vadd.f32 %v1564, 1.0
    %v1568 = vmul.f32 %v1565, 0.5
    %v1569 = vmul.f32 %v1566, 0.5
    %v1570 = vmul.f32 %v1567, 0.5
    %v1571 = vtanh.pop %v1558
    %v1572 = vmul.f32 %v1569, %v1488
    %v1573 = vmul.f32 %v1568, %v1571
    %v1574 = vadd.f32 %v1572, %v1573
    %v1575 = vtanh.pop %v1574
    %v1576 = vmul.f32 %v1570, %v1575
    %s1577 = scalar_lea.vmem [#allocation3], 32
    %1578 = vst [vmem:[%s1577] sm:$0xff] %v1576
    %s1579 = scalar_lea.vmem [#allocation4], 24
    %1580 = vst [vmem:[%s1579] sm:$0xff] %v1576
    %s1581 = smul.u32 5, 4
    %s1582 = smul.addr %s1581, 8
    %s1583 = scalar_lea.vmem [#allocation5], %s1582
    %v1584 = vld [vmem:[%s1583] sm:$0xff]
    %v1585 = vld [vmem:[%s1583 + $0x8] sm:$0xff]
    %v1586 = vld [vmem:[%s1583 + $0x10] sm:$0xff]
    %v1587 = vld [vmem:[%s1583 + $0x18] sm:$0xff]
    %v1588 = vpack.c.bf16 %v1576, %v1576
    %1589 = vmatpush.bf16.msra.mxu0 %v1124
    %1590 = vmatpush.bf16.msra.mxu0 %v1120
    %1591 = vmatpush.bf16.msra.mxu0 %v1116
    %1592 = vmatpush.bf16.msra.mxu0 %v1112
    %1593 = vmatpush.bf16.msra.mxu0 %v1108
    %1594 = vmatpush.bf16.msra.mxu0 %v1104
    %1595 = vmatpush.bf16.msra.mxu0 %v1100
    %1596 = vmatpush.bf16.msra.mxu0 %v1096
    %1597 = vmatmul.bf16.gmra.mxu0 %v1588
    %v1598 = vpop.f32.mrf.mxu0
    %v1599 = vadd.f32 0.0, %v1598
    %v1600 = vpop.f32.mrf.mxu0
    %1601 = vdwg.mxu0
    %1602 = vmatpush.bf16.msra.mxu0 %v1125
    %1603 = vmatpush.bf16.msra.mxu0 %v1121
    %1604 = vmatpush.bf16.msra.mxu0 %v1117
    %1605 = vmatpush.bf16.msra.mxu0 %v1113
    %1606 = vmatpush.bf16.msra.mxu0 %v1109
    %1607 = vmatpush.bf16.msra.mxu0 %v1105
    %1608 = vmatpush.bf16.msra.mxu0 %v1101
    %1609 = vmatpush.bf16.msra.mxu0 %v1097
    %1610 = vmatmul.bf16.gmra.mxu0 %v1588
    %v1611 = vpop.f32.mrf.mxu0
    %v1612 = vadd.f32 0.0, %v1611
    %v1613 = vpop.f32.mrf.mxu0
    %1614 = vdwg.mxu0
    %1615 = vmatpush.bf16.msra.mxu0 %v1126
    %1616 = vmatpush.bf16.msra.mxu0 %v1122
    %1617 = vmatpush.bf16.msra.mxu0 %v1118
    %1618 = vmatpush.bf16.msra.mxu0 %v1114
    %1619 = vmatpush.bf16.msra.mxu0 %v1110
    %1620 = vmatpush.bf16.msra.mxu0 %v1106
    %1621 = vmatpush.bf16.msra.mxu0 %v1102
    %1622 = vmatpush.bf16.msra.mxu0 %v1098
    %1623 = vmatmul.bf16.gmra.mxu0 %v1588
    %v1624 = vpop.f32.mrf.mxu0
    %v1625 = vadd.f32 0.0, %v1624
    %v1626 = vpop.f32.mrf.mxu0
    %1627 = vdwg.mxu0
    %1628 = vmatpush.bf16.msra.mxu0 %v1127
    %1629 = vmatpush.bf16.msra.mxu0 %v1123
    %1630 = vmatpush.bf16.msra.mxu0 %v1119
    %1631 = vmatpush.bf16.msra.mxu0 %v1115
    %1632 = vmatpush.bf16.msra.mxu0 %v1111
    %1633 = vmatpush.bf16.msra.mxu0 %v1107
    %1634 = vmatpush.bf16.msra.mxu0 %v1103
    %1635 = vmatpush.bf16.msra.mxu0 %v1099
    %1636 = vmatmul.bf16.gmra.mxu0 %v1588
    %v1637 = vpop.f32.mrf.mxu0
    %v1638 = vadd.f32 0.0, %v1637
    %v1639 = vpop.f32.mrf.mxu0
    %1640 = vdwg.mxu0
    %v1641 = vadd.f32 %v1584, %v1599
    %v1642 = vadd.f32 %v1585, %v1612
    %v1643 = vadd.f32 %v1586, %v1625
    %v1644 = vadd.f32 %v1587, %v1638
    %v1645 = vmul.f32 %v1641, 0.5
    %v1646 = vmul.f32 %v1642, 0.5
    %v1647 = vmul.f32 %v1643, 0.5
    %v1648 = vtanh.pop %v1645
    %v1649 = vtanh.pop %v1646
    %v1650 = vtanh.pop %v1647
    %v1651 = vadd.f32 %v1648, 1.0
    %v1652 = vadd.f32 %v1649, 1.0
    %v1653 = vadd.f32 %v1650, 1.0
    %v1654 = vmul.f32 %v1651, 0.5
    %v1655 = vmul.f32 %v1652, 0.5
    %v1656 = vmul.f32 %v1653, 0.5
    %v1657 = vtanh.pop %v1644
    %v1658 = vmul.f32 %v1655, %v1574
    %v1659 = vmul.f32 %v1654, %v1657
    %v1660 = vadd.f32 %v1658, %v1659
    %v1661 = vtanh.pop %v1660
    %v1662 = vmul.f32 %v1656, %v1661
    %s1663 = scalar_lea.vmem [#allocation3], 40
    %1664 = vst [vmem:[%s1663] sm:$0xff] %v1662
    %s1665 = scalar_lea.vmem [#allocation4], 16
    %1666 = vst [vmem:[%s1665] sm:$0xff] %v1662
    %s1667 = smul.u32 6, 4
    %s1668 = smul.addr %s1667, 8
    %s1669 = scalar_lea.vmem [#allocation5], %s1668
    %v1670 = vld [vmem:[%s1669] sm:$0xff]
    %v1671 = vld [vmem:[%s1669 + $0x8] sm:$0xff]
    %v1672 = vld [vmem:[%s1669 + $0x10] sm:$0xff]
    %v1673 = vld [vmem:[%s1669 + $0x18] sm:$0xff]
    %v1674 = vpack.c.bf16 %v1662, %v1662
    %1675 = vmatpush.bf16.msra.mxu0 %v1124
    %1676 = vmatpush.bf16.msra.mxu0 %v1120
    %1677 = vmatpush.bf16.msra.mxu0 %v1116
    %1678 = vmatpush.bf16.msra.mxu0 %v1112
    %1679 = vmatpush.bf16.msra.mxu0 %v1108
    %1680 = vmatpush.bf16.msra.mxu0 %v1104
    %1681 = vmatpush.bf16.msra.mxu0 %v1100
    %1682 = vmatpush.bf16.msra.mxu0 %v1096
    %1683 = vmatmul.bf16.gmra.mxu0 %v1674
    %v1684 = vpop.f32.mrf.mxu0
    %v1685 = vadd.f32 0.0, %v1684
    %v1686 = vpop.f32.mrf.mxu0
    %1687 = vdwg.mxu0
    %1688 = vmatpush.bf16.msra.mxu0 %v1125
    %1689 = vmatpush.bf16.msra.mxu0 %v1121
    %1690 = vmatpush.bf16.msra.mxu0 %v1117
    %1691 = vmatpush.bf16.msra.mxu0 %v1113
    %1692 = vmatpush.bf16.msra.mxu0 %v1109
    %1693 = vmatpush.bf16.msra.mxu0 %v1105
    %1694 = vmatpush.bf16.msra.mxu0 %v1101
    %1695 = vmatpush.bf16.msra.mxu0 %v1097
    %1696 = vmatmul.bf16.gmra.mxu0 %v1674
    %v1697 = vpop.f32.mrf.mxu0
    %v1698 = vadd.f32 0.0, %v1697
    %v1699 = vpop.f32.mrf.mxu0
    %1700 = vdwg.mxu0
    %1701 = vmatpush.bf16.msra.mxu0 %v1126
    %1702 = vmatpush.bf16.msra.mxu0 %v1122
    %1703 = vmatpush.bf16.msra.mxu0 %v1118
    %1704 = vmatpush.bf16.msra.mxu0 %v1114
    %1705 = vmatpush.bf16.msra.mxu0 %v1110
    %1706 = vmatpush.bf16.msra.mxu0 %v1106
    %1707 = vmatpush.bf16.msra.mxu0 %v1102
    %1708 = vmatpush.bf16.msra.mxu0 %v1098
    %1709 = vmatmul.bf16.gmra.mxu0 %v1674
    %v1710 = vpop.f32.mrf.mxu0
    %v1711 = vadd.f32 0.0, %v1710
    %v1712 = vpop.f32.mrf.mxu0
    %1713 = vdwg.mxu0
    %1714 = vmatpush.bf16.msra.mxu0 %v1127
    %1715 = vmatpush.bf16.msra.mxu0 %v1123
    %1716 = vmatpush.bf16.msra.mxu0 %v1119
    %1717 = vmatpush.bf16.msra.mxu0 %v1115
    %1718 = vmatpush.bf16.msra.mxu0 %v1111
    %1719 = vmatpush.bf16.msra.mxu0 %v1107
    %1720 = vmatpush.bf16.msra.mxu0 %v1103
    %1721 = vmatpush.bf16.msra.mxu0 %v1099
    %1722 = vmatmul.bf16.gmra.mxu0 %v1674
    %v1723 = vpop.f32.mrf.mxu0
    %v1724 = vadd.f32 0.0, %v1723
    %v1725 = vpop.f32.mrf.mxu0
    %1726 = vdwg.mxu0
    %v1727 = vadd.f32 %v1670, %v1685
    %v1728 = vadd.f32 %v1671, %v1698
    %v1729 = vadd.f32 %v1672, %v1711
    %v1730 = vadd.f32 %v1673, %v1724
    %v1731 = vmul.f32 %v1727, 0.5
    %v1732 = vmul.f32 %v1728, 0.5
    %v1733 = vmul.f32 %v1729, 0.5
    %v1734 = vtanh.pop %v1731
    %v1735 = vtanh.pop %v1732
    %v1736 = vtanh.pop %v1733
    %v1737 = vadd.f32 %v1734, 1.0
    %v1738 = vadd.f32 %v1735, 1.0
    %v1739 = vadd.f32 %v1736, 1.0
    %v1740 = vmul.f32 %v1737, 0.5
    %v1741 = vmul.f32 %v1738, 0.5
    %v1742 = vmul.f32 %v1739, 0.5
    %v1743 = vtanh.pop %v1730
    %v1744 = vmul.f32 %v1741, %v1660
    %v1745 = vmul.f32 %v1740, %v1743
    %v1746 = vadd.f32 %v1744, %v1745
    %v1747 = vtanh.pop %v1746
    %v1748 = vmul.f32 %v1742, %v1747
    %s1749 = scalar_lea.vmem [#allocation3], 48
    %1750 = vst [vmem:[%s1749] sm:$0xff] %v1748
    %s1751 = scalar_lea.vmem [#allocation4], 8
    %1752 = vst [vmem:[%s1751] sm:$0xff] %v1748
    %s1753 = smul.u32 7, 4
    %s1754 = smul.addr %s1753, 8
    %s1755 = scalar_lea.vmem [#allocation5], %s1754
    %v1756 = vld [vmem:[%s1755] sm:$0xff]
    %v1757 = vld [vmem:[%s1755 + $0x8] sm:$0xff]
    %v1758 = vld [vmem:[%s1755 + $0x10] sm:$0xff]
    %v1759 = vld [vmem:[%s1755 + $0x18] sm:$0xff]
    %v1760 = vpack.c.bf16 %v1748, %v1748
    %1761 = vmatpush.bf16.msra.mxu0 %v1124
    %1762 = vmatpush.bf16.msra.mxu0 %v1120
    %1763 = vmatpush.bf16.msra.mxu0 %v1116
    %1764 = vmatpush.bf16.msra.mxu0 %v1112
    %1765 = vmatpush.bf16.msra.mxu0 %v1108
    %1766 = vmatpush.bf16.msra.mxu0 %v1104
    %1767 = vmatpush.bf16.msra.mxu0 %v1100
    %1768 = vmatpush.bf16.msra.mxu0 %v1096
    %1769 = vmatmul.bf16.gmra.mxu0 %v1760
    %v1770 = vpop.f32.mrf.mxu0
    %v1771 = vadd.f32 0.0, %v1770
    %v1772 = vpop.f32.mrf.mxu0
    %1773 = vdwg.mxu0
    %1774 = vmatpush.bf16.msra.mxu0 %v1125
    %1775 = vmatpush.bf16.msra.mxu0 %v1121
    %1776 = vmatpush.bf16.msra.mxu0 %v1117
    %1777 = vmatpush.bf16.msra.mxu0 %v1113
    %1778 = vmatpush.bf16.msra.mxu0 %v1109
    %1779 = vmatpush.bf16.msra.mxu0 %v1105
    %1780 = vmatpush.bf16.msra.mxu0 %v1101
    %1781 = vmatpush.bf16.msra.mxu0 %v1097
    %1782 = vmatmul.bf16.gmra.mxu0 %v1760
    %v1783 = vpop.f32.mrf.mxu0
    %v1784 = vadd.f32 0.0, %v1783
    %v1785 = vpop.f32.mrf.mxu0
    %1786 = vdwg.mxu0
    %1787 = vmatpush.bf16.msra.mxu0 %v1126
    %1788 = vmatpush.bf16.msra.mxu0 %v1122
    %1789 = vmatpush.bf16.msra.mxu0 %v1118
    %1790 = vmatpush.bf16.msra.mxu0 %v1114
    %1791 = vmatpush.bf16.msra.mxu0 %v1110
    %1792 = vmatpush.bf16.msra.mxu0 %v1106
    %1793 = vmatpush.bf16.msra.mxu0 %v1102
    %1794 = vmatpush.bf16.msra.mxu0 %v1098
    %1795 = vmatmul.bf16.gmra.mxu0 %v1760
    %v1796 = vpop.f32.mrf.mxu0
    %v1797 = vadd.f32 0.0, %v1796
    %v1798 = vpop.f32.mrf.mxu0
    %1799 = vdwg.mxu0
    %1800 = vmatpush.bf16.msra.mxu0 %v1127
    %1801 = vmatpush.bf16.msra.mxu0 %v1123
    %1802 = vmatpush.bf16.msra.mxu0 %v1119
    %1803 = vmatpush.bf16.msra.mxu0 %v1115
    %1804 = vmatpush.bf16.msra.mxu0 %v1111
    %1805 = vmatpush.bf16.msra.mxu0 %v1107
    %1806 = vmatpush.bf16.msra.mxu0 %v1103
    %1807 = vmatpush.bf16.msra.mxu0 %v1099
    %1808 = vmatmul.bf16.gmra.mxu0 %v1760
    %v1809 = vpop.f32.mrf.mxu0
    %v1810 = vadd.f32 0.0, %v1809
    %v1811 = vpop.f32.mrf.mxu0
    %1812 = vdwg.mxu0
    %v1813 = vadd.f32 %v1756, %v1771
    %v1814 = vadd.f32 %v1757, %v1784
    %v1815 = vadd.f32 %v1758, %v1797
    %v1816 = vadd.f32 %v1759, %v1810
    %v1817 = vmul.f32 %v1813, 0.5
    %v1818 = vmul.f32 %v1814, 0.5
    %v1819 = vmul.f32 %v1815, 0.5
    %v1820 = vtanh.pop %v1817
    %v1821 = vtanh.pop %v1818
    %v1822 = vtanh.pop %v1819
    %v1823 = vadd.f32 %v1820, 1.0
    %v1824 = vadd.f32 %v1821, 1.0
    %v1825 = vadd.f32 %v1822, 1.0
    %v1826 = vmul.f32 %v1823, 0.5
    %v1827 = vmul.f32 %v1824, 0.5
    %v1828 = vmul.f32 %v1825, 0.5
    %v1829 = vtanh.pop %v1816
    %v1830 = vmul.f32 %v1827, %v1746
    %v1831 = vmul.f32 %v1826, %v1829
    %v1832 = vadd.f32 %v1830, %v1831
    %v1833 = vtanh.pop %v1832
    %v1834 = vmul.f32 %v1828, %v1833
    %s1835 = scalar_lea.vmem [#allocation3], 56
    %1836 = vst [vmem:[%s1835] sm:$0xff] %v1834
    %1837 = vst [vmem:[#allocation4] sm:$0xff] %v1834
    %v1838 = vld [vmem:[#allocation3] sm:$0xff]
    %v1839 = vld [vmem:[#allocation3 + $0x8] sm:$0xff]
    %v1840 = vld [vmem:[#allocation3 + $0x10] sm:$0xff]
    %v1841 = vld [vmem:[#allocation3 + $0x18] sm:$0xff]
    %v1842 = vld [vmem:[#allocation3 + $0x20] sm:$0xff]
    %v1843 = vld [vmem:[#allocation3 + $0x28] sm:$0xff]
    %v1844 = vld [vmem:[#allocation3 + $0x30] sm:$0xff]
    %v1845 = vld [vmem:[#allocation3 + $0x38] sm:$0xff]
    %v1846 = vpack.c.bf16 %v1839, %v1838
    %v1847 = vpack.c.bf16 %v1841, %v1840
    %v1848 = vpack.c.bf16 %v1843, %v1842
    %v1849 = vpack.c.bf16 %v1845, %v1844
    %v1850 = vld [vmem:[#allocation14] sm:$0xff]
    %v1851 = vld [vmem:[#allocation14 + $0x8] sm:$0xff]
    %v1852 = vld [vmem:[#allocation14 + $0x10] sm:$0xff]
    %v1853 = vld [vmem:[#allocation14 + $0x18] sm:$0xff]
    %v1854 = vld [vmem:[#allocation14 + $0x20] sm:$0xff]
    %v1855 = vld [vmem:[#allocation14 + $0x28] sm:$0xff]
    %v1856 = vld [vmem:[#allocation14 + $0x30] sm:$0xff]
    %v1857 = vld [vmem:[#allocation14 + $0x38] sm:$0xff]
    %v1858 = vld [vmem:[#allocation14 + $0x40] sm:$0xff]
    %v1859 = vld [vmem:[#allocation14 + $0x48] sm:$0xff]
    %v1860 = vld [vmem:[#allocation14 + $0x50] sm:$0xff]
    %v1861 = vld [vmem:[#allocation14 + $0x58] sm:$0xff]
    %v1862 = vld [vmem:[#allocation14 + $0x60] sm:$0xff]
    %v1863 = vld [vmem:[#allocation14 + $0x68] sm:$0xff]
    %v1864 = vld [vmem:[#allocation14 + $0x70] sm:$0xff]
    %v1865 = vld [vmem:[#allocation14 + $0x78] sm:$0xff]
    %v1866 = vld [vmem:[#allocation14 + $0x80] sm:$0xff]
    %v1867 = vld [vmem:[#allocation14 + $0x88] sm:$0xff]
    %v1868 = vld [vmem:[#allocation14 + $0x90] sm:$0xff]
    %v1869 = vld [vmem:[#allocation14 + $0x98] sm:$0xff]
    %v1870 = vld [vmem:[#allocation14 + $0xa0] sm:$0xff]
    %v1871 = vld [vmem:[#allocation14 + $0xa8] sm:$0xff]
    %v1872 = vld [vmem:[#allocation14 + $0xb0] sm:$0xff]
    %v1873 = vld [vmem:[#allocation14 + $0xb8] sm:$0xff]
    %v1874 = vld [vmem:[#allocation14 + $0xc0] sm:$0xff]
    %v1875 = vld [vmem:[#allocation14 + $0xc8] sm:$0xff]
    %v1876 = vld [vmem:[#allocation14 + $0xd0] sm:$0xff]
    %v1877 = vld [vmem:[#allocation14 + $0xd8] sm:$0xff]
    %v1878 = vld [vmem:[#allocation14 + $0xe0] sm:$0xff]
    %v1879 = vld [vmem:[#allocation14 + $0xe8] sm:$0xff]
    %v1880 = vld [vmem:[#allocation14 + $0xf0] sm:$0xff]
    %v1881 = vld [vmem:[#allocation14 + $0xf8] sm:$0xff]
    %v1882 = vld [vmem:[#allocation4] sm:$0xff]
    %v1883 = vld [vmem:[#allocation4 + $0x8] sm:$0xff]
    %v1884 = vld [vmem:[#allocation4 + $0x10] sm:$0xff]
    %v1885 = vld [vmem:[#allocation4 + $0x18] sm:$0xff]
    %v1886 = vld [vmem:[#allocation4 + $0x20] sm:$0xff]
    %v1887 = vld [vmem:[#allocation4 + $0x28] sm:$0xff]
    %v1888 = vld [vmem:[#allocation4 + $0x30] sm:$0xff]
    %v1889 = vld [vmem:[#allocation4 + $0x38] sm:$0xff]
    %v1890 = vpack.c.bf16 %v1883, %v1882
    %v1891 = vpack.c.bf16 %v1885, %v1884
    %v1892 = vpack.c.bf16 %v1887, %v1886
    %v1893 = vpack.c.bf16 %v1889, %v1888
    %v1894 = vld [vmem:[#allocation15] sm:$0xff]
    %v1895 = vld [vmem:[#allocation15 + $0x8] sm:$0xff]
    %v1896 = vld [vmem:[#allocation15 + $0x10] sm:$0xff]
    %v1897 = vld [vmem:[#allocation15 + $0x18] sm:$0xff]
    %v1898 = vld [vmem:[#allocation15 + $0x20] sm:$0xff]
    %v1899 = vld [vmem:[#allocation15 + $0x28] sm:$0xff]
    %v1900 = vld [vmem:[#allocation15 + $0x30] sm:$0xff]
    %v1901 = vld [vmem:[#allocation15 + $0x38] sm:$0xff]
    %v1902 = vld [vmem:[#allocation15 + $0x40] sm:$0xff]
    %v1903 = vld [vmem:[#allocation15 + $0x48] sm:$0xff]
    %v1904 = vld [vmem:[#allocation15 + $0x50] sm:$0xff]
    %v1905 = vld [vmem:[#allocation15 + $0x58] sm:$0xff]
    %v1906 = vld [vmem:[#allocation15 + $0x60] sm:$0xff]
    %v1907 = vld [vmem:[#allocation15 + $0x68] sm:$0xff]
    %v1908 = vld [vmem:[#allocation15 + $0x70] sm:$0xff]
    %v1909 = vld [vmem:[#allocation15 + $0x78] sm:$0xff]
    %v1910 = vld [vmem:[#allocation15 + $0x80] sm:$0xff]
    %v1911 = vld [vmem:[#allocation15 + $0x88] sm:$0xff]
    %v1912 = vld [vmem:[#allocation15 + $0x90] sm:$0xff]
    %v1913 = vld [vmem:[#allocation15 + $0x98] sm:$0xff]
    %v1914 = vld [vmem:[#allocation15 + $0xa0] sm:$0xff]
    %v1915 = vld [vmem:[#allocation15 + $0xa8] sm:$0xff]
    %v1916 = vld [vmem:[#allocation15 + $0xb0] sm:$0xff]
    %v1917 = vld [vmem:[#allocation15 + $0xb8] sm:$0xff]
    %v1918 = vld [vmem:[#allocation15 + $0xc0] sm:$0xff]
    %v1919 = vld [vmem:[#allocation15 + $0xc8] sm:$0xff]
    %v1920 = vld [vmem:[#allocation15 + $0xd0] sm:$0xff]
    %v1921 = vld [vmem:[#allocation15 + $0xd8] sm:$0xff]
    %v1922 = vld [vmem:[#allocation15 + $0xe0] sm:$0xff]
    %v1923 = vld [vmem:[#allocation15 + $0xe8] sm:$0xff]
    %v1924 = vld [vmem:[#allocation15 + $0xf0] sm:$0xff]
    %v1925 = vld [vmem:[#allocation15 + $0xf8] sm:$0xff]
    %v1958 = vunpack.c.l.b16 %v1894
    %v1959 = vunpack.c.h.b16 %v1894
    %v1960 = vunpack.c.l.b16 %v1895
    %v1961 = vunpack.c.h.b16 %v1895
    %v1962 = vunpack.c.l.b16 %v1896
    %v1963 = vunpack.c.h.b16 %v1896
    %v1964 = vunpack.c.l.b16 %v1897
    %v1965 = vunpack.c.h.b16 %v1897
    %v1966 = vunpack.c.l.b16 %v1898
    %v1967 = vunpack.c.h.b16 %v1898
    %v1968 = vunpack.c.l.b16 %v1899
    %v1969 = vunpack.c.h.b16 %v1899
    %v1970 = vunpack.c.l.b16 %v1900
    %v1971 = vunpack.c.h.b16 %v1900
    %v1972 = vunpack.c.l.b16 %v1901
    %v1973 = vunpack.c.h.b16 %v1901
    %v1974 = vunpack.c.l.b16 %v1902
    %v1975 = vunpack.c.h.b16 %v1902
    %v1976 = vunpack.c.l.b16 %v1903
    %v1977 = vunpack.c.h.b16 %v1903
    %v1978 = vunpack.c.l.b16 %v1904
    %v1979 = vunpack.c.h.b16 %v1904
    %v1980 = vunpack.c.l.b16 %v1905
    %v1981 = vunpack.c.h.b16 %v1905
    %v1982 = vunpack.c.l.b16 %v1906
    %v1983 = vunpack.c.h.b16 %v1906
    %v1984 = vunpack.c.l.b16 %v1907
    %v1985 = vunpack.c.h.b16 %v1907
    %v1986 = vunpack.c.l.b16 %v1908
    %v1987 = vunpack.c.h.b16 %v1908
    %v1988 = vunpack.c.l.b16 %v1909
    %v1989 = vunpack.c.h.b16 %v1909
    %v1990 = vunpack.c.l.b16 %v1910
    %v1991 = vunpack.c.h.b16 %v1910
    %v1992 = vunpack.c.l.b16 %v1911
    %v1993 = vunpack.c.h.b16 %v1911
    %v1994 = vunpack.c.l.b16 %v1912
    %v1995 = vunpack.c.h.b16 %v1912
    %v1996 = vunpack.c.l.b16 %v1913
    %v1997 = vunpack.c.h.b16 %v1913
    %v1998 = vunpack.c.l.b16 %v1914
    %v1999 = vunpack.c.h.b16 %v1914
    %v2000 = vunpack.c.l.b16 %v1915
    %v2001 = vunpack.c.h.b16 %v1915
    %v2002 = vunpack.c.l.b16 %v1916
    %v2003 = vunpack.c.h.b16 %v1916
    %v2004 = vunpack.c.l.b16 %v1917
    %v2005 = vunpack.c.h.b16 %v1917
    %v2006 = vunpack.c.l.b16 %v1918
    %v2007 = vunpack.c.h.b16 %v1918
    %v2008 = vunpack.c.l.b16 %v1919
    %v2009 = vunpack.c.h.b16 %v1919
    %v2010 = vunpack.c.l.b16 %v1920
    %v2011 = vunpack.c.h.b16 %v1920
    %v2012 = vunpack.c.l.b16 %v1921
    %v2013 = vunpack.c.h.b16 %v1921
    %v2014 = vunpack.c.l.b16 %v1922
    %v2015 = vunpack.c.h.b16 %v1922
    %v2016 = vunpack.c.l.b16 %v1923
    %v2017 = vunpack.c.h.b16 %v1923
    %v2018 = vunpack.c.l.b16 %v1924
    %v2019 = vunpack.c.h.b16 %v1924
    %v2020 = vunpack.c.l.b16 %v1925
    %v2021 = vunpack.c.h.b16 %v1925
    %v2022 = vpack.c.b16 %v1962, %v1958
    %v2023 = vpack.c.b16 %v1963, %v1959
    %v2024 = vpack.c.b16 %v1964, %v1960
    %v2025 = vpack.c.b16 %v1965, %v1961
    %v2026 = vpack.c.b16 %v1970, %v1966
    %v2027 = vpack.c.b16 %v1971, %v1967
    %v2028 = vpack.c.b16 %v1972, %v1968
    %v2029 = vpack.c.b16 %v1973, %v1969
    %v2030 = vpack.c.b16 %v1978, %v1974
    %v2031 = vpack.c.b16 %v1979, %v1975
    %v2032 = vpack.c.b16 %v1980, %v1976
    %v2033 = vpack.c.b16 %v1981, %v1977
    %v2034 = vpack.c.b16 %v1986, %v1982
    %v2035 = vpack.c.b16 %v1987, %v1983
    %v2036 = vpack.c.b16 %v1988, %v1984
    %v2037 = vpack.c.b16 %v1989, %v1985
    %v2038 = vpack.c.b16 %v1994, %v1990
    %v2039 = vpack.c.b16 %v1995, %v1991
    %v2040 = vpack.c.b16 %v1996, %v1992
    %v2041 = vpack.c.b16 %v1997, %v1993
    %v2042 = vpack.c.b16 %v2002, %v1998
    %v2043 = vpack.c.b16 %v2003, %v1999
    %v2044 = vpack.c.b16 %v2004, %v2000
    %v2045 = vpack.c.b16 %v2005, %v2001
    %v2046 = vpack.c.b16 %v2010, %v2006
    %v2047 = vpack.c.b16 %v2011, %v2007
    %v2048 = vpack.c.b16 %v2012, %v2008
    %v2049 = vpack.c.b16 %v2013, %v2009
    %v2050 = vpack.c.b16 %v2018, %v2014
    %v2051 = vpack.c.b16 %v2019, %v2015
    %v2052 = vpack.c.b16 %v2020, %v2016
    %v2053 = vpack.c.b16 %v2021, %v2017
    %2086 = vmatpush.bf16.msra.mxu0 %v2050
    %2087 = vmatpush.bf16.msra.mxu0 %v2046
    %2088 = vmatpush.bf16.msra.mxu0 %v2042
    %2089 = vmatpush.bf16.msra.mxu0 %v2038
    %2090 = vmatpush.bf16.msra.mxu0 %v2034
    %2091 = vmatpush.bf16.msra.mxu0 %v2030
    %2092 = vmatpush.bf16.msra.mxu0 %v2026
    %2093 = vmatpush.bf16.msra.mxu0 %v2022
    %2094 = vmatmul.bf16.gmra.mxu0 %v1890
    %v2095 = vpop.f32.mrf.mxu0
    %v2096 = vadd.f32 0.0, %v2095
    %v2097 = vpop.f32.mrf.mxu0
    %v2098 = vadd.f32 0.0, %v2097
    %2099 = vmatmul.bf16.gmra.mxu0 %v1891
    %v2100 = vpop.f32.mrf.mxu0
    %v2101 = vadd.f32 0.0, %v2100
    %v2102 = vpop.f32.mrf.mxu0
    %v2103 = vadd.f32 0.0, %v2102
    %2104 = vmatmul.bf16.gmra.mxu0 %v1892
    %v2105 = vpop.f32.mrf.mxu0
    %v2106 = vadd.f32 0.0, %v2105
    %v2107 = vpop.f32.mrf.mxu0
    %v2108 = vadd.f32 0.0, %v2107
    %2109 = vmatmul.bf16.gmra.mxu0 %v1893
    %v2110 = vpop.f32.mrf.mxu0
    %v2111 = vadd.f32 0.0, %v2110
    %v2112 = vpop.f32.mrf.mxu0
    %v2113 = vadd.f32 0.0, %v2112
    %2114 = vdwg.mxu0
    %2115 = vmatpush.bf16.msra.mxu0 %v2051
    %2116 = vmatpush.bf16.msra.mxu0 %v2047
    %2117 = vmatpush.bf16.msra.mxu0 %v2043
    %2118 = vmatpush.bf16.msra.mxu0 %v2039
    %2119 = vmatpush.bf16.msra.mxu0 %v2035
    %2120 = vmatpush.bf16.msra.mxu0 %v2031
    %2121 = vmatpush.bf16.msra.mxu0 %v2027
    %2122 = vmatpush.bf16.msra.mxu0 %v2023
    %2123 = vmatmul.bf16.gmra.mxu0 %v1890
    %v2124 = vpop.f32.mrf.mxu0
    %v2125 = vadd.f32 0.0, %v2124
    %v2126 = vpop.f32.mrf.mxu0
    %v2127 = vadd.f32 0.0, %v2126
    %2128 = vmatmul.bf16.gmra.mxu0 %v1891
    %v2129 = vpop.f32.mrf.mxu0
    %v2130 = vadd.f32 0.0, %v2129
    %v2131 = vpop.f32.mrf.mxu0
    %v2132 = vadd.f32 0.0, %v2131
    %2133 = vmatmul.bf16.gmra.mxu0 %v1892
    %v2134 = vpop.f32.mrf.mxu0
    %v2135 = vadd.f32 0.0, %v2134
    %v2136 = vpop.f32.mrf.mxu0
    %v2137 = vadd.f32 0.0, %v2136
    %2138 = vmatmul.bf16.gmra.mxu0 %v1893
    %v2139 = vpop.f32.mrf.mxu0
    %v2140 = vadd.f32 0.0, %v2139
    %v2141 = vpop.f32.mrf.mxu0
    %v2142 = vadd.f32 0.0, %v2141
    %2143 = vdwg.mxu0
    %2144 = vmatpush.bf16.msra.mxu0 %v2052
    %2145 = vmatpush.bf16.msra.mxu0 %v2048
    %2146 = vmatpush.bf16.msra.mxu0 %v2044
    %2147 = vmatpush.bf16.msra.mxu0 %v2040
    %2148 = vmatpush.bf16.msra.mxu0 %v2036
    %2149 = vmatpush.bf16.msra.mxu0 %v2032
    %2150 = vmatpush.bf16.msra.mxu0 %v2028
    %2151 = vmatpush.bf16.msra.mxu0 %v2024
    %2152 = vmatmul.bf16.gmra.mxu0 %v1890
    %v2153 = vpop.f32.mrf.mxu0
    %v2154 = vadd.f32 0.0, %v2153
    %v2155 = vpop.f32.mrf.mxu0
    %v2156 = vadd.f32 0.0, %v2155
    %2157 = vmatmul.bf16.gmra.mxu0 %v1891
    %v2158 = vpop.f32.mrf.mxu0
    %v2159 = vadd.f32 0.0, %v2158
    %v2160 = vpop.f32.mrf.mxu0
    %v2161 = vadd.f32 0.0, %v2160
    %2162 = vmatmul.bf16.gmra.mxu0 %v1892
    %v2163 = vpop.f32.mrf.mxu0
    %v2164 = vadd.f32 0.0, %v2163
    %v2165 = vpop.f32.mrf.mxu0
    %v2166 = vadd.f32 0.0, %v2165
    %2167 = vmatmul.bf16.gmra.mxu0 %v1893
    %v2168 = vpop.f32.mrf.mxu0
    %v2169 = vadd.f32 0.0, %v2168
    %v2170 = vpop.f32.mrf.mxu0
    %v2171 = vadd.f32 0.0, %v2170
    %2172 = vdwg.mxu0
    %2173 = vmatpush.bf16.msra.mxu0 %v2053
    %2174 = vmatpush.bf16.msra.mxu0 %v2049
    %2175 = vmatpush.bf16.msra.mxu0 %v2045
    %2176 = vmatpush.bf16.msra.mxu0 %v2041
    %2177 = vmatpush.bf16.msra.mxu0 %v2037
    %2178 = vmatpush.bf16.msra.mxu0 %v2033
    %2179 = vmatpush.bf16.msra.mxu0 %v2029
    %2180 = vmatpush.bf16.msra.mxu0 %v2025
    %2181 = vmatmul.bf16.gmra.mxu0 %v1890
    %v2182 = vpop.f32.mrf.mxu0
    %v2183 = vadd.f32 0.0, %v2182
    %v2184 = vpop.f32.mrf.mxu0
    %v2185 = vadd.f32 0.0, %v2184
    %2186 = vmatmul.bf16.gmra.mxu0 %v1891
    %v2187 = vpop.f32.mrf.mxu0
    %v2188 = vadd.f32 0.0, %v2187
    %v2189 = vpop.f32.mrf.mxu0
    %v2190 = vadd.f32 0.0, %v2189
    %2191 = vmatmul.bf16.gmra.mxu0 %v1892
    %v2192 = vpop.f32.mrf.mxu0
    %v2193 = vadd.f32 0.0, %v2192
    %v2194 = vpop.f32.mrf.mxu0
    %v2195 = vadd.f32 0.0, %v2194
    %2196 = vmatmul.bf16.gmra.mxu0 %v1893
    %v2197 = vpop.f32.mrf.mxu0
    %v2198 = vadd.f32 0.0, %v2197
    %v2199 = vpop.f32.mrf.mxu0
    %v2200 = vadd.f32 0.0, %v2199
    %2201 = vdwg.mxu0
    %v2234 = vunpack.c.l.b16 %v1850
    %v2235 = vunpack.c.h.b16 %v1850
    %v2236 = vunpack.c.l.b16 %v1851
    %v2237 = vunpack.c.h.b16 %v1851
    %v2238 = vunpack.c.l.b16 %v1852
    %v2239 = vunpack.c.h.b16 %v1852
    %v2240 = vunpack.c.l.b16 %v1853
    %v2241 = vunpack.c.h.b16 %v1853
    %v2242 = vunpack.c.l.b16 %v1854
    %v2243 = vunpack.c.h.b16 %v1854
    %v2244 = vunpack.c.l.b16 %v1855
    %v2245 = vunpack.c.h.b16 %v1855
    %v2246 = vunpack.c.l.b16 %v1856
    %v2247 = vunpack.c.h.b16 %v1856
    %v2248 = vunpack.c.l.b16 %v1857
    %v2249 = vunpack.c.h.b16 %v1857
    %v2250 = vunpack.c.l.b16 %v1858
    %v2251 = vunpack.c.h.b16 %v1858
    %v2252 = vunpack.c.l.b16 %v1859
    %v2253 = vunpack.c.h.b16 %v1859
    %v2254 = vunpack.c.l.b16 %v1860
    %v2255 = vunpack.c.h.b16 %v1860
    %v2256 = vunpack.c.l.b16 %v1861
    %v2257 = vunpack.c.h.b16 %v1861
    %v2258 = vunpack.c.l.b16 %v1862
    %v2259 = vunpack.c.h.b16 %v1862
    %v2260 = vunpack.c.l.b16 %v1863
    %v2261 = vunpack.c.h.b16 %v1863
    %v2262 = vunpack.c.l.b16 %v1864
    %v2263 = vunpack.c.h.b16 %v1864
    %v2264 = vunpack.c.l.b16 %v1865
    %v2265 = vunpack.c.h.b16 %v1865
    %v2266 = vunpack.c.l.b16 %v1866
    %v2267 = vunpack.c.h.b16 %v1866
    %v2268 = vunpack.c.l.b16 %v1867
    %v2269 = vunpack.c.h.b16 %v1867
    %v2270 = vunpack.c.l.b16 %v1868
    %v2271 = vunpack.c.h.b16 %v1868
    %v2272 = vunpack.c.l.b16 %v1869
    %v2273 = vunpack.c.h.b16 %v1869
    %v2274 = vunpack.c.l.b16 %v1870
    %v2275 = vunpack.c.h.b16 %v1870
    %v2276 = vunpack.c.l.b16 %v1871
    %v2277 = vunpack.c.h.b16 %v1871
    %v2278 = vunpack.c.l.b16 %v1872
    %v2279 = vunpack.c.h.b16 %v1872
    %v2280 = vunpack.c.l.b16 %v1873
    %v2281 = vunpack.c.h.b16 %v1873
    %v2282 = vunpack.c.l.b16 %v1874
    %v2283 = vunpack.c.h.b16 %v1874
    %v2284 = vunpack.c.l.b16 %v1875
    %v2285 = vunpack.c.h.b16 %v1875
    %v2286 = vunpack.c.l.b16 %v1876
    %v2287 = vunpack.c.h.b16 %v1876
    %v2288 = vunpack.c.l.b16 %v1877
    %v2289 = vunpack.c.h.b16 %v1877
    %v2290 = vunpack.c.l.b16 %v1878
    %v2291 = vunpack.c.h.b16 %v1878
    %v2292 = vunpack.c.l.b16 %v1879
    %v2293 = vunpack.c.h.b16 %v1879
    %v2294 = vunpack.c.l.b16 %v1880
    %v2295 = vunpack.c.h.b16 %v1880
    %v2296 = vunpack.c.l.b16 %v1881
    %v2297 = vunpack.c.h.b16 %v1881
    %v2298 = vpack.c.b16 %v2238, %v2234
    %v2299 = vpack.c.b16 %v2239, %v2235
    %v2300 = vpack.c.b16 %v2240, %v2236
    %v2301 = vpack.c.b16 %v2241, %v2237
    %v2302 = vpack.c.b16 %v2246, %v2242
    %v2303 = vpack.c.b16 %v2247, %v2243
    %v2304 = vpack.c.b16 %v2248, %v2244
    %v2305 = vpack.c.b16 %v2249, %v2245
    %v2306 = vpack.c.b16 %v2254, %v2250
    %v2307 = vpack.c.b16 %v2255, %v2251
    %v2308 = vpack.c.b16 %v2256, %v2252
    %v2309 = vpack.c.b16 %v2257, %v2253
    %v2310 = vpack.c.b16 %v2262, %v2258
    %v2311 = vpack.c.b16 %v2263, %v2259
    %v2312 = vpack.c.b16 %v2264, %v2260
    %v2313 = vpack.c.b16 %v2265, %v2261
    %v2314 = vpack.c.b16 %v2270, %v2266
    %v2315 = vpack.c.b16 %v2271, %v2267
    %v2316 = vpack.c.b16 %v2272, %v2268
    %v2317 = vpack.c.b16 %v2273, %v2269
    %v2318 = vpack.c.b16 %v2278, %v2274
    %v2319 = vpack.c.b16 %v2279, %v2275
    %v2320 = vpack.c.b16 %v2280, %v2276
    %v2321 = vpack.c.b16 %v2281, %v2277
    %v2322 = vpack.c.b16 %v2286, %v2282
    %v2323 = vpack.c.b16 %v2287, %v2283
    %v2324 = vpack.c.b16 %v2288, %v2284
    %v2325 = vpack.c.b16 %v2289, %v2285
    %v2326 = vpack.c.b16 %v2294, %v2290
    %v2327 = vpack.c.b16 %v2295, %v2291
    %v2328 = vpack.c.b16 %v2296, %v2292
    %v2329 = vpack.c.b16 %v2297, %v2293
    %2362 = vmatpush.bf16.msra.mxu0 %v2326
    %2363 = vmatpush.bf16.msra.mxu0 %v2322
    %2364 = vmatpush.bf16.msra.mxu0 %v2318
    %2365 = vmatpush.bf16.msra.mxu0 %v2314
    %2366 = vmatpush.bf16.msra.mxu0 %v2310
    %2367 = vmatpush.bf16.msra.mxu0 %v2306
    %2368 = vmatpush.bf16.msra.mxu0 %v2302
    %2369 = vmatpush.bf16.msra.mxu0 %v2298
    %2370 = vmatmul.bf16.gmra.mxu0 %v1846
    %v2371 = vpop.f32.mrf.mxu0
    %v2372 = vadd.f32 %v2096, %v2371
    %v2373 = vpop.f32.mrf.mxu0
    %v2374 = vadd.f32 %v2098, %v2373
    %2375 = vmatmul.bf16.gmra.mxu0 %v1847
    %v2376 = vpop.f32.mrf.mxu0
    %v2377 = vadd.f32 %v2101, %v2376
    %v2378 = vpop.f32.mrf.mxu0
    %v2379 = vadd.f32 %v2103, %v2378
    %2380 = vmatmul.bf16.gmra.mxu0 %v1848
    %v2381 = vpop.f32.mrf.mxu0
    %v2382 = vadd.f32 %v2106, %v2381
    %v2383 = vpop.f32.mrf.mxu0
    %v2384 = vadd.f32 %v2108, %v2383
    %2385 = vmatmul.bf16.gmra.mxu0 %v1849
    %v2386 = vpop.f32.mrf.mxu0
    %v2387 = vadd.f32 %v2111, %v2386
    %v2388 = vpop.f32.mrf.mxu0
    %v2389 = vadd.f32 %v2113, %v2388
    %2390 = vdwg.mxu0
    %2391 = vmatpush.bf16.msra.mxu0 %v2327
    %2392 = vmatpush.bf16.msra.mxu0 %v2323
    %2393 = vmatpush.bf16.msra.mxu0 %v2319
    %2394 = vmatpush.bf16.msra.mxu0 %v2315
    %2395 = vmatpush.bf16.msra.mxu0 %v2311
    %2396 = vmatpush.bf16.msra.mxu0 %v2307
    %2397 = vmatpush.bf16.msra.mxu0 %v2303
    %2398 = vmatpush.bf16.msra.mxu0 %v2299
    %2399 = vmatmul.bf16.gmra.mxu0 %v1846
    %v2400 = vpop.f32.mrf.mxu0
    %v2401 = vadd.f32 %v2125, %v2400
    %v2402 = vpop.f32.mrf.mxu0
    %v2403 = vadd.f32 %v2127, %v2402
    %2404 = vmatmul.bf16.gmra.mxu0 %v1847
    %v2405 = vpop.f32.mrf.mxu0
    %v2406 = vadd.f32 %v2130, %v2405
    %v2407 = vpop.f32.mrf.mxu0
    %v2408 = vadd.f32 %v2132, %v2407
    %2409 = vmatmul.bf16.gmra.mxu0 %v1848
    %v2410 = vpop.f32.mrf.mxu0
    %v2411 = vadd.f32 %v2135, %v2410
    %v2412 = vpop.f32.mrf.mxu0
    %v2413 = vadd.f32 %v2137, %v2412
    %2414 = vmatmul.bf16.gmra.mxu0 %v1849
    %v2415 = vpop.f32.mrf.mxu0
    %v2416 = vadd.f32 %v2140, %v2415
    %v2417 = vpop.f32.mrf.mxu0
    %v2418 = vadd.f32 %v2142, %v2417
    %2419 = vdwg.mxu0
    %2420 = vmatpush.bf16.msra.mxu0 %v2328
    %2421 = vmatpush.bf16.msra.mxu0 %v2324
    %2422 = vmatpush.bf16.msra.mxu0 %v2320
    %2423 = vmatpush.bf16.msra.mxu0 %v2316
    %2424 = vmatpush.bf16.msra.mxu0 %v2312
    %2425 = vmatpush.bf16.msra.mxu0 %v2308
    %2426 = vmatpush.bf16.msra.mxu0 %v2304
    %2427 = vmatpush.bf16.msra.mxu0 %v2300
    %2428 = vmatmul.bf16.gmra.mxu0 %v1846
    %v2429 = vpop.f32.mrf.mxu0
    %v2430 = vadd.f32 %v2154, %v2429
    %v2431 = vpop.f32.mrf.mxu0
    %v2432 = vadd.f32 %v2156, %v2431
    %2433 = vmatmul.bf16.gmra.mxu0 %v1847
    %v2434 = vpop.f32.mrf.mxu0
    %v2435 = vadd.f32 %v2159, %v2434
    %v2436 = vpop.f32.mrf.mxu0
    %v2437 = vadd.f32 %v2161, %v2436
    %2438 = vmatmul.bf16.gmra.mxu0 %v1848
    %v2439 = vpop.f32.mrf.mxu0
    %v2440 = vadd.f32 %v2164, %v2439
    %v2441 = vpop.f32.mrf.mxu0
    %v2442 = vadd.f32 %v2166, %v2441
    %2443 = vmatmul.bf16.gmra.mxu0 %v1849
    %v2444 = vpop.f32.mrf.mxu0
    %v2445 = vadd.f32 %v2169, %v2444
    %v2446 = vpop.f32.mrf.mxu0
    %v2447 = vadd.f32 %v2171, %v2446
    %2448 = vdwg.mxu0
    %2449 = vmatpush.bf16.msra.mxu0 %v2329
    %2450 = vmatpush.bf16.msra.mxu0 %v2325
    %2451 = vmatpush.bf16.msra.mxu0 %v2321
    %2452 = vmatpush.bf16.msra.mxu0 %v2317
    %2453 = vmatpush.bf16.msra.mxu0 %v2313
    %2454 = vmatpush.bf16.msra.mxu0 %v2309
    %2455 = vmatpush.bf16.msra.mxu0 %v2305
    %2456 = vmatpush.bf16.msra.mxu0 %v2301
    %2457 = vmatmul.bf16.gmra.mxu0 %v1846
    %v2458 = vpop.f32.mrf.mxu0
    %v2459 = vadd.f32 %v2183, %v2458
    %v2460 = vpop.f32.mrf.mxu0
    %v2461 = vadd.f32 %v2185, %v2460
    %2462 = vmatmul.bf16.gmra.mxu0 %v1847
    %v2463 = vpop.f32.mrf.mxu0
    %v2464 = vadd.f32 %v2188, %v2463
    %v2465 = vpop.f32.mrf.mxu0
    %v2466 = vadd.f32 %v2190, %v2465
    %2467 = vmatmul.bf16.gmra.mxu0 %v1848
    %v2468 = vpop.f32.mrf.mxu0
    %v2469 = vadd.f32 %v2193, %v2468
    %v2470 = vpop.f32.mrf.mxu0
    %v2471 = vadd.f32 %v2195, %v2470
    %2472 = vmatmul.bf16.gmra.mxu0 %v1849
    %v2473 = vpop.f32.mrf.mxu0
    %v2474 = vadd.f32 %v2198, %v2473
    %v2475 = vpop.f32.mrf.mxu0
    %v2476 = vadd.f32 %v2200, %v2475
    %2477 = vdwg.mxu0
    %v2478 = vld [vmem:[%s8] sm:$0xf]
    %v2480 = vperm.slane %v2478, 0
    %v2481 = vperm.slane %v2478, 1
    %v2482 = vperm.slane %v2478, 2
    %v2483 = vperm.slane %v2478, 3
    %v2488 = vadd.f32 %v2372, %v2480
    %v2489 = vadd.f32 %v2401, %v2481
    %v2490 = vadd.f32 %v2430, %v2482
    %v2491 = vadd.f32 %v2459, %v2483
    %v2492 = vadd.f32 %v2374, %v2480
    %v2493 = vadd.f32 %v2403, %v2481
    %v2494 = vadd.f32 %v2432, %v2482
    %v2495 = vadd.f32 %v2461, %v2483
    %v2496 = vadd.f32 %v2377, %v2480
    %v2497 = vadd.f32 %v2406, %v2481
    %v2498 = vadd.f32 %v2435, %v2482
    %v2499 = vadd.f32 %v2464, %v2483
    %v2500 = vadd.f32 %v2379, %v2480
    %v2501 = vadd.f32 %v2408, %v2481
    %v2502 = vadd.f32 %v2437, %v2482
    %v2503 = vadd.f32 %v2466, %v2483
    %v2504 = vadd.f32 %v2382, %v2480
    %v2505 = vadd.f32 %v2411, %v2481
    %v2506 = vadd.f32 %v2440, %v2482
    %v2507 = vadd.f32 %v2469, %v2483
    %v2508 = vadd.f32 %v2384, %v2480
    %v2509 = vadd.f32 %v2413, %v2481
    %v2510 = vadd.f32 %v2442, %v2482
    %v2511 = vadd.f32 %v2471, %v2483
    %v2512 = vadd.f32 %v2387, %v2480
    %v2513 = vadd.f32 %v2416, %v2481
    %v2514 = vadd.f32 %v2445, %v2482
    %v2515 = vadd.f32 %v2474, %v2483
    %v2516 = vadd.f32 %v2389, %v2480
    %v2517 = vadd.f32 %v2418, %v2481
    %v2518 = vadd.f32 %v2447, %v2482
    %v2519 = vadd.f32 %v2476, %v2483
    %2520 = vst [vmem:[#allocation5] sm:$0xff] %v2488
    %2521 = vst [vmem:[#allocation5 + $0x8] sm:$0xff] %v2489
    %2522 = vst [vmem:[#allocation5 + $0x10] sm:$0xff] %v2490
    %2523 = vst [vmem:[#allocation5 + $0x18] sm:$0xff] %v2491
    %2524 = vst [vmem:[#allocation5 + $0x20] sm:$0xff] %v2492
    %2525 = vst [vmem:[#allocation5 + $0x28] sm:$0xff] %v2493
    %2526 = vst [vmem:[#allocation5 + $0x30] sm:$0xff] %v2494
    %2527 = vst [vmem:[#allocation5 + $0x38] sm:$0xff] %v2495
    %2528 = vst [vmem:[#allocation5 + $0x40] sm:$0xff] %v2496
    %2529 = vst [vmem:[#allocation5 + $0x48] sm:$0xff] %v2497
    %2530 = vst [vmem:[#allocation5 + $0x50] sm:$0xff] %v2498
    %2531 = vst [vmem:[#allocation5 + $0x58] sm:$0xff] %v2499
    %2532 = vst [vmem:[#allocation5 + $0x60] sm:$0xff] %v2500
    %2533 = vst [vmem:[#allocation5 + $0x68] sm:$0xff] %v2501
    %2534 = vst [vmem:[#allocation5 + $0x70] sm:$0xff] %v2502
    %2535 = vst [vmem:[#allocation5 + $0x78] sm:$0xff] %v2503
    %2536 = vst [vmem:[#allocation5 + $0x80] sm:$0xff] %v2504
    %2537 = vst [vmem:[#allocation5 + $0x88] sm:$0xff] %v2505
    %2538 = vst [vmem:[#allocation5 + $0x90] sm:$0xff] %v2506
    %2539 = vst [vmem:[#allocation5 + $0x98] sm:$0xff] %v2507
    %2540 = vst [vmem:[#allocation5 + $0xa0] sm:$0xff] %v2508
    %2541 = vst [vmem:[#allocation5 + $0xa8] sm:$0xff] %v2509
    %2542 = vst [vmem:[#allocation5 + $0xb0] sm:$0xff] %v2510
    %2543 = vst [vmem:[#allocation5 + $0xb8] sm:$0xff] %v2511
    %2544 = vst [vmem:[#allocation5 + $0xc0] sm:$0xff] %v2512
    %2545 = vst [vmem:[#allocation5 + $0xc8] sm:$0xff] %v2513
    %2546 = vst [vmem:[#allocation5 + $0xd0] sm:$0xff] %v2514
    %2547 = vst [vmem:[#allocation5 + $0xd8] sm:$0xff] %v2515
    %2548 = vst [vmem:[#allocation5 + $0xe0] sm:$0xff] %v2516
    %2549 = vst [vmem:[#allocation5 + $0xe8] sm:$0xff] %v2517
    %2550 = vst [vmem:[#allocation5 + $0xf0] sm:$0xff] %v2518
    %2551 = vst [vmem:[#allocation5 + $0xf8] sm:$0xff] %v2519
    %v2552 = vld [vmem:[#allocation17] sm:$0xff]
    %v2553 = vld [vmem:[#allocation17 + $0x8] sm:$0xff]
    %v2554 = vld [vmem:[#allocation17 + $0x10] sm:$0xff]
    %v2555 = vld [vmem:[#allocation17 + $0x18] sm:$0xff]
    %v2556 = vld [vmem:[#allocation17 + $0x20] sm:$0xff]
    %v2557 = vld [vmem:[#allocation17 + $0x28] sm:$0xff]
    %v2558 = vld [vmem:[#allocation17 + $0x30] sm:$0xff]
    %v2559 = vld [vmem:[#allocation17 + $0x38] sm:$0xff]
    %v2560 = vld [vmem:[#allocation17 + $0x40] sm:$0xff]
    %v2561 = vld [vmem:[#allocation17 + $0x48] sm:$0xff]
    %v2562 = vld [vmem:[#allocation17 + $0x50] sm:$0xff]
    %v2563 = vld [vmem:[#allocation17 + $0x58] sm:$0xff]
    %v2564 = vld [vmem:[#allocation17 + $0x60] sm:$0xff]
    %v2565 = vld [vmem:[#allocation17 + $0x68] sm:$0xff]
    %v2566 = vld [vmem:[#allocation17 + $0x70] sm:$0xff]
    %v2567 = vld [vmem:[#allocation17 + $0x78] sm:$0xff]
    %v2568 = vld [vmem:[#allocation17 + $0x80] sm:$0xff]
    %v2569 = vld [vmem:[#allocation17 + $0x88] sm:$0xff]
    %v2570 = vld [vmem:[#allocation17 + $0x90] sm:$0xff]
    %v2571 = vld [vmem:[#allocation17 + $0x98] sm:$0xff]
    %v2572 = vld [vmem:[#allocation17 + $0xa0] sm:$0xff]
    %v2573 = vld [vmem:[#allocation17 + $0xa8] sm:$0xff]
    %v2574 = vld [vmem:[#allocation17 + $0xb0] sm:$0xff]
    %v2575 = vld [vmem:[#allocation17 + $0xb8] sm:$0xff]
    %v2576 = vld [vmem:[#allocation17 + $0xc0] sm:$0xff]
    %v2577 = vld [vmem:[#allocation17 + $0xc8] sm:$0xff]
    %v2578 = vld [vmem:[#allocation17 + $0xd0] sm:$0xff]
    %v2579 = vld [vmem:[#allocation17 + $0xd8] sm:$0xff]
    %v2580 = vld [vmem:[#allocation17 + $0xe0] sm:$0xff]
    %v2581 = vld [vmem:[#allocation17 + $0xe8] sm:$0xff]
    %v2582 = vld [vmem:[#allocation17 + $0xf0] sm:$0xff]
    %v2583 = vld [vmem:[#allocation17 + $0xf8] sm:$0xff]
    %v2584 = vld [vmem:[%s995] sm:$0xff]
    %v2585 = vld [vmem:[%s995 + $0x8] sm:$0xff]
    %v2586 = vld [vmem:[%s995 + $0x10] sm:$0xff]
    %v2587 = vld [vmem:[%s995 + $0x18] sm:$0xff]
    %v2620 = vunpack.c.l.b16 %v2552
    %v2621 = vunpack.c.h.b16 %v2552
    %v2622 = vunpack.c.l.b16 %v2553
    %v2623 = vunpack.c.h.b16 %v2553
    %v2624 = vunpack.c.l.b16 %v2554
    %v2625 = vunpack.c.h.b16 %v2554
    %v2626 = vunpack.c.l.b16 %v2555
    %v2627 = vunpack.c.h.b16 %v2555
    %v2628 = vunpack.c.l.b16 %v2556
    %v2629 = vunpack.c.h.b16 %v2556
    %v2630 = vunpack.c.l.b16 %v2557
    %v2631 = vunpack.c.h.b16 %v2557
    %v2632 = vunpack.c.l.b16 %v2558
    %v2633 = vunpack.c.h.b16 %v2558
    %v2634 = vunpack.c.l.b16 %v2559
    %v2635 = vunpack.c.h.b16 %v2559
    %v2636 = vunpack.c.l.b16 %v2560
    %v2637 = vunpack.c.h.b16 %v2560
    %v2638 = vunpack.c.l.b16 %v2561
    %v2639 = vunpack.c.h.b16 %v2561
    %v2640 = vunpack.c.l.b16 %v2562
    %v2641 = vunpack.c.h.b16 %v2562
    %v2642 = vunpack.c.l.b16 %v2563
    %v2643 = vunpack.c.h.b16 %v2563
    %v2644 = vunpack.c.l.b16 %v2564
    %v2645 = vunpack.c.h.b16 %v2564
    %v2646 = vunpack.c.l.b16 %v2565
    %v2647 = vunpack.c.h.b16 %v2565
    %v2648 = vunpack.c.l.b16 %v2566
    %v2649 = vunpack.c.h.b16 %v2566
    %v2650 = vunpack.c.l.b16 %v2567
    %v2651 = vunpack.c.h.b16 %v2567
    %v2652 = vunpack.c.l.b16 %v2568
    %v2653 = vunpack.c.h.b16 %v2568
    %v2654 = vunpack.c.l.b16 %v2569
    %v2655 = vunpack.c.h.b16 %v2569
    %v2656 = vunpack.c.l.b16 %v2570
    %v2657 = vunpack.c.h.b16 %v2570
    %v2658 = vunpack.c.l.b16 %v2571
    %v2659 = vunpack.c.h.b16 %v2571
    %v2660 = vunpack.c.l.b16 %v2572
    %v2661 = vunpack.c.h.b16 %v2572
    %v2662 = vunpack.c.l.b16 %v2573
    %v2663 = vunpack.c.h.b16 %v2573
    %v2664 = vunpack.c.l.b16 %v2574
    %v2665 = vunpack.c.h.b16 %v2574
    %v2666 = vunpack.c.l.b16 %v2575
    %v2667 = vunpack.c.h.b16 %v2575
    %v2668 = vunpack.c.l.b16 %v2576
    %v2669 = vunpack.c.h.b16 %v2576
    %v2670 = vunpack.c.l.b16 %v2577
    %v2671 = vunpack.c.h.b16 %v2577
    %v2672 = vunpack.c.l.b16 %v2578
    %v2673 = vunpack.c.h.b16 %v2578
    %v2674 = vunpack.c.l.b16 %v2579
    %v2675 = vunpack.c.h.b16 %v2579
    %v2676 = vunpack.c.l.b16 %v2580
    %v2677 = vunpack.c.h.b16 %v2580
    %v2678 = vunpack.c.l.b16 %v2581
    %v2679 = vunpack.c.h.b16 %v2581
    %v2680 = vunpack.c.l.b16 %v2582
    %v2681 = vunpack.c.h.b16 %v2582
    %v2682 = vunpack.c.l.b16 %v2583
    %v2683 = vunpack.c.h.b16 %v2583
    %v2684 = vpack.c.b16 %v2624, %v2620
    %v2685 = vpack.c.b16 %v2625, %v2621
    %v2686 = vpack.c.b16 %v2626, %v2622
    %v2687 = vpack.c.b16 %v2627, %v2623
    %v2688 = vpack.c.b16 %v2632, %v2628
    %v2689 = vpack.c.b16 %v2633, %v2629
    %v2690 = vpack.c.b16 %v2634, %v2630
    %v2691 = vpack.c.b16 %v2635, %v2631
    %v2692 = vpack.c.b16 %v2640, %v2636
    %v2693 = vpack.c.b16 %v2641, %v2637
    %v2694 = vpack.c.b16 %v2642, %v2638
    %v2695 = vpack.c.b16 %v2643, %v2639
    %v2696 = vpack.c.b16 %v2648, %v2644
    %v2697 = vpack.c.b16 %v2649, %v2645
    %v2698 = vpack.c.b16 %v2650, %v2646
    %v2699 = vpack.c.b16 %v2651, %v2647
    %v2700 = vpack.c.b16 %v2656, %v2652
    %v2701 = vpack.c.b16 %v2657, %v2653
    %v2702 = vpack.c.b16 %v2658, %v2654
    %v2703 = vpack.c.b16 %v2659, %v2655
    %v2704 = vpack.c.b16 %v2664, %v2660
    %v2705 = vpack.c.b16 %v2665, %v2661
    %v2706 = vpack.c.b16 %v2666, %v2662
    %v2707 = vpack.c.b16 %v2667, %v2663
    %v2708 = vpack.c.b16 %v2672, %v2668
    %v2709 = vpack.c.b16 %v2673, %v2669
    %v2710 = vpack.c.b16 %v2674, %v2670
    %v2711 = vpack.c.b16 %v2675, %v2671
    %v2712 = vpack.c.b16 %v2680, %v2676
    %v2713 = vpack.c.b16 %v2681, %v2677
    %v2714 = vpack.c.b16 %v2682, %v2678
    %v2715 = vpack.c.b16 %v2683, %v2679
    %2748 = vmatpush.bf16.msra.mxu0 %v2712
    %2749 = vmatpush.bf16.msra.mxu0 %v2708
    %2750 = vmatpush.bf16.msra.mxu0 %v2704
    %2751 = vmatpush.bf16.msra.mxu0 %v2700
    %2752 = vmatpush.bf16.msra.mxu0 %v2696
    %2753 = vmatpush.bf16.msra.mxu0 %v2692
    %2754 = vmatpush.bf16.msra.mxu0 %v2688
    %2755 = vmatpush.bf16.msra.mxu0 %v2684
    %2756 = vmatmul.bf16.gmra.mxu0 0
    %v2757 = vpop.f32.mrf.mxu0
    %v2758 = vadd.f32 0.0, %v2757
    %v2759 = vpop.f32.mrf.mxu0
    %2760 = vdwg.mxu0
    %2761 = vmatpush.bf16.msra.mxu0 %v2713
    %2762 = vmatpush.bf16.msra.mxu0 %v2709
    %2763 = vmatpush.bf16.msra.mxu0 %v2705
    %2764 = vmatpush.bf16.msra.mxu0 %v2701
    %2765 = vmatpush.bf16.msra.mxu0 %v2697
    %2766 = vmatpush.bf16.msra.mxu0 %v2693
    %2767 = vmatpush.bf16.msra.mxu0 %v2689
    %2768 = vmatpush.bf16.msra.mxu0 %v2685
    %2769 = vmatmul.bf16.gmra.mxu0 0
    %v2770 = vpop.f32.mrf.mxu0
    %v2771 = vadd.f32 0.0, %v2770
    %v2772 = vpop.f32.mrf.mxu0
    %2773 = vdwg.mxu0
    %2774 = vmatpush.bf16.msra.mxu0 %v2714
    %2775 = vmatpush.bf16.msra.mxu0 %v2710
    %2776 = vmatpush.bf16.msra.mxu0 %v2706
    %2777 = vmatpush.bf16.msra.mxu0 %v2702
    %2778 = vmatpush.bf16.msra.mxu0 %v2698
    %2779 = vmatpush.bf16.msra.mxu0 %v2694
    %2780 = vmatpush.bf16.msra.mxu0 %v2690
    %2781 = vmatpush.bf16.msra.mxu0 %v2686
    %2782 = vmatmul.bf16.gmra.mxu0 0
    %v2783 = vpop.f32.mrf.mxu0
    %v2784 = vadd.f32 0.0, %v2783
    %v2785 = vpop.f32.mrf.mxu0
    %2786 = vdwg.mxu0
    %2787 = vmatpush.bf16.msra.mxu0 %v2715
    %2788 = vmatpush.bf16.msra.mxu0 %v2711
    %2789 = vmatpush.bf16.msra.mxu0 %v2707
    %2790 = vmatpush.bf16.msra.mxu0 %v2703
    %2791 = vmatpush.bf16.msra.mxu0 %v2699
    %2792 = vmatpush.bf16.msra.mxu0 %v2695
    %2793 = vmatpush.bf16.msra.mxu0 %v2691
    %2794 = vmatpush.bf16.msra.mxu0 %v2687
    %2795 = vmatmul.bf16.gmra.mxu0 0
    %v2796 = vpop.f32.mrf.mxu0
    %v2797 = vadd.f32 0.0, %v2796
    %v2798 = vpop.f32.mrf.mxu0
    %2799 = vdwg.mxu0
    %v2800 = vadd.f32 %v2584, %v2758
    %v2801 = vadd.f32 %v2585, %v2771
    %v2802 = vadd.f32 %v2586, %v2784
    %v2803 = vadd.f32 %v2587, %v2797
    %v2804 = vmul.f32 %v2800, 0.5
    %v2805 = vmul.f32 %v2801, 0.5
    %v2806 = vmul.f32 %v2802, 0.5
    %v2807 = vtanh.pop %v2804
    %v2808 = vtanh.pop %v2805
    %v2809 = vtanh.pop %v2806
    %v2810 = vadd.f32 %v2807, 1.0
    %v2811 = vadd.f32 %v2808, 1.0
    %v2812 = vadd.f32 %v2809, 1.0
    %v2813 = vmul.f32 %v2810, 0.5
    %v2814 = vmul.f32 %v2811, 0.5
    %v2815 = vmul.f32 %v2812, 0.5
    %v2816 = vtanh.pop %v2803
    %v2817 = vmul.f32 %v2814, 0.0
    %v2818 = vmul.f32 %v2813, %v2816
    %v2819 = vadd.f32 %v2817, %v2818
    %v2820 = vtanh.pop %v2819
    %v2821 = vmul.f32 %v2815, %v2820
    %2822 = vst [vmem:[#allocation3] sm:$0xff] %v2821
    %2823 = vst [vmem:[%s1235] sm:$0xff] %v2821
    %v2824 = vld [vmem:[%s1239] sm:$0xff]
    %v2825 = vld [vmem:[%s1239 + $0x8] sm:$0xff]
    %v2826 = vld [vmem:[%s1239 + $0x10] sm:$0xff]
    %v2827 = vld [vmem:[%s1239 + $0x18] sm:$0xff]
    %v2828 = vpack.c.bf16 %v2821, %v2821
    %2829 = vmatpush.bf16.msra.mxu0 %v2712
    %2830 = vmatpush.bf16.msra.mxu0 %v2708
    %2831 = vmatpush.bf16.msra.mxu0 %v2704
    %2832 = vmatpush.bf16.msra.mxu0 %v2700
    %2833 = vmatpush.bf16.msra.mxu0 %v2696
    %2834 = vmatpush.bf16.msra.mxu0 %v2692
    %2835 = vmatpush.bf16.msra.mxu0 %v2688
    %2836 = vmatpush.bf16.msra.mxu0 %v2684
    %2837 = vmatmul.bf16.gmra.mxu0 %v2828
    %v2838 = vpop.f32.mrf.mxu0
    %v2839 = vadd.f32 0.0, %v2838
    %v2840 = vpop.f32.mrf.mxu0
    %2841 = vdwg.mxu0
    %2842 = vmatpush.bf16.msra.mxu0 %v2713
    %2843 = vmatpush.bf16.msra.mxu0 %v2709
    %2844 = vmatpush.bf16.msra.mxu0 %v2705
    %2845 = vmatpush.bf16.msra.mxu0 %v2701
    %2846 = vmatpush.bf16.msra.mxu0 %v2697
    %2847 = vmatpush.bf16.msra.mxu0 %v2693
    %2848 = vmatpush.bf16.msra.mxu0 %v2689
    %2849 = vmatpush.bf16.msra.mxu0 %v2685
    %2850 = vmatmul.bf16.gmra.mxu0 %v2828
    %v2851 = vpop.f32.mrf.mxu0
    %v2852 = vadd.f32 0.0, %v2851
    %v2853 = vpop.f32.mrf.mxu0
    %2854 = vdwg.mxu0
    %2855 = vmatpush.bf16.msra.mxu0 %v2714
    %2856 = vmatpush.bf16.msra.mxu0 %v2710
    %2857 = vmatpush.bf16.msra.mxu0 %v2706
    %2858 = vmatpush.bf16.msra.mxu0 %v2702
    %2859 = vmatpush.bf16.msra.mxu0 %v2698
    %2860 = vmatpush.bf16.msra.mxu0 %v2694
    %2861 = vmatpush.bf16.msra.mxu0 %v2690
    %2862 = vmatpush.bf16.msra.mxu0 %v2686
    %2863 = vmatmul.bf16.gmra.mxu0 %v2828
    %v2864 = vpop.f32.mrf.mxu0
    %v2865 = vadd.f32 0.0, %v2864
    %v2866 = vpop.f32.mrf.mxu0
    %2867 = vdwg.mxu0
    %2868 = vmatpush.bf16.msra.mxu0 %v2715
    %2869 = vmatpush.bf16.msra.mxu0 %v2711
    %2870 = vmatpush.bf16.msra.mxu0 %v2707
    %2871 = vmatpush.bf16.msra.mxu0 %v2703
    %2872 = vmatpush.bf16.msra.mxu0 %v2699
    %2873 = vmatpush.bf16.msra.mxu0 %v2695
    %2874 = vmatpush.bf16.msra.mxu0 %v2691
    %2875 = vmatpush.bf16.msra.mxu0 %v2687
    %2876 = vmatmul.bf16.gmra.mxu0 %v2828
    %v2877 = vpop.f32.mrf.mxu0
    %v2878 = vadd.f32 0.0, %v2877
    %v2879 = vpop.f32.mrf.mxu0
    %2880 = vdwg.mxu0
    %v2881 = vadd.f32 %v2824, %v2839
    %v2882 = vadd.f32 %v2825, %v2852
    %v2883 = vadd.f32 %v2826, %v2865
    %v2884 = vadd.f32 %v2827, %v2878
    %v2885 = vmul.f32 %v2881, 0.5
    %v2886 = vmul.f32 %v2882, 0.5
    %v2887 = vmul.f32 %v2883, 0.5
    %v2888 = vtanh.pop %v2885
    %v2889 = vtanh.pop %v2886
    %v2890 = vtanh.pop %v2887
    %v2891 = vadd.f32 %v2888, 1.0
    %v2892 = vadd.f32 %v2889, 1.0
    %v2893 = vadd.f32 %v2890, 1.0
    %v2894 = vmul.f32 %v2891, 0.5
    %v2895 = vmul.f32 %v2892, 0.5
    %v2896 = vmul.f32 %v2893, 0.5
    %v2897 = vtanh.pop %v2884
    %v2898 = vmul.f32 %v2895, %v2819
    %v2899 = vmul.f32 %v2894, %v2897
    %v2900 = vadd.f32 %v2898, %v2899
    %v2901 = vtanh.pop %v2900
    %v2902 = vmul.f32 %v2896, %v2901
    %2903 = vst [vmem:[%s1319] sm:$0xff] %v2902
    %2904 = vst [vmem:[%s1321] sm:$0xff] %v2902
    %v2905 = vld [vmem:[%s1325] sm:$0xff]
    %v2906 = vld [vmem:[%s1325 + $0x8] sm:$0xff]
    %v2907 = vld [vmem:[%s1325 + $0x10] sm:$0xff]
    %v2908 = vld [vmem:[%s1325 + $0x18] sm:$0xff]
    %v2909 = vpack.c.bf16 %v2902, %v2902
    %2910 = vmatpush.bf16.msra.mxu0 %v2712
    %2911 = vmatpush.bf16.msra.mxu0 %v2708
    %2912 = vmatpush.bf16.msra.mxu0 %v2704
    %2913 = vmatpush.bf16.msra.mxu0 %v2700
    %2914 = vmatpush.bf16.msra.mxu0 %v2696
    %2915 = vmatpush.bf16.msra.mxu0 %v2692
    %2916 = vmatpush.bf16.msra.mxu0 %v2688
    %2917 = vmatpush.bf16.msra.mxu0 %v2684
    %2918 = vmatmul.bf16.gmra.mxu0 %v2909
    %v2919 = vpop.f32.mrf.mxu0
    %v2920 = vadd.f32 0.0, %v2919
    %v2921 = vpop.f32.mrf.mxu0
    %2922 = vdwg.mxu0
    %2923 = vmatpush.bf16.msra.mxu0 %v2713
    %2924 = vmatpush.bf16.msra.mxu0 %v2709
    %2925 = vmatpush.bf16.msra.mxu0 %v2705
    %2926 = vmatpush.bf16.msra.mxu0 %v2701
    %2927 = vmatpush.bf16.msra.mxu0 %v2697
    %2928 = vmatpush.bf16.msra.mxu0 %v2693
    %2929 = vmatpush.bf16.msra.mxu0 %v2689
    %2930 = vmatpush.bf16.msra.mxu0 %v2685
    %2931 = vmatmul.bf16.gmra.mxu0 %v2909
    %v2932 = vpop.f32.mrf.mxu0
    %v2933 = vadd.f32 0.0, %v2932
    %v2934 = vpop.f32.mrf.mxu0
    %2935 = vdwg.mxu0
    %2936 = vmatpush.bf16.msra.mxu0 %v2714
    %2937 = vmatpush.bf16.msra.mxu0 %v2710
    %2938 = vmatpush.bf16.msra.mxu0 %v2706
    %2939 = vmatpush.bf16.msra.mxu0 %v2702
    %2940 = vmatpush.bf16.msra.mxu0 %v2698
    %2941 = vmatpush.bf16.msra.mxu0 %v2694
    %2942 = vmatpush.bf16.msra.mxu0 %v2690
    %2943 = vmatpush.bf16.msra.mxu0 %v2686
    %2944 = vmatmul.bf16.gmra.mxu0 %v2909
    %v2945 = vpop.f32.mrf.mxu0
    %v2946 = vadd.f32 0.0, %v2945
    %v2947 = vpop.f32.mrf.mxu0
    %2948 = vdwg.mxu0
    %2949 = vmatpush.bf16.msra.mxu0 %v2715
    %2950 = vmatpush.bf16.msra.mxu0 %v2711
    %2951 = vmatpush.bf16.msra.mxu0 %v2707
    %2952 = vmatpush.bf16.msra.mxu0 %v2703
    %2953 = vmatpush.bf16.msra.mxu0 %v2699
    %2954 = vmatpush.bf16.msra.mxu0 %v2695
    %2955 = vmatpush.bf16.msra.mxu0 %v2691
    %2956 = vmatpush.bf16.msra.mxu0 %v2687
    %2957 = vmatmul.bf16.gmra.mxu0 %v2909
    %v2958 = vpop.f32.mrf.mxu0
    %v2959 = vadd.f32 0.0, %v2958
    %v2960 = vpop.f32.mrf.mxu0
    %2961 = vdwg.mxu0
    %v2962 = vadd.f32 %v2905, %v2920
    %v2963 = vadd.f32 %v2906, %v2933
    %v2964 = vadd.f32 %v2907, %v2946
    %v2965 = vadd.f32 %v2908, %v2959
    %v2966 = vmul.f32 %v2962, 0.5
    %v2967 = vmul.f32 %v2963, 0.5
    %v2968 = vmul.f32 %v2964, 0.5
    %v2969 = vtanh.pop %v2966
    %v2970 = vtanh.pop %v2967
    %v2971 = vtanh.pop %v2968
    %v2972 = vadd.f32 %v2969, 1.0
    %v2973 = vadd.f32 %v2970, 1.0
    %v2974 = vadd.f32 %v2971, 1.0
    %v2975 = vmul.f32 %v2972, 0.5
    %v2976 = vmul.f32 %v2973, 0.5
    %v2977 = vmul.f32 %v2974, 0.5
    %v2978 = vtanh.pop %v2965
    %v2979 = vmul.f32 %v2976, %v2900
    %v2980 = vmul.f32 %v2975, %v2978
    %v2981 = vadd.f32 %v2979, %v2980
    %v2982 = vtanh.pop %v2981
    %v2983 = vmul.f32 %v2977, %v2982
    %2984 = vst [vmem:[%s1405] sm:$0xff] %v2983
    %2985 = vst [vmem:[%s1407] sm:$0xff] %v2983
    %v2986 = vld [vmem:[%s1411] sm:$0xff]
    %v2987 = vld [vmem:[%s1411 + $0x8] sm:$0xff]
    %v2988 = vld [vmem:[%s1411 + $0x10] sm:$0xff]
    %v2989 = vld [vmem:[%s1411 + $0x18] sm:$0xff]
    %v2990 = vpack.c.bf16 %v2983, %v2983
    %2991 = vmatpush.bf16.msra.mxu0 %v2712
    %2992 = vmatpush.bf16.msra.mxu0 %v2708
    %2993 = vmatpush.bf16.msra.mxu0 %v2704
    %2994 = vmatpush.bf16.msra.mxu0 %v2700
    %2995 = vmatpush.bf16.msra.mxu0 %v2696
    %2996 = vmatpush.bf16.msra.mxu0 %v2692
    %2997 = vmatpush.bf16.msra.mxu0 %v2688
    %2998 = vmatpush.bf16.msra.mxu0 %v2684
    %2999 = vmatmul.bf16.gmra.mxu0 %v2990
    %v3000 = vpop.f32.mrf.mxu0
    %v3001 = vadd.f32 0.0, %v3000
    %v3002 = vpop.f32.mrf.mxu0
    %3003 = vdwg.mxu0
    %3004 = vmatpush.bf16.msra.mxu0 %v2713
    %3005 = vmatpush.bf16.msra.mxu0 %v2709
    %3006 = vmatpush.bf16.msra.mxu0 %v2705
    %3007 = vmatpush.bf16.msra.mxu0 %v2701
    %3008 = vmatpush.bf16.msra.mxu0 %v2697
    %3009 = vmatpush.bf16.msra.mxu0 %v2693
    %3010 = vmatpush.bf16.msra.mxu0 %v2689
    %3011 = vmatpush.bf16.msra.mxu0 %v2685
    %3012 = vmatmul.bf16.gmra.mxu0 %v2990
    %v3013 = vpop.f32.mrf.mxu0
    %v3014 = vadd.f32 0.0, %v3013
    %v3015 = vpop.f32.mrf.mxu0
    %3016 = vdwg.mxu0
    %3017 = vmatpush.bf16.msra.mxu0 %v2714
    %3018 = vmatpush.bf16.msra.mxu0 %v2710
    %3019 = vmatpush.bf16.msra.mxu0 %v2706
    %3020 = vmatpush.bf16.msra.mxu0 %v2702
    %3021 = vmatpush.bf16.msra.mxu0 %v2698
    %3022 = vmatpush.bf16.msra.mxu0 %v2694
    %3023 = vmatpush.bf16.msra.mxu0 %v2690
    %3024 = vmatpush.bf16.msra.mxu0 %v2686
    %3025 = vmatmul.bf16.gmra.mxu0 %v2990
    %v3026 = vpop.f32.mrf.mxu0
    %v3027 = vadd.f32 0.0, %v3026
    %v3028 = vpop.f32.mrf.mxu0
    %3029 = vdwg.mxu0
    %3030 = vmatpush.bf16.msra.mxu0 %v2715
    %3031 = vmatpush.bf16.msra.mxu0 %v2711
    %3032 = vmatpush.bf16.msra.mxu0 %v2707
    %3033 = vmatpush.bf16.msra.mxu0 %v2703
    %3034 = vmatpush.bf16.msra.mxu0 %v2699
    %3035 = vmatpush.bf16.msra.mxu0 %v2695
    %3036 = vmatpush.bf16.msra.mxu0 %v2691
    %3037 = vmatpush.bf16.msra.mxu0 %v2687
    %3038 = vmatmul.bf16.gmra.mxu0 %v2990
    %v3039 = vpop.f32.mrf.mxu0
    %v3040 = vadd.f32 0.0, %v3039
    %v3041 = vpop.f32.mrf.mxu0
    %3042 = vdwg.mxu0
    %v3043 = vadd.f32 %v2986, %v3001
    %v3044 = vadd.f32 %v2987, %v3014
    %v3045 = vadd.f32 %v2988, %v3027
    %v3046 = vadd.f32 %v2989, %v3040
    %v3047 = vmul.f32 %v3043, 0.5
    %v3048 = vmul.f32 %v3044, 0.5
    %v3049 = vmul.f32 %v3045, 0.5
    %v3050 = vtanh.pop %v3047
    %v3051 = vtanh.pop %v3048
    %v3052 = vtanh.pop %v3049
    %v3053 = vadd.f32 %v3050, 1.0
    %v3054 = vadd.f32 %v3051, 1.0
    %v3055 = vadd.f32 %v3052, 1.0
    %v3056 = vmul.f32 %v3053, 0.5
    %v3057 = vmul.f32 %v3054, 0.5
    %v3058 = vmul.f32 %v3055, 0.5
    %v3059 = vtanh.pop %v3046
    %v3060 = vmul.f32 %v3057, %v2981
    %v3061 = vmul.f32 %v3056, %v3059
    %v3062 = vadd.f32 %v3060, %v3061
    %v3063 = vtanh.pop %v3062
    %v3064 = vmul.f32 %v3058, %v3063
    %3065 = vst [vmem:[%s1491] sm:$0xff] %v3064
    %3066 = vst [vmem:[%s1493] sm:$0xff] %v3064
    %v3067 = vld [vmem:[%s1497] sm:$0xff]
    %v3068 = vld [vmem:[%s1497 + $0x8] sm:$0xff]
    %v3069 = vld [vmem:[%s1497 + $0x10] sm:$0xff]
    %v3070 = vld [vmem:[%s1497 + $0x18] sm:$0xff]
    %v3071 = vpack.c.bf16 %v3064, %v3064
    %3072 = vmatpush.bf16.msra.mxu0 %v2712
    %3073 = vmatpush.bf16.msra.mxu0 %v2708
    %3074 = vmatpush.bf16.msra.mxu0 %v2704
    %3075 = vmatpush.bf16.msra.mxu0 %v2700
    %3076 = vmatpush.bf16.msra.mxu0 %v2696
    %3077 = vmatpush.bf16.msra.mxu0 %v2692
    %3078 = vmatpush.bf16.msra.mxu0 %v2688
    %3079 = vmatpush.bf16.msra.mxu0 %v2684
    %3080 = vmatmul.bf16.gmra.mxu0 %v3071
    %v3081 = vpop.f32.mrf.mxu0
    %v3082 = vadd.f32 0.0, %v3081
    %v3083 = vpop.f32.mrf.mxu0
    %3084 = vdwg.mxu0
    %3085 = vmatpush.bf16.msra.mxu0 %v2713
    %3086 = vmatpush.bf16.msra.mxu0 %v2709
    %3087 = vmatpush.bf16.msra.mxu0 %v2705
    %3088 = vmatpush.bf16.msra.mxu0 %v2701
    %3089 = vmatpush.bf16.msra.mxu0 %v2697
    %3090 = vmatpush.bf16.msra.mxu0 %v2693
    %3091 = vmatpush.bf16.msra.mxu0 %v2689
    %3092 = vmatpush.bf16.msra.mxu0 %v2685
    %3093 = vmatmul.bf16.gmra.mxu0 %v3071
    %v3094 = vpop.f32.mrf.mxu0
    %v3095 = vadd.f32 0.0, %v3094
    %v3096 = vpop.f32.mrf.mxu0
    %3097 = vdwg.mxu0
    %3098 = vmatpush.bf16.msra.mxu0 %v2714
    %3099 = vmatpush.bf16.msra.mxu0 %v2710
    %3100 = vmatpush.bf16.msra.mxu0 %v2706
    %3101 = vmatpush.bf16.msra.mxu0 %v2702
    %3102 = vmatpush.bf16.msra.mxu0 %v2698
    %3103 = vmatpush.bf16.msra.mxu0 %v2694
    %3104 = vmatpush.bf16.msra.mxu0 %v2690
    %3105 = vmatpush.bf16.msra.mxu0 %v2686
    %3106 = vmatmul.bf16.gmra.mxu0 %v3071
    %v3107 = vpop.f32.mrf.mxu0
    %v3108 = vadd.f32 0.0, %v3107
    %v3109 = vpop.f32.mrf.mxu0
    %3110 = vdwg.mxu0
    %3111 = vmatpush.bf16.msra.mxu0 %v2715
    %3112 = vmatpush.bf16.msra.mxu0 %v2711
    %3113 = vmatpush.bf16.msra.mxu0 %v2707
    %3114 = vmatpush.bf16.msra.mxu0 %v2703
    %3115 = vmatpush.bf16.msra.mxu0 %v2699
    %3116 = vmatpush.bf16.msra.mxu0 %v2695
    %3117 = vmatpush.bf16.msra.mxu0 %v2691
    %3118 = vmatpush.bf16.msra.mxu0 %v2687
    %3119 = vmatmul.bf16.gmra.mxu0 %v3071
    %v3120 = vpop.f32.mrf.mxu0
    %v3121 = vadd.f32 0.0, %v3120
    %v3122 = vpop.f32.mrf.mxu0
    %3123 = vdwg.mxu0
    %v3124 = vadd.f32 %v3067, %v3082
    %v3125 = vadd.f32 %v3068, %v3095
    %v3126 = vadd.f32 %v3069, %v3108
    %v3127 = vadd.f32 %v3070, %v3121
    %v3128 = vmul.f32 %v3124, 0.5
    %v3129 = vmul.f32 %v3125, 0.5
    %v3130 = vmul.f32 %v3126, 0.5
    %v3131 = vtanh.pop %v3128
    %v3132 = vtanh.pop %v3129
    %v3133 = vtanh.pop %v3130
    %v3134 = vadd.f32 %v3131, 1.0
    %v3135 = vadd.f32 %v3132, 1.0
    %v3136 = vadd.f32 %v3133, 1.0
    %v3137 = vmul.f32 %v3134, 0.5
    %v3138 = vmul.f32 %v3135, 0.5
    %v3139 = vmul.f32 %v3136, 0.5
    %v3140 = vtanh.pop %v3127
    %v3141 = vmul.f32 %v3138, %v3062
    %v3142 = vmul.f32 %v3137, %v3140
    %v3143 = vadd.f32 %v3141, %v3142
    %v3144 = vtanh.pop %v3143
    %v3145 = vmul.f32 %v3139, %v3144
    %3146 = vst [vmem:[%s1577] sm:$0xff] %v3145
    %3147 = vst [vmem:[%s1579] sm:$0xff] %v3145
    %v3148 = vld [vmem:[%s1583] sm:$0xff]
    %v3149 = vld [vmem:[%s1583 + $0x8] sm:$0xff]
    %v3150 = vld [vmem:[%s1583 + $0x10] sm:$0xff]
    %v3151 = vld [vmem:[%s1583 + $0x18] sm:$0xff]
    %v3152 = vpack.c.bf16 %v3145, %v3145
    %3153 = vmatpush.bf16.msra.mxu0 %v2712
    %3154 = vmatpush.bf16.msra.mxu0 %v2708
    %3155 = vmatpush.bf16.msra.mxu0 %v2704
    %3156 = vmatpush.bf16.msra.mxu0 %v2700
    %3157 = vmatpush.bf16.msra.mxu0 %v2696
    %3158 = vmatpush.bf16.msra.mxu0 %v2692
    %3159 = vmatpush.bf16.msra.mxu0 %v2688
    %3160 = vmatpush.bf16.msra.mxu0 %v2684
    %3161 = vmatmul.bf16.gmra.mxu0 %v3152
    %v3162 = vpop.f32.mrf.mxu0
    %v3163 = vadd.f32 0.0, %v3162
    %v3164 = vpop.f32.mrf.mxu0
    %3165 = vdwg.mxu0
    %3166 = vmatpush.bf16.msra.mxu0 %v2713
    %3167 = vmatpush.bf16.msra.mxu0 %v2709
    %3168 = vmatpush.bf16.msra.mxu0 %v2705
    %3169 = vmatpush.bf16.msra.mxu0 %v2701
    %3170 = vmatpush.bf16.msra.mxu0 %v2697
    %3171 = vmatpush.bf16.msra.mxu0 %v2693
    %3172 = vmatpush.bf16.msra.mxu0 %v2689
    %3173 = vmatpush.bf16.msra.mxu0 %v2685
    %3174 = vmatmul.bf16.gmra.mxu0 %v3152
    %v3175 = vpop.f32.mrf.mxu0
    %v3176 = vadd.f32 0.0, %v3175
    %v3177 = vpop.f32.mrf.mxu0
    %3178 = vdwg.mxu0
    %3179 = vmatpush.bf16.msra.mxu0 %v2714
    %3180 = vmatpush.bf16.msra.mxu0 %v2710
    %3181 = vmatpush.bf16.msra.mxu0 %v2706
    %3182 = vmatpush.bf16.msra.mxu0 %v2702
    %3183 = vmatpush.bf16.msra.mxu0 %v2698
    %3184 = vmatpush.bf16.msra.mxu0 %v2694
    %3185 = vmatpush.bf16.msra.mxu0 %v2690
    %3186 = vmatpush.bf16.msra.mxu0 %v2686
    %3187 = vmatmul.bf16.gmra.mxu0 %v3152
    %v3188 = vpop.f32.mrf.mxu0
    %v3189 = vadd.f32 0.0, %v3188
    %v3190 = vpop.f32.mrf.mxu0
    %3191 = vdwg.mxu0
    %3192 = vmatpush.bf16.msra.mxu0 %v2715
    %3193 = vmatpush.bf16.msra.mxu0 %v2711
    %3194 = vmatpush.bf16.msra.mxu0 %v2707
    %3195 = vmatpush.bf16.msra.mxu0 %v2703
    %3196 = vmatpush.bf16.msra.mxu0 %v2699
    %3197 = vmatpush.bf16.msra.mxu0 %v2695
    %3198 = vmatpush.bf16.msra.mxu0 %v2691
    %3199 = vmatpush.bf16.msra.mxu0 %v2687
    %3200 = vmatmul.bf16.gmra.mxu0 %v3152
    %v3201 = vpop.f32.mrf.mxu0
    %v3202 = vadd.f32 0.0, %v3201
    %v3203 = vpop.f32.mrf.mxu0
    %3204 = vdwg.mxu0
    %v3205 = vadd.f32 %v3148, %v3163
    %v3206 = vadd.f32 %v3149, %v3176
    %v3207 = vadd.f32 %v3150, %v3189
    %v3208 = vadd.f32 %v3151, %v3202
    %v3209 = vmul.f32 %v3205, 0.5
    %v3210 = vmul.f32 %v3206, 0.5
    %v3211 = vmul.f32 %v3207, 0.5
    %v3212 = vtanh.pop %v3209
    %v3213 = vtanh.pop %v3210
    %v3214 = vtanh.pop %v3211
    %v3215 = vadd.f32 %v3212, 1.0
    %v3216 = vadd.f32 %v3213, 1.0
    %v3217 = vadd.f32 %v3214, 1.0
    %v3218 = vmul.f32 %v3215, 0.5
    %v3219 = vmul.f32 %v3216, 0.5
    %v3220 = vmul.f32 %v3217, 0.5
    %v3221 = vtanh.pop %v3208
    %v3222 = vmul.f32 %v3219, %v3143
    %v3223 = vmul.f32 %v3218, %v3221
    %v3224 = vadd.f32 %v3222, %v3223
    %v3225 = vtanh.pop %v3224
    %v3226 = vmul.f32 %v3220, %v3225
    %3227 = vst [vmem:[%s1663] sm:$0xff] %v3226
    %3228 = vst [vmem:[%s1665] sm:$0xff] %v3226
    %v3229 = vld [vmem:[%s1669] sm:$0xff]
    %v3230 = vld [vmem:[%s1669 + $0x8] sm:$0xff]
    %v3231 = vld [vmem:[%s1669 + $0x10] sm:$0xff]
    %v3232 = vld [vmem:[%s1669 + $0x18] sm:$0xff]
    %v3233 = vpack.c.bf16 %v3226, %v3226
    %3234 = vmatpush.bf16.msra.mxu0 %v2712
    %3235 = vmatpush.bf16.msra.mxu0 %v2708
    %3236 = vmatpush.bf16.msra.mxu0 %v2704
    %3237 = vmatpush.bf16.msra.mxu0 %v2700
    %3238 = vmatpush.bf16.msra.mxu0 %v2696
    %3239 = vmatpush.bf16.msra.mxu0 %v2692
    %3240 = vmatpush.bf16.msra.mxu0 %v2688
    %3241 = vmatpush.bf16.msra.mxu0 %v2684
    %3242 = vmatmul.bf16.gmra.mxu0 %v3233
    %v3243 = vpop.f32.mrf.mxu0
    %v3244 = vadd.f32 0.0, %v3243
    %v3245 = vpop.f32.mrf.mxu0
    %3246 = vdwg.mxu0
    %3247 = vmatpush.bf16.msra.mxu0 %v2713
    %3248 = vmatpush.bf16.msra.mxu0 %v2709
    %3249 = vmatpush.bf16.msra.mxu0 %v2705
    %3250 = vmatpush.bf16.msra.mxu0 %v2701
    %3251 = vmatpush.bf16.msra.mxu0 %v2697
    %3252 = vmatpush.bf16.msra.mxu0 %v2693
    %3253 = vmatpush.bf16.msra.mxu0 %v2689
    %3254 = vmatpush.bf16.msra.mxu0 %v2685
    %3255 = vmatmul.bf16.gmra.mxu0 %v3233
    %v3256 = vpop.f32.mrf.mxu0
    %v3257 = vadd.f32 0.0, %v3256
    %v3258 = vpop.f32.mrf.mxu0
    %3259 = vdwg.mxu0
    %3260 = vmatpush.bf16.msra.mxu0 %v2714
    %3261 = vmatpush.bf16.msra.mxu0 %v2710
    %3262 = vmatpush.bf16.msra.mxu0 %v2706
    %3263 = vmatpush.bf16.msra.mxu0 %v2702
    %3264 = vmatpush.bf16.msra.mxu0 %v2698
    %3265 = vmatpush.bf16.msra.mxu0 %v2694
    %3266 = vmatpush.bf16.msra.mxu0 %v2690
    %3267 = vmatpush.bf16.msra.mxu0 %v2686
    %3268 = vmatmul.bf16.gmra.mxu0 %v3233
    %v3269 = vpop.f32.mrf.mxu0
    %v3270 = vadd.f32 0.0, %v3269
    %v3271 = vpop.f32.mrf.mxu0
    %3272 = vdwg.mxu0
    %3273 = vmatpush.bf16.msra.mxu0 %v2715
    %3274 = vmatpush.bf16.msra.mxu0 %v2711
    %3275 = vmatpush.bf16.msra.mxu0 %v2707
    %3276 = vmatpush.bf16.msra.mxu0 %v2703
    %3277 = vmatpush.bf16.msra.mxu0 %v2699
    %3278 = vmatpush.bf16.msra.mxu0 %v2695
    %3279 = vmatpush.bf16.msra.mxu0 %v2691
    %3280 = vmatpush.bf16.msra.mxu0 %v2687
    %3281 = vmatmul.bf16.gmra.mxu0 %v3233
    %v3282 = vpop.f32.mrf.mxu0
    %v3283 = vadd.f32 0.0, %v3282
    %v3284 = vpop.f32.mrf.mxu0
    %3285 = vdwg.mxu0
    %v3286 = vadd.f32 %v3229, %v3244
    %v3287 = vadd.f32 %v3230, %v3257
    %v3288 = vadd.f32 %v3231, %v3270
    %v3289 = vadd.f32 %v3232, %v3283
    %v3290 = vmul.f32 %v3286, 0.5
    %v3291 = vmul.f32 %v3287, 0.5
    %v3292 = vmul.f32 %v3288, 0.5
    %v3293 = vtanh.pop %v3290
    %v3294 = vtanh.pop %v3291
    %v3295 = vtanh.pop %v3292
    %v3296 = vadd.f32 %v3293, 1.0
    %v3297 = vadd.f32 %v3294, 1.0
    %v3298 = vadd.f32 %v3295, 1.0
    %v3299 = vmul.f32 %v3296, 0.5
    %v3300 = vmul.f32 %v3297, 0.5
    %v3301 = vmul.f32 %v3298, 0.5
    %v3302 = vtanh.pop %v3289
    %v3303 = vmul.f32 %v3300, %v3224
    %v3304 = vmul.f32 %v3299, %v3302
    %v3305 = vadd.f32 %v3303, %v3304
    %v3306 = vtanh.pop %v3305
    %v3307 = vmul.f32 %v3301, %v3306
    %3308 = vst [vmem:[%s1749] sm:$0xff] %v3307
    %3309 = vst [vmem:[%s1751] sm:$0xff] %v3307
    %v3310 = vld [vmem:[%s1755] sm:$0xff]
    %v3311 = vld [vmem:[%s1755 + $0x8] sm:$0xff]
    %v3312 = vld [vmem:[%s1755 + $0x10] sm:$0xff]
    %v3313 = vld [vmem:[%s1755 + $0x18] sm:$0xff]
    %v3314 = vpack.c.bf16 %v3307, %v3307
    %3315 = vmatpush.bf16.msra.mxu0 %v2712
    %3316 = vmatpush.bf16.msra.mxu0 %v2708
    %3317 = vmatpush.bf16.msra.mxu0 %v2704
    %3318 = vmatpush.bf16.msra.mxu0 %v2700
    %3319 = vmatpush.bf16.msra.mxu0 %v2696
    %3320 = vmatpush.bf16.msra.mxu0 %v2692
    %3321 = vmatpush.bf16.msra.mxu0 %v2688
    %3322 = vmatpush.bf16.msra.mxu0 %v2684
    %3323 = vmatmul.bf16.gmra.mxu0 %v3314
    %v3324 = vpop.f32.mrf.mxu0
    %v3325 = vadd.f32 0.0, %v3324
    %v3326 = vpop.f32.mrf.mxu0
    %3327 = vdwg.mxu0
    %3328 = vmatpush.bf16.msra.mxu0 %v2713
    %3329 = vmatpush.bf16.msra.mxu0 %v2709
    %3330 = vmatpush.bf16.msra.mxu0 %v2705
    %3331 = vmatpush.bf16.msra.mxu0 %v2701
    %3332 = vmatpush.bf16.msra.mxu0 %v2697
    %3333 = vmatpush.bf16.msra.mxu0 %v2693
    %3334 = vmatpush.bf16.msra.mxu0 %v2689
    %3335 = vmatpush.bf16.msra.mxu0 %v2685
    %3336 = vmatmul.bf16.gmra.mxu0 %v3314
    %v3337 = vpop.f32.mrf.mxu0
    %v3338 = vadd.f32 0.0, %v3337
    %v3339 = vpop.f32.mrf.mxu0
    %3340 = vdwg.mxu0
    %3341 = vmatpush.bf16.msra.mxu0 %v2714
    %3342 = vmatpush.bf16.msra.mxu0 %v2710
    %3343 = vmatpush.bf16.msra.mxu0 %v2706
    %3344 = vmatpush.bf16.msra.mxu0 %v2702
    %3345 = vmatpush.bf16.msra.mxu0 %v2698
    %3346 = vmatpush.bf16.msra.mxu0 %v2694
    %3347 = vmatpush.bf16.msra.mxu0 %v2690
    %3348 = vmatpush.bf16.msra.mxu0 %v2686
    %3349 = vmatmul.bf16.gmra.mxu0 %v3314
    %v3350 = vpop.f32.mrf.mxu0
    %v3351 = vadd.f32 0.0, %v3350
    %v3352 = vpop.f32.mrf.mxu0
    %3353 = vdwg.mxu0
    %3354 = vmatpush.bf16.msra.mxu0 %v2715
    %3355 = vmatpush.bf16.msra.mxu0 %v2711
    %3356 = vmatpush.bf16.msra.mxu0 %v2707
    %3357 = vmatpush.bf16.msra.mxu0 %v2703
    %3358 = vmatpush.bf16.msra.mxu0 %v2699
    %3359 = vmatpush.bf16.msra.mxu0 %v2695
    %3360 = vmatpush.bf16.msra.mxu0 %v2691
    %3361 = vmatpush.bf16.msra.mxu0 %v2687
    %3362 = vmatmul.bf16.gmra.mxu0 %v3314
    %v3363 = vpop.f32.mrf.mxu0
    %v3364 = vadd.f32 0.0, %v3363
    %v3365 = vpop.f32.mrf.mxu0
    %3366 = vdwg.mxu0
    %v3367 = vadd.f32 %v3310, %v3325
    %v3368 = vadd.f32 %v3311, %v3338
    %v3369 = vadd.f32 %v3312, %v3351
    %v3370 = vadd.f32 %v3313, %v3364
    %v3371 = vmul.f32 %v3367, 0.5
    %v3372 = vmul.f32 %v3368, 0.5
    %v3373 = vmul.f32 %v3369, 0.5
    %v3374 = vtanh.pop %v3371
    %v3375 = vtanh.pop %v3372
    %v3376 = vtanh.pop %v3373
    %v3377 = vadd.f32 %v3374, 1.0
    %v3378 = vadd.f32 %v3375, 1.0
    %v3379 = vadd.f32 %v3376, 1.0
    %v3380 = vmul.f32 %v3377, 0.5
    %v3381 = vmul.f32 %v3378, 0.5
    %v3382 = vmul.f32 %v3379, 0.5
    %v3383 = vtanh.pop %v3370
    %v3384 = vmul.f32 %v3381, %v3305
    %v3385 = vmul.f32 %v3380, %v3383
    %v3386 = vadd.f32 %v3384, %v3385
    %v3387 = vtanh.pop %v3386
    %v3388 = vmul.f32 %v3382, %v3387
    %3389 = vst [vmem:[%s1835] sm:$0xff] %v3388
    %3390 = vst [vmem:[#allocation4] sm:$0xff] %v3388
    %v3391 = vld [vmem:[#allocation3] sm:$0xff]
    %v3392 = vld [vmem:[#allocation3 + $0x8] sm:$0xff]
    %v3393 = vld [vmem:[#allocation3 + $0x10] sm:$0xff]
    %v3394 = vld [vmem:[#allocation3 + $0x18] sm:$0xff]
    %v3395 = vld [vmem:[#allocation3 + $0x20] sm:$0xff]
    %v3396 = vld [vmem:[#allocation3 + $0x28] sm:$0xff]
    %v3397 = vld [vmem:[#allocation3 + $0x30] sm:$0xff]
    %v3398 = vld [vmem:[#allocation3 + $0x38] sm:$0xff]
    %v3399 = vpack.c.bf16 %v3392, %v3391
    %v3400 = vpack.c.bf16 %v3394, %v3393
    %v3401 = vpack.c.bf16 %v3396, %v3395
    %v3402 = vpack.c.bf16 %v3398, %v3397
    %v3403 = vld [vmem:[#allocation18] sm:$0xff]
    %v3404 = vld [vmem:[#allocation18 + $0x8] sm:$0xff]
    %v3405 = vld [vmem:[#allocation18 + $0x10] sm:$0xff]
    %v3406 = vld [vmem:[#allocation18 + $0x18] sm:$0xff]
    %v3407 = vld [vmem:[#allocation18 + $0x20] sm:$0xff]
    %v3408 = vld [vmem:[#allocation18 + $0x28] sm:$0xff]
    %v3409 = vld [vmem:[#allocation18 + $0x30] sm:$0xff]
    %v3410 = vld [vmem:[#allocation18 + $0x38] sm:$0xff]
    %v3411 = vld [vmem:[#allocation18 + $0x40] sm:$0xff]
    %v3412 = vld [vmem:[#allocation18 + $0x48] sm:$0xff]
    %v3413 = vld [vmem:[#allocation18 + $0x50] sm:$0xff]
    %v3414 = vld [vmem:[#allocation18 + $0x58] sm:$0xff]
    %v3415 = vld [vmem:[#allocation18 + $0x60] sm:$0xff]
    %v3416 = vld [vmem:[#allocation18 + $0x68] sm:$0xff]
    %v3417 = vld [vmem:[#allocation18 + $0x70] sm:$0xff]
    %v3418 = vld [vmem:[#allocation18 + $0x78] sm:$0xff]
    %v3419 = vld [vmem:[#allocation18 + $0x80] sm:$0xff]
    %v3420 = vld [vmem:[#allocation18 + $0x88] sm:$0xff]
    %v3421 = vld [vmem:[#allocation18 + $0x90] sm:$0xff]
    %v3422 = vld [vmem:[#allocation18 + $0x98] sm:$0xff]
    %v3423 = vld [vmem:[#allocation18 + $0xa0] sm:$0xff]
    %v3424 = vld [vmem:[#allocation18 + $0xa8] sm:$0xff]
    %v3425 = vld [vmem:[#allocation18 + $0xb0] sm:$0xff]
    %v3426 = vld [vmem:[#allocation18 + $0xb8] sm:$0xff]
    %v3427 = vld [vmem:[#allocation18 + $0xc0] sm:$0xff]
    %v3428 = vld [vmem:[#allocation18 + $0xc8] sm:$0xff]
    %v3429 = vld [vmem:[#allocation18 + $0xd0] sm:$0xff]
    %v3430 = vld [vmem:[#allocation18 + $0xd8] sm:$0xff]
    %v3431 = vld [vmem:[#allocation18 + $0xe0] sm:$0xff]
    %v3432 = vld [vmem:[#allocation18 + $0xe8] sm:$0xff]
    %v3433 = vld [vmem:[#allocation18 + $0xf0] sm:$0xff]
    %v3434 = vld [vmem:[#allocation18 + $0xf8] sm:$0xff]
    %v3435 = vld [vmem:[#allocation4] sm:$0xff]
    %v3436 = vld [vmem:[#allocation4 + $0x8] sm:$0xff]
    %v3437 = vld [vmem:[#allocation4 + $0x10] sm:$0xff]
    %v3438 = vld [vmem:[#allocation4 + $0x18] sm:$0xff]
    %v3439 = vld [vmem:[#allocation4 + $0x20] sm:$0xff]
    %v3440 = vld [vmem:[#allocation4 + $0x28] sm:$0xff]
    %v3441 = vld [vmem:[#allocation4 + $0x30] sm:$0xff]
    %v3442 = vld [vmem:[#allocation4 + $0x38] sm:$0xff]
    %v3443 = vpack.c.bf16 %v3436, %v3435
    %v3444 = vpack.c.bf16 %v3438, %v3437
    %v3445 = vpack.c.bf16 %v3440, %v3439
    %v3446 = vpack.c.bf16 %v3442, %v3441
    %v3447 = vld [vmem:[#allocation20] sm:$0xff]
    %v3448 = vld [vmem:[#allocation20 + $0x8] sm:$0xff]
    %v3449 = vld [vmem:[#allocation20 + $0x10] sm:$0xff]
    %v3450 = vld [vmem:[#allocation20 + $0x18] sm:$0xff]
    %v3451 = vld [vmem:[#allocation20 + $0x20] sm:$0xff]
    %v3452 = vld [vmem:[#allocation20 + $0x28] sm:$0xff]
    %v3453 = vld [vmem:[#allocation20 + $0x30] sm:$0xff]
    %v3454 = vld [vmem:[#allocation20 + $0x38] sm:$0xff]
    %v3455 = vld [vmem:[#allocation20 + $0x40] sm:$0xff]
    %v3456 = vld [vmem:[#allocation20 + $0x48] sm:$0xff]
    %v3457 = vld [vmem:[#allocation20 + $0x50] sm:$0xff]
    %v3458 = vld [vmem:[#allocation20 + $0x58] sm:$0xff]
    %v3459 = vld [vmem:[#allocation20 + $0x60] sm:$0xff]
    %v3460 = vld [vmem:[#allocation20 + $0x68] sm:$0xff]
    %v3461 = vld [vmem:[#allocation20 + $0x70] sm:$0xff]
    %v3462 = vld [vmem:[#allocation20 + $0x78] sm:$0xff]
    %v3463 = vld [vmem:[#allocation20 + $0x80] sm:$0xff]
    %v3464 = vld [vmem:[#allocation20 + $0x88] sm:$0xff]
    %v3465 = vld [vmem:[#allocation20 + $0x90] sm:$0xff]
    %v3466 = vld [vmem:[#allocation20 + $0x98] sm:$0xff]
    %v3467 = vld [vmem:[#allocation20 + $0xa0] sm:$0xff]
    %v3468 = vld [vmem:[#allocation20 + $0xa8] sm:$0xff]
    %v3469 = vld [vmem:[#allocation20 + $0xb0] sm:$0xff]
    %v3470 = vld [vmem:[#allocation20 + $0xb8] sm:$0xff]
    %v3471 = vld [vmem:[#allocation20 + $0xc0] sm:$0xff]
    %v3472 = vld [vmem:[#allocation20 + $0xc8] sm:$0xff]
    %v3473 = vld [vmem:[#allocation20 + $0xd0] sm:$0xff]
    %v3474 = vld [vmem:[#allocation20 + $0xd8] sm:$0xff]
    %v3475 = vld [vmem:[#allocation20 + $0xe0] sm:$0xff]
    %v3476 = vld [vmem:[#allocation20 + $0xe8] sm:$0xff]
    %v3477 = vld [vmem:[#allocation20 + $0xf0] sm:$0xff]
    %v3478 = vld [vmem:[#allocation20 + $0xf8] sm:$0xff]
    %v3511 = vunpack.c.l.b16 %v3447
    %v3512 = vunpack.c.h.b16 %v3447
    %v3513 = vunpack.c.l.b16 %v3448
    %v3514 = vunpack.c.h.b16 %v3448
    %v3515 = vunpack.c.l.b16 %v3449
    %v3516 = vunpack.c.h.b16 %v3449
    %v3517 = vunpack.c.l.b16 %v3450
    %v3518 = vunpack.c.h.b16 %v3450
    %v3519 = vunpack.c.l.b16 %v3451
    %v3520 = vunpack.c.h.b16 %v3451
    %v3521 = vunpack.c.l.b16 %v3452
    %v3522 = vunpack.c.h.b16 %v3452
    %v3523 = vunpack.c.l.b16 %v3453
    %v3524 = vunpack.c.h.b16 %v3453
    %v3525 = vunpack.c.l.b16 %v3454
    %v3526 = vunpack.c.h.b16 %v3454
    %v3527 = vunpack.c.l.b16 %v3455
    %v3528 = vunpack.c.h.b16 %v3455
    %v3529 = vunpack.c.l.b16 %v3456
    %v3530 = vunpack.c.h.b16 %v3456
    %v3531 = vunpack.c.l.b16 %v3457
    %v3532 = vunpack.c.h.b16 %v3457
    %v3533 = vunpack.c.l.b16 %v3458
    %v3534 = vunpack.c.h.b16 %v3458
    %v3535 = vunpack.c.l.b16 %v3459
    %v3536 = vunpack.c.h.b16 %v3459
    %v3537 = vunpack.c.l.b16 %v3460
    %v3538 = vunpack.c.h.b16 %v3460
    %v3539 = vunpack.c.l.b16 %v3461
    %v3540 = vunpack.c.h.b16 %v3461
    %v3541 = vunpack.c.l.b16 %v3462
    %v3542 = vunpack.c.h.b16 %v3462
    %v3543 = vunpack.c.l.b16 %v3463
    %v3544 = vunpack.c.h.b16 %v3463
    %v3545 = vunpack.c.l.b16 %v3464
    %v3546 = vunpack.c.h.b16 %v3464
    %v3547 = vunpack.c.l.b16 %v3465
    %v3548 = vunpack.c.h.b16 %v3465
    %v3549 = vunpack.c.l.b16 %v3466
    %v3550 = vunpack.c.h.b16 %v3466
    %v3551 = vunpack.c.l.b16 %v3467
    %v3552 = vunpack.c.h.b16 %v3467
    %v3553 = vunpack.c.l.b16 %v3468
    %v3554 = vunpack.c.h.b16 %v3468
    %v3555 = vunpack.c.l.b16 %v3469
    %v3556 = vunpack.c.h.b16 %v3469
    %v3557 = vunpack.c.l.b16 %v3470
    %v3558 = vunpack.c.h.b16 %v3470
    %v3559 = vunpack.c.l.b16 %v3471
    %v3560 = vunpack.c.h.b16 %v3471
    %v3561 = vunpack.c.l.b16 %v3472
    %v3562 = vunpack.c.h.b16 %v3472
    %v3563 = vunpack.c.l.b16 %v3473
    %v3564 = vunpack.c.h.b16 %v3473
    %v3565 = vunpack.c.l.b16 %v3474
    %v3566 = vunpack.c.h.b16 %v3474
    %v3567 = vunpack.c.l.b16 %v3475
    %v3568 = vunpack.c.h.b16 %v3475
    %v3569 = vunpack.c.l.b16 %v3476
    %v3570 = vunpack.c.h.b16 %v3476
    %v3571 = vunpack.c.l.b16 %v3477
    %v3572 = vunpack.c.h.b16 %v3477
    %v3573 = vunpack.c.l.b16 %v3478
    %v3574 = vunpack.c.h.b16 %v3478
    %v3575 = vpack.c.b16 %v3515, %v3511
    %v3576 = vpack.c.b16 %v3516, %v3512
    %v3577 = vpack.c.b16 %v3517, %v3513
    %v3578 = vpack.c.b16 %v3518, %v3514
    %v3579 = vpack.c.b16 %v3523, %v3519
    %v3580 = vpack.c.b16 %v3524, %v3520
    %v3581 = vpack.c.b16 %v3525, %v3521
    %v3582 = vpack.c.b16 %v3526, %v3522
    %v3583 = vpack.c.b16 %v3531, %v3527
    %v3584 = vpack.c.b16 %v3532, %v3528
    %v3585 = vpack.c.b16 %v3533, %v3529
    %v3586 = vpack.c.b16 %v3534, %v3530
    %v3587 = vpack.c.b16 %v3539, %v3535
    %v3588 = vpack.c.b16 %v3540, %v3536
    %v3589 = vpack.c.b16 %v3541, %v3537
    %v3590 = vpack.c.b16 %v3542, %v3538
    %v3591 = vpack.c.b16 %v3547, %v3543
    %v3592 = vpack.c.b16 %v3548, %v3544
    %v3593 = vpack.c.b16 %v3549, %v3545
    %v3594 = vpack.c.b16 %v3550, %v3546
    %v3595 = vpack.c.b16 %v3555, %v3551
    %v3596 = vpack.c.b16 %v3556, %v3552
    %v3597 = vpack.c.b16 %v3557, %v3553
    %v3598 = vpack.c.b16 %v3558, %v3554
    %v3599 = vpack.c.b16 %v3563, %v3559
    %v3600 = vpack.c.b16 %v3564, %v3560
    %v3601 = vpack.c.b16 %v3565, %v3561
    %v3602 = vpack.c.b16 %v3566, %v3562
    %v3603 = vpack.c.b16 %v3571, %v3567
    %v3604 = vpack.c.b16 %v3572, %v3568
    %v3605 = vpack.c.b16 %v3573, %v3569
    %v3606 = vpack.c.b16 %v3574, %v3570
    %3639 = vmatpush.bf16.msra.mxu0 %v3603
    %3640 = vmatpush.bf16.msra.mxu0 %v3599
    %3641 = vmatpush.bf16.msra.mxu0 %v3595
    %3642 = vmatpush.bf16.msra.mxu0 %v3591
    %3643 = vmatpush.bf16.msra.mxu0 %v3587
    %3644 = vmatpush.bf16.msra.mxu0 %v3583
    %3645 = vmatpush.bf16.msra.mxu0 %v3579
    %3646 = vmatpush.bf16.msra.mxu0 %v3575
    %3647 = vmatmul.bf16.gmra.mxu0 %v3443
    %v3648 = vpop.f32.mrf.mxu0
    %v3649 = vadd.f32 0.0, %v3648
    %v3650 = vpop.f32.mrf.mxu0
    %v3651 = vadd.f32 0.0, %v3650
    %3652 = vmatmul.bf16.gmra.mxu0 %v3444
    %v3653 = vpop.f32.mrf.mxu0
    %v3654 = vadd.f32 0.0, %v3653
    %v3655 = vpop.f32.mrf.mxu0
    %v3656 = vadd.f32 0.0, %v3655
    %3657 = vmatmul.bf16.gmra.mxu0 %v3445
    %v3658 = vpop.f32.mrf.mxu0
    %v3659 = vadd.f32 0.0, %v3658
    %v3660 = vpop.f32.mrf.mxu0
    %v3661 = vadd.f32 0.0, %v3660
    %3662 = vmatmul.bf16.gmra.mxu0 %v3446
    %v3663 = vpop.f32.mrf.mxu0
    %v3664 = vadd.f32 0.0, %v3663
    %v3665 = vpop.f32.mrf.mxu0
    %v3666 = vadd.f32 0.0, %v3665
    %3667 = vdwg.mxu0
    %3668 = vmatpush.bf16.msra.mxu0 %v3604
    %3669 = vmatpush.bf16.msra.mxu0 %v3600
    %3670 = vmatpush.bf16.msra.mxu0 %v3596
    %3671 = vmatpush.bf16.msra.mxu0 %v3592
    %3672 = vmatpush.bf16.msra.mxu0 %v3588
    %3673 = vmatpush.bf16.msra.mxu0 %v3584
    %3674 = vmatpush.bf16.msra.mxu0 %v3580
    %3675 = vmatpush.bf16.msra.mxu0 %v3576
    %3676 = vmatmul.bf16.gmra.mxu0 %v3443
    %v3677 = vpop.f32.mrf.mxu0
    %v3678 = vadd.f32 0.0, %v3677
    %v3679 = vpop.f32.mrf.mxu0
    %v3680 = vadd.f32 0.0, %v3679
    %3681 = vmatmul.bf16.gmra.mxu0 %v3444
    %v3682 = vpop.f32.mrf.mxu0
    %v3683 = vadd.f32 0.0, %v3682
    %v3684 = vpop.f32.mrf.mxu0
    %v3685 = vadd.f32 0.0, %v3684
    %3686 = vmatmul.bf16.gmra.mxu0 %v3445
    %v3687 = vpop.f32.mrf.mxu0
    %v3688 = vadd.f32 0.0, %v3687
    %v3689 = vpop.f32.mrf.mxu0
    %v3690 = vadd.f32 0.0, %v3689
    %3691 = vmatmul.bf16.gmra.mxu0 %v3446
    %v3692 = vpop.f32.mrf.mxu0
    %v3693 = vadd.f32 0.0, %v3692
    %v3694 = vpop.f32.mrf.mxu0
    %v3695 = vadd.f32 0.0, %v3694
    %3696 = vdwg.mxu0
    %3697 = vmatpush.bf16.msra.mxu0 %v3605
    %3698 = vmatpush.bf16.msra.mxu0 %v3601
    %3699 = vmatpush.bf16.msra.mxu0 %v3597
    %3700 = vmatpush.bf16.msra.mxu0 %v3593
    %3701 = vmatpush.bf16.msra.mxu0 %v3589
    %3702 = vmatpush.bf16.msra.mxu0 %v3585
    %3703 = vmatpush.bf16.msra.mxu0 %v3581
    %3704 = vmatpush.bf16.msra.mxu0 %v3577
    %3705 = vmatmul.bf16.gmra.mxu0 %v3443
    %v3706 = vpop.f32.mrf.mxu0
    %v3707 = vadd.f32 0.0, %v3706
    %v3708 = vpop.f32.mrf.mxu0
    %v3709 = vadd.f32 0.0, %v3708
    %3710 = vmatmul.bf16.gmra.mxu0 %v3444
    %v3711 = vpop.f32.mrf.mxu0
    %v3712 = vadd.f32 0.0, %v3711
    %v3713 = vpop.f32.mrf.mxu0
    %v3714 = vadd.f32 0.0, %v3713
    %3715 = vmatmul.bf16.gmra.mxu0 %v3445
    %v3716 = vpop.f32.mrf.mxu0
    %v3717 = vadd.f32 0.0, %v3716
    %v3718 = vpop.f32.mrf.mxu0
    %v3719 = vadd.f32 0.0, %v3718
    %3720 = vmatmul.bf16.gmra.mxu0 %v3446
    %v3721 = vpop.f32.mrf.mxu0
    %v3722 = vadd.f32 0.0, %v3721
    %v3723 = vpop.f32.mrf.mxu0
    %v3724 = vadd.f32 0.0, %v3723
    %3725 = vdwg.mxu0
    %3726 = vmatpush.bf16.msra.mxu0 %v3606
    %3727 = vmatpush.bf16.msra.mxu0 %v3602
    %3728 = vmatpush.bf16.msra.mxu0 %v3598
    %3729 = vmatpush.bf16.msra.mxu0 %v3594
    %3730 = vmatpush.bf16.msra.mxu0 %v3590
    %3731 = vmatpush.bf16.msra.mxu0 %v3586
    %3732 = vmatpush.bf16.msra.mxu0 %v3582
    %3733 = vmatpush.bf16.msra.mxu0 %v3578
    %3734 = vmatmul.bf16.gmra.mxu0 %v3443
    %v3735 = vpop.f32.mrf.mxu0
    %v3736 = vadd.f32 0.0, %v3735
    %v3737 = vpop.f32.mrf.mxu0
    %v3738 = vadd.f32 0.0, %v3737
    %3739 = vmatmul.bf16.gmra.mxu0 %v3444
    %v3740 = vpop.f32.mrf.mxu0
    %v3741 = vadd.f32 0.0, %v3740
    %v3742 = vpop.f32.mrf.mxu0
    %v3743 = vadd.f32 0.0, %v3742
    %3744 = vmatmul.bf16.gmra.mxu0 %v3445
    %v3745 = vpop.f32.mrf.mxu0
    %v3746 = vadd.f32 0.0, %v3745
    %v3747 = vpop.f32.mrf.mxu0
    %v3748 = vadd.f32 0.0, %v3747
    %3749 = vmatmul.bf16.gmra.mxu0 %v3446
    %v3750 = vpop.f32.mrf.mxu0
    %v3751 = vadd.f32 0.0, %v3750
    %v3752 = vpop.f32.mrf.mxu0
    %v3753 = vadd.f32 0.0, %v3752
    %3754 = vdwg.mxu0
    %v3787 = vunpack.c.l.b16 %v3403
    %v3788 = vunpack.c.h.b16 %v3403
    %v3789 = vunpack.c.l.b16 %v3404
    %v3790 = vunpack.c.h.b16 %v3404
    %v3791 = vunpack.c.l.b16 %v3405
    %v3792 = vunpack.c.h.b16 %v3405
    %v3793 = vunpack.c.l.b16 %v3406
    %v3794 = vunpack.c.h.b16 %v3406
    %v3795 = vunpack.c.l.b16 %v3407
    %v3796 = vunpack.c.h.b16 %v3407
    %v3797 = vunpack.c.l.b16 %v3408
    %v3798 = vunpack.c.h.b16 %v3408
    %v3799 = vunpack.c.l.b16 %v3409
    %v3800 = vunpack.c.h.b16 %v3409
    %v3801 = vunpack.c.l.b16 %v3410
    %v3802 = vunpack.c.h.b16 %v3410
    %v3803 = vunpack.c.l.b16 %v3411
    %v3804 = vunpack.c.h.b16 %v3411
    %v3805 = vunpack.c.l.b16 %v3412
    %v3806 = vunpack.c.h.b16 %v3412
    %v3807 = vunpack.c.l.b16 %v3413
    %v3808 = vunpack.c.h.b16 %v3413
    %v3809 = vunpack.c.l.b16 %v3414
    %v3810 = vunpack.c.h.b16 %v3414
    %v3811 = vunpack.c.l.b16 %v3415
    %v3812 = vunpack.c.h.b16 %v3415
    %v3813 = vunpack.c.l.b16 %v3416
    %v3814 = vunpack.c.h.b16 %v3416
    %v3815 = vunpack.c.l.b16 %v3417
    %v3816 = vunpack.c.h.b16 %v3417
    %v3817 = vunpack.c.l.b16 %v3418
    %v3818 = vunpack.c.h.b16 %v3418
    %v3819 = vunpack.c.l.b16 %v3419
    %v3820 = vunpack.c.h.b16 %v3419
    %v3821 = vunpack.c.l.b16 %v3420
    %v3822 = vunpack.c.h.b16 %v3420
    %v3823 = vunpack.c.l.b16 %v3421
    %v3824 = vunpack.c.h.b16 %v3421
    %v3825 = vunpack.c.l.b16 %v3422
    %v3826 = vunpack.c.h.b16 %v3422
    %v3827 = vunpack.c.l.b16 %v3423
    %v3828 = vunpack.c.h.b16 %v3423
    %v3829 = vunpack.c.l.b16 %v3424
    %v3830 = vunpack.c.h.b16 %v3424
    %v3831 = vunpack.c.l.b16 %v3425
    %v3832 = vunpack.c.h.b16 %v3425
    %v3833 = vunpack.c.l.b16 %v3426
    %v3834 = vunpack.c.h.b16 %v3426
    %v3835 = vunpack.c.l.b16 %v3427
    %v3836 = vunpack.c.h.b16 %v3427
    %v3837 = vunpack.c.l.b16 %v3428
    %v3838 = vunpack.c.h.b16 %v3428
    %v3839 = vunpack.c.l.b16 %v3429
    %v3840 = vunpack.c.h.b16 %v3429
    %v3841 = vunpack.c.l.b16 %v3430
    %v3842 = vunpack.c.h.b16 %v3430
    %v3843 = vunpack.c.l.b16 %v3431
    %v3844 = vunpack.c.h.b16 %v3431
    %v3845 = vunpack.c.l.b16 %v3432
    %v3846 = vunpack.c.h.b16 %v3432
    %v3847 = vunpack.c.l.b16 %v3433
    %v3848 = vunpack.c.h.b16 %v3433
    %v3849 = vunpack.c.l.b16 %v3434
    %v3850 = vunpack.c.h.b16 %v3434
    %v3851 = vpack.c.b16 %v3791, %v3787
    %v3852 = vpack.c.b16 %v3792, %v3788
    %v3853 = vpack.c.b16 %v3793, %v3789
    %v3854 = vpack.c.b16 %v3794, %v3790
    %v3855 = vpack.c.b16 %v3799, %v3795
    %v3856 = vpack.c.b16 %v3800, %v3796
    %v3857 = vpack.c.b16 %v3801, %v3797
    %v3858 = vpack.c.b16 %v3802, %v3798
    %v3859 = vpack.c.b16 %v3807, %v3803
    %v3860 = vpack.c.b16 %v3808, %v3804
    %v3861 = vpack.c.b16 %v3809, %v3805
    %v3862 = vpack.c.b16 %v3810, %v3806
    %v3863 = vpack.c.b16 %v3815, %v3811
    %v3864 = vpack.c.b16 %v3816, %v3812
    %v3865 = vpack.c.b16 %v3817, %v3813
    %v3866 = vpack.c.b16 %v3818, %v3814
    %v3867 = vpack.c.b16 %v3823, %v3819
    %v3868 = vpack.c.b16 %v3824, %v3820
    %v3869 = vpack.c.b16 %v3825, %v3821
    %v3870 = vpack.c.b16 %v3826, %v3822
    %v3871 = vpack.c.b16 %v3831, %v3827
    %v3872 = vpack.c.b16 %v3832, %v3828
    %v3873 = vpack.c.b16 %v3833, %v3829
    %v3874 = vpack.c.b16 %v3834, %v3830
    %v3875 = vpack.c.b16 %v3839, %v3835
    %v3876 = vpack.c.b16 %v3840, %v3836
    %v3877 = vpack.c.b16 %v3841, %v3837
    %v3878 = vpack.c.b16 %v3842, %v3838
    %v3879 = vpack.c.b16 %v3847, %v3843
    %v3880 = vpack.c.b16 %v3848, %v3844
    %v3881 = vpack.c.b16 %v3849, %v3845
    %v3882 = vpack.c.b16 %v3850, %v3846
    %3915 = vmatpush.bf16.msra.mxu0 %v3879
    %3916 = vmatpush.bf16.msra.mxu0 %v3875
    %3917 = vmatpush.bf16.msra.mxu0 %v3871
    %3918 = vmatpush.bf16.msra.mxu0 %v3867
    %3919 = vmatpush.bf16.msra.mxu0 %v3863
    %3920 = vmatpush.bf16.msra.mxu0 %v3859
    %3921 = vmatpush.bf16.msra.mxu0 %v3855
    %3922 = vmatpush.bf16.msra.mxu0 %v3851
    %3923 = vmatmul.bf16.gmra.mxu0 %v3399
    %v3924 = vpop.f32.mrf.mxu0
    %v3925 = vadd.f32 %v3649, %v3924
    %v3926 = vpop.f32.mrf.mxu0
    %v3927 = vadd.f32 %v3651, %v3926
    %3928 = vmatmul.bf16.gmra.mxu0 %v3400
    %v3929 = vpop.f32.mrf.mxu0
    %v3930 = vadd.f32 %v3654, %v3929
    %v3931 = vpop.f32.mrf.mxu0
    %v3932 = vadd.f32 %v3656, %v3931
    %3933 = vmatmul.bf16.gmra.mxu0 %v3401
    %v3934 = vpop.f32.mrf.mxu0
    %v3935 = vadd.f32 %v3659, %v3934
    %v3936 = vpop.f32.mrf.mxu0
    %v3937 = vadd.f32 %v3661, %v3936
    %3938 = vmatmul.bf16.gmra.mxu0 %v3402
    %v3939 = vpop.f32.mrf.mxu0
    %v3940 = vadd.f32 %v3664, %v3939
    %v3941 = vpop.f32.mrf.mxu0
    %v3942 = vadd.f32 %v3666, %v3941
    %3943 = vdwg.mxu0
    %3944 = vmatpush.bf16.msra.mxu0 %v3880
    %3945 = vmatpush.bf16.msra.mxu0 %v3876
    %3946 = vmatpush.bf16.msra.mxu0 %v3872
    %3947 = vmatpush.bf16.msra.mxu0 %v3868
    %3948 = vmatpush.bf16.msra.mxu0 %v3864
    %3949 = vmatpush.bf16.msra.mxu0 %v3860
    %3950 = vmatpush.bf16.msra.mxu0 %v3856
    %3951 = vmatpush.bf16.msra.mxu0 %v3852
    %3952 = vmatmul.bf16.gmra.mxu0 %v3399
    %v3953 = vpop.f32.mrf.mxu0
    %v3954 = vadd.f32 %v3678, %v3953
    %v3955 = vpop.f32.mrf.mxu0
    %v3956 = vadd.f32 %v3680, %v3955
    %3957 = vmatmul.bf16.gmra.mxu0 %v3400
    %v3958 = vpop.f32.mrf.mxu0
    %v3959 = vadd.f32 %v3683, %v3958
    %v3960 = vpop.f32.mrf.mxu0
    %v3961 = vadd.f32 %v3685, %v3960
    %3962 = vmatmul.bf16.gmra.mxu0 %v3401
    %v3963 = vpop.f32.mrf.mxu0
    %v3964 = vadd.f32 %v3688, %v3963
    %v3965 = vpop.f32.mrf.mxu0
    %v3966 = vadd.f32 %v3690, %v3965
    %3967 = vmatmul.bf16.gmra.mxu0 %v3402
    %v3968 = vpop.f32.mrf.mxu0
    %v3969 = vadd.f32 %v3693, %v3968
    %v3970 = vpop.f32.mrf.mxu0
    %v3971 = vadd.f32 %v3695, %v3970
    %3972 = vdwg.mxu0
    %3973 = vmatpush.bf16.msra.mxu0 %v3881
    %3974 = vmatpush.bf16.msra.mxu0 %v3877
    %3975 = vmatpush.bf16.msra.mxu0 %v3873
    %3976 = vmatpush.bf16.msra.mxu0 %v3869
    %3977 = vmatpush.bf16.msra.mxu0 %v3865
    %3978 = vmatpush.bf16.msra.mxu0 %v3861
    %3979 = vmatpush.bf16.msra.mxu0 %v3857
    %3980 = vmatpush.bf16.msra.mxu0 %v3853
    %3981 = vmatmul.bf16.gmra.mxu0 %v3399
    %v3982 = vpop.f32.mrf.mxu0
    %v3983 = vadd.f32 %v3707, %v3982
    %v3984 = vpop.f32.mrf.mxu0
    %v3985 = vadd.f32 %v3709, %v3984
    %3986 = vmatmul.bf16.gmra.mxu0 %v3400
    %v3987 = vpop.f32.mrf.mxu0
    %v3988 = vadd.f32 %v3712, %v3987
    %v3989 = vpop.f32.mrf.mxu0
    %v3990 = vadd.f32 %v3714, %v3989
    %3991 = vmatmul.bf16.gmra.mxu0 %v3401
    %v3992 = vpop.f32.mrf.mxu0
    %v3993 = vadd.f32 %v3717, %v3992
    %v3994 = vpop.f32.mrf.mxu0
    %v3995 = vadd.f32 %v3719, %v3994
    %3996 = vmatmul.bf16.gmra.mxu0 %v3402
    %v3997 = vpop.f32.mrf.mxu0
    %v3998 = vadd.f32 %v3722, %v3997
    %v3999 = vpop.f32.mrf.mxu0
    %v4000 = vadd.f32 %v3724, %v3999
    %4001 = vdwg.mxu0
    %4002 = vmatpush.bf16.msra.mxu0 %v3882
    %4003 = vmatpush.bf16.msra.mxu0 %v3878
    %4004 = vmatpush.bf16.msra.mxu0 %v3874
    %4005 = vmatpush.bf16.msra.mxu0 %v3870
    %4006 = vmatpush.bf16.msra.mxu0 %v3866
    %4007 = vmatpush.bf16.msra.mxu0 %v3862
    %4008 = vmatpush.bf16.msra.mxu0 %v3858
    %4009 = vmatpush.bf16.msra.mxu0 %v3854
    %4010 = vmatmul.bf16.gmra.mxu0 %v3399
    %v4011 = vpop.f32.mrf.mxu0
    %v4012 = vadd.f32 %v3736, %v4011
    %v4013 = vpop.f32.mrf.mxu0
    %v4014 = vadd.f32 %v3738, %v4013
    %4015 = vmatmul.bf16.gmra.mxu0 %v3400
    %v4016 = vpop.f32.mrf.mxu0
    %v4017 = vadd.f32 %v3741, %v4016
    %v4018 = vpop.f32.mrf.mxu0
    %v4019 = vadd.f32 %v3743, %v4018
    %4020 = vmatmul.bf16.gmra.mxu0 %v3401
    %v4021 = vpop.f32.mrf.mxu0
    %v4022 = vadd.f32 %v3746, %v4021
    %v4023 = vpop.f32.mrf.mxu0
    %v4024 = vadd.f32 %v3748, %v4023
    %4025 = vmatmul.bf16.gmra.mxu0 %v3402
    %v4026 = vpop.f32.mrf.mxu0
    %v4027 = vadd.f32 %v3751, %v4026
    %v4028 = vpop.f32.mrf.mxu0
    %v4029 = vadd.f32 %v3753, %v4028
    %4030 = vdwg.mxu0
    %v4031 = vld [vmem:[%s12] sm:$0xf]
    %v4033 = vperm.slane %v4031, 0
    %v4034 = vperm.slane %v4031, 1
    %v4035 = vperm.slane %v4031, 2
    %v4036 = vperm.slane %v4031, 3
    %v4041 = vadd.f32 %v3925, %v4033
    %v4042 = vadd.f32 %v3954, %v4034
    %v4043 = vadd.f32 %v3983, %v4035
    %v4044 = vadd.f32 %v4012, %v4036
    %v4045 = vadd.f32 %v3927, %v4033
    %v4046 = vadd.f32 %v3956, %v4034
    %v4047 = vadd.f32 %v3985, %v4035
    %v4048 = vadd.f32 %v4014, %v4036
    %v4049 = vadd.f32 %v3930, %v4033
    %v4050 = vadd.f32 %v3959, %v4034
    %v4051 = vadd.f32 %v3988, %v4035
    %v4052 = vadd.f32 %v4017, %v4036
    %v4053 = vadd.f32 %v3932, %v4033
    %v4054 = vadd.f32 %v3961, %v4034
    %v4055 = vadd.f32 %v3990, %v4035
    %v4056 = vadd.f32 %v4019, %v4036
    %v4057 = vadd.f32 %v3935, %v4033
    %v4058 = vadd.f32 %v3964, %v4034
    %v4059 = vadd.f32 %v3993, %v4035
    %v4060 = vadd.f32 %v4022, %v4036
    %v4061 = vadd.f32 %v3937, %v4033
    %v4062 = vadd.f32 %v3966, %v4034
    %v4063 = vadd.f32 %v3995, %v4035
    %v4064 = vadd.f32 %v4024, %v4036
    %v4065 = vadd.f32 %v3940, %v4033
    %v4066 = vadd.f32 %v3969, %v4034
    %v4067 = vadd.f32 %v3998, %v4035
    %v4068 = vadd.f32 %v4027, %v4036
    %v4069 = vadd.f32 %v3942, %v4033
    %v4070 = vadd.f32 %v3971, %v4034
    %v4071 = vadd.f32 %v4000, %v4035
    %v4072 = vadd.f32 %v4029, %v4036
    %4073 = vst [vmem:[#allocation5] sm:$0xff] %v4041
    %4074 = vst [vmem:[#allocation5 + $0x8] sm:$0xff] %v4042
    %4075 = vst [vmem:[#allocation5 + $0x10] sm:$0xff] %v4043
    %4076 = vst [vmem:[#allocation5 + $0x18] sm:$0xff] %v4044
    %4077 = vst [vmem:[#allocation5 + $0x20] sm:$0xff] %v4045
    %4078 = vst [vmem:[#allocation5 + $0x28] sm:$0xff] %v4046
    %4079 = vst [vmem:[#allocation5 + $0x30] sm:$0xff] %v4047
    %4080 = vst [vmem:[#allocation5 + $0x38] sm:$0xff] %v4048
    %4081 = vst [vmem:[#allocation5 + $0x40] sm:$0xff] %v4049
    %4082 = vst [vmem:[#allocation5 + $0x48] sm:$0xff] %v4050
    %4083 = vst [vmem:[#allocation5 + $0x50] sm:$0xff] %v4051
    %4084 = vst [vmem:[#allocation5 + $0x58] sm:$0xff] %v4052
    %4085 = vst [vmem:[#allocation5 + $0x60] sm:$0xff] %v4053
    %4086 = vst [vmem:[#allocation5 + $0x68] sm:$0xff] %v4054
    %4087 = vst [vmem:[#allocation5 + $0x70] sm:$0xff] %v4055
    %4088 = vst [vmem:[#allocation5 + $0x78] sm:$0xff] %v4056
    %4089 = vst [vmem:[#allocation5 + $0x80] sm:$0xff] %v4057
    %4090 = vst [vmem:[#allocation5 + $0x88] sm:$0xff] %v4058
    %4091 = vst [vmem:[#allocation5 + $0x90] sm:$0xff] %v4059
    %4092 = vst [vmem:[#allocation5 + $0x98] sm:$0xff] %v4060
    %4093 = vst [vmem:[#allocation5 + $0xa0] sm:$0xff] %v4061
    %4094 = vst [vmem:[#allocation5 + $0xa8] sm:$0xff] %v4062
    %4095 = vst [vmem:[#allocation5 + $0xb0] sm:$0xff] %v4063
    %4096 = vst [vmem:[#allocation5 + $0xb8] sm:$0xff] %v4064
    %4097 = vst [vmem:[#allocation5 + $0xc0] sm:$0xff] %v4065
    %4098 = vst [vmem:[#allocation5 + $0xc8] sm:$0xff] %v4066
    %4099 = vst [vmem:[#allocation5 + $0xd0] sm:$0xff] %v4067
    %4100 = vst [vmem:[#allocation5 + $0xd8] sm:$0xff] %v4068
    %4101 = vst [vmem:[#allocation5 + $0xe0] sm:$0xff] %v4069
    %4102 = vst [vmem:[#allocation5 + $0xe8] sm:$0xff] %v4070
    %4103 = vst [vmem:[#allocation5 + $0xf0] sm:$0xff] %v4071
    %4104 = vst [vmem:[#allocation5 + $0xf8] sm:$0xff] %v4072
    %v4105 = vld [vmem:[#allocation21] sm:$0xff]
    %v4106 = vld [vmem:[#allocation21 + $0x8] sm:$0xff]
    %v4107 = vld [vmem:[#allocation21 + $0x10] sm:$0xff]
    %v4108 = vld [vmem:[#allocation21 + $0x18] sm:$0xff]
    %v4109 = vld [vmem:[#allocation21 + $0x20] sm:$0xff]
    %v4110 = vld [vmem:[#allocation21 + $0x28] sm:$0xff]
    %v4111 = vld [vmem:[#allocation21 + $0x30] sm:$0xff]
    %v4112 = vld [vmem:[#allocation21 + $0x38] sm:$0xff]
    %v4113 = vld [vmem:[#allocation21 + $0x40] sm:$0xff]
    %v4114 = vld [vmem:[#allocation21 + $0x48] sm:$0xff]
    %v4115 = vld [vmem:[#allocation21 + $0x50] sm:$0xff]
    %v4116 = vld [vmem:[#allocation21 + $0x58] sm:$0xff]
    %v4117 = vld [vmem:[#allocation21 + $0x60] sm:$0xff]
    %v4118 = vld [vmem:[#allocation21 + $0x68] sm:$0xff]
    %v4119 = vld [vmem:[#allocation21 + $0x70] sm:$0xff]
    %v4120 = vld [vmem:[#allocation21 + $0x78] sm:$0xff]
    %v4121 = vld [vmem:[#allocation21 + $0x80] sm:$0xff]
    %v4122 = vld [vmem:[#allocation21 + $0x88] sm:$0xff]
    %v4123 = vld [vmem:[#allocation21 + $0x90] sm:$0xff]
    %v4124 = vld [vmem:[#allocation21 + $0x98] sm:$0xff]
    %v4125 = vld [vmem:[#allocation21 + $0xa0] sm:$0xff]
    %v4126 = vld [vmem:[#allocation21 + $0xa8] sm:$0xff]
    %v4127 = vld [vmem:[#allocation21 + $0xb0] sm:$0xff]
    %v4128 = vld [vmem:[#allocation21 + $0xb8] sm:$0xff]
    %v4129 = vld [vmem:[#allocation21 + $0xc0] sm:$0xff]
    %v4130 = vld [vmem:[#allocation21 + $0xc8] sm:$0xff]
    %v4131 = vld [vmem:[#allocation21 + $0xd0] sm:$0xff]
    %v4132 = vld [vmem:[#allocation21 + $0xd8] sm:$0xff]
    %v4133 = vld [vmem:[#allocation21 + $0xe0] sm:$0xff]
    %v4134 = vld [vmem:[#allocation21 + $0xe8] sm:$0xff]
    %v4135 = vld [vmem:[#allocation21 + $0xf0] sm:$0xff]
    %v4136 = vld [vmem:[#allocation21 + $0xf8] sm:$0xff]
    %v4137 = vld [vmem:[%s995] sm:$0xff]
    %v4138 = vld [vmem:[%s995 + $0x8] sm:$0xff]
    %v4139 = vld [vmem:[%s995 + $0x10] sm:$0xff]
    %v4140 = vld [vmem:[%s995 + $0x18] sm:$0xff]
    %v4173 = vunpack.c.l.b16 %v4105
    %v4174 = vunpack.c.h.b16 %v4105
    %v4175 = vunpack.c.l.b16 %v4106
    %v4176 = vunpack.c.h.b16 %v4106
    %v4177 = vunpack.c.l.b16 %v4107
    %v4178 = vunpack.c.h.b16 %v4107
    %v4179 = vunpack.c.l.b16 %v4108
    %v4180 = vunpack.c.h.b16 %v4108
    %v4181 = vunpack.c.l.b16 %v4109
    %v4182 = vunpack.c.h.b16 %v4109
    %v4183 = vunpack.c.l.b16 %v4110
    %v4184 = vunpack.c.h.b16 %v4110
    %v4185 = vunpack.c.l.b16 %v4111
    %v4186 = vunpack.c.h.b16 %v4111
    %v4187 = vunpack.c.l.b16 %v4112
    %v4188 = vunpack.c.h.b16 %v4112
    %v4189 = vunpack.c.l.b16 %v4113
    %v4190 = vunpack.c.h.b16 %v4113
    %v4191 = vunpack.c.l.b16 %v4114
    %v4192 = vunpack.c.h.b16 %v4114
    %v4193 = vunpack.c.l.b16 %v4115
    %v4194 = vunpack.c.h.b16 %v4115
    %v4195 = vunpack.c.l.b16 %v4116
    %v4196 = vunpack.c.h.b16 %v4116
    %v4197 = vunpack.c.l.b16 %v4117
    %v4198 = vunpack.c.h.b16 %v4117
    %v4199 = vunpack.c.l.b16 %v4118
    %v4200 = vunpack.c.h.b16 %v4118
    %v4201 = vunpack.c.l.b16 %v4119
    %v4202 = vunpack.c.h.b16 %v4119
    %v4203 = vunpack.c.l.b16 %v4120
    %v4204 = vunpack.c.h.b16 %v4120
    %v4205 = vunpack.c.l.b16 %v4121
    %v4206 = vunpack.c.h.b16 %v4121
    %v4207 = vunpack.c.l.b16 %v4122
    %v4208 = vunpack.c.h.b16 %v4122
    %v4209 = vunpack.c.l.b16 %v4123
    %v4210 = vunpack.c.h.b16 %v4123
    %v4211 = vunpack.c.l.b16 %v4124
    %v4212 = vunpack.c.h.b16 %v4124
    %v4213 = vunpack.c.l.b16 %v4125
    %v4214 = vunpack.c.h.b16 %v4125
    %v4215 = vunpack.c.l.b16 %v4126
    %v4216 = vunpack.c.h.b16 %v4126
    %v4217 = vunpack.c.l.b16 %v4127
    %v4218 = vunpack.c.h.b16 %v4127
    %v4219 = vunpack.c.l.b16 %v4128
    %v4220 = vunpack.c.h.b16 %v4128
    %v4221 = vunpack.c.l.b16 %v4129
    %v4222 = vunpack.c.h.b16 %v4129
    %v4223 = vunpack.c.l.b16 %v4130
    %v4224 = vunpack.c.h.b16 %v4130
    %v4225 = vunpack.c.l.b16 %v4131
    %v4226 = vunpack.c.h.b16 %v4131
    %v4227 = vunpack.c.l.b16 %v4132
    %v4228 = vunpack.c.h.b16 %v4132
    %v4229 = vunpack.c.l.b16 %v4133
    %v4230 = vunpack.c.h.b16 %v4133
    %v4231 = vunpack.c.l.b16 %v4134
    %v4232 = vunpack.c.h.b16 %v4134
    %v4233 = vunpack.c.l.b16 %v4135
    %v4234 = vunpack.c.h.b16 %v4135
    %v4235 = vunpack.c.l.b16 %v4136
    %v4236 = vunpack.c.h.b16 %v4136
    %v4237 = vpack.c.b16 %v4177, %v4173
    %v4238 = vpack.c.b16 %v4178, %v4174
    %v4239 = vpack.c.b16 %v4179, %v4175
    %v4240 = vpack.c.b16 %v4180, %v4176
    %v4241 = vpack.c.b16 %v4185, %v4181
    %v4242 = vpack.c.b16 %v4186, %v4182
    %v4243 = vpack.c.b16 %v4187, %v4183
    %v4244 = vpack.c.b16 %v4188, %v4184
    %v4245 = vpack.c.b16 %v4193, %v4189
    %v4246 = vpack.c.b16 %v4194, %v4190
    %v4247 = vpack.c.b16 %v4195, %v4191
    %v4248 = vpack.c.b16 %v4196, %v4192
    %v4249 = vpack.c.b16 %v4201, %v4197
    %v4250 = vpack.c.b16 %v4202, %v4198
    %v4251 = vpack.c.b16 %v4203, %v4199
    %v4252 = vpack.c.b16 %v4204, %v4200
    %v4253 = vpack.c.b16 %v4209, %v4205
    %v4254 = vpack.c.b16 %v4210, %v4206
    %v4255 = vpack.c.b16 %v4211, %v4207
    %v4256 = vpack.c.b16 %v4212, %v4208
    %v4257 = vpack.c.b16 %v4217, %v4213
    %v4258 = vpack.c.b16 %v4218, %v4214
    %v4259 = vpack.c.b16 %v4219, %v4215
    %v4260 = vpack.c.b16 %v4220, %v4216
    %v4261 = vpack.c.b16 %v4225, %v4221
    %v4262 = vpack.c.b16 %v4226, %v4222
    %v4263 = vpack.c.b16 %v4227, %v4223
    %v4264 = vpack.c.b16 %v4228, %v4224
    %v4265 = vpack.c.b16 %v4233, %v4229
    %v4266 = vpack.c.b16 %v4234, %v4230
    %v4267 = vpack.c.b16 %v4235, %v4231
    %v4268 = vpack.c.b16 %v4236, %v4232
    %4301 = vmatpush.bf16.msra.mxu0 %v4265
    %4302 = vmatpush.bf16.msra.mxu0 %v4261
    %4303 = vmatpush.bf16.msra.mxu0 %v4257
    %4304 = vmatpush.bf16.msra.mxu0 %v4253
    %4305 = vmatpush.bf16.msra.mxu0 %v4249
    %4306 = vmatpush.bf16.msra.mxu0 %v4245
    %4307 = vmatpush.bf16.msra.mxu0 %v4241
    %4308 = vmatpush.bf16.msra.mxu0 %v4237
    %4309 = vmatmul.bf16.gmra.mxu0 0
    %v4310 = vpop.f32.mrf.mxu0
    %v4311 = vadd.f32 0.0, %v4310
    %v4312 = vpop.f32.mrf.mxu0
    %4313 = vdwg.mxu0
    %4314 = vmatpush.bf16.msra.mxu0 %v4266
    %4315 = vmatpush.bf16.msra.mxu0 %v4262
    %4316 = vmatpush.bf16.msra.mxu0 %v4258
    %4317 = vmatpush.bf16.msra.mxu0 %v4254
    %4318 = vmatpush.bf16.msra.mxu0 %v4250
    %4319 = vmatpush.bf16.msra.mxu0 %v4246
    %4320 = vmatpush.bf16.msra.mxu0 %v4242
    %4321 = vmatpush.bf16.msra.mxu0 %v4238
    %4322 = vmatmul.bf16.gmra.mxu0 0
    %v4323 = vpop.f32.mrf.mxu0
    %v4324 = vadd.f32 0.0, %v4323
    %v4325 = vpop.f32.mrf.mxu0
    %4326 = vdwg.mxu0
    %4327 = vmatpush.bf16.msra.mxu0 %v4267
    %4328 = vmatpush.bf16.msra.mxu0 %v4263
    %4329 = vmatpush.bf16.msra.mxu0 %v4259
    %4330 = vmatpush.bf16.msra.mxu0 %v4255
    %4331 = vmatpush.bf16.msra.mxu0 %v4251
    %4332 = vmatpush.bf16.msra.mxu0 %v4247
    %4333 = vmatpush.bf16.msra.mxu0 %v4243
    %4334 = vmatpush.bf16.msra.mxu0 %v4239
    %4335 = vmatmul.bf16.gmra.mxu0 0
    %v4336 = vpop.f32.mrf.mxu0
    %v4337 = vadd.f32 0.0, %v4336
    %v4338 = vpop.f32.mrf.mxu0
    %4339 = vdwg.mxu0
    %4340 = vmatpush.bf16.msra.mxu0 %v4268
    %4341 = vmatpush.bf16.msra.mxu0 %v4264
    %4342 = vmatpush.bf16.msra.mxu0 %v4260
    %4343 = vmatpush.bf16.msra.mxu0 %v4256
    %4344 = vmatpush.bf16.msra.mxu0 %v4252
    %4345 = vmatpush.bf16.msra.mxu0 %v4248
    %4346 = vmatpush.bf16.msra.mxu0 %v4244
    %4347 = vmatpush.bf16.msra.mxu0 %v4240
    %4348 = vmatmul.bf16.gmra.mxu0 0
    %v4349 = vpop.f32.mrf.mxu0
    %v4350 = vadd.f32 0.0, %v4349
    %v4351 = vpop.f32.mrf.mxu0
    %4352 = vdwg.mxu0
    %v4353 = vadd.f32 %v4137, %v4311
    %v4354 = vadd.f32 %v4138, %v4324
    %v4355 = vadd.f32 %v4139, %v4337
    %v4356 = vadd.f32 %v4140, %v4350
    %v4357 = vmul.f32 %v4353, 0.5
    %v4358 = vmul.f32 %v4354, 0.5
    %v4359 = vmul.f32 %v4355, 0.5
    %v4360 = vtanh.pop %v4357
    %v4361 = vtanh.pop %v4358
    %v4362 = vtanh.pop %v4359
    %v4363 = vadd.f32 %v4360, 1.0
    %v4364 = vadd.f32 %v4361, 1.0
    %v4365 = vadd.f32 %v4362, 1.0
    %v4366 = vmul.f32 %v4363, 0.5
    %v4367 = vmul.f32 %v4364, 0.5
    %v4368 = vmul.f32 %v4365, 0.5
    %v4369 = vtanh.pop %v4356
    %v4370 = vmul.f32 %v4367, 0.0
    %v4371 = vmul.f32 %v4366, %v4369
    %v4372 = vadd.f32 %v4370, %v4371
    %v4373 = vtanh.pop %v4372
    %v4374 = vmul.f32 %v4368, %v4373
    %v4375 = vadd.f32 %v4374, 0.0
    %v4376 = vld [vmem:[%s1239] sm:$0xff]
    %v4377 = vld [vmem:[%s1239 + $0x8] sm:$0xff]
    %v4378 = vld [vmem:[%s1239 + $0x10] sm:$0xff]
    %v4379 = vld [vmem:[%s1239 + $0x18] sm:$0xff]
    %v4380 = vpack.c.bf16 %v4374, %v4374
    %4381 = vmatpush.bf16.msra.mxu0 %v4265
    %4382 = vmatpush.bf16.msra.mxu0 %v4261
    %4383 = vmatpush.bf16.msra.mxu0 %v4257
    %4384 = vmatpush.bf16.msra.mxu0 %v4253
    %4385 = vmatpush.bf16.msra.mxu0 %v4249
    %4386 = vmatpush.bf16.msra.mxu0 %v4245
    %4387 = vmatpush.bf16.msra.mxu0 %v4241
    %4388 = vmatpush.bf16.msra.mxu0 %v4237
    %4389 = vmatmul.bf16.gmra.mxu0 %v4380
    %v4390 = vpop.f32.mrf.mxu0
    %v4391 = vadd.f32 0.0, %v4390
    %v4392 = vpop.f32.mrf.mxu0
    %4393 = vdwg.mxu0
    %4394 = vmatpush.bf16.msra.mxu0 %v4266
    %4395 = vmatpush.bf16.msra.mxu0 %v4262
    %4396 = vmatpush.bf16.msra.mxu0 %v4258
    %4397 = vmatpush.bf16.msra.mxu0 %v4254
    %4398 = vmatpush.bf16.msra.mxu0 %v4250
    %4399 = vmatpush.bf16.msra.mxu0 %v4246
    %4400 = vmatpush.bf16.msra.mxu0 %v4242
    %4401 = vmatpush.bf16.msra.mxu0 %v4238
    %4402 = vmatmul.bf16.gmra.mxu0 %v4380
    %v4403 = vpop.f32.mrf.mxu0
    %v4404 = vadd.f32 0.0, %v4403
    %v4405 = vpop.f32.mrf.mxu0
    %4406 = vdwg.mxu0
    %4407 = vmatpush.bf16.msra.mxu0 %v4267
    %4408 = vmatpush.bf16.msra.mxu0 %v4263
    %4409 = vmatpush.bf16.msra.mxu0 %v4259
    %4410 = vmatpush.bf16.msra.mxu0 %v4255
    %4411 = vmatpush.bf16.msra.mxu0 %v4251
    %4412 = vmatpush.bf16.msra.mxu0 %v4247
    %4413 = vmatpush.bf16.msra.mxu0 %v4243
    %4414 = vmatpush.bf16.msra.mxu0 %v4239
    %4415 = vmatmul.bf16.gmra.mxu0 %v4380
    %v4416 = vpop.f32.mrf.mxu0
    %v4417 = vadd.f32 0.0, %v4416
    %v4418 = vpop.f32.mrf.mxu0
    %4419 = vdwg.mxu0
    %4420 = vmatpush.bf16.msra.mxu0 %v4268
    %4421 = vmatpush.bf16.msra.mxu0 %v4264
    %4422 = vmatpush.bf16.msra.mxu0 %v4260
    %4423 = vmatpush.bf16.msra.mxu0 %v4256
    %4424 = vmatpush.bf16.msra.mxu0 %v4252
    %4425 = vmatpush.bf16.msra.mxu0 %v4248
    %4426 = vmatpush.bf16.msra.mxu0 %v4244
    %4427 = vmatpush.bf16.msra.mxu0 %v4240
    %4428 = vmatmul.bf16.gmra.mxu0 %v4380
    %v4429 = vpop.f32.mrf.mxu0
    %v4430 = vadd.f32 0.0, %v4429
    %v4431 = vpop.f32.mrf.mxu0
    %4432 = vdwg.mxu0
    %v4433 = vadd.f32 %v4376, %v4391
    %v4434 = vadd.f32 %v4377, %v4404
    %v4435 = vadd.f32 %v4378, %v4417
    %v4436 = vadd.f32 %v4379, %v4430
    %v4437 = vmul.f32 %v4433, 0.5
    %v4438 = vmul.f32 %v4434, 0.5
    %v4439 = vmul.f32 %v4435, 0.5
    %v4440 = vtanh.pop %v4437
    %v4441 = vtanh.pop %v4438
    %v4442 = vtanh.pop %v4439
    %v4443 = vadd.f32 %v4440, 1.0
    %v4444 = vadd.f32 %v4441, 1.0
    %v4445 = vadd.f32 %v4442, 1.0
    %v4446 = vmul.f32 %v4443, 0.5
    %v4447 = vmul.f32 %v4444, 0.5
    %v4448 = vmul.f32 %v4445, 0.5
    %v4449 = vtanh.pop %v4436
    %v4450 = vmul.f32 %v4447, %v4372
    %v4451 = vmul.f32 %v4446, %v4449
    %v4452 = vadd.f32 %v4450, %v4451
    %v4453 = vtanh.pop %v4452
    %v4454 = vmul.f32 %v4448, %v4453
    %v4455 = vadd.f32 %v4375, %v4454
    %v4456 = vld [vmem:[%s1325] sm:$0xff]
    %v4457 = vld [vmem:[%s1325 + $0x8] sm:$0xff]
    %v4458 = vld [vmem:[%s1325 + $0x10] sm:$0xff]
    %v4459 = vld [vmem:[%s1325 + $0x18] sm:$0xff]
    %v4460 = vpack.c.bf16 %v4454, %v4454
    %4461 = vmatpush.bf16.msra.mxu0 %v4265
    %4462 = vmatpush.bf16.msra.mxu0 %v4261
    %4463 = vmatpush.bf16.msra.mxu0 %v4257
    %4464 = vmatpush.bf16.msra.mxu0 %v4253
    %4465 = vmatpush.bf16.msra.mxu0 %v4249
    %4466 = vmatpush.bf16.msra.mxu0 %v4245
    %4467 = vmatpush.bf16.msra.mxu0 %v4241
    %4468 = vmatpush.bf16.msra.mxu0 %v4237
    %4469 = vmatmul.bf16.gmra.mxu0 %v4460
    %v4470 = vpop.f32.mrf.mxu0
    %v4471 = vadd.f32 0.0, %v4470
    %v4472 = vpop.f32.mrf.mxu0
    %4473 = vdwg.mxu0
    %4474 = vmatpush.bf16.msra.mxu0 %v4266
    %4475 = vmatpush.bf16.msra.mxu0 %v4262
    %4476 = vmatpush.bf16.msra.mxu0 %v4258
    %4477 = vmatpush.bf16.msra.mxu0 %v4254
    %4478 = vmatpush.bf16.msra.mxu0 %v4250
    %4479 = vmatpush.bf16.msra.mxu0 %v4246
    %4480 = vmatpush.bf16.msra.mxu0 %v4242
    %4481 = vmatpush.bf16.msra.mxu0 %v4238
    %4482 = vmatmul.bf16.gmra.mxu0 %v4460
    %v4483 = vpop.f32.mrf.mxu0
    %v4484 = vadd.f32 0.0, %v4483
    %v4485 = vpop.f32.mrf.mxu0
    %4486 = vdwg.mxu0
    %4487 = vmatpush.bf16.msra.mxu0 %v4267
    %4488 = vmatpush.bf16.msra.mxu0 %v4263
    %4489 = vmatpush.bf16.msra.mxu0 %v4259
    %4490 = vmatpush.bf16.msra.mxu0 %v4255
    %4491 = vmatpush.bf16.msra.mxu0 %v4251
    %4492 = vmatpush.bf16.msra.mxu0 %v4247
    %4493 = vmatpush.bf16.msra.mxu0 %v4243
    %4494 = vmatpush.bf16.msra.mxu0 %v4239
    %4495 = vmatmul.bf16.gmra.mxu0 %v4460
    %v4496 = vpop.f32.mrf.mxu0
    %v4497 = vadd.f32 0.0, %v4496
    %v4498 = vpop.f32.mrf.mxu0
    %4499 = vdwg.mxu0
    %4500 = vmatpush.bf16.msra.mxu0 %v4268
    %4501 = vmatpush.bf16.msra.mxu0 %v4264
    %4502 = vmatpush.bf16.msra.mxu0 %v4260
    %4503 = vmatpush.bf16.msra.mxu0 %v4256
    %4504 = vmatpush.bf16.msra.mxu0 %v4252
    %4505 = vmatpush.bf16.msra.mxu0 %v4248
    %4506 = vmatpush.bf16.msra.mxu0 %v4244
    %4507 = vmatpush.bf16.msra.mxu0 %v4240
    %4508 = vmatmul.bf16.gmra.mxu0 %v4460
    %v4509 = vpop.f32.mrf.mxu0
    %v4510 = vadd.f32 0.0, %v4509
    %v4511 = vpop.f32.mrf.mxu0
    %4512 = vdwg.mxu0
    %v4513 = vadd.f32 %v4456, %v4471
    %v4514 = vadd.f32 %v4457, %v4484
    %v4515 = vadd.f32 %v4458, %v4497
    %v4516 = vadd.f32 %v4459, %v4510
    %v4517 = vmul.f32 %v4513, 0.5
    %v4518 = vmul.f32 %v4514, 0.5
    %v4519 = vmul.f32 %v4515, 0.5
    %v4520 = vtanh.pop %v4517
    %v4521 = vtanh.pop %v4518
    %v4522 = vtanh.pop %v4519
    %v4523 = vadd.f32 %v4520, 1.0
    %v4524 = vadd.f32 %v4521, 1.0
    %v4525 = vadd.f32 %v4522, 1.0
    %v4526 = vmul.f32 %v4523, 0.5
    %v4527 = vmul.f32 %v4524, 0.5
    %v4528 = vmul.f32 %v4525, 0.5
    %v4529 = vtanh.pop %v4516
    %v4530 = vmul.f32 %v4527, %v4452
    %v4531 = vmul.f32 %v4526, %v4529
    %v4532 = vadd.f32 %v4530, %v4531
    %v4533 = vtanh.pop %v4532
    %v4534 = vmul.f32 %v4528, %v4533
    %v4535 = vadd.f32 %v4455, %v4534
    %v4536 = vld [vmem:[%s1411] sm:$0xff]
    %v4537 = vld [vmem:[%s1411 + $0x8] sm:$0xff]
    %v4538 = vld [vmem:[%s1411 + $0x10] sm:$0xff]
    %v4539 = vld [vmem:[%s1411 + $0x18] sm:$0xff]
    %v4540 = vpack.c.bf16 %v4534, %v4534
    %4541 = vmatpush.bf16.msra.mxu0 %v4265
    %4542 = vmatpush.bf16.msra.mxu0 %v4261
    %4543 = vmatpush.bf16.msra.mxu0 %v4257
    %4544 = vmatpush.bf16.msra.mxu0 %v4253
    %4545 = vmatpush.bf16.msra.mxu0 %v4249
    %4546 = vmatpush.bf16.msra.mxu0 %v4245
    %4547 = vmatpush.bf16.msra.mxu0 %v4241
    %4548 = vmatpush.bf16.msra.mxu0 %v4237
    %4549 = vmatmul.bf16.gmra.mxu0 %v4540
    %v4550 = vpop.f32.mrf.mxu0
    %v4551 = vadd.f32 0.0, %v4550
    %v4552 = vpop.f32.mrf.mxu0
    %4553 = vdwg.mxu0
    %4554 = vmatpush.bf16.msra.mxu0 %v4266
    %4555 = vmatpush.bf16.msra.mxu0 %v4262
    %4556 = vmatpush.bf16.msra.mxu0 %v4258
    %4557 = vmatpush.bf16.msra.mxu0 %v4254
    %4558 = vmatpush.bf16.msra.mxu0 %v4250
    %4559 = vmatpush.bf16.msra.mxu0 %v4246
    %4560 = vmatpush.bf16.msra.mxu0 %v4242
    %4561 = vmatpush.bf16.msra.mxu0 %v4238
    %4562 = vmatmul.bf16.gmra.mxu0 %v4540
    %v4563 = vpop.f32.mrf.mxu0
    %v4564 = vadd.f32 0.0, %v4563
    %v4565 = vpop.f32.mrf.mxu0
    %4566 = vdwg.mxu0
    %4567 = vmatpush.bf16.msra.mxu0 %v4267
    %4568 = vmatpush.bf16.msra.mxu0 %v4263
    %4569 = vmatpush.bf16.msra.mxu0 %v4259
    %4570 = vmatpush.bf16.msra.mxu0 %v4255
    %4571 = vmatpush.bf16.msra.mxu0 %v4251
    %4572 = vmatpush.bf16.msra.mxu0 %v4247
    %4573 = vmatpush.bf16.msra.mxu0 %v4243
    %4574 = vmatpush.bf16.msra.mxu0 %v4239
    %4575 = vmatmul.bf16.gmra.mxu0 %v4540
    %v4576 = vpop.f32.mrf.mxu0
    %v4577 = vadd.f32 0.0, %v4576
    %v4578 = vpop.f32.mrf.mxu0
    %4579 = vdwg.mxu0
    %4580 = vmatpush.bf16.msra.mxu0 %v4268
    %4581 = vmatpush.bf16.msra.mxu0 %v4264
    %4582 = vmatpush.bf16.msra.mxu0 %v4260
    %4583 = vmatpush.bf16.msra.mxu0 %v4256
    %4584 = vmatpush.bf16.msra.mxu0 %v4252
    %4585 = vmatpush.bf16.msra.mxu0 %v4248
    %4586 = vmatpush.bf16.msra.mxu0 %v4244
    %4587 = vmatpush.bf16.msra.mxu0 %v4240
    %4588 = vmatmul.bf16.gmra.mxu0 %v4540
    %v4589 = vpop.f32.mrf.mxu0
    %v4590 = vadd.f32 0.0, %v4589
    %v4591 = vpop.f32.mrf.mxu0
    %4592 = vdwg.mxu0
    %v4593 = vadd.f32 %v4536, %v4551
    %v4594 = vadd.f32 %v4537, %v4564
    %v4595 = vadd.f32 %v4538, %v4577
    %v4596 = vadd.f32 %v4539, %v4590
    %v4597 = vmul.f32 %v4593, 0.5
    %v4598 = vmul.f32 %v4594, 0.5
    %v4599 = vmul.f32 %v4595, 0.5
    %v4600 = vtanh.pop %v4597
    %v4601 = vtanh.pop %v4598
    %v4602 = vtanh.pop %v4599
    %v4603 = vadd.f32 %v4600, 1.0
    %v4604 = vadd.f32 %v4601, 1.0
    %v4605 = vadd.f32 %v4602, 1.0
    %v4606 = vmul.f32 %v4603, 0.5
    %v4607 = vmul.f32 %v4604, 0.5
    %v4608 = vmul.f32 %v4605, 0.5
    %v4609 = vtanh.pop %v4596
    %v4610 = vmul.f32 %v4607, %v4532
    %v4611 = vmul.f32 %v4606, %v4609
    %v4612 = vadd.f32 %v4610, %v4611
    %v4613 = vtanh.pop %v4612
    %v4614 = vmul.f32 %v4608, %v4613
    %v4615 = vadd.f32 %v4535, %v4614
    %v4616 = vld [vmem:[%s1497] sm:$0xff]
    %v4617 = vld [vmem:[%s1497 + $0x8] sm:$0xff]
    %v4618 = vld [vmem:[%s1497 + $0x10] sm:$0xff]
    %v4619 = vld [vmem:[%s1497 + $0x18] sm:$0xff]
    %v4620 = vpack.c.bf16 %v4614, %v4614
    %4621 = vmatpush.bf16.msra.mxu0 %v4265
    %4622 = vmatpush.bf16.msra.mxu0 %v4261
    %4623 = vmatpush.bf16.msra.mxu0 %v4257
    %4624 = vmatpush.bf16.msra.mxu0 %v4253
    %4625 = vmatpush.bf16.msra.mxu0 %v4249
    %4626 = vmatpush.bf16.msra.mxu0 %v4245
    %4627 = vmatpush.bf16.msra.mxu0 %v4241
    %4628 = vmatpush.bf16.msra.mxu0 %v4237
    %4629 = vmatmul.bf16.gmra.mxu0 %v4620
    %v4630 = vpop.f32.mrf.mxu0
    %v4631 = vadd.f32 0.0, %v4630
    %v4632 = vpop.f32.mrf.mxu0
    %4633 = vdwg.mxu0
    %4634 = vmatpush.bf16.msra.mxu0 %v4266
    %4635 = vmatpush.bf16.msra.mxu0 %v4262
    %4636 = vmatpush.bf16.msra.mxu0 %v4258
    %4637 = vmatpush.bf16.msra.mxu0 %v4254
    %4638 = vmatpush.bf16.msra.mxu0 %v4250
    %4639 = vmatpush.bf16.msra.mxu0 %v4246
    %4640 = vmatpush.bf16.msra.mxu0 %v4242
    %4641 = vmatpush.bf16.msra.mxu0 %v4238
    %4642 = vmatmul.bf16.gmra.mxu0 %v4620
    %v4643 = vpop.f32.mrf.mxu0
    %v4644 = vadd.f32 0.0, %v4643
    %v4645 = vpop.f32.mrf.mxu0
    %4646 = vdwg.mxu0
    %4647 = vmatpush.bf16.msra.mxu0 %v4267
    %4648 = vmatpush.bf16.msra.mxu0 %v4263
    %4649 = vmatpush.bf16.msra.mxu0 %v4259
    %4650 = vmatpush.bf16.msra.mxu0 %v4255
    %4651 = vmatpush.bf16.msra.mxu0 %v4251
    %4652 = vmatpush.bf16.msra.mxu0 %v4247
    %4653 = vmatpush.bf16.msra.mxu0 %v4243
    %4654 = vmatpush.bf16.msra.mxu0 %v4239
    %4655 = vmatmul.bf16.gmra.mxu0 %v4620
    %v4656 = vpop.f32.mrf.mxu0
    %v4657 = vadd.f32 0.0, %v4656
    %v4658 = vpop.f32.mrf.mxu0
    %4659 = vdwg.mxu0
    %4660 = vmatpush.bf16.msra.mxu0 %v4268
    %4661 = vmatpush.bf16.msra.mxu0 %v4264
    %4662 = vmatpush.bf16.msra.mxu0 %v4260
    %4663 = vmatpush.bf16.msra.mxu0 %v4256
    %4664 = vmatpush.bf16.msra.mxu0 %v4252
    %4665 = vmatpush.bf16.msra.mxu0 %v4248
    %4666 = vmatpush.bf16.msra.mxu0 %v4244
    %4667 = vmatpush.bf16.msra.mxu0 %v4240
    %4668 = vmatmul.bf16.gmra.mxu0 %v4620
    %v4669 = vpop.f32.mrf.mxu0
    %v4670 = vadd.f32 0.0, %v4669
    %v4671 = vpop.f32.mrf.mxu0
    %4672 = vdwg.mxu0
    %v4673 = vadd.f32 %v4616, %v4631
    %v4674 = vadd.f32 %v4617, %v4644
    %v4675 = vadd.f32 %v4618, %v4657
    %v4676 = vadd.f32 %v4619, %v4670
    %v4677 = vmul.f32 %v4673, 0.5
    %v4678 = vmul.f32 %v4674, 0.5
    %v4679 = vmul.f32 %v4675, 0.5
    %v4680 = vtanh.pop %v4677
    %v4681 = vtanh.pop %v4678
    %v4682 = vtanh.pop %v4679
    %v4683 = vadd.f32 %v4680, 1.0
    %v4684 = vadd.f32 %v4681, 1.0
    %v4685 = vadd.f32 %v4682, 1.0
    %v4686 = vmul.f32 %v4683, 0.5
    %v4687 = vmul.f32 %v4684, 0.5
    %v4688 = vmul.f32 %v4685, 0.5
    %v4689 = vtanh.pop %v4676
    %v4690 = vmul.f32 %v4687, %v4612
    %v4691 = vmul.f32 %v4686, %v4689
    %v4692 = vadd.f32 %v4690, %v4691
    %v4693 = vtanh.pop %v4692
    %v4694 = vmul.f32 %v4688, %v4693
    %v4695 = vadd.f32 %v4615, %v4694
    %v4696 = vld [vmem:[%s1583] sm:$0xff]
    %v4697 = vld [vmem:[%s1583 + $0x8] sm:$0xff]
    %v4698 = vld [vmem:[%s1583 + $0x10] sm:$0xff]
    %v4699 = vld [vmem:[%s1583 + $0x18] sm:$0xff]
    %v4700 = vpack.c.bf16 %v4694, %v4694
    %4701 = vmatpush.bf16.msra.mxu0 %v4265
    %4702 = vmatpush.bf16.msra.mxu0 %v4261
    %4703 = vmatpush.bf16.msra.mxu0 %v4257
    %4704 = vmatpush.bf16.msra.mxu0 %v4253
    %4705 = vmatpush.bf16.msra.mxu0 %v4249
    %4706 = vmatpush.bf16.msra.mxu0 %v4245
    %4707 = vmatpush.bf16.msra.mxu0 %v4241
    %4708 = vmatpush.bf16.msra.mxu0 %v4237
    %4709 = vmatmul.bf16.gmra.mxu0 %v4700
    %v4710 = vpop.f32.mrf.mxu0
    %v4711 = vadd.f32 0.0, %v4710
    %v4712 = vpop.f32.mrf.mxu0
    %4713 = vdwg.mxu0
    %4714 = vmatpush.bf16.msra.mxu0 %v4266
    %4715 = vmatpush.bf16.msra.mxu0 %v4262
    %4716 = vmatpush.bf16.msra.mxu0 %v4258
    %4717 = vmatpush.bf16.msra.mxu0 %v4254
    %4718 = vmatpush.bf16.msra.mxu0 %v4250
    %4719 = vmatpush.bf16.msra.mxu0 %v4246
    %4720 = vmatpush.bf16.msra.mxu0 %v4242
    %4721 = vmatpush.bf16.msra.mxu0 %v4238
    %4722 = vmatmul.bf16.gmra.mxu0 %v4700
    %v4723 = vpop.f32.mrf.mxu0
    %v4724 = vadd.f32 0.0, %v4723
    %v4725 = vpop.f32.mrf.mxu0
    %4726 = vdwg.mxu0
    %4727 = vmatpush.bf16.msra.mxu0 %v4267
    %4728 = vmatpush.bf16.msra.mxu0 %v4263
    %4729 = vmatpush.bf16.msra.mxu0 %v4259
    %4730 = vmatpush.bf16.msra.mxu0 %v4255
    %4731 = vmatpush.bf16.msra.mxu0 %v4251
    %4732 = vmatpush.bf16.msra.mxu0 %v4247
    %4733 = vmatpush.bf16.msra.mxu0 %v4243
    %4734 = vmatpush.bf16.msra.mxu0 %v4239
    %4735 = vmatmul.bf16.gmra.mxu0 %v4700
    %v4736 = vpop.f32.mrf.mxu0
    %v4737 = vadd.f32 0.0, %v4736
    %v4738 = vpop.f32.mrf.mxu0
    %4739 = vdwg.mxu0
    %4740 = vmatpush.bf16.msra.mxu0 %v4268
    %4741 = vmatpush.bf16.msra.mxu0 %v4264
    %4742 = vmatpush.bf16.msra.mxu0 %v4260
    %4743 = vmatpush.bf16.msra.mxu0 %v4256
    %4744 = vmatpush.bf16.msra.mxu0 %v4252
    %4745 = vmatpush.bf16.msra.mxu0 %v4248
    %4746 = vmatpush.bf16.msra.mxu0 %v4244
    %4747 = vmatpush.bf16.msra.mxu0 %v4240
    %4748 = vmatmul.bf16.gmra.mxu0 %v4700
    %v4749 = vpop.f32.mrf.mxu0
    %v4750 = vadd.f32 0.0, %v4749
    %v4751 = vpop.f32.mrf.mxu0
    %4752 = vdwg.mxu0
    %v4753 = vadd.f32 %v4696, %v4711
    %v4754 = vadd.f32 %v4697, %v4724
    %v4755 = vadd.f32 %v4698, %v4737
    %v4756 = vadd.f32 %v4699, %v4750
    %v4757 = vmul.f32 %v4753, 0.5
    %v4758 = vmul.f32 %v4754, 0.5
    %v4759 = vmul.f32 %v4755, 0.5
    %v4760 = vtanh.pop %v4757
    %v4761 = vtanh.pop %v4758
    %v4762 = vtanh.pop %v4759
    %v4763 = vadd.f32 %v4760, 1.0
    %v4764 = vadd.f32 %v4761, 1.0
    %v4765 = vadd.f32 %v4762, 1.0
    %v4766 = vmul.f32 %v4763, 0.5
    %v4767 = vmul.f32 %v4764, 0.5
    %v4768 = vmul.f32 %v4765, 0.5
    %v4769 = vtanh.pop %v4756
    %v4770 = vmul.f32 %v4767, %v4692
    %v4771 = vmul.f32 %v4766, %v4769
    %v4772 = vadd.f32 %v4770, %v4771
    %v4773 = vtanh.pop %v4772
    %v4774 = vmul.f32 %v4768, %v4773
    %v4775 = vadd.f32 %v4695, %v4774
    %v4776 = vld [vmem:[%s1669] sm:$0xff]
    %v4777 = vld [vmem:[%s1669 + $0x8] sm:$0xff]
    %v4778 = vld [vmem:[%s1669 + $0x10] sm:$0xff]
    %v4779 = vld [vmem:[%s1669 + $0x18] sm:$0xff]
    %v4780 = vpack.c.bf16 %v4774, %v4774
    %4781 = vmatpush.bf16.msra.mxu0 %v4265
    %4782 = vmatpush.bf16.msra.mxu0 %v4261
    %4783 = vmatpush.bf16.msra.mxu0 %v4257
    %4784 = vmatpush.bf16.msra.mxu0 %v4253
    %4785 = vmatpush.bf16.msra.mxu0 %v4249
    %4786 = vmatpush.bf16.msra.mxu0 %v4245
    %4787 = vmatpush.bf16.msra.mxu0 %v4241
    %4788 = vmatpush.bf16.msra.mxu0 %v4237
    %4789 = vmatmul.bf16.gmra.mxu0 %v4780
    %v4790 = vpop.f32.mrf.mxu0
    %v4791 = vadd.f32 0.0, %v4790
    %v4792 = vpop.f32.mrf.mxu0
    %4793 = vdwg.mxu0
    %4794 = vmatpush.bf16.msra.mxu0 %v4266
    %4795 = vmatpush.bf16.msra.mxu0 %v4262
    %4796 = vmatpush.bf16.msra.mxu0 %v4258
    %4797 = vmatpush.bf16.msra.mxu0 %v4254
    %4798 = vmatpush.bf16.msra.mxu0 %v4250
    %4799 = vmatpush.bf16.msra.mxu0 %v4246
    %4800 = vmatpush.bf16.msra.mxu0 %v4242
    %4801 = vmatpush.bf16.msra.mxu0 %v4238
    %4802 = vmatmul.bf16.gmra.mxu0 %v4780
    %v4803 = vpop.f32.mrf.mxu0
    %v4804 = vadd.f32 0.0, %v4803
    %v4805 = vpop.f32.mrf.mxu0
    %4806 = vdwg.mxu0
    %4807 = vmatpush.bf16.msra.mxu0 %v4267
    %4808 = vmatpush.bf16.msra.mxu0 %v4263
    %4809 = vmatpush.bf16.msra.mxu0 %v4259
    %4810 = vmatpush.bf16.msra.mxu0 %v4255
    %4811 = vmatpush.bf16.msra.mxu0 %v4251
    %4812 = vmatpush.bf16.msra.mxu0 %v4247
    %4813 = vmatpush.bf16.msra.mxu0 %v4243
    %4814 = vmatpush.bf16.msra.mxu0 %v4239
    %4815 = vmatmul.bf16.gmra.mxu0 %v4780
    %v4816 = vpop.f32.mrf.mxu0
    %v4817 = vadd.f32 0.0, %v4816
    %v4818 = vpop.f32.mrf.mxu0
    %4819 = vdwg.mxu0
    %4820 = vmatpush.bf16.msra.mxu0 %v4268
    %4821 = vmatpush.bf16.msra.mxu0 %v4264
    %4822 = vmatpush.bf16.msra.mxu0 %v4260
    %4823 = vmatpush.bf16.msra.mxu0 %v4256
    %4824 = vmatpush.bf16.msra.mxu0 %v4252
    %4825 = vmatpush.bf16.msra.mxu0 %v4248
    %4826 = vmatpush.bf16.msra.mxu0 %v4244
    %4827 = vmatpush.bf16.msra.mxu0 %v4240
    %4828 = vmatmul.bf16.gmra.mxu0 %v4780
    %v4829 = vpop.f32.mrf.mxu0
    %v4830 = vadd.f32 0.0, %v4829
    %v4831 = vpop.f32.mrf.mxu0
    %4832 = vdwg.mxu0
    %v4833 = vadd.f32 %v4776, %v4791
    %v4834 = vadd.f32 %v4777, %v4804
    %v4835 = vadd.f32 %v4778, %v4817
    %v4836 = vadd.f32 %v4779, %v4830
    %v4837 = vmul.f32 %v4833, 0.5
    %v4838 = vmul.f32 %v4834, 0.5
    %v4839 = vmul.f32 %v4835, 0.5
    %v4840 = vtanh.pop %v4837
    %v4841 = vtanh.pop %v4838
    %v4842 = vtanh.pop %v4839
    %v4843 = vadd.f32 %v4840, 1.0
    %v4844 = vadd.f32 %v4841, 1.0
    %v4845 = vadd.f32 %v4842, 1.0
    %v4846 = vmul.f32 %v4843, 0.5
    %v4847 = vmul.f32 %v4844, 0.5
    %v4848 = vmul.f32 %v4845, 0.5
    %v4849 = vtanh.pop %v4836
    %v4850 = vmul.f32 %v4847, %v4772
    %v4851 = vmul.f32 %v4846, %v4849
    %v4852 = vadd.f32 %v4850, %v4851
    %v4853 = vtanh.pop %v4852
    %v4854 = vmul.f32 %v4848, %v4853
    %v4855 = vadd.f32 %v4775, %v4854
    %v4856 = vld [vmem:[%s1755] sm:$0xff]
    %v4857 = vld [vmem:[%s1755 + $0x8] sm:$0xff]
    %v4858 = vld [vmem:[%s1755 + $0x10] sm:$0xff]
    %v4859 = vld [vmem:[%s1755 + $0x18] sm:$0xff]
    %v4860 = vpack.c.bf16 %v4854, %v4854
    %4861 = vmatpush.bf16.msra.mxu0 %v4265
    %4862 = vmatpush.bf16.msra.mxu0 %v4261
    %4863 = vmatpush.bf16.msra.mxu0 %v4257
    %4864 = vmatpush.bf16.msra.mxu0 %v4253
    %4865 = vmatpush.bf16.msra.mxu0 %v4249
    %4866 = vmatpush.bf16.msra.mxu0 %v4245
    %4867 = vmatpush.bf16.msra.mxu0 %v4241
    %4868 = vmatpush.bf16.msra.mxu0 %v4237
    %4869 = vmatmul.bf16.gmra.mxu0 %v4860
    %v4870 = vpop.f32.mrf.mxu0
    %v4871 = vadd.f32 0.0, %v4870
    %v4872 = vpop.f32.mrf.mxu0
    %4873 = vdwg.mxu0
    %4874 = vmatpush.bf16.msra.mxu0 %v4266
    %4875 = vmatpush.bf16.msra.mxu0 %v4262
    %4876 = vmatpush.bf16.msra.mxu0 %v4258
    %4877 = vmatpush.bf16.msra.mxu0 %v4254
    %4878 = vmatpush.bf16.msra.mxu0 %v4250
    %4879 = vmatpush.bf16.msra.mxu0 %v4246
    %4880 = vmatpush.bf16.msra.mxu0 %v4242
    %4881 = vmatpush.bf16.msra.mxu0 %v4238
    %4882 = vmatmul.bf16.gmra.mxu0 %v4860
    %v4883 = vpop.f32.mrf.mxu0
    %v4884 = vadd.f32 0.0, %v4883
    %v4885 = vpop.f32.mrf.mxu0
    %4886 = vdwg.mxu0
    %4887 = vmatpush.bf16.msra.mxu0 %v4267
    %4888 = vmatpush.bf16.msra.mxu0 %v4263
    %4889 = vmatpush.bf16.msra.mxu0 %v4259
    %4890 = vmatpush.bf16.msra.mxu0 %v4255
    %4891 = vmatpush.bf16.msra.mxu0 %v4251
    %4892 = vmatpush.bf16.msra.mxu0 %v4247
    %4893 = vmatpush.bf16.msra.mxu0 %v4243
    %4894 = vmatpush.bf16.msra.mxu0 %v4239
    %4895 = vmatmul.bf16.gmra.mxu0 %v4860
    %v4896 = vpop.f32.mrf.mxu0
    %v4897 = vadd.f32 0.0, %v4896
    %v4898 = vpop.f32.mrf.mxu0
    %4899 = vdwg.mxu0
    %4900 = vmatpush.bf16.msra.mxu0 %v4268
    %4901 = vmatpush.bf16.msra.mxu0 %v4264
    %4902 = vmatpush.bf16.msra.mxu0 %v4260
    %4903 = vmatpush.bf16.msra.mxu0 %v4256
    %4904 = vmatpush.bf16.msra.mxu0 %v4252
    %4905 = vmatpush.bf16.msra.mxu0 %v4248
    %4906 = vmatpush.bf16.msra.mxu0 %v4244
    %4907 = vmatpush.bf16.msra.mxu0 %v4240
    %4908 = vmatmul.bf16.gmra.mxu0 %v4860
    %v4909 = vpop.f32.mrf.mxu0
    %v4910 = vadd.f32 0.0, %v4909
    %v4911 = vpop.f32.mrf.mxu0
    %4912 = vdwg.mxu0
    %v4913 = vadd.f32 %v4856, %v4871
    %v4914 = vadd.f32 %v4857, %v4884
    %v4915 = vadd.f32 %v4858, %v4897
    %v4916 = vadd.f32 %v4859, %v4910
    %v4917 = vmul.f32 %v4913, 0.5
    %v4918 = vmul.f32 %v4914, 0.5
    %v4919 = vmul.f32 %v4915, 0.5
    %v4920 = vtanh.pop %v4917
    %v4921 = vtanh.pop %v4918
    %v4922 = vtanh.pop %v4919
    %v4923 = vadd.f32 %v4920, 1.0
    %v4924 = vadd.f32 %v4921, 1.0
    %v4925 = vadd.f32 %v4922, 1.0
    %v4926 = vmul.f32 %v4923, 0.5
    %v4927 = vmul.f32 %v4924, 0.5
    %v4928 = vmul.f32 %v4925, 0.5
    %v4929 = vtanh.pop %v4916
    %v4930 = vmul.f32 %v4927, %v4852
    %v4931 = vmul.f32 %v4926, %v4929
    %v4932 = vadd.f32 %v4930, %v4931
    %v4933 = vtanh.pop %v4932
    %v4934 = vmul.f32 %v4928, %v4933
    %v4935 = vadd.f32 %v4855, %v4934
    %v4936 = vmul.f32 %v4935, 0.125
    %v4937 = vld [vmem:[%s13] sm:$0xff]
    %v4938 = vld [vmem:[%s13 + $0x8] sm:$0xff]
    %v4939 = vld [vmem:[%s13 + $0x10] sm:$0xff]
    %v4940 = vld [vmem:[%s13 + $0x18] sm:$0xff]
    %v4941 = vld [vmem:[%s13 + $0x20] sm:$0xff]
    %v4942 = vld [vmem:[%s13 + $0x28] sm:$0xff]
    %v4943 = vld [vmem:[%s13 + $0x30] sm:$0xff]
    %v4944 = vld [vmem:[%s13 + $0x38] sm:$0xff]
    %v4945 = vld [vmem:[%s13 + $0x40] sm:$0xff]
    %v4946 = vld [vmem:[%s13 + $0x48] sm:$0xff]
    %v4947 = vld [vmem:[%s13 + $0x50] sm:$0xff]
    %v4948 = vld [vmem:[%s13 + $0x58] sm:$0xff]
    %v4949 = vld [vmem:[%s13 + $0x60] sm:$0xff]
    %v4950 = vld [vmem:[%s13 + $0x68] sm:$0xff]
    %v4951 = vld [vmem:[%s13 + $0x70] sm:$0xff]
    %v4952 = vld [vmem:[%s13 + $0x78] sm:$0xff]
    %v4953 = vld [vmem:[%s14] sm:$0x1]
    %v4955 = vperm.slane %v4953, 0
    %4957 = vmatpush.msra.mxu0 %v4952
    %4958 = vmatpush.msra.mxu0 %v4951
    %4959 = vmatpush.msra.mxu0 %v4950
    %4960 = vmatpush.msra.mxu0 %v4949
    %4961 = vmatpush.msra.mxu0 %v4948
    %4962 = vmatpush.msra.mxu0 %v4947
    %4963 = vmatpush.msra.mxu0 %v4946
    %4964 = vmatpush.msra.mxu0 %v4945
    %4965 = vmatpush.msra.mxu0 %v4944
    %4966 = vmatpush.msra.mxu0 %v4943
    %4967 = vmatpush.msra.mxu0 %v4942
    %4968 = vmatpush.msra.mxu0 %v4941
    %4969 = vmatpush.msra.mxu0 %v4940
    %4970 = vmatpush.msra.mxu0 %v4939
    %4971 = vmatpush.msra.mxu0 %v4938
    %4972 = vmatpush.msra.mxu0 %v4937
    %4973 = vmatmul.f32.gmra.mxu0 %v4936
    %v4974 = vpop.f32.mrf.mxu0
    %v4975 = vadd.f32 %v4955, %v4974
    %4976 = vdwg.mxu0
    %v4977 = vmax.f32 %v4975, 0.0
    %v4978 = vld [vmem:[%s15] sm:$0xff]
    %v4979 = vld [vmem:[%s15 + $0x8] sm:$0xff]
    %v4980 = vld [vmem:[%s15 + $0x10] sm:$0xff]
    %v4981 = vld [vmem:[%s15 + $0x18] sm:$0xff]
    %v4982 = vld [vmem:[%s15 + $0x20] sm:$0xff]
    %v4983 = vld [vmem:[%s15 + $0x28] sm:$0xff]
    %v4984 = vld [vmem:[%s15 + $0x30] sm:$0xff]
    %v4985 = vld [vmem:[%s15 + $0x38] sm:$0xff]
    %v4986 = vld [vmem:[%s15 + $0x40] sm:$0xff]
    %v4987 = vld [vmem:[%s15 + $0x48] sm:$0xff]
    %v4988 = vld [vmem:[%s15 + $0x50] sm:$0xff]
    %v4989 = vld [vmem:[%s15 + $0x58] sm:$0xff]
    %v4990 = vld [vmem:[%s15 + $0x60] sm:$0xff]
    %v4991 = vld [vmem:[%s15 + $0x68] sm:$0xff]
    %v4992 = vld [vmem:[%s15 + $0x70] sm:$0xff]
    %v4993 = vld [vmem:[%s15 + $0x78] sm:$0xff]
    %v4994 = vld [vmem:[%s16] sm:$0x1]
    %v4996 = vperm.slane %v4994, 0
    %4998 = vmatpush.msra.mxu0 %v4993
    %4999 = vmatpush.msra.mxu0 %v4992
    %5000 = vmatpush.msra.mxu0 %v4991
    %5001 = vmatpush.msra.mxu0 %v4990
    %5002 = vmatpush.msra.mxu0 %v4989
    %5003 = vmatpush.msra.mxu0 %v4988
    %5004 = vmatpush.msra.mxu0 %v4987
    %5005 = vmatpush.msra.mxu0 %v4986
    %5006 = vmatpush.msra.mxu0 %v4985
    %5007 = vmatpush.msra.mxu0 %v4984
    %5008 = vmatpush.msra.mxu0 %v4983
    %5009 = vmatpush.msra.mxu0 %v4982
    %5010 = vmatpush.msra.mxu0 %v4981
    %5011 = vmatpush.msra.mxu0 %v4980
    %5012 = vmatpush.msra.mxu0 %v4979
    %5013 = vmatpush.msra.mxu0 %v4978
    %5014 = vmatmul.f32.gmra.mxu0 %v4977
    %v5015 = vpop.f32.mrf.mxu0
    %v5016 = vadd.f32 %v4996, %v5015
    %5017 = vdwg.mxu0
    %vm5018 = vcmask 39936
    %5019 = vst.msk [vmem:[#allocation23] sm:$0xff] %vm5018, %v5016
    %5020 = vst [vmem:[#allocation24] sm:$0xff] %v4936
    // Predicated region
    $region110: #{tpu_custom_call.1} parent=1 // pred_check
      _
    $region111: #{tpu_custom_call.1} parent=1 // pred_check_branch
      %5022 = sbr.rel (0) target = $region113
    $region112: #{tpu_custom_call.1} parent=1 // pred_region
      %5024 = vsyncadd [#allocation8], 0
      %s5026 = sshll.u32 [#allocation23], 4
      %s5027 = int_to_ptr.vmem [resolvable:$true] %s5026
      %s5028 = sshll.u32 %s17, 4
      %s5029 = int_to_ptr.hbm [resolvable:$true] %s5028
      %5031 = dma.vmem_to_hbm [thread:$0]  %s5027, 128, %s5029, [#allocation8]
    $region113: #{tpu_custom_call.1} parent=1 // pred_fallthru
      _
    // Predicated region
    $region114: #{tpu_custom_call.1} parent=1 // pred_check
      _
    $region115: #{tpu_custom_call.1} parent=1 // pred_check_branch
      %5033 = sbr.rel (0) target = $region117
    $region116: #{tpu_custom_call.1} parent=1 // pred_region
      %5035 = vsyncadd [#allocation25], 0
      %s5037 = sshll.u32 [#allocation24], 4
      %s5038 = int_to_ptr.vmem [resolvable:$true] %s5037
      %s5039 = sshll.u32 %s18, 4
      %s5040 = int_to_ptr.hbm [resolvable:$true] %s5039
      %5042 = dma.vmem_to_hbm [thread:$0]  %s5038, 128, %s5040, [#allocation25]
    $region117: #{tpu_custom_call.1} parent=1 // pred_fallthru
      _
    // Predicated region
    $region118: #{tpu_custom_call.1} parent=1 // pred_check
      _
    $region119: #{tpu_custom_call.1} parent=1 // pred_check_branch
      %5044 = sbr.rel (0) target = $region121
    $region120: #{tpu_custom_call.1} parent=1 // pred_region
      %5046 = dma.done [#allocation8], 128
    $region121: #{tpu_custom_call.1} parent=1 // pred_fallthru
      _
    // Predicated region
    $region122: #{tpu_custom_call.1} parent=1 // pred_check
      _
    $region123: #{tpu_custom_call.1} parent=1 // pred_check_branch
      %5048 = sbr.rel (0) target = $region125
    $region124: #{tpu_custom_call.1} parent=1 // pred_region
      %5050 = dma.done [#allocation25], 128
    $region125: #{tpu_custom_call.1} parent=1 // pred_fallthru
      _
    %5051 = vsyncpa [#allocation7], 1
    %5052 = vsyncpa [#allocation10], 1
    %5053 = vsyncpa [#allocation13], 1
    %5054 = vsyncpa [#allocation16], 1
    %5055 = vsyncpa [#allocation19], 1
    %5056 = vsyncpa [#allocation22], 1
    %5057 = vsyncpa [#allocation8], 1
    %5058 = vsyncpa [#allocation25], 1

</llo_original>
